<compile_context>
chip_gen: v6e
topology: v6e:2x2x1
jax: 0.10.0
libtpu: 0.0.40
codegen_flags: <defaults>
</compile_context>

<pallas_src>
import jax
import jax.numpy as jnp
from jax.experimental import pallas as pl
from jax.experimental.pallas import tpu as pltpu


# ----------------------------------------------------------------------------- helpers

def _round_up(n, m):
    return ((n + m - 1) // m) * m


def _pad_lanes_to(a, sp):
    pad = sp - a.shape[-1]
    if pad:
        a = jnp.pad(a, [(0, 0)] * (a.ndim - 1) + [(0, pad)])
    return a


def _pick_stile(sp, cap=2048):
    """Largest power-of-two multiple of 128 that divides sp (capped)."""
    t = 128
    while t * 2 <= cap and sp % (t * 2) == 0:
        t *= 2
    return min(t, sp)


def _pick_ctile(c, sp, itemsize, target=1 << 20):
    """Channel tile: a multiple of 8 dividing c, sized toward ~1 MiB blocks."""
    if c % 8 != 0:
        return c
    ct = 8
    while c % (ct * 2) == 0 and (ct * 2) * sp * itemsize <= target:
        ct *= 2
    return ct


_VMEM_LIMIT = None


def _vmem_limit():
    """<= 75% of this generation's per-core VMEM (64 MiB on v7x, 128 MiB on v5e/v6e)."""
    global _VMEM_LIMIT
    if _VMEM_LIMIT is None:
        try:
            cap = int(pltpu.get_tpu_info().vmem_capacity_bytes)
        except Exception:
            cap = 64 << 20          # conservative fallback (v7x per-core VMEM)
        _VMEM_LIMIT = (cap * 3) // 4
    return _VMEM_LIMIT


def _mosaic(*sem):
    return pltpu.CompilerParams(dimension_semantics=sem, vmem_limit_bytes=_vmem_limit())


def _gelu_tanh(x):
    # TODO(synk): PyTorch F.gelu defaults to the exact erf form; the tanh approximation is used to
    # stay on ops with guaranteed Mosaic lowerings (the pure-JAX reference below matches it).
    c = 0.7978845608028654  # sqrt(2/pi)
    return 0.5 * x * (1.0 + jnp.tanh(c * (x + 0.044715 * x * x * x)))


# ----------------------------------------------------------------------------- fused LayerNorm + 1x1 conv

def ln_pointwise_conv(x, gamma, beta, w, eps=1e-5):
    """Fused channel LayerNorm (Restormer 'WithBias') + bias-free 1x1 conv.

    x: (B, Cin, Sp) lane-padded channels-first; gamma/beta: (Cin,); w: (Cout, Cin).
    Returns (B, Cout, Sp).  Pad columns of the output hold w@beta; the only consumer (the
    depthwise conv) re-zeroes them, so the chain never needs an extra pad/slice HBM pass.
    """
    B, Cin, Sp = x.shape
    Cout = w.shape[0]
    # Fold the LN affine into the conv:  W @ (xn*g + b) = (W*g) @ xn + (W @ b)
    w_fold = w.astype(jnp.float32) * gamma.astype(jnp.float32)[None, :]
    bias = (w.astype(jnp.float32) @ beta.astype(jnp.float32)).reshape(Cout, 1)
    ts = _pick_stile(Sp)

    def kernel(x_ref, w_ref, b_ref, o_ref):
        xv = x_ref[0].astype(jnp.float32)                              # (Cin, ts)
        mu = jnp.mean(xv, axis=0, keepdims=True)
        var = jnp.mean((xv - mu) * (xv - mu), axis=0, keepdims=True)
        xn = (xv - mu) * jax.lax.rsqrt(var + eps)
        y = jnp.dot(w_ref[...], xn, preferred_element_type=jnp.float32) + b_ref[...]
        o_ref[0] = y.astype(o_ref.dtype)

    return pl.pallas_call(
        kernel,
        out_shape=jax.ShapeDtypeStruct((B, Cout, Sp), x.dtype),
        grid_spec=pltpu.PrefetchScalarGridSpec(
            num_scalar_prefetch=0,
            grid=(B, Sp // ts),
            in_specs=[pl.BlockSpec((1, Cin, ts), lambda b, s: (b, 0, s)),
                      pl.BlockSpec((Cout, Cin), lambda b, s: (0, 0)),
                      pl.BlockSpec((Cout, 1), lambda b, s: (0, 0))],
            out_specs=pl.BlockSpec((1, Cout, ts), lambda b, s: (b, 0, s)),
        ),
        compiler_params=_mosaic("parallel", "parallel"),
    )(x, w_fold, bias)


# ----------------------------------------------------------------------------- depthwise 3x3 conv (lane-flat)

def dwconv3x3_flat(x, w, H, W, S):
    """Depthwise 3x3 conv (stride 1, zero padding 1) on lane-flattened spatial data.

    x: (B, C, Sp) with the valid row-major image in columns [0, S=H*W); w: (C, 3, 3).
    Returns (B, C, Sp) with pad columns zeroed.  The image is copied into a VMEM scratch at a
    lane-aligned halo offset; each of the 9 taps is a static lane slice of the scratch (lane-dense),
    and the left/right column taps are corrected with precomputed per-column masks.
    """
    B, C, Sp = x.shape
    LPAD = 128                                            # lane-aligned halo offset in the scratch
    total = _round_up(LPAD + Sp + W + 1, 128)
    w9 = w.reshape(C, 9).astype(jnp.float32)

    col = jnp.arange(Sp, dtype=jnp.int32)
    valid = col < S
    jmod = col % W
    masks = jnp.stack([valid & (jmod != 0),               # left-tap columns (b == 0)
                       valid,                             # centre columns   (b == 1)
                       valid & (jmod != W - 1)],          # right-tap columns(b == 2)
                      axis=0).astype(jnp.float32)         # (3, Sp)

    Ct = _pick_ctile(C, Sp, x.dtype.itemsize)

    def kernel(x_ref, w_ref, m_ref, o_ref, scr):
        scr[...] = jnp.zeros_like(scr)
        scr[:, LPAD:LPAD + S] = x_ref[0, :, :S].astype(jnp.float32)
        acc = jnp.zeros((Ct, Sp), jnp.float32)
        for b in range(3):
            acc_b = jnp.zeros((Ct, Sp), jnp.float32)
            for a in range(3):
                off = LPAD + (a - 1) * W + (b - 1)
                acc_b = acc_b + scr[:, off:off + Sp] * w_ref[:, 3 * a + b:3 * a + b + 1]
            acc = acc + acc_b * m_ref[b:b + 1]
        o_ref[0] = acc.astype(o_ref.dtype)

    return pl.pallas_call(
        kernel,
        out_shape=jax.ShapeDtypeStruct((B, C, Sp), x.dtype),
        grid_spec=pltpu.PrefetchScalarGridSpec(
            num_scalar_prefetch=0,
            grid=(B, C // Ct),
            in_specs=[pl.BlockSpec((1, Ct, Sp), lambda b, c: (b, c, 0)),
                      pl.BlockSpec((Ct, 9), lambda b, c: (c, 0)),
                      pl.BlockSpec((3, Sp), lambda b, c: (0, 0))],
            out_specs=pl.BlockSpec((1, Ct, Sp), lambda b, c: (b, c, 0)),
            scratch_shapes=[pltpu.VMEM((Ct, total), jnp.float32)],
        ),
        compiler_params=_mosaic("parallel", "parallel"),
    )(x, w9, masks)


# ----------------------------------------------------------------------------- channel attention (+ proj)

def cattention_fused(qkv, temperature, proj_w):
    """Transposed (channel) attention over ALL heads of a batch element + fused project_out.

    qkv: (B, 3C, Sp) with zero pad columns (zero pads change neither the L2 norms, q@k^T, nor the
    valid columns of attn@v).  temperature: (NH,); proj_w: (C, C).  Returns (B, C, Sp).
    All heads are computed with one C x C attention matrix plus a block-diagonal additive mask,
    which keeps the MXU dots full-depth instead of NH tiny (C/NH)-row dots.
    """
    B, C3, Sp = qkv.shape
    C = C3 // 3
    nh = temperature.shape[0]
    ch = C // nh
    t_row = jnp.repeat(temperature.astype(jnp.float32), ch).reshape(C, 1)
    head = jnp.arange(C, dtype=jnp.int32) // ch
    blk_mask = jnp.where(head[:, None] == head[None, :], 0.0, -1e30).astype(jnp.float32)
    w_f = proj_w.astype(jnp.float32)

    def kernel(x_ref, t_ref, m_ref, w_ref, o_ref):
        q = x_ref[0, 0:C, :].astype(jnp.float32)                       # (C, Sp)
        k = x_ref[0, C:2 * C, :].astype(jnp.float32)
        v = x_ref[0, 2 * C:3 * C, :].astype(jnp.float32)
        qn = q / jnp.maximum(jnp.sqrt(jnp.sum(q * q, axis=-1, keepdims=True)), 1e-12)
        kn = k / jnp.maximum(jnp.sqrt(jnp.sum(k * k, axis=-1, keepdims=True)), 1e-12)
        attn = jax.lax.dot_general(qn, kn, (((1,), (1,)), ((), ())),
                                   preferred_element_type=jnp.float32)  # (C, C)
        attn = attn * t_ref[...] + m_ref[...]                           # temperature + head mask
        attn = attn - jnp.max(attn, axis=-1, keepdims=True)
        attn = jnp.exp(attn)
        attn = attn / jnp.sum(attn, axis=-1, keepdims=True)
        out = jnp.dot(attn, v, preferred_element_type=jnp.float32)      # (C, Sp)
        o_ref[0] = jnp.dot(w_ref[...], out,
                           preferred_element_type=jnp.float32).astype(o_ref.dtype)

    return pl.pallas_call(
        kernel,
        out_shape=jax.ShapeDtypeStruct((B, C, Sp), qkv.dtype),
        grid_spec=pltpu.PrefetchScalarGridSpec(
            num_scalar_prefetch=0,
            grid=(B,),
            in_specs=[pl.BlockSpec((1, C3, Sp), lambda b: (b, 0, 0)),
                      pl.BlockSpec((C, 1), lambda b: (0, 0)),
                      pl.BlockSpec((C, C), lambda b: (0, 0)),
                      pl.BlockSpec((C, C), lambda b: (0, 0))],
            out_specs=pl.BlockSpec((1, C, Sp), lambda b: (b, 0, 0)),
        ),
        compiler_params=_mosaic("parallel"),
    )(qkv, t_row, blk_mask, w_f)


# ----------------------------------------------------------------------------- SELayer

def se_layer(x, w1, w2):
    """Squeeze-and-Excitation.  x: (B, C, H, W); w1: (hidden, C); w2: (C, hidden) (torch Linear)."""
    B, C, H, W = x.shape
    S = H * W
    hidden = w1.shape[0]
    Sp = _round_up(S, 128)
    xf = _pad_lanes_to(x.reshape(B, C, S), Sp)

    # Several batch elements per grid step, tile sized toward ~2 MiB, clamped to B.
    bytes_per_img = C * Sp * x.dtype.itemsize
    Bt = int(max(1, min(B, (2 << 20) // max(1, bytes_per_img))))
    nB = pl.cdiv(B, Bt)
    bpad = nB * Bt - B
    if bpad:
        xf = jnp.pad(xf, ((0, bpad), (0, 0), (0, 0)))

    w1_f = w1.astype(jnp.float32)                    # (hidden, C): channels on the lane axis
    w2_t = jnp.transpose(w2).astype(jnp.float32)     # (hidden, C)
    inv_count = 1.0 / float(S)

    def kernel(x_ref, w1_ref, w2_ref, o_ref):
        xv = x_ref[...]                                                   # (Bt, C, Sp), native dtype
        pooled = jnp.sum(xv.astype(jnp.float32), axis=-1) * inv_count     # true-count mean
        logits = jnp.zeros((Bt, C), jnp.float32)
        for j in range(hidden):        # excitation on the VPU: no degenerate (<8 row) MXU dots
            hj = jnp.maximum(jnp.sum(pooled * w1_ref[j], axis=-1, keepdims=True), 0.0)
            logits = logits + hj * w2_ref[j]
        gate = 1.0 / (1.0 + jnp.exp(-logits))                             # sigmoid
        o_ref[...] = xv * gate.astype(xv.dtype)[:, :, None]               # scale in native dtype

    out = pl.pallas_call(
        kernel,
        out_shape=jax.ShapeDtypeStruct((nB * Bt, C, Sp), x.dtype),
        grid_spec=pltpu.PrefetchScalarGridSpec(
            num_scalar_prefetch=0,
            grid=(nB,),
            in_specs=[pl.BlockSpec((Bt, C, Sp), lambda i: (i, 0, 0)),
                      pl.BlockSpec((hidden, C), lambda i: (0, 0)),
                      pl.BlockSpec((hidden, C), lambda i: (0, 0))],
            out_specs=pl.BlockSpec((Bt, C, Sp), lambda i: (i, 0, 0)),
        ),
        compiler_params=_mosaic("parallel"),
    )(xf, w1_f, w2_t)
    return out[:B, :, :S].reshape(B, C, H, W)


# ----------------------------------------------------------------------------- fused GELU gate + project_out

def gated_project_out(y, x2, w):
    """project_out(gelu(x1) * x2) where x1 is the first C channels of y (the dwconv output).

    y: (B, 2C, Sp); x2: (B, C, Sp); w: (Cout, C).  The channel split is done by the BlockSpec
    (no XLA slice copy) and the GELU gate is fused with the 1x1 conv (single HBM pass).
    """
    B, _, Sp = y.shape
    C = x2.shape[1]
    Cout = w.shape[0]
    w_f = w.astype(jnp.float32)
    ts = _pick_stile(Sp)

    def kernel(a_ref, b_ref, w_ref, o_ref):
        g = _gelu_tanh(a_ref[0].astype(jnp.float32)) * b_ref[0].astype(jnp.float32)
        o_ref[0] = jnp.dot(w_ref[...], g, preferred_element_type=jnp.float32).astype(o_ref.dtype)

    return pl.pallas_call(
        kernel,
        out_shape=jax.ShapeDtypeStruct((B, Cout, Sp), y.dtype),
        grid_spec=pltpu.PrefetchScalarGridSpec(
            num_scalar_prefetch=0,
            grid=(B, Sp // ts),
            in_specs=[pl.BlockSpec((1, C, ts), lambda b, s: (b, 0, s)),   # x1 = y[:, :C]
                      pl.BlockSpec((1, C, ts), lambda b, s: (b, 0, s)),
                      pl.BlockSpec((Cout, C), lambda b, s: (0, 0))],
            out_specs=pl.BlockSpec((1, Cout, ts), lambda b, s: (b, 0, s)),
        ),
        compiler_params=_mosaic("parallel", "parallel"),
    )(y, x2, w_f)


# ----------------------------------------------------------------------------- full block (Pallas path)

def cattention_path(mag, p):
    """norm1 -> qkv 1x1 -> qkv dwconv -> channel attention (+ fused project_out)."""
    B, C, H, Wf = mag.shape
    S = H * Wf
    Sp = _round_up(S, 128)
    magf = _pad_lanes_to(mag.reshape(B, C, S), Sp)                       # pad once for the chain
    qkv = ln_pointwise_conv(magf, p['norm1_w'], p['norm1_b'], p['qkv_w'])
    qkv = dwconv3x3_flat(qkv, p['qkv_dw_w'], H, Wf, S)
    out = cattention_fused(qkv, p['temperature'], p['proj_w'])
    return out[:, :, :S].reshape(B, C, H, Wf)                            # slice once after


def sftffn_path(x, p):
    """norm2 -> project_in 1x1 -> dwconv -> (FFT + SE) -> GELU gate + project_out."""
    B, C, H, W = x.shape
    S = H * W
    Sp = _round_up(S, 128)
    xf = _pad_lanes_to(x.reshape(B, C, S), Sp)
    y = ln_pointwise_conv(xf, p['norm2_w'], p['norm2_b'], p['ffn_in_w'])  # (B, 2C, Sp)
    y = dwconv3x3_flat(y, p['ffn_dw_w'], H, W, S)                          # (B, 2C, Sp), pads zeroed
    x1 = y[:, :C, :S].reshape(B, C, H, W)
    # TODO(synk): rfft2/irfft2 and complex abs/angle have no Pallas TPU equivalent (no FFT unit /
    # complex dtype in Mosaic); they stay as regular XLA ops.
    f = jnp.fft.rfft2(x1, norm='backward')
    mag, pha = jnp.abs(f), jnp.angle(f)
    mag = se_layer(mag, p['se_w1'], p['se_w2'])
    f2 = jax.lax.complex(mag * jnp.cos(pha), mag * jnp.sin(pha))
    x2 = jnp.fft.irfft2(f2, s=(H, W), norm='backward')
    x2f = _pad_lanes_to(x2.reshape(B, C, S), Sp)
    out = gated_project_out(y, x2f, p['ffn_out_w'])
    return out[:, :, :S].reshape(B, C, H, W)


def ctransformer_block(x, p):
    B, C, H, W = x.shape
    # TODO(synk): FFT / complex math kept in XLA (see note above).
    f = jnp.fft.rfft2(x, norm='backward')
    mag, pha = jnp.abs(f), jnp.angle(f)
    m = cattention_path(mag, p)
    f2 = jax.lax.complex(m * jnp.cos(pha), m * jnp.sin(pha))
    x = jnp.fft.irfft2(f2, s=(H, W), norm='backward') + x
    return x + sftffn_path(x, p)


# ----------------------------------------------------------------------------- pure-JAX reference

_HIGHEST = jax.lax.Precision.HIGHEST


def _pconv_ref(x, w):
    return jnp.einsum('oc,bchw->bohw', w, x, precision=_HIGHEST)


def _dwconv_ref(x, w):
    B, C, H, W = x.shape
    xp = jnp.pad(x, ((0, 0), (0, 0), (1, 1), (1, 1)))
    out = jnp.zeros_like(x)
    for di in range(3):
        for dj in range(3):
            out = out + xp[:, :, di:di + H, dj:dj + W] * w[:, di, dj][None, :, None, None]
    return out


def _layernorm_ref(x, w, b, eps=1e-5):
    mu = jnp.mean(x, axis=1, keepdims=True)
    var = jnp.mean((x - mu) ** 2, axis=1, keepdims=True)
    return (x - mu) / jnp.sqrt(var + eps) * w[None, :, None, None] + b[None, :, None, None]


def _cattention_ref(x, p):
    B, C, H, W = x.shape
    nh = p['temperature'].shape[0]
    ch = C // nh
    qkv = _dwconv_ref(_pconv_ref(x, p['qkv_w']), p['qkv_dw_w'])
    q, k, v = jnp.split(qkv, 3, axis=1)
    q, k, v = (t.reshape(B, nh, ch, H * W) for t in (q, k, v))

    def l2n(t):
        return t / jnp.maximum(jnp.sqrt(jnp.sum(t * t, -1, keepdims=True)), 1e-12)

    q, k = l2n(q), l2n(k)
    attn = jnp.einsum('bhcs,bhds->bhcd', q, k, precision=_HIGHEST)
    attn = attn * p['temperature'][None, :, None, None]
    attn = jax.nn.softmax(attn, axis=-1)
    out = jnp.einsum('bhcd,bhds->bhcs', attn, v, precision=_HIGHEST).reshape(B, C, H, W)
    return _pconv_ref(out, p['proj_w'])


def _se_ref(x, w1, w2):
    y = jnp.mean(x, axis=(2, 3))
    y = jnp.maximum(jnp.einsum('hc,bc->bh', w1, y, precision=_HIGHEST), 0.0)
    y = jax.nn.sigmoid(jnp.einsum('ch,bh->bc', w2, y, precision=_HIGHEST))
    return x * y[:, :, None, None]


def _sftffn_ref(x, p, H, W):
    y = _dwconv_ref(_pconv_ref(x, p['ffn_in_w']), p['ffn_dw_w'])
    x1, _ = jnp.split(y, 2, axis=1)
    f = jnp.fft.rfft2(x1, norm='backward')
    mag, pha = jnp.abs(f), jnp.angle(f)
    mag = _se_ref(mag, p['se_w1'], p['se_w2'])
    f2 = jax.lax.complex(mag * jnp.cos(pha), mag * jnp.sin(pha))
    x2 = jnp.fft.irfft2(f2, s=(H, W), norm='backward')
    return _pconv_ref(_gelu_tanh(x1) * x2, p['ffn_out_w'])


def ctransformer_block_ref(x, p):
    B, C, H, W = x.shape
    f = jnp.fft.rfft2(x, norm='backward')
    mag, pha = jnp.abs(f), jnp.angle(f)
    m = _cattention_ref(_layernorm_ref(mag, p['norm1_w'], p['norm1_b']), p)
    f2 = jax.lax.complex(m * jnp.cos(pha), m * jnp.sin(pha))
    x = jnp.fft.irfft2(f2, s=(H, W), norm='backward') + x
    return x + _sftffn_ref(_layernorm_ref(x, p['norm2_w'], p['norm2_b']), p, H, W)


# ----------------------------------------------------------------------------- test

if __name__ == "__main__":
    # dim must be a multiple of num_heads and >= 16 so SELayer(dim, reduction=16) has a real hidden dim.
    B, C, H, W = 2, 32, 16, 16
    num_heads = 4
    reduction = 16
    hidden = C // reduction

    key = jax.random.PRNGKey(0)
    ks = jax.random.split(key, 14)

    def rnd(k, shape, scale=0.1):
        return scale * jax.random.normal(k, shape, dtype=jnp.float32)

    params = {
        'norm1_w': 1.0 + rnd(ks[0], (C,)),
        'norm1_b': rnd(ks[1], (C,)),
        'qkv_w': rnd(ks[2], (3 * C, C)),          # Conv2d(dim, 3*dim, 1), bias=False
        'qkv_dw_w': rnd(ks[3], (3 * C, 3, 3)),    # depthwise Conv2d(3*dim, 3*dim, 3, groups=3*dim)
        'temperature': 1.0 + rnd(ks[4], (num_heads,)),
        'proj_w': rnd(ks[5], (C, C)),
        'norm2_w': 1.0 + rnd(ks[6], (C,)),
        'norm2_b': rnd(ks[7], (C,)),
        'ffn_in_w': rnd(ks[8], (2 * C, C)),       # Conv2d(dim, 2*dim, 1)
        'ffn_dw_w': rnd(ks[9], (2 * C, 3, 3)),    # depthwise Conv2d(2*dim, 2*dim, 3)
        'ffn_out_w': rnd(ks[10], (C, C)),         # Conv2d(dim, dim, 1)
        'se_w1': rnd(ks[11], (hidden, C)),        # Linear(C, C//16, bias=False)
        'se_w2': rnd(ks[12], (C, hidden)),        # Linear(C//16, C, bias=False)
    }
    x = jax.random.normal(ks[13], (B, C, H, W), dtype=jnp.float32)

    fwd = jax.jit(ctransformer_block)
    out = jax.block_until_ready(fwd(x, params))

    ref = jax.block_until_ready(ctransformer_block_ref(x, params))
    assert out.shape == (B, C, H, W)
    assert jnp.allclose(out, ref, atol=1e-3, rtol=1e-3), (
        f"mismatch vs reference, max abs diff = {jnp.max(jnp.abs(out - ref))}")

    print("KERNEL_OK")
</pallas_src>

<mosaic_0001>
module attributes {stable_mosaic.version = 11 : i64} {
  func.func @kernel(%arg0: i32, %arg1: i32, %arg2: memref<1x32x256xf32, #tpu.memory_space<vmem>>, %arg3: memref<32x9xf32, #tpu.memory_space<vmem>>, %arg4: memref<3x256xf32, #tpu.memory_space<vmem>>, %arg5: memref<1x32x256xf32, #tpu.memory_space<vmem>>, %arg6: memref<32x512xf32, #tpu.memory_space<vmem>>) attributes {dimension_semantics = [#tpu.dimension_semantics<parallel>, #tpu.dimension_semantics<parallel>], iteration_bounds = array<i64: 2, 3>, scalar_prefetch = 0 : i64, scratch_operands = 1 : i64, tpu.core_type = #tpu.core_type<tc>, window_params = [{transform_indices = @transform_0, window_bounds = array<i64: 1, 32, 256>}, {transform_indices = @transform_1, window_bounds = array<i64: 32, 9>}, {pipeline_mode = #tpu.pipeline_mode<synchronous>, transform_indices = @transform_2, window_bounds = array<i64: 3, 256>}, {transform_indices = @transform_3, window_bounds = array<i64: 1, 32, 256>}]} {
    %cst = arith.constant 0.000000e+00 : f32
    %0 = vector.broadcast %cst : f32 to vector<32x512xf32>
    %c0 = arith.constant 0 : index
    %c0_0 = arith.constant 0 : index
    %1 = vector.load %arg6[%c0, %c0_0] : memref<32x512xf32, #tpu.memory_space<vmem>>, vector<32x512xf32>
    tpu.vector_store %arg6[%c0, %c0_0], %0 {strides = array<i32>} : memref<32x512xf32, #tpu.memory_space<vmem>>, vector<32x512xf32>,
    %c0_1 = arith.constant 0 : index
    %c0_2 = arith.constant 0 : index
    %c0_3 = arith.constant 0 : index
    %2 = vector.load %arg2[%c0_1, %c0_2, %c0_3] : memref<1x32x256xf32, #tpu.memory_space<vmem>>, vector<1x32x144xf32>
    %3 = vector.shape_cast %2 : vector<1x32x144xf32> to vector<32x144xf32>
    %c0_4 = arith.constant 0 : index
    %c128 = arith.constant 128 : index
    %4 = vector.load %arg6[%c0_4, %c128] : memref<32x512xf32, #tpu.memory_space<vmem>>, vector<32x144xf32>
    tpu.vector_store %arg6[%c0_4, %c128], %3 {strides = array<i32>} : memref<32x512xf32, #tpu.memory_space<vmem>>, vector<32x144xf32>,
    %cst_5 = arith.constant 0.000000e+00 : f32
    %5 = vector.broadcast %cst_5 : f32 to vector<32x256xf32>
    %cst_6 = arith.constant 0.000000e+00 : f32
    %6 = vector.broadcast %cst_6 : f32 to vector<32x256xf32>
    %c0_7 = arith.constant 0 : index
    %c118 = arith.constant 118 : index
    %7 = vector.load %arg6[%c0_7, %c118] : memref<32x512xf32, #tpu.memory_space<vmem>>, vector<32x256xf32>
    %c0_8 = arith.constant 0 : index
    %c0_9 = arith.constant 0 : index
    %8 = vector.load %arg3[%c0_8, %c0_9] : memref<32x9xf32, #tpu.memory_space<vmem>>, vector<32x1xf32>
    %9 = vector.broadcast %8 : vector<32x1xf32> to vector<32x256xf32>
    %10 = arith.mulf %7, %9 : vector<32x256xf32>
    %11 = arith.addf %6, %10 : vector<32x256xf32>
    %c0_10 = arith.constant 0 : index
    %c127 = arith.constant 127 : index
    %12 = vector.load %arg6[%c0_10, %c127] : memref<32x512xf32, #tpu.memory_space<vmem>>, vector<32x256xf32>
    %c0_11 = arith.constant 0 : index
    %c3 = arith.constant 3 : index
    %13 = vector.load %arg3[%c0_11, %c3] : memref<32x9xf32, #tpu.memory_space<vmem>>, vector<32x1xf32>
    %14 = vector.broadcast %13 : vector<32x1xf32> to vector<32x256xf32>
    %15 = arith.mulf %12, %14 : vector<32x256xf32>
    %16 = arith.addf %11, %15 : vector<32x256xf32>
    %c0_12 = arith.constant 0 : index
    %c136 = arith.constant 136 : index
    %17 = vector.load %arg6[%c0_12, %c136] : memref<32x512xf32, #tpu.memory_space<vmem>>, vector<32x256xf32>
    %c0_13 = arith.constant 0 : index
    %c6 = arith.constant 6 : index
    %18 = vector.load %arg3[%c0_13, %c6] : memref<32x9xf32, #tpu.memory_space<vmem>>, vector<32x1xf32>
    %19 = vector.broadcast %18 : vector<32x1xf32> to vector<32x256xf32>
    %20 = arith.mulf %17, %19 : vector<32x256xf32>
    %21 = arith.addf %16, %20 : vector<32x256xf32>
    %c0_14 = arith.constant 0 : index
    %c0_15 = arith.constant 0 : index
    %22 = vector.load %arg4[%c0_14, %c0_15] : memref<3x256xf32, #tpu.memory_space<vmem>>, vector<1x256xf32>
    %23 = vector.broadcast %22 : vector<1x256xf32> to vector<32x256xf32>
    %24 = arith.mulf %21, %23 : vector<32x256xf32>
    %25 = arith.addf %5, %24 : vector<32x256xf32>
    %cst_16 = arith.constant 0.000000e+00 : f32
    %26 = vector.broadcast %cst_16 : f32 to vector<32x256xf32>
    %c0_17 = arith.constant 0 : index
    %c119 = arith.constant 119 : index
    %27 = vector.load %arg6[%c0_17, %c119] : memref<32x512xf32, #tpu.memory_space<vmem>>, vector<32x256xf32>
    %c0_18 = arith.constant 0 : index
    %c1 = arith.constant 1 : index
    %28 = vector.load %arg3[%c0_18, %c1] : memref<32x9xf32, #tpu.memory_space<vmem>>, vector<32x1xf32>
    %29 = vector.broadcast %28 : vector<32x1xf32> to vector<32x256xf32>
    %30 = arith.mulf %27, %29 : vector<32x256xf32>
    %31 = arith.addf %26, %30 : vector<32x256xf32>
    %c0_19 = arith.constant 0 : index
    %c128_20 = arith.constant 128 : index
    %32 = vector.load %arg6[%c0_19, %c128_20] : memref<32x512xf32, #tpu.memory_space<vmem>>, vector<32x256xf32>
    %c0_21 = arith.constant 0 : index
    %c4 = arith.constant 4 : index
    %33 = vector.load %arg3[%c0_21, %c4] : memref<32x9xf32, #tpu.memory_space<vmem>>, vector<32x1xf32>
    %34 = vector.broadcast %33 : vector<32x1xf32> to vector<32x256xf32>
    %35 = arith.mulf %32, %34 : vector<32x256xf32>
    %36 = arith.addf %31, %35 : vector<32x256xf32>
    %c0_22 = arith.constant 0 : index
    %c137 = arith.constant 137 : index
    %37 = vector.load %arg6[%c0_22, %c137] : memref<32x512xf32, #tpu.memory_space<vmem>>, vector<32x256xf32>
    %c0_23 = arith.constant 0 : index
    %c7 = arith.constant 7 : index
    %38 = vector.load %arg3[%c0_23, %c7] : memref<32x9xf32, #tpu.memory_space<vmem>>, vector<32x1xf32>
    %39 = vector.broadcast %38 : vector<32x1xf32> to vector<32x256xf32>
    %40 = arith.mulf %37, %39 : vector<32x256xf32>
    %41 = arith.addf %36, %40 : vector<32x256xf32>
    %c1_24 = arith.constant 1 : index
    %c0_25 = arith.constant 0 : index
    %42 = vector.load %arg4[%c1_24, %c0_25] : memref<3x256xf32, #tpu.memory_space<vmem>>, vector<1x256xf32>
    %43 = vector.broadcast %42 : vector<1x256xf32> to vector<32x256xf32>
    %44 = arith.mulf %41, %43 : vector<32x256xf32>
    %45 = arith.addf %25, %44 : vector<32x256xf32>
    %cst_26 = arith.constant 0.000000e+00 : f32
    %46 = vector.broadcast %cst_26 : f32 to vector<32x256xf32>
    %c0_27 = arith.constant 0 : index
    %c120 = arith.constant 120 : index
    %47 = vector.load %arg6[%c0_27, %c120] : memref<32x512xf32, #tpu.memory_space<vmem>>, vector<32x256xf32>
    %c0_28 = arith.constant 0 : index
    %c2 = arith.constant 2 : index
    %48 = vector.load %arg3[%c0_28, %c2] : memref<32x9xf32, #tpu.memory_space<vmem>>, vector<32x1xf32>
    %49 = vector.broadcast %48 : vector<32x1xf32> to vector<32x256xf32>
    %50 = arith.mulf %47, %49 : vector<32x256xf32>
    %51 = arith.addf %46, %50 : vector<32x256xf32>
    %c0_29 = arith.constant 0 : index
    %c129 = arith.constant 129 : index
    %52 = vector.load %arg6[%c0_29, %c129] : memref<32x512xf32, #tpu.memory_space<vmem>>, vector<32x256xf32>
    %c0_30 = arith.constant 0 : index
    %c5 = arith.constant 5 : index
    %53 = vector.load %arg3[%c0_30, %c5] : memref<32x9xf32, #tpu.memory_space<vmem>>, vector<32x1xf32>
    %54 = vector.broadcast %53 : vector<32x1xf32> to vector<32x256xf32>
    %55 = arith.mulf %52, %54 : vector<32x256xf32>
    %56 = arith.addf %51, %55 : vector<32x256xf32>
    %c0_31 = arith.constant 0 : index
    %c138 = arith.constant 138 : index
    %57 = vector.load %arg6[%c0_31, %c138] : memref<32x512xf32, #tpu.memory_space<vmem>>, vector<32x256xf32>
    %c0_32 = arith.constant 0 : index
    %c8 = arith.constant 8 : index
    %58 = vector.load %arg3[%c0_32, %c8] : memref<32x9xf32, #tpu.memory_space<vmem>>, vector<32x1xf32>
    %59 = vector.broadcast %58 : vector<32x1xf32> to vector<32x256xf32>
    %60 = arith.mulf %57, %59 : vector<32x256xf32>
    %61 = arith.addf %56, %60 : vector<32x256xf32>
    %c2_33 = arith.constant 2 : index
    %c0_34 = arith.constant 0 : index
    %62 = vector.load %arg4[%c2_33, %c0_34] : memref<3x256xf32, #tpu.memory_space<vmem>>, vector<1x256xf32>
    %63 = vector.broadcast %62 : vector<1x256xf32> to vector<32x256xf32>
    %64 = arith.mulf %61, %63 : vector<32x256xf32>
    %65 = arith.addf %45, %64 : vector<32x256xf32>
    %c0_35 = arith.constant 0 : index
    %c0_36 = arith.constant 0 : index
    %c0_37 = arith.constant 0 : index
    %66 = vector.load %arg5[%c0_35, %c0_36, %c0_37] : memref<1x32x256xf32, #tpu.memory_space<vmem>>, vector<1x32x256xf32>
    %67 = vector.shape_cast %66 : vector<1x32x256xf32> to vector<32x256xf32>
    %68 = vector.shape_cast %65 : vector<32x256xf32> to vector<1x32x256xf32>
    tpu.vector_store %arg5[%c0_35, %c0_36, %c0_37], %68 {strides = array<i32>} : memref<1x32x256xf32, #tpu.memory_space<vmem>>, vector<1x32x256xf32>,
    return
  }
  func.func @transform_0(%arg0: i32, %arg1: i32) -> (i32, i32, i32) {
    %c0_i32 = arith.constant 0 : i32
    %c0_i32_0 = arith.constant 0 : i32
    return %arg0, %arg1, %c0_i32 : i32, i32, i32
  }
  func.func @transform_1(%arg0: i32, %arg1: i32) -> (i32, i32) {
    %c0_i32 = arith.constant 0 : i32
    %c0_i32_0 = arith.constant 0 : i32
    return %arg1, %c0_i32 : i32, i32
  }
  func.func @transform_2(%arg0: i32, %arg1: i32) -> (i32, i32) {
    %c0_i32 = arith.constant 0 : i32
    %c0_i32_0 = arith.constant 0 : i32
    %c0_i32_1 = arith.constant 0 : i32
    return %c0_i32, %c0_i32_0 : i32, i32
  }
  func.func @transform_3(%arg0: i32, %arg1: i32) -> (i32, i32, i32) {
    %c0_i32 = arith.constant 0 : i32
    %c0_i32_0 = arith.constant 0 : i32
    return %arg0, %arg1, %c0_i32 : i32, i32, i32
  }
}

module attributes {stable_mosaic.version = 11 : i64} {
  func.func @kernel(%arg0: i32, %arg1: i32, %arg2: memref<1x32x256xf32, #tpu.memory_space<vmem>>, %arg3: memref<96x32xf32, #tpu.memory_space<vmem>>, %arg4: memref<96x1xf32, #tpu.memory_space<vmem>>, %arg5: memref<1x96x256xf32, #tpu.memory_space<vmem>>) attributes {dimension_semantics = [#tpu.dimension_semantics<parallel>, #tpu.dimension_semantics<parallel>], iteration_bounds = array<i64: 2, 1>, scalar_prefetch = 0 : i64, scratch_operands = 0 : i64, tpu.core_type = #tpu.core_type<tc>, window_params = [{transform_indices = @transform_0, window_bounds = array<i64: 1, 32, 256>}, {pipeline_mode = #tpu.pipeline_mode<synchronous>, transform_indices = @transform_1, window_bounds = array<i64: 96, 32>}, {pipeline_mode = #tpu.pipeline_mode<synchronous>, transform_indices = @transform_2, window_bounds = array<i64: 96, 1>}, {transform_indices = @transform_3, window_bounds = array<i64: 1, 96, 256>}]} {
    %c0 = arith.constant 0 : index
    %c0_0 = arith.constant 0 : index
    %c0_1 = arith.constant 0 : index
    %0 = vector.load %arg2[%c0, %c0_0, %c0_1] : memref<1x32x256xf32, #tpu.memory_space<vmem>>, vector<1x32x256xf32>
    %1 = vector.shape_cast %0 : vector<1x32x256xf32> to vector<32x256xf32>
    %cst = arith.constant dense<0.000000e+00> : vector<256xf32>
    %2 = vector.multi_reduction <add>, %1, %cst [0] : vector<32x256xf32> to vector<256xf32>
    %3 = vector.shape_cast %2 : vector<256xf32> to vector<1x256xf32>
    %cst_2 = arith.constant 3.200000e+01 : f32
    %4 = vector.broadcast %cst_2 : f32 to vector<1x256xf32>
    %5 = arith.divf %3, %4 : vector<1x256xf32>
    %6 = vector.broadcast %5 : vector<1x256xf32> to vector<32x256xf32>
    %7 = arith.subf %1, %6 : vector<32x256xf32>
    %8 = vector.broadcast %5 : vector<1x256xf32> to vector<32x256xf32>
    %9 = arith.subf %1, %8 : vector<32x256xf32>
    %10 = arith.mulf %7, %9 : vector<32x256xf32>
    %cst_3 = arith.constant dense<0.000000e+00> : vector<256xf32>
    %11 = vector.multi_reduction <add>, %10, %cst_3 [0] : vector<32x256xf32> to vector<256xf32>
    %12 = vector.shape_cast %11 : vector<256xf32> to vector<1x256xf32>
    %cst_4 = arith.constant 3.200000e+01 : f32
    %13 = vector.broadcast %cst_4 : f32 to vector<1x256xf32>
    %14 = arith.divf %12, %13 : vector<1x256xf32>
    %15 = vector.broadcast %5 : vector<1x256xf32> to vector<32x256xf32>
    %16 = arith.subf %1, %15 : vector<32x256xf32>
    %cst_5 = arith.constant 9.99999974E-6 : f32
    %17 = vector.broadcast %cst_5 : f32 to vector<1x256xf32>
    %18 = arith.addf %14, %17 : vector<1x256xf32>
    %19 = math.rsqrt %18 : vector<1x256xf32>
    %20 = vector.broadcast %19 : vector<1x256xf32> to vector<32x256xf32>
    %21 = arith.mulf %16, %20 : vector<32x256xf32>
    %c0_6 = arith.constant 0 : index
    %c0_7 = arith.constant 0 : index
    %22 = vector.load %arg3[%c0_6, %c0_7] : memref<96x32xf32, #tpu.memory_space<vmem>>, vector<96x32xf32>
    %cst_8 = arith.constant dense<0.000000e+00> : vector<96x256xf32>
    %23 = tpu.matmul %22, %21, %cst_8 {dimension_numbers = #tpu.dot_dimension_numbers<[1], [0], [0], [1], [0, 0, 1, 1], [], []>} : vector<96x32xf32>, vector<32x256xf32>, vector<96x256xf32> -> vector<96x256xf32>
    %c0_9 = arith.constant 0 : index
    %c0_10 = arith.constant 0 : index
    %24 = vector.load %arg4[%c0_9, %c0_10] : memref<96x1xf32, #tpu.memory_space<vmem>>, vector<96x1xf32>
    %25 = vector.broadcast %24 : vector<96x1xf32> to vector<96x256xf32>
    %26 = arith.addf %23, %25 : vector<96x256xf32>
    %c0_11 = arith.constant 0 : index
    %c0_12 = arith.constant 0 : index
    %c0_13 = arith.constant 0 : index
    %27 = vector.load %arg5[%c0_11, %c0_12, %c0_13] : memref<1x96x256xf32, #tpu.memory_space<vmem>>, vector<1x96x256xf32>
    %28 = vector.shape_cast %27 : vector<1x96x256xf32> to vector<96x256xf32>
    %29 = vector.shape_cast %26 : vector<96x256xf32> to vector<1x96x256xf32>
    tpu.vector_store %arg5[%c0_11, %c0_12, %c0_13], %29 {strides = array<i32>} : memref<1x96x256xf32, #tpu.memory_space<vmem>>, vector<1x96x256xf32>,
    return
  }
  func.func @transform_0(%arg0: i32, %arg1: i32) -> (i32, i32, i32) {
    %c0_i32 = arith.constant 0 : i32
    %c0_i32_0 = arith.constant 0 : i32
    return %arg0, %c0_i32, %arg1 : i32, i32, i32
  }
  func.func @transform_1(%arg0: i32, %arg1: i32) -> (i32, i32) {
    %c0_i32 = arith.constant 0 : i32
    %c0_i32_0 = arith.constant 0 : i32
    %c0_i32_1 = arith.constant 0 : i32
    return %c0_i32, %c0_i32_0 : i32, i32
  }
  func.func @transform_2(%arg0: i32, %arg1: i32) -> (i32, i32) {
    %c0_i32 = arith.constant 0 : i32
    %c0_i32_0 = arith.constant 0 : i32
    %c0_i32_1 = arith.constant 0 : i32
    return %c0_i32, %c0_i32_0 : i32, i32
  }
  func.func @transform_3(%arg0: i32, %arg1: i32) -> (i32, i32, i32) {
    %c0_i32 = arith.constant 0 : i32
    %c0_i32_0 = arith.constant 0 : i32
    return %arg0, %c0_i32, %arg1 : i32, i32, i32
  }
}

module attributes {stable_mosaic.version = 11 : i64} {
  func.func @kernel(%arg0: i32, %arg1: memref<1x96x256xf32, #tpu.memory_space<vmem>>, %arg2: memref<32x1xf32, #tpu.memory_space<vmem>>, %arg3: memref<32x32xf32, #tpu.memory_space<vmem>>, %arg4: memref<32x32xf32, #tpu.memory_space<vmem>>, %arg5: memref<1x32x256xf32, #tpu.memory_space<vmem>>) attributes {dimension_semantics = [#tpu.dimension_semantics<parallel>], iteration_bounds = array<i64: 2>, scalar_prefetch = 0 : i64, scratch_operands = 0 : i64, tpu.core_type = #tpu.core_type<tc>, window_params = [{transform_indices = @transform_0, window_bounds = array<i64: 1, 96, 256>}, {pipeline_mode = #tpu.pipeline_mode<synchronous>, transform_indices = @transform_1, window_bounds = array<i64: 32, 1>}, {pipeline_mode = #tpu.pipeline_mode<synchronous>, transform_indices = @transform_2, window_bounds = array<i64: 32, 32>}, {pipeline_mode = #tpu.pipeline_mode<synchronous>, transform_indices = @transform_3, window_bounds = array<i64: 32, 32>}, {transform_indices = @transform_4, window_bounds = array<i64: 1, 32, 256>}]} {
    %c0 = arith.constant 0 : index
    %c0_0 = arith.constant 0 : index
    %c0_1 = arith.constant 0 : index
    %0 = vector.load %arg1[%c0, %c0_0, %c0_1] : memref<1x96x256xf32, #tpu.memory_space<vmem>>, vector<1x32x256xf32>
    %1 = vector.shape_cast %0 : vector<1x32x256xf32> to vector<32x256xf32>
    %c0_2 = arith.constant 0 : index
    %c32 = arith.constant 32 : index
    %c0_3 = arith.constant 0 : index
    %2 = vector.load %arg1[%c0_2, %c32, %c0_3] : memref<1x96x256xf32, #tpu.memory_space<vmem>>, vector<1x32x256xf32>
    %3 = vector.shape_cast %2 : vector<1x32x256xf32> to vector<32x256xf32>
    %c0_4 = arith.constant 0 : index
    %c64 = arith.constant 64 : index
    %c0_5 = arith.constant 0 : index
    %4 = vector.load %arg1[%c0_4, %c64, %c0_5] : memref<1x96x256xf32, #tpu.memory_space<vmem>>, vector<1x32x256xf32>
    %5 = vector.shape_cast %4 : vector<1x32x256xf32> to vector<32x256xf32>
    %6 = arith.mulf %1, %1 : vector<32x256xf32>
    %cst = arith.constant dense<0.000000e+00> : vector<32xf32>
    %7 = vector.multi_reduction <add>, %6, %cst [1] : vector<32x256xf32> to vector<32xf32>
    %8 = vector.shape_cast %7 : vector<32xf32> to vector<32x1xf32>
    %9 = math.sqrt %8 : vector<32x1xf32>
    %cst_6 = arith.constant 9.99999996E-13 : f32
    %10 = vector.broadcast %cst_6 : f32 to vector<32x1xf32>
    %11 = arith.maximumf %9, %10 : vector<32x1xf32>
    %12 = vector.broadcast %11 : vector<32x1xf32> to vector<32x256xf32>
    %13 = arith.divf %1, %12 : vector<32x256xf32>
    %14 = arith.mulf %3, %3 : vector<32x256xf32>
    %cst_7 = arith.constant dense<0.000000e+00> : vector<32xf32>
    %15 = vector.multi_reduction <add>, %14, %cst_7 [1] : vector<32x256xf32> to vector<32xf32>
    %16 = vector.shape_cast %15 : vector<32xf32> to vector<32x1xf32>
    %17 = math.sqrt %16 : vector<32x1xf32>
    %cst_8 = arith.constant 9.99999996E-13 : f32
    %18 = vector.broadcast %cst_8 : f32 to vector<32x1xf32>
    %19 = arith.maximumf %17, %18 : vector<32x1xf32>
    %20 = vector.broadcast %19 : vector<32x1xf32> to vector<32x256xf32>
    %21 = arith.divf %3, %20 : vector<32x256xf32>
    %cst_9 = arith.constant dense<0.000000e+00> : vector<32x32xf32>
    %22 = tpu.matmul %13, %21, %cst_9 {dimension_numbers = #tpu.dot_dimension_numbers<[1], [1], [0], [0], [0, 0, 1, 0], [], []>} : vector<32x256xf32>, vector<32x256xf32>, vector<32x32xf32> -> vector<32x32xf32>
    %c0_10 = arith.constant 0 : index
    %c0_11 = arith.constant 0 : index
    %23 = vector.load %arg2[%c0_10, %c0_11] : memref<32x1xf32, #tpu.memory_space<vmem>>, vector<32x1xf32>
    %24 = vector.broadcast %23 : vector<32x1xf32> to vector<32x32xf32>
    %25 = arith.mulf %22, %24 : vector<32x32xf32>
    %c0_12 = arith.constant 0 : index
    %c0_13 = arith.constant 0 : index
    %26 = vector.load %arg3[%c0_12, %c0_13] : memref<32x32xf32, #tpu.memory_space<vmem>>, vector<32x32xf32>
    %27 = arith.addf %25, %26 : vector<32x32xf32>
    %cst_14 = arith.constant dense<0xFF800000> : vector<32xf32>
    %28 = vector.multi_reduction <maximumf>, %27, %cst_14 [1] : vector<32x32xf32> to vector<32xf32>
    %29 = vector.shape_cast %28 : vector<32xf32> to vector<32x1xf32>
    %30 = vector.broadcast %29 : vector<32x1xf32> to vector<32x32xf32>
    %31 = arith.subf %27, %30 : vector<32x32xf32>
    %32 = math.exp %31 : vector<32x32xf32>
    %cst_15 = arith.constant dense<0.000000e+00> : vector<32xf32>
    %33 = vector.multi_reduction <add>, %32, %cst_15 [1] : vector<32x32xf32> to vector<32xf32>
    %34 = vector.shape_cast %33 : vector<32xf32> to vector<32x1xf32>
    %35 = vector.broadcast %34 : vector<32x1xf32> to vector<32x32xf32>
    %36 = arith.divf %32, %35 : vector<32x32xf32>
    %cst_16 = arith.constant dense<0.000000e+00> : vector<32x256xf32>
    %37 = tpu.matmul %36, %5, %cst_16 {dimension_numbers = #tpu.dot_dimension_numbers<[1], [0], [0], [1], [0, 0, 1, 1], [], []>} : vector<32x32xf32>, vector<32x256xf32>, vector<32x256xf32> -> vector<32x256xf32>
    %c0_17 = arith.constant 0 : index
    %c0_18 = arith.constant 0 : index
    %38 = vector.load %arg4[%c0_17, %c0_18] : memref<32x32xf32, #tpu.memory_space<vmem>>, vector<32x32xf32>
    %cst_19 = arith.constant dense<0.000000e+00> : vector<32x256xf32>
    %39 = tpu.matmul %38, %37, %cst_19 {dimension_numbers = #tpu.dot_dimension_numbers<[1], [0], [0], [1], [0, 0, 1, 1], [], []>} : vector<32x32xf32>, vector<32x256xf32>, vector<32x256xf32> -> vector<32x256xf32>
    %c0_20 = arith.constant 0 : index
    %c0_21 = arith.constant 0 : index
    %c0_22 = arith.constant 0 : index
    %40 = vector.load %arg5[%c0_20, %c0_21, %c0_22] : memref<1x32x256xf32, #tpu.memory_space<vmem>>, vector<1x32x256xf32>
    %41 = vector.shape_cast %40 : vector<1x32x256xf32> to vector<32x256xf32>
    %42 = vector.shape_cast %39 : vector<32x256xf32> to vector<1x32x256xf32>
    tpu.vector_store %arg5[%c0_20, %c0_21, %c0_22], %42 {strides = array<i32>} : memref<1x32x256xf32, #tpu.memory_space<vmem>>, vector<1x32x256xf32>,
    return
  }
  func.func @transform_0(%arg0: i32) -> (i32, i32, i32) {
    %c0_i32 = arith.constant 0 : i32
    %c0_i32_0 = arith.constant 0 : i32
    %c0_i32_1 = arith.constant 0 : i32
    return %arg0, %c0_i32, %c0_i32_0 : i32, i32, i32
  }
  func.func @transform_1(%arg0: i32) -> (i32, i32) {
    %c0_i32 = arith.constant 0 : i32
    %c0_i32_0 = arith.constant 0 : i32
    %c0_i32_1 = arith.constant 0 : i32
    return %c0_i32, %c0_i32_0 : i32, i32
  }
  func.func @transform_2(%arg0: i32) -> (i32, i32) {
    %c0_i32 = arith.constant 0 : i32
    %c0_i32_0 = arith.constant 0 : i32
    %c0_i32_1 = arith.constant 0 : i32
    return %c0_i32, %c0_i32_0 : i32, i32
  }
  func.func @transform_3(%arg0: i32) -> (i32, i32) {
    %c0_i32 = arith.constant 0 : i32
    %c0_i32_0 = arith.constant 0 : i32
    %c0_i32_1 = arith.constant 0 : i32
    return %c0_i32, %c0_i32_0 : i32, i32
  }
  func.func @transform_4(%arg0: i32) -> (i32, i32, i32) {
    %c0_i32 = arith.constant 0 : i32
    %c0_i32_0 = arith.constant 0 : i32
    %c0_i32_1 = arith.constant 0 : i32
    return %arg0, %c0_i32, %c0_i32_0 : i32, i32, i32
  }
}

module attributes {stable_mosaic.version = 11 : i64} {
  func.func @kernel(%arg0: i32, %arg1: i32, %arg2: memref<1x32x256xf32, #tpu.memory_space<vmem>>, %arg3: memref<64x32xf32, #tpu.memory_space<vmem>>, %arg4: memref<64x1xf32, #tpu.memory_space<vmem>>, %arg5: memref<1x64x256xf32, #tpu.memory_space<vmem>>) attributes {dimension_semantics = [#tpu.dimension_semantics<parallel>, #tpu.dimension_semantics<parallel>], iteration_bounds = array<i64: 2, 1>, scalar_prefetch = 0 : i64, scratch_operands = 0 : i64, tpu.core_type = #tpu.core_type<tc>, window_params = [{transform_indices = @transform_0, window_bounds = array<i64: 1, 32, 256>}, {pipeline_mode = #tpu.pipeline_mode<synchronous>, transform_indices = @transform_1, window_bounds = array<i64: 64, 32>}, {pipeline_mode = #tpu.pipeline_mode<synchronous>, transform_indices = @transform_2, window_bounds = array<i64: 64, 1>}, {transform_indices = @transform_3, window_bounds = array<i64: 1, 64, 256>}]} {
    %c0 = arith.constant 0 : index
    %c0_0 = arith.constant 0 : index
    %c0_1 = arith.constant 0 : index
    %0 = vector.load %arg2[%c0, %c0_0, %c0_1] : memref<1x32x256xf32, #tpu.memory_space<vmem>>, vector<1x32x256xf32>
    %1 = vector.shape_cast %0 : vector<1x32x256xf32> to vector<32x256xf32>
    %cst = arith.constant dense<0.000000e+00> : vector<256xf32>
    %2 = vector.multi_reduction <add>, %1, %cst [0] : vector<32x256xf32> to vector<256xf32>
    %3 = vector.shape_cast %2 : vector<256xf32> to vector<1x256xf32>
    %cst_2 = arith.constant 3.200000e+01 : f32
    %4 = vector.broadcast %cst_2 : f32 to vector<1x256xf32>
    %5 = arith.divf %3, %4 : vector<1x256xf32>
    %6 = vector.broadcast %5 : vector<1x256xf32> to vector<32x256xf32>
    %7 = arith.subf %1, %6 : vector<32x256xf32>
    %8 = vector.broadcast %5 : vector<1x256xf32> to vector<32x256xf32>
    %9 = arith.subf %1, %8 : vector<32x256xf32>
    %10 = arith.mulf %7, %9 : vector<32x256xf32>
    %cst_3 = arith.constant dense<0.000000e+00> : vector<256xf32>
    %11 = vector.multi_reduction <add>, %10, %cst_3 [0] : vector<32x256xf32> to vector<256xf32>
    %12 = vector.shape_cast %11 : vector<256xf32> to vector<1x256xf32>
    %cst_4 = arith.constant 3.200000e+01 : f32
    %13 = vector.broadcast %cst_4 : f32 to vector<1x256xf32>
    %14 = arith.divf %12, %13 : vector<1x256xf32>
    %15 = vector.broadcast %5 : vector<1x256xf32> to vector<32x256xf32>
    %16 = arith.subf %1, %15 : vector<32x256xf32>
    %cst_5 = arith.constant 9.99999974E-6 : f32
    %17 = vector.broadcast %cst_5 : f32 to vector<1x256xf32>
    %18 = arith.addf %14, %17 : vector<1x256xf32>
    %19 = math.rsqrt %18 : vector<1x256xf32>
    %20 = vector.broadcast %19 : vector<1x256xf32> to vector<32x256xf32>
    %21 = arith.mulf %16, %20 : vector<32x256xf32>
    %c0_6 = arith.constant 0 : index
    %c0_7 = arith.constant 0 : index
    %22 = vector.load %arg3[%c0_6, %c0_7] : memref<64x32xf32, #tpu.memory_space<vmem>>, vector<64x32xf32>
    %cst_8 = arith.constant dense<0.000000e+00> : vector<64x256xf32>
    %23 = tpu.matmul %22, %21, %cst_8 {dimension_numbers = #tpu.dot_dimension_numbers<[1], [0], [0], [1], [0, 0, 1, 1], [], []>} : vector<64x32xf32>, vector<32x256xf32>, vector<64x256xf32> -> vector<64x256xf32>
    %c0_9 = arith.constant 0 : index
    %c0_10 = arith.constant 0 : index
    %24 = vector.load %arg4[%c0_9, %c0_10] : memref<64x1xf32, #tpu.memory_space<vmem>>, vector<64x1xf32>
    %25 = vector.broadcast %24 : vector<64x1xf32> to vector<64x256xf32>
    %26 = arith.addf %23, %25 : vector<64x256xf32>
    %c0_11 = arith.constant 0 : index
    %c0_12 = arith.constant 0 : index
    %c0_13 = arith.constant 0 : index
    %27 = vector.load %arg5[%c0_11, %c0_12, %c0_13] : memref<1x64x256xf32, #tpu.memory_space<vmem>>, vector<1x64x256xf32>
    %28 = vector.shape_cast %27 : vector<1x64x256xf32> to vector<64x256xf32>
    %29 = vector.shape_cast %26 : vector<64x256xf32> to vector<1x64x256xf32>
    tpu.vector_store %arg5[%c0_11, %c0_12, %c0_13], %29 {strides = array<i32>} : memref<1x64x256xf32, #tpu.memory_space<vmem>>, vector<1x64x256xf32>,
    return
  }
  func.func @transform_0(%arg0: i32, %arg1: i32) -> (i32, i32, i32) {
    %c0_i32 = arith.constant 0 : i32
    %c0_i32_0 = arith.constant 0 : i32
    return %arg0, %c0_i32, %arg1 : i32, i32, i32
  }
  func.func @transform_1(%arg0: i32, %arg1: i32) -> (i32, i32) {
    %c0_i32 = arith.constant 0 : i32
    %c0_i32_0 = arith.constant 0 : i32
    %c0_i32_1 = arith.constant 0 : i32
    return %c0_i32, %c0_i32_0 : i32, i32
  }
  func.func @transform_2(%arg0: i32, %arg1: i32) -> (i32, i32) {
    %c0_i32 = arith.constant 0 : i32
    %c0_i32_0 = arith.constant 0 : i32
    %c0_i32_1 = arith.constant 0 : i32
    return %c0_i32, %c0_i32_0 : i32, i32
  }
  func.func @transform_3(%arg0: i32, %arg1: i32) -> (i32, i32, i32) {
    %c0_i32 = arith.constant 0 : i32
    %c0_i32_0 = arith.constant 0 : i32
    return %arg0, %c0_i32, %arg1 : i32, i32, i32
  }
}

module attributes {stable_mosaic.version = 11 : i64} {
  func.func @kernel(%arg0: i32, %arg1: i32, %arg2: memref<1x64x256xf32, #tpu.memory_space<vmem>>, %arg3: memref<64x9xf32, #tpu.memory_space<vmem>>, %arg4: memref<3x256xf32, #tpu.memory_space<vmem>>, %arg5: memref<1x64x256xf32, #tpu.memory_space<vmem>>, %arg6: memref<64x512xf32, #tpu.memory_space<vmem>>) attributes {dimension_semantics = [#tpu.dimension_semantics<parallel>, #tpu.dimension_semantics<parallel>], iteration_bounds = array<i64: 2, 1>, scalar_prefetch = 0 : i64, scratch_operands = 1 : i64, tpu.core_type = #tpu.core_type<tc>, window_params = [{transform_indices = @transform_0, window_bounds = array<i64: 1, 64, 256>}, {transform_indices = @transform_1, window_bounds = array<i64: 64, 9>}, {pipeline_mode = #tpu.pipeline_mode<synchronous>, transform_indices = @transform_2, window_bounds = array<i64: 3, 256>}, {transform_indices = @transform_3, window_bounds = array<i64: 1, 64, 256>}]} {
    %cst = arith.constant 0.000000e+00 : f32
    %0 = vector.broadcast %cst : f32 to vector<64x512xf32>
    %c0 = arith.constant 0 : index
    %c0_0 = arith.constant 0 : index
    %1 = vector.load %arg6[%c0, %c0_0] : memref<64x512xf32, #tpu.memory_space<vmem>>, vector<64x512xf32>
    tpu.vector_store %arg6[%c0, %c0_0], %0 {strides = array<i32>} : memref<64x512xf32, #tpu.memory_space<vmem>>, vector<64x512xf32>,
    %c0_1 = arith.constant 0 : index
    %c0_2 = arith.constant 0 : index
    %c0_3 = arith.constant 0 : index
    %2 = vector.load %arg2[%c0_1, %c0_2, %c0_3] : memref<1x64x256xf32, #tpu.memory_space<vmem>>, vector<1x64x256xf32>
    %3 = vector.shape_cast %2 : vector<1x64x256xf32> to vector<64x256xf32>
    %c0_4 = arith.constant 0 : index
    %c128 = arith.constant 128 : index
    %4 = vector.load %arg6[%c0_4, %c128] : memref<64x512xf32, #tpu.memory_space<vmem>>, vector<64x256xf32>
    tpu.vector_store %arg6[%c0_4, %c128], %3 {strides = array<i32>} : memref<64x512xf32, #tpu.memory_space<vmem>>, vector<64x256xf32>,
    %cst_5 = arith.constant 0.000000e+00 : f32
    %5 = vector.broadcast %cst_5 : f32 to vector<64x256xf32>
    %cst_6 = arith.constant 0.000000e+00 : f32
    %6 = vector.broadcast %cst_6 : f32 to vector<64x256xf32>
    %c0_7 = arith.constant 0 : index
    %c111 = arith.constant 111 : index
    %7 = vector.load %arg6[%c0_7, %c111] : memref<64x512xf32, #tpu.memory_space<vmem>>, vector<64x256xf32>
    %c0_8 = arith.constant 0 : index
    %c0_9 = arith.constant 0 : index
    %8 = vector.load %arg3[%c0_8, %c0_9] : memref<64x9xf32, #tpu.memory_space<vmem>>, vector<64x1xf32>
    %9 = vector.broadcast %8 : vector<64x1xf32> to vector<64x256xf32>
    %10 = arith.mulf %7, %9 : vector<64x256xf32>
    %11 = arith.addf %6, %10 : vector<64x256xf32>
    %c0_10 = arith.constant 0 : index
    %c127 = arith.constant 127 : index
    %12 = vector.load %arg6[%c0_10, %c127] : memref<64x512xf32, #tpu.memory_space<vmem>>, vector<64x256xf32>
    %c0_11 = arith.constant 0 : index
    %c3 = arith.constant 3 : index
    %13 = vector.load %arg3[%c0_11, %c3] : memref<64x9xf32, #tpu.memory_space<vmem>>, vector<64x1xf32>
    %14 = vector.broadcast %13 : vector<64x1xf32> to vector<64x256xf32>
    %15 = arith.mulf %12, %14 : vector<64x256xf32>
    %16 = arith.addf %11, %15 : vector<64x256xf32>
    %c0_12 = arith.constant 0 : index
    %c143 = arith.constant 143 : index
    %17 = vector.load %arg6[%c0_12, %c143] : memref<64x512xf32, #tpu.memory_space<vmem>>, vector<64x256xf32>
    %c0_13 = arith.constant 0 : index
    %c6 = arith.constant 6 : index
    %18 = vector.load %arg3[%c0_13, %c6] : memref<64x9xf32, #tpu.memory_space<vmem>>, vector<64x1xf32>
    %19 = vector.broadcast %18 : vector<64x1xf32> to vector<64x256xf32>
    %20 = arith.mulf %17, %19 : vector<64x256xf32>
    %21 = arith.addf %16, %20 : vector<64x256xf32>
    %c0_14 = arith.constant 0 : index
    %c0_15 = arith.constant 0 : index
    %22 = vector.load %arg4[%c0_14, %c0_15] : memref<3x256xf32, #tpu.memory_space<vmem>>, vector<1x256xf32>
    %23 = vector.broadcast %22 : vector<1x256xf32> to vector<64x256xf32>
    %24 = arith.mulf %21, %23 : vector<64x256xf32>
    %25 = arith.addf %5, %24 : vector<64x256xf32>
    %cst_16 = arith.constant 0.000000e+00 : f32
    %26 = vector.broadcast %cst_16 : f32 to vector<64x256xf32>
    %c0_17 = arith.constant 0 : index
    %c112 = arith.constant 112 : index
    %27 = vector.load %arg6[%c0_17, %c112] : memref<64x512xf32, #tpu.memory_space<vmem>>, vector<64x256xf32>
    %c0_18 = arith.constant 0 : index
    %c1 = arith.constant 1 : index
    %28 = vector.load %arg3[%c0_18, %c1] : memref<64x9xf32, #tpu.memory_space<vmem>>, vector<64x1xf32>
    %29 = vector.broadcast %28 : vector<64x1xf32> to vector<64x256xf32>
    %30 = arith.mulf %27, %29 : vector<64x256xf32>
    %31 = arith.addf %26, %30 : vector<64x256xf32>
    %c0_19 = arith.constant 0 : index
    %c128_20 = arith.constant 128 : index
    %32 = vector.load %arg6[%c0_19, %c128_20] : memref<64x512xf32, #tpu.memory_space<vmem>>, vector<64x256xf32>
    %c0_21 = arith.constant 0 : index
    %c4 = arith.constant 4 : index
    %33 = vector.load %arg3[%c0_21, %c4] : memref<64x9xf32, #tpu.memory_space<vmem>>, vector<64x1xf32>
    %34 = vector.broadcast %33 : vector<64x1xf32> to vector<64x256xf32>
    %35 = arith.mulf %32, %34 : vector<64x256xf32>
    %36 = arith.addf %31, %35 : vector<64x256xf32>
    %c0_22 = arith.constant 0 : index
    %c144 = arith.constant 144 : index
    %37 = vector.load %arg6[%c0_22, %c144] : memref<64x512xf32, #tpu.memory_space<vmem>>, vector<64x256xf32>
    %c0_23 = arith.constant 0 : index
    %c7 = arith.constant 7 : index
    %38 = vector.load %arg3[%c0_23, %c7] : memref<64x9xf32, #tpu.memory_space<vmem>>, vector<64x1xf32>
    %39 = vector.broadcast %38 : vector<64x1xf32> to vector<64x256xf32>
    %40 = arith.mulf %37, %39 : vector<64x256xf32>
    %41 = arith.addf %36, %40 : vector<64x256xf32>
    %c1_24 = arith.constant 1 : index
    %c0_25 = arith.constant 0 : index
    %42 = vector.load %arg4[%c1_24, %c0_25] : memref<3x256xf32, #tpu.memory_space<vmem>>, vector<1x256xf32>
    %43 = vector.broadcast %42 : vector<1x256xf32> to vector<64x256xf32>
    %44 = arith.mulf %41, %43 : vector<64x256xf32>
    %45 = arith.addf %25, %44 : vector<64x256xf32>
    %cst_26 = arith.constant 0.000000e+00 : f32
    %46 = vector.broadcast %cst_26 : f32 to vector<64x256xf32>
    %c0_27 = arith.constant 0 : index
    %c113 = arith.constant 113 : index
    %47 = vector.load %arg6[%c0_27, %c113] : memref<64x512xf32, #tpu.memory_space<vmem>>, vector<64x256xf32>
    %c0_28 = arith.constant 0 : index
    %c2 = arith.constant 2 : index
    %48 = vector.load %arg3[%c0_28, %c2] : memref<64x9xf32, #tpu.memory_space<vmem>>, vector<64x1xf32>
    %49 = vector.broadcast %48 : vector<64x1xf32> to vector<64x256xf32>
    %50 = arith.mulf %47, %49 : vector<64x256xf32>
    %51 = arith.addf %46, %50 : vector<64x256xf32>
    %c0_29 = arith.constant 0 : index
    %c129 = arith.constant 129 : index
    %52 = vector.load %arg6[%c0_29, %c129] : memref<64x512xf32, #tpu.memory_space<vmem>>, vector<64x256xf32>
    %c0_30 = arith.constant 0 : index
    %c5 = arith.constant 5 : index
    %53 = vector.load %arg3[%c0_30, %c5] : memref<64x9xf32, #tpu.memory_space<vmem>>, vector<64x1xf32>
    %54 = vector.broadcast %53 : vector<64x1xf32> to vector<64x256xf32>
    %55 = arith.mulf %52, %54 : vector<64x256xf32>
    %56 = arith.addf %51, %55 : vector<64x256xf32>
    %c0_31 = arith.constant 0 : index
    %c145 = arith.constant 145 : index
    %57 = vector.load %arg6[%c0_31, %c145] : memref<64x512xf32, #tpu.memory_space<vmem>>, vector<64x256xf32>
    %c0_32 = arith.constant 0 : index
    %c8 = arith.constant 8 : index
    %58 = vector.load %arg3[%c0_32, %c8] : memref<64x9xf32, #tpu.memory_space<vmem>>, vector<64x1xf32>
    %59 = vector.broadcast %58 : vector<64x1xf32> to vector<64x256xf32>
    %60 = arith.mulf %57, %59 : vector<64x256xf32>
    %61 = arith.addf %56, %60 : vector<64x256xf32>
    %c2_33 = arith.constant 2 : index
    %c0_34 = arith.constant 0 : index
    %62 = vector.load %arg4[%c2_33, %c0_34] : memref<3x256xf32, #tpu.memory_space<vmem>>, vector<1x256xf32>
    %63 = vector.broadcast %62 : vector<1x256xf32> to vector<64x256xf32>
    %64 = arith.mulf %61, %63 : vector<64x256xf32>
    %65 = arith.addf %45, %64 : vector<64x256xf32>
    %c0_35 = arith.constant 0 : index
    %c0_36 = arith.constant 0 : index
    %c0_37 = arith.constant 0 : index
    %66 = vector.load %arg5[%c0_35, %c0_36, %c0_37] : memref<1x64x256xf32, #tpu.memory_space<vmem>>, vector<1x64x256xf32>
    %67 = vector.shape_cast %66 : vector<1x64x256xf32> to vector<64x256xf32>
    %68 = vector.shape_cast %65 : vector<64x256xf32> to vector<1x64x256xf32>
    tpu.vector_store %arg5[%c0_35, %c0_36, %c0_37], %68 {strides = array<i32>} : memref<1x64x256xf32, #tpu.memory_space<vmem>>, vector<1x64x256xf32>,
    return
  }
  func.func @transform_0(%arg0: i32, %arg1: i32) -> (i32, i32, i32) {
    %c0_i32 = arith.constant 0 : i32
    %c0_i32_0 = arith.constant 0 : i32
    return %arg0, %arg1, %c0_i32 : i32, i32, i32
  }
  func.func @transform_1(%arg0: i32, %arg1: i32) -> (i32, i32) {
    %c0_i32 = arith.constant 0 : i32
    %c0_i32_0 = arith.constant 0 : i32
    return %arg1, %c0_i32 : i32, i32
  }
  func.func @transform_2(%arg0: i32, %arg1: i32) -> (i32, i32) {
    %c0_i32 = arith.constant 0 : i32
    %c0_i32_0 = arith.constant 0 : i32
    %c0_i32_1 = arith.constant 0 : i32
    return %c0_i32, %c0_i32_0 : i32, i32
  }
  func.func @transform_3(%arg0: i32, %arg1: i32) -> (i32, i32, i32) {
    %c0_i32 = arith.constant 0 : i32
    %c0_i32_0 = arith.constant 0 : i32
    return %arg0, %arg1, %c0_i32 : i32, i32, i32
  }
}

module attributes {stable_mosaic.version = 11 : i64} {
  func.func @kernel(%arg0: i32, %arg1: memref<2x32x256xf32, #tpu.memory_space<vmem>>, %arg2: memref<2x32xf32, #tpu.memory_space<vmem>>, %arg3: memref<2x32xf32, #tpu.memory_space<vmem>>, %arg4: memref<2x32x256xf32, #tpu.memory_space<vmem>>) attributes {dimension_semantics = [#tpu.dimension_semantics<parallel>], iteration_bounds = array<i64: 1>, scalar_prefetch = 0 : i64, scratch_operands = 0 : i64, tpu.core_type = #tpu.core_type<tc>, window_params = [{transform_indices = @transform_0, window_bounds = array<i64: 2, 32, 256>}, {pipeline_mode = #tpu.pipeline_mode<synchronous>, transform_indices = @transform_1, window_bounds = array<i64: 2, 32>}, {pipeline_mode = #tpu.pipeline_mode<synchronous>, transform_indices = @transform_2, window_bounds = array<i64: 2, 32>}, {transform_indices = @transform_3, window_bounds = array<i64: 2, 32, 256>}]} {
    %c0 = arith.constant 0 : index
    %c0_0 = arith.constant 0 : index
    %c0_1 = arith.constant 0 : index
    %0 = vector.load %arg1[%c0, %c0_0, %c0_1] : memref<2x32x256xf32, #tpu.memory_space<vmem>>, vector<2x32x256xf32>
    %cst = arith.constant dense<0.000000e+00> : vector<2x32xf32>
    %1 = vector.multi_reduction <add>, %0, %cst [2] : vector<2x32x256xf32> to vector<2x32xf32>
    %cst_2 = arith.constant 0.0069444445 : f32
    %2 = vector.broadcast %cst_2 : f32 to vector<2x32xf32>
    %3 = arith.mulf %1, %2 : vector<2x32xf32>
    %cst_3 = arith.constant 0.000000e+00 : f32
    %4 = vector.broadcast %cst_3 : f32 to vector<2x32xf32>
    %c0_4 = arith.constant 0 : index
    %c0_5 = arith.constant 0 : index
    %5 = vector.load %arg2[%c0_4, %c0_5] : memref<2x32xf32, #tpu.memory_space<vmem>>, vector<1x32xf32>
    %6 = vector.shape_cast %5 : vector<1x32xf32> to vector<32xf32>
    %7 = vector.shape_cast %6 : vector<32xf32> to vector<1x32xf32>
    %8 = vector.broadcast %7 : vector<1x32xf32> to vector<2x32xf32>
    %9 = arith.mulf %3, %8 : vector<2x32xf32>
    %cst_6 = arith.constant dense<0.000000e+00> : vector<2xf32>
    %10 = vector.multi_reduction <add>, %9, %cst_6 [1] : vector<2x32xf32> to vector<2xf32>
    %11 = vector.shape_cast %10 : vector<2xf32> to vector<2x1xf32>
    %cst_7 = arith.constant 0.000000e+00 : f32
    %12 = vector.broadcast %cst_7 : f32 to vector<2x1xf32>
    %13 = arith.maximumf %11, %12 : vector<2x1xf32>
    %c0_8 = arith.constant 0 : index
    %c0_9 = arith.constant 0 : index
    %14 = vector.load %arg3[%c0_8, %c0_9] : memref<2x32xf32, #tpu.memory_space<vmem>>, vector<1x32xf32>
    %15 = vector.shape_cast %14 : vector<1x32xf32> to vector<32xf32>
    %16 = vector.shape_cast %15 : vector<32xf32> to vector<1x32xf32>
    %17 = vector.broadcast %13 : vector<2x1xf32> to vector<2x32xf32>
    %18 = vector.broadcast %16 : vector<1x32xf32> to vector<2x32xf32>
    %19 = arith.mulf %17, %18 : vector<2x32xf32>
    %20 = arith.addf %4, %19 : vector<2x32xf32>
    %c1 = arith.constant 1 : index
    %c0_10 = arith.constant 0 : index
    %21 = vector.load %arg2[%c1, %c0_10] : memref<2x32xf32, #tpu.memory_space<vmem>>, vector<1x32xf32>
    %22 = vector.shape_cast %21 : vector<1x32xf32> to vector<32xf32>
    %23 = vector.shape_cast %22 : vector<32xf32> to vector<1x32xf32>
    %24 = vector.broadcast %23 : vector<1x32xf32> to vector<2x32xf32>
    %25 = arith.mulf %3, %24 : vector<2x32xf32>
    %cst_11 = arith.constant dense<0.000000e+00> : vector<2xf32>
    %26 = vector.multi_reduction <add>, %25, %cst_11 [1] : vector<2x32xf32> to vector<2xf32>
    %27 = vector.shape_cast %26 : vector<2xf32> to vector<2x1xf32>
    %cst_12 = arith.constant 0.000000e+00 : f32
    %28 = vector.broadcast %cst_12 : f32 to vector<2x1xf32>
    %29 = arith.maximumf %27, %28 : vector<2x1xf32>
    %c1_13 = arith.constant 1 : index
    %c0_14 = arith.constant 0 : index
    %30 = vector.load %arg3[%c1_13, %c0_14] : memref<2x32xf32, #tpu.memory_space<vmem>>, vector<1x32xf32>
    %31 = vector.shape_cast %30 : vector<1x32xf32> to vector<32xf32>
    %32 = vector.shape_cast %31 : vector<32xf32> to vector<1x32xf32>
    %33 = vector.broadcast %29 : vector<2x1xf32> to vector<2x32xf32>
    %34 = vector.broadcast %32 : vector<1x32xf32> to vector<2x32xf32>
    %35 = arith.mulf %33, %34 : vector<2x32xf32>
    %36 = arith.addf %20, %35 : vector<2x32xf32>
    %cst_15 = arith.constant 0.000000e+00 : f32
    %37 = vector.broadcast %cst_15 : f32 to vector<2x32xf32>
    %38 = arith.subf %37, %36 : vector<2x32xf32>
    %39 = math.exp %38 : vector<2x32xf32>
    %cst_16 = arith.constant 1.000000e+00 : f32
    %40 = vector.broadcast %cst_16 : f32 to vector<2x32xf32>
    %41 = arith.addf %40, %39 : vector<2x32xf32>
    %cst_17 = arith.constant 1.000000e+00 : f32
    %42 = vector.broadcast %cst_17 : f32 to vector<2x32xf32>
    %43 = arith.divf %42, %41 : vector<2x32xf32>
    %44 = vector.shape_cast %43 : vector<2x32xf32> to vector<2x32x1xf32>
    %45 = vector.broadcast %44 : vector<2x32x1xf32> to vector<2x32x256xf32>
    %46 = arith.mulf %0, %45 : vector<2x32x256xf32>
    %c0_18 = arith.constant 0 : index
    %c0_19 = arith.constant 0 : index
    %c0_20 = arith.constant 0 : index
    %47 = vector.load %arg4[%c0_18, %c0_19, %c0_20] : memref<2x32x256xf32, #tpu.memory_space<vmem>>, vector<2x32x256xf32>
    tpu.vector_store %arg4[%c0_18, %c0_19, %c0_20], %46 {strides = array<i32>} : memref<2x32x256xf32, #tpu.memory_space<vmem>>, vector<2x32x256xf32>,
    return
  }
  func.func @transform_0(%arg0: i32) -> (i32, i32, i32) {
    %c0_i32 = arith.constant 0 : i32
    %c0_i32_0 = arith.constant 0 : i32
    %c0_i32_1 = arith.constant 0 : i32
    return %arg0, %c0_i32, %c0_i32_0 : i32, i32, i32
  }
  func.func @transform_1(%arg0: i32) -> (i32, i32) {
    %c0_i32 = arith.constant 0 : i32
    %c0_i32_0 = arith.constant 0 : i32
    %c0_i32_1 = arith.constant 0 : i32
    return %c0_i32, %c0_i32_0 : i32, i32
  }
  func.func @transform_2(%arg0: i32) -> (i32, i32) {
    %c0_i32 = arith.constant 0 : i32
    %c0_i32_0 = arith.constant 0 : i32
    %c0_i32_1 = arith.constant 0 : i32
    return %c0_i32, %c0_i32_0 : i32, i32
  }
  func.func @transform_3(%arg0: i32) -> (i32, i32, i32) {
    %c0_i32 = arith.constant 0 : i32
    %c0_i32_0 = arith.constant 0 : i32
    %c0_i32_1 = arith.constant 0 : i32
    return %arg0, %c0_i32, %c0_i32_0 : i32, i32, i32
  }
}

module attributes {stable_mosaic.version = 11 : i64} {
  func.func @kernel(%arg0: i32, %arg1: i32, %arg2: memref<1x32x256xf32, #tpu.memory_space<vmem>>, %arg3: memref<1x32x256xf32, #tpu.memory_space<vmem>>, %arg4: memref<32x32xf32, #tpu.memory_space<vmem>>, %arg5: memref<1x32x256xf32, #tpu.memory_space<vmem>>) attributes {dimension_semantics = [#tpu.dimension_semantics<parallel>, #tpu.dimension_semantics<parallel>], iteration_bounds = array<i64: 2, 1>, scalar_prefetch = 0 : i64, scratch_operands = 0 : i64, tpu.core_type = #tpu.core_type<tc>, window_params = [{transform_indices = @transform_0, window_bounds = array<i64: 1, 32, 256>}, {transform_indices = @transform_1, window_bounds = array<i64: 1, 32, 256>}, {pipeline_mode = #tpu.pipeline_mode<synchronous>, transform_indices = @transform_2, window_bounds = array<i64: 32, 32>}, {transform_indices = @transform_3, window_bounds = array<i64: 1, 32, 256>}]} {
    %c0 = arith.constant 0 : index
    %c0_0 = arith.constant 0 : index
    %c0_1 = arith.constant 0 : index
    %0 = vector.load %arg2[%c0, %c0_0, %c0_1] : memref<1x32x256xf32, #tpu.memory_space<vmem>>, vector<1x32x256xf32>
    %1 = vector.shape_cast %0 : vector<1x32x256xf32> to vector<32x256xf32>
    %cst = arith.constant 5.000000e-01 : f32
    %2 = vector.broadcast %cst : f32 to vector<32x256xf32>
    %3 = arith.mulf %2, %1 : vector<32x256xf32>
    %cst_2 = arith.constant 4.471500e-02 : f32
    %4 = vector.broadcast %cst_2 : f32 to vector<32x256xf32>
    %5 = arith.mulf %4, %1 : vector<32x256xf32>
    %6 = arith.mulf %5, %1 : vector<32x256xf32>
    %7 = arith.mulf %6, %1 : vector<32x256xf32>
    %8 = arith.addf %1, %7 : vector<32x256xf32>
    %cst_3 = arith.constant 0.797884583 : f32
    %9 = vector.broadcast %cst_3 : f32 to vector<32x256xf32>
    %10 = arith.mulf %9, %8 : vector<32x256xf32>
    %11 = math.tanh %10 : vector<32x256xf32>
    %cst_4 = arith.constant 1.000000e+00 : f32
    %12 = vector.broadcast %cst_4 : f32 to vector<32x256xf32>
    %13 = arith.addf %12, %11 : vector<32x256xf32>
    %14 = arith.mulf %3, %13 : vector<32x256xf32>
    %c0_5 = arith.constant 0 : index
    %c0_6 = arith.constant 0 : index
    %c0_7 = arith.constant 0 : index
    %15 = vector.load %arg3[%c0_5, %c0_6, %c0_7] : memref<1x32x256xf32, #tpu.memory_space<vmem>>, vector<1x32x256xf32>
    %16 = vector.shape_cast %15 : vector<1x32x256xf32> to vector<32x256xf32>
    %17 = arith.mulf %14, %16 : vector<32x256xf32>
    %c0_8 = arith.constant 0 : index
    %c0_9 = arith.constant 0 : index
    %18 = vector.load %arg4[%c0_8, %c0_9] : memref<32x32xf32, #tpu.memory_space<vmem>>, vector<32x32xf32>
    %cst_10 = arith.constant dense<0.000000e+00> : vector<32x256xf32>
    %19 = tpu.matmul %18, %17, %cst_10 {dimension_numbers = #tpu.dot_dimension_numbers<[1], [0], [0], [1], [0, 0, 1, 1], [], []>} : vector<32x32xf32>, vector<32x256xf32>, vector<32x256xf32> -> vector<32x256xf32>
    %c0_11 = arith.constant 0 : index
    %c0_12 = arith.constant 0 : index
    %c0_13 = arith.constant 0 : index
    %20 = vector.load %arg5[%c0_11, %c0_12, %c0_13] : memref<1x32x256xf32, #tpu.memory_space<vmem>>, vector<1x32x256xf32>
    %21 = vector.shape_cast %20 : vector<1x32x256xf32> to vector<32x256xf32>
    %22 = vector.shape_cast %19 : vector<32x256xf32> to vector<1x32x256xf32>
    tpu.vector_store %arg5[%c0_11, %c0_12, %c0_13], %22 {strides = array<i32>} : memref<1x32x256xf32, #tpu.memory_space<vmem>>, vector<1x32x256xf32>,
    return
  }
  func.func @transform_0(%arg0: i32, %arg1: i32) -> (i32, i32, i32) {
    %c0_i32 = arith.constant 0 : i32
    %c0_i32_0 = arith.constant 0 : i32
    return %arg0, %c0_i32, %arg1 : i32, i32, i32
  }
  func.func @transform_1(%arg0: i32, %arg1: i32) -> (i32, i32, i32) {
    %c0_i32 = arith.constant 0 : i32
    %c0_i32_0 = arith.constant 0 : i32
    return %arg0, %c0_i32, %arg1 : i32, i32, i32
  }
  func.func @transform_2(%arg0: i32, %arg1: i32) -> (i32, i32) {
    %c0_i32 = arith.constant 0 : i32
    %c0_i32_0 = arith.constant 0 : i32
    %c0_i32_1 = arith.constant 0 : i32
    return %c0_i32, %c0_i32_0 : i32, i32
  }
  func.func @transform_3(%arg0: i32, %arg1: i32) -> (i32, i32, i32) {
    %c0_i32 = arith.constant 0 : i32
    %c0_i32_0 = arith.constant 0 : i32
    return %arg0, %c0_i32, %arg1 : i32, i32, i32
  }
}

</mosaic_0001>

<llo_original>
// kernel: ctransformer_block.7
$region0: #{ctransformer_block.7}
  #allocation0 [shape = 'u32[]', space=smem, size = 0x4, offset = 0x4, fixed_abs, tag = 'smem constant byte address 0x4 - core index']
  #allocation1 [shape = 'u32[144,128]{1,0:T(1,128)}', space=vmem, size = 0x12000, scoped, tag = 'internal scratch']
  %s0 = inlined_call_operand.vmem [shape: f32[2,32,256], index: 0, kind: input, shape index: {}]
  %s1 = inlined_call_operand.vmem [shape: f32[96,32], index: 1, kind: input, shape index: {}]
  %s2 = inlined_call_operand.vmem [shape: f32[96,1], index: 2, kind: input, shape index: {}]
  %s3 = inlined_call_operand.vmem [shape: f32[2,96,256], index: 3, kind: output, shape index: {}]
  %s4 = sld [smem:[#allocation0]]
  $region45: #{ctransformer_block.7} parent=0
    _
  %s6 = ssub.s32 1, %s4
  %s7 = scalar_select 0, %s6, %s4
  loop: start=0, step=1, limit=4
  $region2: #{ctransformer_block.7} parent=0 // loop_pre_header
    _
  $region3: #{ctransformer_block.7} parent=0 // loop_header
    %s9 = sphi 0, %s13
    %p10 = scmp.ge.s32.totalorder %s9, 4
    %s16 = sphi 0, %s28
    %s17 = sphi 0, %s24
    %s18 = sphi 0, %s16
    %s19 = sphi 0, %s17
    %s20 = sphi 0, %s18
    %s21 = sphi 0, %s19
    %s33 = sphi 0, %s35
    %s36 = sphi 0, %s33
    %s37 = sphi 0, %s36
    %s53 = sphi 0, %s37
    %s57 = sphi 0, %s57
    %s59 = sphi 0, %s57
    %s60 = sphi 0, %s59
    %s74 = sphi 0, %s60
    %s78 = sphi 0, %s78
    %s80 = sphi 0, %s78
    %s81 = sphi 0, %s80
    %s95 = sphi 0, %s81
    %s103 = sphi 0, %s105
    %s106 = sphi 0, %s103
    %s107 = sphi 0, %s106
    %s123 = sphi 0, %s107
  $region4: #{ctransformer_block.7} parent=0 // loop_header_branch
    %12 = sbr.rel (%p10) target = $region8
  $region5: #{ctransformer_block.7} parent=0 // loop_body
    %s14 = ssub.s32 %s9, 1
    %s15 = ssub.s32 %s9, 2
    %s22 = sadd.s32 1, %s17
    %p23 = scmp.ge.s32.totalorder %s22, 1
    %s24 = scalar_select %p23, 0, %s22
    %s25 = sadd.s32 1, %s16
    %s26 = scalar_select %p23, %s25, %s16
    %p27 = scmp.ge.s32.totalorder %s26, 2
    %s28 = scalar_select %p27, 0, %s26
    %s29 = ssub.s32 %s16, %s28
    %s30 = ssub.s32 %s17, %s24
    %s31 = sor.u32 %s29, %s30
    %p32 = scmp.eq.s32.totalorder %s31, 0
    %s34 = sadd.s32 %s33, 1
    %s35 = scalar_select %p32, %s33, %s34
    %p38 = pneg %p32
    %p39 = scmp.eq.s32.totalorder %s9, 1
    %p40 = por %p38, %p39
    %p41 = scmp.ne.s32.totalorder %s33, %s36
    %p42 = scmp.eq.s32.totalorder %s9, 0
    %p43 = por %p41, %p42
    %p44 = scmp.ne.s32.totalorder %s33, %s36
    %p45 = scmp.eq.s32.totalorder %s14, 1
    %p46 = por %p44, %p45
    %p47 = scmp.ne.s32.totalorder %s36, %s37
    %p48 = scmp.eq.s32.totalorder %s14, 0
    %p49 = por %p47, %p48
    %p50 = scmp.ne.s32.totalorder %s36, %s37
    %p51 = scmp.eq.s32.totalorder %s15, 1
    %p52 = por %p50, %p51
    %p54 = scmp.ne.s32.totalorder %s37, %s53
    %p55 = scmp.eq.s32.totalorder %s15, 0
    %p56 = por %p54, %p55
    %s58 = sadd.s32 %s57, 1
    %p61 = scmp.eq.s32.totalorder %s9, 1
    %p62 = scmp.ne.s32.totalorder %s57, %s59
    %p63 = scmp.eq.s32.totalorder %s9, 0
    %p64 = por %p62, %p63
    %p65 = scmp.ne.s32.totalorder %s57, %s59
    %p66 = scmp.eq.s32.totalorder %s14, 1
    %p67 = por %p65, %p66
    %p68 = scmp.ne.s32.totalorder %s59, %s60
    %p69 = scmp.eq.s32.totalorder %s14, 0
    %p70 = por %p68, %p69
    %p71 = scmp.ne.s32.totalorder %s59, %s60
    %p72 = scmp.eq.s32.totalorder %s15, 1
    %p73 = por %p71, %p72
    %p75 = scmp.ne.s32.totalorder %s60, %s74
    %p76 = scmp.eq.s32.totalorder %s15, 0
    %p77 = por %p75, %p76
    %s79 = sadd.s32 %s78, 1
    %p82 = scmp.eq.s32.totalorder %s9, 1
    %p83 = scmp.ne.s32.totalorder %s78, %s80
    %p84 = scmp.eq.s32.totalorder %s9, 0
    %p85 = por %p83, %p84
    %p86 = scmp.ne.s32.totalorder %s78, %s80
    %p87 = scmp.eq.s32.totalorder %s14, 1
    %p88 = por %p86, %p87
    %p89 = scmp.ne.s32.totalorder %s80, %s81
    %p90 = scmp.eq.s32.totalorder %s14, 0
    %p91 = por %p89, %p90
    %p92 = scmp.ne.s32.totalorder %s80, %s81
    %p93 = scmp.eq.s32.totalorder %s15, 1
    %p94 = por %p92, %p93
    %p96 = scmp.ne.s32.totalorder %s81, %s95
    %p97 = scmp.eq.s32.totalorder %s15, 0
    %p98 = por %p96, %p97
    %s99 = ssub.s32 %s16, %s28
    %s100 = ssub.s32 %s17, %s24
    %s101 = sor.u32 %s99, %s100
    %p102 = scmp.eq.s32.totalorder %s101, 0
    %s104 = sadd.s32 %s103, 1
    %s105 = scalar_select %p102, %s103, %s104
    %p108 = pneg %p102
    %p109 = scmp.eq.s32.totalorder %s9, 1
    %p110 = por %p108, %p109
    %p111 = scmp.ne.s32.totalorder %s103, %s106
    %p112 = scmp.eq.s32.totalorder %s9, 0
    %p113 = por %p111, %p112
    %p114 = scmp.ne.s32.totalorder %s103, %s106
    %p115 = scmp.eq.s32.totalorder %s14, 1
    %p116 = por %p114, %p115
    %p117 = scmp.ne.s32.totalorder %s106, %s107
    %p118 = scmp.eq.s32.totalorder %s14, 0
    %p119 = por %p117, %p118
    %p120 = scmp.ne.s32.totalorder %s106, %s107
    %p121 = scmp.eq.s32.totalorder %s15, 1
    %p122 = por %p120, %p121
    %p124 = scmp.ne.s32.totalorder %s107, %s123
    %p125 = scmp.eq.s32.totalorder %s15, 0
    %p126 = por %p124, %p125
    %p127 = scmp.le.s32.totalorder 1, %s9
    %p128 = scmp.lt.s32.totalorder %s9, 3
    %p129 = pnand %p127, %p128
    %p130 = pneg %p129
    // Predicated region
    $region9: #{ctransformer_block.7} parent=5 // pred_check
      _
    $region10: #{ctransformer_block.7} parent=5 // pred_check_branch
      %132 = sbr.rel (%p129) target = $region12
    $region11: #{ctransformer_block.7} parent=5 // pred_region
      %s133 = ssub.s32 %s9, 1
      // Predicated region
      $region13: #{ctransformer_block.7} parent=11 // pred_check
        %p134 = pneg %p70
      $region14: #{ctransformer_block.7} parent=11 // pred_check_branch
        %136 = sbr.rel (%p134) target = $region16
      $region15: #{ctransformer_block.7} parent=11 // pred_region
        _
      $region16: #{ctransformer_block.7} parent=11 // pred_fallthru
        _
      // Predicated region
      $region17: #{ctransformer_block.7} parent=11 // pred_check
        %p137 = pneg %p91
      $region18: #{ctransformer_block.7} parent=11 // pred_check_branch
        %139 = sbr.rel (%p137) target = $region20
      $region19: #{ctransformer_block.7} parent=11 // pred_region
        _
      $region20: #{ctransformer_block.7} parent=11 // pred_fallthru
        _
    $region12: #{ctransformer_block.7} parent=5 // pred_fallthru
      _
    %p140 = scmp.lt.s32.totalorder %s9, 2
    // Predicated region
    $region21: #{ctransformer_block.7} parent=5 // pred_check
      %p141 = pneg %p140
    $region22: #{ctransformer_block.7} parent=5 // pred_check_branch
      %143 = sbr.rel (%p141) target = $region24
    $region23: #{ctransformer_block.7} parent=5 // pred_region
      // Predicated region
      $region25: #{ctransformer_block.7} parent=23 // pred_check
        %p144 = pneg %p43
      $region26: #{ctransformer_block.7} parent=23 // pred_check_branch
        %146 = sbr.rel (%p144) target = $region28
      $region27: #{ctransformer_block.7} parent=23 // pred_region
        %s147 = smul.u32 2, %s17
        %p148 = scmp.lt.s32.totalorder %s16, 1
        %s149 = scalar_select %p148, %s16, 1
        %p150 = scmp.lt.s32.totalorder %s147, 1
        %s151 = scalar_select %p150, %s147, 1
        %s152 = smul.addr %s149, 8
        %s153 = sadd.s32 %s151, %s152
        %s154 = smul.addr %s153, 8
        %s155 = scalar_lea.vmem %s0, %s154
        %s156 = smul.u32 2, %s17
      $region28: #{ctransformer_block.7} parent=23 // pred_fallthru
        _
    $region24: #{ctransformer_block.7} parent=5 // pred_fallthru
      _
    %p157 = scmp.le.s32.totalorder 1, %s9
    %p158 = scmp.lt.s32.totalorder %s9, 3
    %p159 = pnand %p157, %p158
    %p160 = pneg %p159
    // Predicated region
    $region29: #{ctransformer_block.7} parent=5 // pred_check
      _
    $region30: #{ctransformer_block.7} parent=5 // pred_check_branch
      %162 = sbr.rel (%p159) target = $region32
    $region31: #{ctransformer_block.7} parent=5 // pred_region
      %s163 = ssub.s32 %s9, 1
      %s164 = smul.u32 2, %s19
      %p165 = scmp.lt.s32.totalorder %s18, 1
      %s166 = scalar_select %p165, %s18, 1
      %p167 = scmp.lt.s32.totalorder %s164, 1
      %s168 = scalar_select %p167, %s164, 1
      %s169 = smul.addr %s166, 8
      %s170 = sadd.s32 %s168, %s169
      %s171 = smul.addr %s170, 8
      %s172 = scalar_lea.vmem %s0, %s171
      %p173 = pneg %p49
      %p174 = pneg %p46
      %p175 = pneg %p70
      %p176 = pneg %p67
      %p177 = pneg %p91
      %p178 = pneg %p88
      %p179 = pneg %p119
      %p180 = pneg %p116
      %s181 = smul.u32 2, %s19
      %p182 = scmp.lt.s32.totalorder %s18, 1
      %s183 = scalar_select %p182, %s18, 1
      %p184 = scmp.lt.s32.totalorder %s181, 1
      %s185 = scalar_select %p184, %s181, 1
      %s186 = smul.addr %s183, 24
      %s187 = sadd.s32 %s185, %s186
      %s188 = smul.addr %s187, 8
      %s189 = scalar_lea.vmem %s3, %s188
      %s190 = smul.u32 2, %s19
      %p191 = scmp.lt.s32.totalorder %s18, 1
      %s192 = scalar_select %p191, %s18, 1
      %p193 = scmp.lt.s32.totalorder %s190, 1
      %s194 = scalar_select %p193, %s190, 1
      %s195 = smul.addr %s192, 8
      %s196 = sadd.s32 %s194, %s195
      %s197 = smul.addr %s196, 8
      %s198 = scalar_lea.vmem %s0, %s197
      %s199 = smul.u32 2, %s19
      %s200 = smul.u32 2, %s19
      %p201 = scmp.lt.s32.totalorder %s18, 1
      %s202 = scalar_select %p201, %s18, 1
      %p203 = scmp.lt.s32.totalorder %s200, 1
      %s204 = scalar_select %p203, %s200, 1
      %s205 = smul.addr %s202, 24
      %s206 = sadd.s32 %s204, %s205
      %s207 = smul.addr %s206, 8
      %s208 = scalar_lea.vmem %s3, %s207
      %s209 = smul.u32 2, %s19
      %v210 = vld [vmem:[%s198] sm:$0xff]
      %v211 = vld [vmem:[%s198 + $0x8] sm:$0xff]
      %v212 = vld [vmem:[%s198 + $0x10] sm:$0xff]
      %v213 = vld [vmem:[%s198 + $0x18] sm:$0xff]
      %v214 = vld [vmem:[%s198 + $0x20] sm:$0xff]
      %v215 = vld [vmem:[%s198 + $0x28] sm:$0xff]
      %v216 = vld [vmem:[%s198 + $0x30] sm:$0xff]
      %v217 = vld [vmem:[%s198 + $0x38] sm:$0xff]
      %v218 = vadd.f32 %v210, %v212
      %v219 = vadd.f32 %v218, %v214
      %v220 = vadd.f32 %v219, %v216
      %v221 = vrot.slane %v220, 4
      %v222 = vadd.f32 %v220, %v221
      %v223 = vrot.slane %v222, 2
      %v224 = vadd.f32 %v222, %v223
      %v225 = vrot.slane %v224, 1
      %v226 = vadd.f32 %v224, %v225
      %v227 = vadd.f32 %v211, %v213
      %v228 = vadd.f32 %v227, %v215
      %v229 = vadd.f32 %v228, %v217
      %v230 = vrot.slane %v229, 4
      %v231 = vadd.f32 %v229, %v230
      %v232 = vrot.slane %v231, 2
      %v233 = vadd.f32 %v231, %v232
      %v234 = vrot.slane %v233, 1
      %v235 = vadd.f32 %v233, %v234
      %v236 = vrcp.pop 32.0
      %v237 = vmul.f32 %v226, %v236
      %v238 = vmul.f32 %v235, %v236
      %v239 = vsub.f32 %v210, %v237
      %v240 = vsub.f32 %v211, %v238
      %v241 = vsub.f32 %v212, %v237
      %v242 = vsub.f32 %v213, %v238
      %v243 = vsub.f32 %v214, %v237
      %v244 = vsub.f32 %v215, %v238
      %v245 = vsub.f32 %v216, %v237
      %v246 = vsub.f32 %v217, %v238
      %v247 = vmul.f32 %v239, %v239
      %v248 = vmul.f32 %v240, %v240
      %v249 = vmul.f32 %v241, %v241
      %v250 = vmul.f32 %v242, %v242
      %v251 = vmul.f32 %v243, %v243
      %v252 = vmul.f32 %v244, %v244
      %v253 = vmul.f32 %v245, %v245
      %v254 = vmul.f32 %v246, %v246
      %v255 = vadd.f32 %v247, %v249
      %v256 = vadd.f32 %v255, %v251
      %v257 = vadd.f32 %v256, %v253
      %v258 = vrot.slane %v257, 4
      %v259 = vadd.f32 %v257, %v258
      %v260 = vrot.slane %v259, 2
      %v261 = vadd.f32 %v259, %v260
      %v262 = vrot.slane %v261, 1
      %v263 = vadd.f32 %v261, %v262
      %v264 = vadd.f32 %v248, %v250
      %v265 = vadd.f32 %v264, %v252
      %v266 = vadd.f32 %v265, %v254
      %v267 = vrot.slane %v266, 4
      %v268 = vadd.f32 %v266, %v267
      %v269 = vrot.slane %v268, 2
      %v270 = vadd.f32 %v268, %v269
      %v271 = vrot.slane %v270, 1
      %v272 = vadd.f32 %v270, %v271
      %v273 = vmul.f32 %v263, %v236
      %v274 = vmul.f32 %v272, %v236
      %v275 = vadd.f32 %v273, 1e-05
      %v276 = vadd.f32 %v274, 1e-05
      %v277 = vrsqrt.pop %v275
      %v278 = vrsqrt.pop %v276
      %v279 = vmul.f32 %v239, %v277
      %v280 = vmul.f32 %v240, %v278
      %v281 = vmul.f32 %v241, %v277
      %v282 = vmul.f32 %v242, %v278
      %v283 = vmul.f32 %v243, %v277
      %v284 = vmul.f32 %v244, %v278
      %v285 = vmul.f32 %v245, %v277
      %v286 = vmul.f32 %v246, %v278
      %v287 = vld [vmem:[%s1] sm:$0xff]
      %v288 = vld [vmem:[%s1 + $0x8] sm:$0xff]
      %v289 = vld [vmem:[%s1 + $0x10] sm:$0xff]
      %v290 = vld [vmem:[%s1 + $0x18] sm:$0xff]
      %v291 = vld [vmem:[%s1 + $0x20] sm:$0xff]
      %v292 = vld [vmem:[%s1 + $0x28] sm:$0xff]
      %v293 = vld [vmem:[%s1 + $0x30] sm:$0xff]
      %v294 = vld [vmem:[%s1 + $0x38] sm:$0xff]
      %v295 = vld [vmem:[%s1 + $0x40] sm:$0xff]
      %v296 = vld [vmem:[%s1 + $0x48] sm:$0xff]
      %v297 = vld [vmem:[%s1 + $0x50] sm:$0xff]
      %v298 = vld [vmem:[%s1 + $0x58] sm:$0xff]
      %v299 = vld [vmem:[%s2] sm:$0xff]
      %v300 = vld [vmem:[%s2 + $0x8] sm:$0xff]
      %v301 = vld [vmem:[%s2 + $0x10] sm:$0xff]
      %v302 = vld [vmem:[%s2 + $0x18] sm:$0xff]
      %v303 = vld [vmem:[%s2 + $0x20] sm:$0xff]
      %v304 = vld [vmem:[%s2 + $0x28] sm:$0xff]
      %v305 = vld [vmem:[%s2 + $0x30] sm:$0xff]
      %v306 = vld [vmem:[%s2 + $0x38] sm:$0xff]
      %v307 = vld [vmem:[%s2 + $0x40] sm:$0xff]
      %v308 = vld [vmem:[%s2 + $0x48] sm:$0xff]
      %v309 = vld [vmem:[%s2 + $0x50] sm:$0xff]
      %v310 = vld [vmem:[%s2 + $0x58] sm:$0xff]
      %312 = vset.pattern.permute.xlu0 0
      %313 = vperm.xlu0 %312, %v299
      %v314 = vpop.permute.xlu0 %313
      %317 = vset.pattern.permute.xlu0 0
      %318 = vperm.xlu0 %317, %v300
      %v319 = vpop.permute.xlu0 %318
      %322 = vset.pattern.permute.xlu0 0
      %323 = vperm.xlu0 %322, %v301
      %v324 = vpop.permute.xlu0 %323
      %327 = vset.pattern.permute.xlu0 0
      %328 = vperm.xlu0 %327, %v302
      %v329 = vpop.permute.xlu0 %328
      %332 = vset.pattern.permute.xlu0 0
      %333 = vperm.xlu0 %332, %v303
      %v334 = vpop.permute.xlu0 %333
      %337 = vset.pattern.permute.xlu0 0
      %338 = vperm.xlu0 %337, %v304
      %v339 = vpop.permute.xlu0 %338
      %342 = vset.pattern.permute.xlu0 0
      %343 = vperm.xlu0 %342, %v305
      %v344 = vpop.permute.xlu0 %343
      %347 = vset.pattern.permute.xlu0 0
      %348 = vperm.xlu0 %347, %v306
      %v349 = vpop.permute.xlu0 %348
      %352 = vset.pattern.permute.xlu0 0
      %353 = vperm.xlu0 %352, %v307
      %v354 = vpop.permute.xlu0 %353
      %357 = vset.pattern.permute.xlu0 0
      %358 = vperm.xlu0 %357, %v308
      %v359 = vpop.permute.xlu0 %358
      %362 = vset.pattern.permute.xlu0 0
      %363 = vperm.xlu0 %362, %v309
      %v364 = vpop.permute.xlu0 %363
      %367 = vset.pattern.permute.xlu0 0
      %368 = vperm.xlu0 %367, %v310
      %v369 = vpop.permute.xlu0 %368
      %vm371 = vcmask 261120
      %v373 = vsel %vm371, %v287, 0
      %v376 = vsel %vm371, %v288, 0
      %v379 = vsel %vm371, %v289, 0
      %v382 = vsel %vm371, %v290, 0
      %v385 = vsel %vm371, %v291, 0
      %v388 = vsel %vm371, %v292, 0
      %v391 = vsel %vm371, %v293, 0
      %v394 = vsel %vm371, %v294, 0
      %v397 = vsel %vm371, %v295, 0
      %v400 = vsel %vm371, %v296, 0
      %v403 = vsel %vm371, %v297, 0
      %v406 = vsel %vm371, %v298, 0
      %408 = vmatprep.subr.mxu0 0.0
      %409 = vmatpush1.msra.mxu0 0.0
      %410 = vmatprep.subr.mxu0 0.0
      %411 = vmatpush1.msra.mxu0 0.0
      %412 = vmatprep.subr.mxu0 0.0
      %413 = vmatpush1.msra.mxu0 0.0
      %414 = vmatprep.subr.mxu0 0.0
      %415 = vmatpush1.msra.mxu0 0.0
      %416 = vmatprep.subr.mxu0 0.0
      %417 = vmatpush1.msra.mxu0 0.0
      %418 = vmatprep.subr.mxu0 0.0
      %419 = vmatpush1.msra.mxu0 0.0
      %420 = vmatprep.subr.mxu0 0.0
      %421 = vmatpush1.msra.mxu0 0.0
      %422 = vmatprep.subr.mxu0 0.0
      %423 = vmatpush1.msra.mxu0 0.0
      %424 = vmatprep.subr.mxu0 0.0
      %425 = vmatpush1.msra.mxu0 0.0
      %426 = vmatprep.subr.mxu0 0.0
      %427 = vmatpush1.msra.mxu0 0.0
      %428 = vmatprep.subr.mxu0 0.0
      %429 = vmatpush1.msra.mxu0 0.0
      %430 = vmatprep.subr.mxu0 0.0
      %431 = vmatpush1.msra.mxu0 0.0
      %432 = vmatprep.subr.mxu0 %v286
      %433 = vmatpush1.msra.mxu0 %v285
      %434 = vmatprep.subr.mxu0 %v284
      %435 = vmatpush1.msra.mxu0 %v283
      %436 = vmatprep.subr.mxu0 %v282
      %437 = vmatpush1.msra.mxu0 %v281
      %438 = vmatprep.subr.mxu0 %v280
      %439 = vmatpush1.msra.mxu0 %v279
      %440 = vmatprep.subr.mxu0 0.0
      %441 = vmatpush2.msra.mxu0 0.0
      %442 = vmatprep.subr.mxu0 0.0
      %443 = vmatpush2.msra.mxu0 0.0
      %444 = vmatprep.subr.mxu0 0.0
      %445 = vmatpush2.msra.mxu0 0.0
      %446 = vmatprep.subr.mxu0 0.0
      %447 = vmatpush2.msra.mxu0 0.0
      %448 = vmatprep.subr.mxu0 0.0
      %449 = vmatpush2.msra.mxu0 0.0
      %450 = vmatprep.subr.mxu0 0.0
      %451 = vmatpush2.msra.mxu0 0.0
      %452 = vmatprep.subr.mxu0 0.0
      %453 = vmatpush2.msra.mxu0 0.0
      %454 = vmatprep.subr.mxu0 0.0
      %455 = vmatpush2.msra.mxu0 0.0
      %456 = vmatprep.subr.mxu0 0.0
      %457 = vmatpush2.msra.mxu0 0.0
      %458 = vmatprep.subr.mxu0 0.0
      %459 = vmatpush2.msra.mxu0 0.0
      %460 = vmatprep.subr.mxu0 0.0
      %461 = vmatpush2.msra.mxu0 0.0
      %462 = vmatprep.subr.mxu0 0.0
      %463 = vmatpush2.msra.mxu0 0.0
      %464 = vmatprep.subr.mxu0 0.0
      %465 = vmatpush2.msra.mxu0 0.0
      %466 = vmatprep.subr.mxu0 0.0
      %467 = vmatpush2.msra.mxu0 0.0
      %468 = vmatprep.subr.mxu0 0.0
      %469 = vmatpush2.msra.mxu0 0.0
      %470 = vmatprep.subr.mxu0 0.0
      %471 = vmatpush2.msra.mxu0 0.0
      %472 = vmatprep.mubr.f32.mxu0 0.0
      %473 = vmatmul.mubr.f32.gmra.mxu0 %v373
      %v474 = vpop.f32.mrf.mxu0
      %v475 = vadd.f32 %v314, %v474
      %v476 = vpop.f32.mrf.mxu0
      %v477 = vadd.f32 %v314, %v476
      %478 = vmatprep.mubr.f32.mxu0 0.0
      %479 = vmatmul.mubr.f32.gmra.mxu0 %v376
      %v480 = vpop.f32.mrf.mxu0
      %v481 = vadd.f32 %v319, %v480
      %v482 = vpop.f32.mrf.mxu0
      %v483 = vadd.f32 %v319, %v482
      %484 = vmatprep.mubr.f32.mxu0 0.0
      %485 = vmatmul.mubr.f32.gmra.mxu0 %v379
      %v486 = vpop.f32.mrf.mxu0
      %v487 = vadd.f32 %v324, %v486
      %v488 = vpop.f32.mrf.mxu0
      %v489 = vadd.f32 %v324, %v488
      %490 = vmatprep.mubr.f32.mxu0 0.0
      %491 = vmatmul.mubr.f32.gmra.mxu0 %v382
      %v492 = vpop.f32.mrf.mxu0
      %v493 = vadd.f32 %v329, %v492
      %v494 = vpop.f32.mrf.mxu0
      %v495 = vadd.f32 %v329, %v494
      %496 = vmatprep.mubr.f32.mxu0 0.0
      %497 = vmatmul.mubr.f32.gmra.mxu0 %v385
      %v498 = vpop.f32.mrf.mxu0
      %v499 = vadd.f32 %v334, %v498
      %v500 = vpop.f32.mrf.mxu0
      %v501 = vadd.f32 %v334, %v500
      %502 = vmatprep.mubr.f32.mxu0 0.0
      %503 = vmatmul.mubr.f32.gmra.mxu0 %v388
      %v504 = vpop.f32.mrf.mxu0
      %v505 = vadd.f32 %v339, %v504
      %v506 = vpop.f32.mrf.mxu0
      %v507 = vadd.f32 %v339, %v506
      %508 = vmatprep.mubr.f32.mxu0 0.0
      %509 = vmatmul.mubr.f32.gmra.mxu0 %v391
      %v510 = vpop.f32.mrf.mxu0
      %v511 = vadd.f32 %v344, %v510
      %v512 = vpop.f32.mrf.mxu0
      %v513 = vadd.f32 %v344, %v512
      %514 = vmatprep.mubr.f32.mxu0 0.0
      %515 = vmatmul.mubr.f32.gmra.mxu0 %v394
      %v516 = vpop.f32.mrf.mxu0
      %v517 = vadd.f32 %v349, %v516
      %v518 = vpop.f32.mrf.mxu0
      %v519 = vadd.f32 %v349, %v518
      %520 = vmatprep.mubr.f32.mxu0 0.0
      %521 = vmatmul.mubr.f32.gmra.mxu0 %v397
      %v522 = vpop.f32.mrf.mxu0
      %v523 = vadd.f32 %v354, %v522
      %v524 = vpop.f32.mrf.mxu0
      %v525 = vadd.f32 %v354, %v524
      %526 = vmatprep.mubr.f32.mxu0 0.0
      %527 = vmatmul.mubr.f32.gmra.mxu0 %v400
      %v528 = vpop.f32.mrf.mxu0
      %v529 = vadd.f32 %v359, %v528
      %v530 = vpop.f32.mrf.mxu0
      %v531 = vadd.f32 %v359, %v530
      %532 = vmatprep.mubr.f32.mxu0 0.0
      %533 = vmatmul.mubr.f32.gmra.mxu0 %v403
      %v534 = vpop.f32.mrf.mxu0
      %v535 = vadd.f32 %v364, %v534
      %v536 = vpop.f32.mrf.mxu0
      %v537 = vadd.f32 %v364, %v536
      %538 = vmatprep.mubr.f32.mxu0 0.0
      %539 = vmatmul.mubr.f32.gmra.mxu0 %v406
      %v540 = vpop.f32.mrf.mxu0
      %v541 = vadd.f32 %v369, %v540
      %v542 = vpop.f32.mrf.mxu0
      %v543 = vadd.f32 %v369, %v542
      %544 = vdwg.mxu0
      %545 = vst [vmem:[%s208] sm:$0xff] %v475
      %546 = vst [vmem:[%s208 + $0x8] sm:$0xff] %v477
      %547 = vst [vmem:[%s208 + $0x10] sm:$0xff] %v481
      %548 = vst [vmem:[%s208 + $0x18] sm:$0xff] %v483
      %549 = vst [vmem:[%s208 + $0x20] sm:$0xff] %v487
      %550 = vst [vmem:[%s208 + $0x28] sm:$0xff] %v489
      %551 = vst [vmem:[%s208 + $0x30] sm:$0xff] %v493
      %552 = vst [vmem:[%s208 + $0x38] sm:$0xff] %v495
      %553 = vst [vmem:[%s208 + $0x40] sm:$0xff] %v499
      %554 = vst [vmem:[%s208 + $0x48] sm:$0xff] %v501
      %555 = vst [vmem:[%s208 + $0x50] sm:$0xff] %v505
      %556 = vst [vmem:[%s208 + $0x58] sm:$0xff] %v507
      %557 = vst [vmem:[%s208 + $0x60] sm:$0xff] %v511
      %558 = vst [vmem:[%s208 + $0x68] sm:$0xff] %v513
      %559 = vst [vmem:[%s208 + $0x70] sm:$0xff] %v517
      %560 = vst [vmem:[%s208 + $0x78] sm:$0xff] %v519
      %561 = vst [vmem:[%s208 + $0x80] sm:$0xff] %v523
      %562 = vst [vmem:[%s208 + $0x88] sm:$0xff] %v525
      %563 = vst [vmem:[%s208 + $0x90] sm:$0xff] %v529
      %564 = vst [vmem:[%s208 + $0x98] sm:$0xff] %v531
      %565 = vst [vmem:[%s208 + $0xa0] sm:$0xff] %v535
      %566 = vst [vmem:[%s208 + $0xa8] sm:$0xff] %v537
      %567 = vst [vmem:[%s208 + $0xb0] sm:$0xff] %v541
      %568 = vst [vmem:[%s208 + $0xb8] sm:$0xff] %v543
      %s569 = smul.u32 2, %s19
      %p570 = scmp.lt.s32.totalorder %s18, 1
      %s571 = scalar_select %p570, %s18, 1
      %p572 = scmp.lt.s32.totalorder %s569, 1
      %s573 = scalar_select %p572, %s569, 1
      %s574 = smul.addr %s571, 24
      %s575 = sadd.s32 %s573, %s574
      %s576 = smul.addr %s575, 8
      %s577 = scalar_lea.vmem %s3, %s576
      // Predicated region
      $region33: #{ctransformer_block.7} parent=31 // pred_check
        %p578 = pneg %p116
      $region34: #{ctransformer_block.7} parent=31 // pred_check_branch
        %580 = sbr.rel (%p578) target = $region36
      $region35: #{ctransformer_block.7} parent=31 // pred_region
        %s581 = smul.u32 2, %s19
      $region36: #{ctransformer_block.7} parent=31 // pred_fallthru
        _
    $region32: #{ctransformer_block.7} parent=5 // pred_fallthru
      _
    %p582 = scmp.le.s32.totalorder 2, %s9
    // Predicated region
    $region37: #{ctransformer_block.7} parent=5 // pred_check
      %p583 = pneg %p582
    $region38: #{ctransformer_block.7} parent=5 // pred_check_branch
      %585 = sbr.rel (%p583) target = $region40
    $region39: #{ctransformer_block.7} parent=5 // pred_region
      %s586 = ssub.s32 %s9, 2
      // Predicated region
      $region41: #{ctransformer_block.7} parent=39 // pred_check
        %p587 = pneg %p122
      $region42: #{ctransformer_block.7} parent=39 // pred_check_branch
        %589 = sbr.rel (%p587) target = $region44
      $region43: #{ctransformer_block.7} parent=39 // pred_region
        %s590 = smul.u32 2, %s21
        %p591 = scmp.lt.s32.totalorder %s20, 1
        %s592 = scalar_select %p591, %s20, 1
        %p593 = scmp.lt.s32.totalorder %s590, 1
        %s594 = scalar_select %p593, %s590, 1
        %s595 = smul.addr %s592, 24
        %s596 = sadd.s32 %s594, %s595
        %s597 = smul.addr %s596, 8
        %s598 = scalar_lea.vmem %s3, %s597
      $region44: #{ctransformer_block.7} parent=39 // pred_fallthru
        _
    $region40: #{ctransformer_block.7} parent=5 // pred_fallthru
      _
  $region6: #{ctransformer_block.7} parent=0 // loop_footer
    %s13 = sadd.s32 1, %s9
  $region7: #{ctransformer_block.7} parent=0 // loop_footer_branch
    %8 = sbr.rel target = $region3
  $region8: #{ctransformer_block.7} parent=0 // loop_exit
    _

// kernel: ctransformer_block.9
$region0: #{ctransformer_block.9}
  #allocation0 [shape = 'u32[]', space=smem, size = 0x4, offset = 0x4, fixed_abs, tag = 'smem constant byte address 0x4 - core index']
  #allocation1 [shape = 'u32[144,128]{1,0:T(1,128)}', space=vmem, size = 0x12000, scoped, tag = 'internal scratch']
  %s0 = inlined_call_operand.vmem [shape: f32[2,96,256], index: 0, kind: input, shape index: {}]
  %s1 = inlined_call_operand.vmem [shape: f32[32,1], index: 1, kind: input, shape index: {}]
  %s2 = inlined_call_operand.vmem [shape: f32[32,32], index: 2, kind: input, shape index: {}]
  %s3 = inlined_call_operand.vmem [shape: f32[32,32], index: 3, kind: input, shape index: {}]
  %s4 = inlined_call_operand.vmem [shape: f32[2,32,256], index: 4, kind: output, shape index: {}]
  %s5 = sld [smem:[#allocation0]]
  $region49: #{ctransformer_block.9} parent=0
    _
  %s7 = ssub.s32 1, %s5
  %s8 = scalar_select 0, %s7, %s5
  loop: start=0, step=1, limit=4
  $region2: #{ctransformer_block.9} parent=0 // loop_pre_header
    _
  $region3: #{ctransformer_block.9} parent=0 // loop_header
    %s10 = sphi 0, %s14
    %p11 = scmp.ge.s32.totalorder %s10, 4
    %s20 = sphi 0, %s22
    %s23 = sphi 0, %s20
    %s24 = sphi 0, %s23
    %s40 = sphi 0, %s24
    %s44 = sphi 0, %s44
    %s46 = sphi 0, %s44
    %s47 = sphi 0, %s46
    %s61 = sphi 0, %s47
    %s65 = sphi 0, %s65
    %s67 = sphi 0, %s65
    %s68 = sphi 0, %s67
    %s82 = sphi 0, %s68
    %s86 = sphi 0, %s86
    %s88 = sphi 0, %s86
    %s89 = sphi 0, %s88
    %s103 = sphi 0, %s89
    %s109 = sphi 0, %s111
    %s112 = sphi 0, %s109
    %s113 = sphi 0, %s112
    %s129 = sphi 0, %s113
  $region4: #{ctransformer_block.9} parent=0 // loop_header_branch
    %13 = sbr.rel (%p11) target = $region8
  $region5: #{ctransformer_block.9} parent=0 // loop_body
    %s15 = ssub.s32 %s10, 1
    %s16 = ssub.s32 %s10, 2
    %s17 = sadd.s32 %s10, 1
    %s18 = ssub.s32 %s10, %s17
    %p19 = scmp.eq.s32.totalorder %s18, 0
    %s21 = sadd.s32 %s20, 1
    %s22 = scalar_select %p19, %s20, %s21
    %p25 = pneg %p19
    %p26 = scmp.eq.s32.totalorder %s10, 1
    %p27 = por %p25, %p26
    %p28 = scmp.ne.s32.totalorder %s20, %s23
    %p29 = scmp.eq.s32.totalorder %s10, 0
    %p30 = por %p28, %p29
    %p31 = scmp.ne.s32.totalorder %s20, %s23
    %p32 = scmp.eq.s32.totalorder %s15, 1
    %p33 = por %p31, %p32
    %p34 = scmp.ne.s32.totalorder %s23, %s24
    %p35 = scmp.eq.s32.totalorder %s15, 0
    %p36 = por %p34, %p35
    %p37 = scmp.ne.s32.totalorder %s23, %s24
    %p38 = scmp.eq.s32.totalorder %s16, 1
    %p39 = por %p37, %p38
    %p41 = scmp.ne.s32.totalorder %s24, %s40
    %p42 = scmp.eq.s32.totalorder %s16, 0
    %p43 = por %p41, %p42
    %s45 = sadd.s32 %s44, 1
    %p48 = scmp.eq.s32.totalorder %s10, 1
    %p49 = scmp.ne.s32.totalorder %s44, %s46
    %p50 = scmp.eq.s32.totalorder %s10, 0
    %p51 = por %p49, %p50
    %p52 = scmp.ne.s32.totalorder %s44, %s46
    %p53 = scmp.eq.s32.totalorder %s15, 1
    %p54 = por %p52, %p53
    %p55 = scmp.ne.s32.totalorder %s46, %s47
    %p56 = scmp.eq.s32.totalorder %s15, 0
    %p57 = por %p55, %p56
    %p58 = scmp.ne.s32.totalorder %s46, %s47
    %p59 = scmp.eq.s32.totalorder %s16, 1
    %p60 = por %p58, %p59
    %p62 = scmp.ne.s32.totalorder %s47, %s61
    %p63 = scmp.eq.s32.totalorder %s16, 0
    %p64 = por %p62, %p63
    %s66 = sadd.s32 %s65, 1
    %p69 = scmp.eq.s32.totalorder %s10, 1
    %p70 = scmp.ne.s32.totalorder %s65, %s67
    %p71 = scmp.eq.s32.totalorder %s10, 0
    %p72 = por %p70, %p71
    %p73 = scmp.ne.s32.totalorder %s65, %s67
    %p74 = scmp.eq.s32.totalorder %s15, 1
    %p75 = por %p73, %p74
    %p76 = scmp.ne.s32.totalorder %s67, %s68
    %p77 = scmp.eq.s32.totalorder %s15, 0
    %p78 = por %p76, %p77
    %p79 = scmp.ne.s32.totalorder %s67, %s68
    %p80 = scmp.eq.s32.totalorder %s16, 1
    %p81 = por %p79, %p80
    %p83 = scmp.ne.s32.totalorder %s68, %s82
    %p84 = scmp.eq.s32.totalorder %s16, 0
    %p85 = por %p83, %p84
    %s87 = sadd.s32 %s86, 1
    %p90 = scmp.eq.s32.totalorder %s10, 1
    %p91 = scmp.ne.s32.totalorder %s86, %s88
    %p92 = scmp.eq.s32.totalorder %s10, 0
    %p93 = por %p91, %p92
    %p94 = scmp.ne.s32.totalorder %s86, %s88
    %p95 = scmp.eq.s32.totalorder %s15, 1
    %p96 = por %p94, %p95
    %p97 = scmp.ne.s32.totalorder %s88, %s89
    %p98 = scmp.eq.s32.totalorder %s15, 0
    %p99 = por %p97, %p98
    %p100 = scmp.ne.s32.totalorder %s88, %s89
    %p101 = scmp.eq.s32.totalorder %s16, 1
    %p102 = por %p100, %p101
    %p104 = scmp.ne.s32.totalorder %s89, %s103
    %p105 = scmp.eq.s32.totalorder %s16, 0
    %p106 = por %p104, %p105
    %s107 = ssub.s32 %s10, %s17
    %p108 = scmp.eq.s32.totalorder %s107, 0
    %s110 = sadd.s32 %s109, 1
    %s111 = scalar_select %p108, %s109, %s110
    %p114 = pneg %p108
    %p115 = scmp.eq.s32.totalorder %s10, 1
    %p116 = por %p114, %p115
    %p117 = scmp.ne.s32.totalorder %s109, %s112
    %p118 = scmp.eq.s32.totalorder %s10, 0
    %p119 = por %p117, %p118
    %p120 = scmp.ne.s32.totalorder %s109, %s112
    %p121 = scmp.eq.s32.totalorder %s15, 1
    %p122 = por %p120, %p121
    %p123 = scmp.ne.s32.totalorder %s112, %s113
    %p124 = scmp.eq.s32.totalorder %s15, 0
    %p125 = por %p123, %p124
    %p126 = scmp.ne.s32.totalorder %s112, %s113
    %p127 = scmp.eq.s32.totalorder %s16, 1
    %p128 = por %p126, %p127
    %p130 = scmp.ne.s32.totalorder %s113, %s129
    %p131 = scmp.eq.s32.totalorder %s16, 0
    %p132 = por %p130, %p131
    %p133 = scmp.le.s32.totalorder 1, %s10
    %p134 = scmp.lt.s32.totalorder %s10, 3
    %p135 = pnand %p133, %p134
    %p136 = pneg %p135
    // Predicated region
    $region9: #{ctransformer_block.9} parent=5 // pred_check
      _
    $region10: #{ctransformer_block.9} parent=5 // pred_check_branch
      %138 = sbr.rel (%p135) target = $region12
    $region11: #{ctransformer_block.9} parent=5 // pred_region
      %s139 = ssub.s32 %s10, 1
      // Predicated region
      $region13: #{ctransformer_block.9} parent=11 // pred_check
        %p140 = pneg %p57
      $region14: #{ctransformer_block.9} parent=11 // pred_check_branch
        %142 = sbr.rel (%p140) target = $region16
      $region15: #{ctransformer_block.9} parent=11 // pred_region
        _
      $region16: #{ctransformer_block.9} parent=11 // pred_fallthru
        _
      // Predicated region
      $region17: #{ctransformer_block.9} parent=11 // pred_check
        %p143 = pneg %p78
      $region18: #{ctransformer_block.9} parent=11 // pred_check_branch
        %145 = sbr.rel (%p143) target = $region20
      $region19: #{ctransformer_block.9} parent=11 // pred_region
        _
      $region20: #{ctransformer_block.9} parent=11 // pred_fallthru
        _
      // Predicated region
      $region21: #{ctransformer_block.9} parent=11 // pred_check
        %p146 = pneg %p99
      $region22: #{ctransformer_block.9} parent=11 // pred_check_branch
        %148 = sbr.rel (%p146) target = $region24
      $region23: #{ctransformer_block.9} parent=11 // pred_region
        _
      $region24: #{ctransformer_block.9} parent=11 // pred_fallthru
        _
    $region12: #{ctransformer_block.9} parent=5 // pred_fallthru
      _
    %p149 = scmp.lt.s32.totalorder %s10, 2
    // Predicated region
    $region25: #{ctransformer_block.9} parent=5 // pred_check
      %p150 = pneg %p149
    $region26: #{ctransformer_block.9} parent=5 // pred_check_branch
      %152 = sbr.rel (%p150) target = $region28
    $region27: #{ctransformer_block.9} parent=5 // pred_region
      // Predicated region
      $region29: #{ctransformer_block.9} parent=27 // pred_check
        %p153 = pneg %p30
      $region30: #{ctransformer_block.9} parent=27 // pred_check_branch
        %155 = sbr.rel (%p153) target = $region32
      $region31: #{ctransformer_block.9} parent=27 // pred_region
        %p156 = scmp.lt.s32.totalorder %s10, 1
        %s157 = scalar_select %p156, %s10, 1
        %s158 = smul.addr %s157, 24
        %s159 = smul.addr %s158, 8
        %s160 = scalar_lea.vmem %s0, %s159
      $region32: #{ctransformer_block.9} parent=27 // pred_fallthru
        _
    $region28: #{ctransformer_block.9} parent=5 // pred_fallthru
      _
    %p161 = scmp.le.s32.totalorder 1, %s10
    %p162 = scmp.lt.s32.totalorder %s10, 3
    %p163 = pnand %p161, %p162
    %p164 = pneg %p163
    // Predicated region
    $region33: #{ctransformer_block.9} parent=5 // pred_check
      _
    $region34: #{ctransformer_block.9} parent=5 // pred_check_branch
      %166 = sbr.rel (%p163) target = $region36
    $region35: #{ctransformer_block.9} parent=5 // pred_region
      %s167 = ssub.s32 %s10, 1
      %p168 = scmp.lt.s32.totalorder %s15, 1
      %s169 = scalar_select %p168, %s15, 1
      %s170 = smul.addr %s169, 24
      %s171 = smul.addr %s170, 8
      %s172 = scalar_lea.vmem %s0, %s171
      %p173 = pneg %p36
      %p174 = pneg %p33
      %p175 = pneg %p57
      %p176 = pneg %p54
      %p177 = pneg %p78
      %p178 = pneg %p75
      %p179 = pneg %p99
      %p180 = pneg %p96
      %p181 = pneg %p125
      %p182 = pneg %p122
      %p183 = scmp.lt.s32.totalorder %s15, 1
      %s184 = scalar_select %p183, %s15, 1
      %s185 = smul.addr %s184, 8
      %s186 = smul.addr %s185, 8
      %s187 = scalar_lea.vmem %s4, %s186
      %p188 = scmp.lt.s32.totalorder %s15, 1
      %s189 = scalar_select %p188, %s15, 1
      %s190 = smul.addr %s189, 24
      %s191 = smul.addr %s190, 8
      %s192 = scalar_lea.vmem %s0, %s191
      %p193 = scmp.lt.s32.totalorder %s15, 1
      %s194 = scalar_select %p193, %s15, 1
      %s195 = smul.addr %s194, 8
      %s196 = smul.addr %s195, 8
      %s197 = scalar_lea.vmem %s4, %s196
      %v198 = vld [vmem:[%s192] sm:$0xff]
      %v199 = vld [vmem:[%s192 + $0x8] sm:$0xff]
      %v200 = vld [vmem:[%s192 + $0x10] sm:$0xff]
      %v201 = vld [vmem:[%s192 + $0x18] sm:$0xff]
      %v202 = vld [vmem:[%s192 + $0x20] sm:$0xff]
      %v203 = vld [vmem:[%s192 + $0x28] sm:$0xff]
      %v204 = vld [vmem:[%s192 + $0x30] sm:$0xff]
      %v205 = vld [vmem:[%s192 + $0x38] sm:$0xff]
      %v206 = vld [vmem:[%s192 + $0x40] sm:$0xff]
      %v207 = vld [vmem:[%s192 + $0x48] sm:$0xff]
      %v208 = vld [vmem:[%s192 + $0x50] sm:$0xff]
      %v209 = vld [vmem:[%s192 + $0x58] sm:$0xff]
      %v210 = vld [vmem:[%s192 + $0x60] sm:$0xff]
      %v211 = vld [vmem:[%s192 + $0x68] sm:$0xff]
      %v212 = vld [vmem:[%s192 + $0x70] sm:$0xff]
      %v213 = vld [vmem:[%s192 + $0x78] sm:$0xff]
      %v214 = vld [vmem:[%s192 + $0x80] sm:$0xff]
      %v215 = vld [vmem:[%s192 + $0x88] sm:$0xff]
      %v216 = vld [vmem:[%s192 + $0x90] sm:$0xff]
      %v217 = vld [vmem:[%s192 + $0x98] sm:$0xff]
      %v218 = vld [vmem:[%s192 + $0xa0] sm:$0xff]
      %v219 = vld [vmem:[%s192 + $0xa8] sm:$0xff]
      %v220 = vld [vmem:[%s192 + $0xb0] sm:$0xff]
      %v221 = vld [vmem:[%s192 + $0xb8] sm:$0xff]
      %v222 = vmul.f32 %v198, %v198
      %v223 = vmul.f32 %v199, %v199
      %v224 = vmul.f32 %v200, %v200
      %v225 = vmul.f32 %v201, %v201
      %v226 = vmul.f32 %v202, %v202
      %v227 = vmul.f32 %v203, %v203
      %v228 = vmul.f32 %v204, %v204
      %v229 = vmul.f32 %v205, %v205
      %v230 = vadd.f32 %v222, %v223
      %231 = vadd.xlane.f32.xlu0 %v230
      %v232 = vpop.xlane.xlu0 %231
      %v233 = vadd.f32 %v224, %v225
      %234 = vadd.xlane.f32.xlu0 %v233
      %v235 = vpop.xlane.xlu0 %234
      %v236 = vadd.f32 %v226, %v227
      %237 = vadd.xlane.f32.xlu0 %v236
      %v238 = vpop.xlane.xlu0 %237
      %v239 = vadd.f32 %v228, %v229
      %240 = vadd.xlane.f32.xlu0 %v239
      %v241 = vpop.xlane.xlu0 %240
      %v242 = vrsqrt.pop %v232
      %v243 = vmul.f32 %v232, %v242
      %vm244 = vcmp.eq.f32.partialorder %v232, inf
      %v245 = vsel %vm244, %v232, %v243
      %vm246 = vcmp.eq.f32.partialorder %v232, 0.0
      %v247 = vand.u32 %v232, 2147483648
      %v248 = vsel %vm246, %v247, %v245
      %v249 = vrsqrt.pop %v235
      %v250 = vmul.f32 %v235, %v249
      %vm251 = vcmp.eq.f32.partialorder %v235, inf
      %v252 = vsel %vm251, %v235, %v250
      %vm253 = vcmp.eq.f32.partialorder %v235, 0.0
      %v254 = vand.u32 %v235, 2147483648
      %v255 = vsel %vm253, %v254, %v252
      %v256 = vrsqrt.pop %v238
      %v257 = vmul.f32 %v238, %v256
      %vm258 = vcmp.eq.f32.partialorder %v238, inf
      %v259 = vsel %vm258, %v238, %v257
      %vm260 = vcmp.eq.f32.partialorder %v238, 0.0
      %v261 = vand.u32 %v238, 2147483648
      %v262 = vsel %vm260, %v261, %v259
      %v263 = vrsqrt.pop %v241
      %v264 = vmul.f32 %v241, %v263
      %vm265 = vcmp.eq.f32.partialorder %v241, inf
      %v266 = vsel %vm265, %v241, %v264
      %vm267 = vcmp.eq.f32.partialorder %v241, 0.0
      %v268 = vand.u32 %v241, 2147483648
      %v269 = vsel %vm267, %v268, %v266
      %v270 = vmax.f32 %v248, 1e-12
      %v271 = vmax.f32 %v255, 1e-12
      %v272 = vmax.f32 %v262, 1e-12
      %v273 = vmax.f32 %v269, 1e-12
      %v274 = vrcp.pop %v270
      %v275 = vmul.f32 %v198, %v274
      %v276 = vmul.f32 %v199, %v274
      %v277 = vrcp.pop %v271
      %v278 = vmul.f32 %v200, %v277
      %v279 = vmul.f32 %v201, %v277
      %v280 = vrcp.pop %v272
      %v281 = vmul.f32 %v202, %v280
      %v282 = vmul.f32 %v203, %v280
      %v283 = vrcp.pop %v273
      %v284 = vmul.f32 %v204, %v283
      %v285 = vmul.f32 %v205, %v283
      %v286 = vmul.f32 %v206, %v206
      %v287 = vmul.f32 %v207, %v207
      %v288 = vmul.f32 %v208, %v208
      %v289 = vmul.f32 %v209, %v209
      %v290 = vmul.f32 %v210, %v210
      %v291 = vmul.f32 %v211, %v211
      %v292 = vmul.f32 %v212, %v212
      %v293 = vmul.f32 %v213, %v213
      %v294 = vadd.f32 %v286, %v287
      %295 = vadd.xlane.f32.xlu0 %v294
      %v296 = vpop.xlane.xlu0 %295
      %v297 = vadd.f32 %v288, %v289
      %298 = vadd.xlane.f32.xlu0 %v297
      %v299 = vpop.xlane.xlu0 %298
      %v300 = vadd.f32 %v290, %v291
      %301 = vadd.xlane.f32.xlu0 %v300
      %v302 = vpop.xlane.xlu0 %301
      %v303 = vadd.f32 %v292, %v293
      %304 = vadd.xlane.f32.xlu0 %v303
      %v305 = vpop.xlane.xlu0 %304
      %v306 = vrsqrt.pop %v296
      %v307 = vmul.f32 %v296, %v306
      %vm308 = vcmp.eq.f32.partialorder %v296, inf
      %v309 = vsel %vm308, %v296, %v307
      %vm310 = vcmp.eq.f32.partialorder %v296, 0.0
      %v311 = vand.u32 %v296, 2147483648
      %v312 = vsel %vm310, %v311, %v309
      %v313 = vrsqrt.pop %v299
      %v314 = vmul.f32 %v299, %v313
      %vm315 = vcmp.eq.f32.partialorder %v299, inf
      %v316 = vsel %vm315, %v299, %v314
      %vm317 = vcmp.eq.f32.partialorder %v299, 0.0
      %v318 = vand.u32 %v299, 2147483648
      %v319 = vsel %vm317, %v318, %v316
      %v320 = vrsqrt.pop %v302
      %v321 = vmul.f32 %v302, %v320
      %vm322 = vcmp.eq.f32.partialorder %v302, inf
      %v323 = vsel %vm322, %v302, %v321
      %vm324 = vcmp.eq.f32.partialorder %v302, 0.0
      %v325 = vand.u32 %v302, 2147483648
      %v326 = vsel %vm324, %v325, %v323
      %v327 = vrsqrt.pop %v305
      %v328 = vmul.f32 %v305, %v327
      %vm329 = vcmp.eq.f32.partialorder %v305, inf
      %v330 = vsel %vm329, %v305, %v328
      %vm331 = vcmp.eq.f32.partialorder %v305, 0.0
      %v332 = vand.u32 %v305, 2147483648
      %v333 = vsel %vm331, %v332, %v330
      %v334 = vmax.f32 %v312, 1e-12
      %v335 = vmax.f32 %v319, 1e-12
      %v336 = vmax.f32 %v326, 1e-12
      %v337 = vmax.f32 %v333, 1e-12
      %v338 = vrcp.pop %v334
      %v339 = vmul.f32 %v206, %v338
      %v340 = vmul.f32 %v207, %v338
      %v341 = vrcp.pop %v335
      %v342 = vmul.f32 %v208, %v341
      %v343 = vmul.f32 %v209, %v341
      %v344 = vrcp.pop %v336
      %v345 = vmul.f32 %v210, %v344
      %v346 = vmul.f32 %v211, %v344
      %v347 = vrcp.pop %v337
      %v348 = vmul.f32 %v212, %v347
      %v349 = vmul.f32 %v213, %v347
      %350 = vmatprep.subr.mxu0 0.0
      %351 = vmatpush1.xpose.msra.mxu0 0.0
      %352 = vmatprep.subr.mxu0 0.0
      %353 = vmatpush1.xpose.msra.mxu0 0.0
      %354 = vmatprep.subr.mxu0 0.0
      %355 = vmatpush1.xpose.msra.mxu0 0.0
      %356 = vmatprep.subr.mxu0 0.0
      %357 = vmatpush1.xpose.msra.mxu0 0.0
      %358 = vmatprep.subr.mxu0 0.0
      %359 = vmatpush1.xpose.msra.mxu0 0.0
      %360 = vmatprep.subr.mxu0 0.0
      %361 = vmatpush1.xpose.msra.mxu0 0.0
      %362 = vmatprep.subr.mxu0 0.0
      %363 = vmatpush1.xpose.msra.mxu0 0.0
      %364 = vmatprep.subr.mxu0 0.0
      %365 = vmatpush1.xpose.msra.mxu0 0.0
      %366 = vmatprep.subr.mxu0 0.0
      %367 = vmatpush1.xpose.msra.mxu0 0.0
      %368 = vmatprep.subr.mxu0 0.0
      %369 = vmatpush1.xpose.msra.mxu0 0.0
      %370 = vmatprep.subr.mxu0 0.0
      %371 = vmatpush1.xpose.msra.mxu0 0.0
      %372 = vmatprep.subr.mxu0 0.0
      %373 = vmatpush1.xpose.msra.mxu0 0.0
      %374 = vmatprep.subr.mxu0 %v349
      %375 = vmatpush1.xpose.msra.mxu0 %v348
      %376 = vmatprep.subr.mxu0 %v346
      %377 = vmatpush1.xpose.msra.mxu0 %v345
      %378 = vmatprep.subr.mxu0 %v343
      %379 = vmatpush1.xpose.msra.mxu0 %v342
      %380 = vmatprep.subr.mxu0 %v340
      %381 = vmatpush1.xpose.msra.mxu0 %v339
      %382 = vmatprep.subr.mxu0 0.0
      %383 = vmatpush2.xpose.msra.mxu0 0.0
      %384 = vmatprep.subr.mxu0 0.0
      %385 = vmatpush2.xpose.msra.mxu0 0.0
      %386 = vmatprep.subr.mxu0 0.0
      %387 = vmatpush2.xpose.msra.mxu0 0.0
      %388 = vmatprep.subr.mxu0 0.0
      %389 = vmatpush2.xpose.msra.mxu0 0.0
      %390 = vmatprep.subr.mxu0 0.0
      %391 = vmatpush2.xpose.msra.mxu0 0.0
      %392 = vmatprep.subr.mxu0 0.0
      %393 = vmatpush2.xpose.msra.mxu0 0.0
      %394 = vmatprep.subr.mxu0 0.0
      %395 = vmatpush2.xpose.msra.mxu0 0.0
      %396 = vmatprep.subr.mxu0 0.0
      %397 = vmatpush2.xpose.msra.mxu0 0.0
      %398 = vmatprep.subr.mxu0 0.0
      %399 = vmatpush2.xpose.msra.mxu0 0.0
      %400 = vmatprep.subr.mxu0 0.0
      %401 = vmatpush2.xpose.msra.mxu0 0.0
      %402 = vmatprep.subr.mxu0 0.0
      %403 = vmatpush2.xpose.msra.mxu0 0.0
      %404 = vmatprep.subr.mxu0 0.0
      %405 = vmatpush2.xpose.msra.mxu0 0.0
      %406 = vmatprep.subr.mxu0 0.0
      %407 = vmatpush2.xpose.msra.mxu0 0.0
      %408 = vmatprep.subr.mxu0 0.0
      %409 = vmatpush2.xpose.msra.mxu0 0.0
      %410 = vmatprep.subr.mxu0 0.0
      %411 = vmatpush2.xpose.msra.mxu0 0.0
      %412 = vmatprep.subr.mxu0 0.0
      %413 = vmatpush2.xpose.msra.mxu0 0.0
      %414 = vmatprep.mubr.f32.mxu0 %v276
      %415 = vmatmul.mubr.f32.gmra.mxu0 %v275
      %v416 = vpop.f32.mrf.mxu0
      %v417 = vadd.f32 0.0, %v416
      %v418 = vpop.f32.mrf.mxu0
      %419 = vmatprep.mubr.f32.mxu0 %v279
      %420 = vmatmul.mubr.f32.gmra.mxu0 %v278
      %v421 = vpop.f32.mrf.mxu0
      %v422 = vadd.f32 0.0, %v421
      %v423 = vpop.f32.mrf.mxu0
      %424 = vmatprep.mubr.f32.mxu0 %v282
      %425 = vmatmul.mubr.f32.gmra.mxu0 %v281
      %v426 = vpop.f32.mrf.mxu0
      %v427 = vadd.f32 0.0, %v426
      %v428 = vpop.f32.mrf.mxu0
      %429 = vmatprep.mubr.f32.mxu0 %v285
      %430 = vmatmul.mubr.f32.gmra.mxu0 %v284
      %v431 = vpop.f32.mrf.mxu0
      %v432 = vadd.f32 0.0, %v431
      %v433 = vpop.f32.mrf.mxu0
      %434 = vdwg.mxu0
      %v435 = vld [vmem:[%s1] sm:$0xff]
      %v436 = vld [vmem:[%s1 + $0x8] sm:$0xff]
      %v437 = vld [vmem:[%s1 + $0x10] sm:$0xff]
      %v438 = vld [vmem:[%s1 + $0x18] sm:$0xff]
      %440 = vset.pattern.permute.xlu0 0
      %441 = vperm.xlu0 %440, %v435
      %v442 = vpop.permute.xlu0 %441
      %445 = vset.pattern.permute.xlu0 0
      %446 = vperm.xlu0 %445, %v436
      %v447 = vpop.permute.xlu0 %446
      %450 = vset.pattern.permute.xlu0 0
      %451 = vperm.xlu0 %450, %v437
      %v452 = vpop.permute.xlu0 %451
      %455 = vset.pattern.permute.xlu0 0
      %456 = vperm.xlu0 %455, %v438
      %v457 = vpop.permute.xlu0 %456
      %v459 = vmul.f32 %v417, %v442
      %v460 = vmul.f32 %v422, %v447
      %v461 = vmul.f32 %v427, %v452
      %v462 = vmul.f32 %v432, %v457
      %v463 = vld [vmem:[%s2] sm:$0xff]
      %v464 = vld [vmem:[%s2 + $0x8] sm:$0xff]
      %v465 = vld [vmem:[%s2 + $0x10] sm:$0xff]
      %v466 = vld [vmem:[%s2 + $0x18] sm:$0xff]
      %v467 = vadd.f32 %v459, %v463
      %v468 = vadd.f32 %v460, %v464
      %v469 = vadd.f32 %v461, %v465
      %v470 = vadd.f32 %v462, %v466
      %vm471 = vcmask 261120
      %v472 = vsel %vm471, %v467, -inf
      %473 = vmax.xlane.f32.xlu0 %v472
      %v474 = vpop.xlane.xlu0 %473
      %v475 = vsel %vm471, %v468, -inf
      %476 = vmax.xlane.f32.xlu0 %v475
      %v477 = vpop.xlane.xlu0 %476
      %v478 = vsel %vm471, %v469, -inf
      %479 = vmax.xlane.f32.xlu0 %v478
      %v480 = vpop.xlane.xlu0 %479
      %v481 = vsel %vm471, %v470, -inf
      %482 = vmax.xlane.f32.xlu0 %v481
      %v483 = vpop.xlane.xlu0 %482
      %v484 = vsub.f32 %v467, %v474
      %v485 = vsub.f32 %v468, %v477
      %v486 = vsub.f32 %v469, %v480
      %v487 = vsub.f32 %v470, %v483
      %v488 = vmul.f32 %v484, 1.442695
      %v489 = vpow.pop %v488
      %v490 = vmul.f32 %v485, 1.442695
      %v491 = vpow.pop %v490
      %v492 = vmul.f32 %v486, 1.442695
      %v493 = vpow.pop %v492
      %v494 = vmul.f32 %v487, 1.442695
      %v495 = vpow.pop %v494
      %v496 = vsel %vm471, %v489, 0.0
      %497 = vadd.xlane.f32.xlu0 %v496
      %v498 = vpop.xlane.xlu0 %497
      %v499 = vsel %vm471, %v491, 0.0
      %500 = vadd.xlane.f32.xlu0 %v499
      %v501 = vpop.xlane.xlu0 %500
      %v502 = vsel %vm471, %v493, 0.0
      %503 = vadd.xlane.f32.xlu0 %v502
      %v504 = vpop.xlane.xlu0 %503
      %v505 = vsel %vm471, %v495, 0.0
      %506 = vadd.xlane.f32.xlu0 %v505
      %v507 = vpop.xlane.xlu0 %506
      %v508 = vrcp.pop %v498
      %v509 = vmul.f32 %v489, %v508
      %v510 = vrcp.pop %v501
      %v511 = vmul.f32 %v491, %v510
      %v512 = vrcp.pop %v504
      %v513 = vmul.f32 %v493, %v512
      %v514 = vrcp.pop %v507
      %v515 = vmul.f32 %v495, %v514
      %v517 = vsel %vm471, %v509, 0
      %v520 = vsel %vm471, %v511, 0
      %v523 = vsel %vm471, %v513, 0
      %v526 = vsel %vm471, %v515, 0
      %528 = vmatprep.subr.mxu0 0.0
      %529 = vmatpush1.msra.mxu0 0.0
      %530 = vmatprep.subr.mxu0 0.0
      %531 = vmatpush1.msra.mxu0 0.0
      %532 = vmatprep.subr.mxu0 0.0
      %533 = vmatpush1.msra.mxu0 0.0
      %534 = vmatprep.subr.mxu0 0.0
      %535 = vmatpush1.msra.mxu0 0.0
      %536 = vmatprep.subr.mxu0 0.0
      %537 = vmatpush1.msra.mxu0 0.0
      %538 = vmatprep.subr.mxu0 0.0
      %539 = vmatpush1.msra.mxu0 0.0
      %540 = vmatprep.subr.mxu0 0.0
      %541 = vmatpush1.msra.mxu0 0.0
      %542 = vmatprep.subr.mxu0 0.0
      %543 = vmatpush1.msra.mxu0 0.0
      %544 = vmatprep.subr.mxu0 0.0
      %545 = vmatpush1.msra.mxu0 0.0
      %546 = vmatprep.subr.mxu0 0.0
      %547 = vmatpush1.msra.mxu0 0.0
      %548 = vmatprep.subr.mxu0 0.0
      %549 = vmatpush1.msra.mxu0 0.0
      %550 = vmatprep.subr.mxu0 0.0
      %551 = vmatpush1.msra.mxu0 0.0
      %552 = vmatprep.subr.mxu0 %v221
      %553 = vmatpush1.msra.mxu0 %v220
      %554 = vmatprep.subr.mxu0 %v219
      %555 = vmatpush1.msra.mxu0 %v218
      %556 = vmatprep.subr.mxu0 %v217
      %557 = vmatpush1.msra.mxu0 %v216
      %558 = vmatprep.subr.mxu0 %v215
      %559 = vmatpush1.msra.mxu0 %v214
      %560 = vmatprep.subr.mxu0 0.0
      %561 = vmatpush2.msra.mxu0 0.0
      %562 = vmatprep.subr.mxu0 0.0
      %563 = vmatpush2.msra.mxu0 0.0
      %564 = vmatprep.subr.mxu0 0.0
      %565 = vmatpush2.msra.mxu0 0.0
      %566 = vmatprep.subr.mxu0 0.0
      %567 = vmatpush2.msra.mxu0 0.0
      %568 = vmatprep.subr.mxu0 0.0
      %569 = vmatpush2.msra.mxu0 0.0
      %570 = vmatprep.subr.mxu0 0.0
      %571 = vmatpush2.msra.mxu0 0.0
      %572 = vmatprep.subr.mxu0 0.0
      %573 = vmatpush2.msra.mxu0 0.0
      %574 = vmatprep.subr.mxu0 0.0
      %575 = vmatpush2.msra.mxu0 0.0
      %576 = vmatprep.subr.mxu0 0.0
      %577 = vmatpush2.msra.mxu0 0.0
      %578 = vmatprep.subr.mxu0 0.0
      %579 = vmatpush2.msra.mxu0 0.0
      %580 = vmatprep.subr.mxu0 0.0
      %581 = vmatpush2.msra.mxu0 0.0
      %582 = vmatprep.subr.mxu0 0.0
      %583 = vmatpush2.msra.mxu0 0.0
      %584 = vmatprep.subr.mxu0 0.0
      %585 = vmatpush2.msra.mxu0 0.0
      %586 = vmatprep.subr.mxu0 0.0
      %587 = vmatpush2.msra.mxu0 0.0
      %588 = vmatprep.subr.mxu0 0.0
      %589 = vmatpush2.msra.mxu0 0.0
      %590 = vmatprep.subr.mxu0 0.0
      %591 = vmatpush2.msra.mxu0 0.0
      %592 = vmatprep.mubr.f32.mxu0 0.0
      %593 = vmatmul.mubr.f32.gmra.mxu0 %v517
      %v594 = vpop.f32.mrf.mxu0
      %v595 = vadd.f32 0.0, %v594
      %v596 = vpop.f32.mrf.mxu0
      %v597 = vadd.f32 0.0, %v596
      %598 = vmatprep.mubr.f32.mxu0 0.0
      %599 = vmatmul.mubr.f32.gmra.mxu0 %v520
      %v600 = vpop.f32.mrf.mxu0
      %v601 = vadd.f32 0.0, %v600
      %v602 = vpop.f32.mrf.mxu0
      %v603 = vadd.f32 0.0, %v602
      %604 = vmatprep.mubr.f32.mxu0 0.0
      %605 = vmatmul.mubr.f32.gmra.mxu0 %v523
      %v606 = vpop.f32.mrf.mxu0
      %v607 = vadd.f32 0.0, %v606
      %v608 = vpop.f32.mrf.mxu0
      %v609 = vadd.f32 0.0, %v608
      %610 = vmatprep.mubr.f32.mxu0 0.0
      %611 = vmatmul.mubr.f32.gmra.mxu0 %v526
      %v612 = vpop.f32.mrf.mxu0
      %v613 = vadd.f32 0.0, %v612
      %v614 = vpop.f32.mrf.mxu0
      %v615 = vadd.f32 0.0, %v614
      %616 = vdwg.mxu0
      %v617 = vld [vmem:[%s3] sm:$0xff]
      %v618 = vld [vmem:[%s3 + $0x8] sm:$0xff]
      %v619 = vld [vmem:[%s3 + $0x10] sm:$0xff]
      %v620 = vld [vmem:[%s3 + $0x18] sm:$0xff]
      %v622 = vsel %vm471, %v617, 0
      %v625 = vsel %vm471, %v618, 0
      %v628 = vsel %vm471, %v619, 0
      %v631 = vsel %vm471, %v620, 0
      %633 = vmatprep.subr.mxu0 0.0
      %634 = vmatpush1.msra.mxu0 0.0
      %635 = vmatprep.subr.mxu0 0.0
      %636 = vmatpush1.msra.mxu0 0.0
      %637 = vmatprep.subr.mxu0 0.0
      %638 = vmatpush1.msra.mxu0 0.0
      %639 = vmatprep.subr.mxu0 0.0
      %640 = vmatpush1.msra.mxu0 0.0
      %641 = vmatprep.subr.mxu0 0.0
      %642 = vmatpush1.msra.mxu0 0.0
      %643 = vmatprep.subr.mxu0 0.0
      %644 = vmatpush1.msra.mxu0 0.0
      %645 = vmatprep.subr.mxu0 0.0
      %646 = vmatpush1.msra.mxu0 0.0
      %647 = vmatprep.subr.mxu0 0.0
      %648 = vmatpush1.msra.mxu0 0.0
      %649 = vmatprep.subr.mxu0 0.0
      %650 = vmatpush1.msra.mxu0 0.0
      %651 = vmatprep.subr.mxu0 0.0
      %652 = vmatpush1.msra.mxu0 0.0
      %653 = vmatprep.subr.mxu0 0.0
      %654 = vmatpush1.msra.mxu0 0.0
      %655 = vmatprep.subr.mxu0 0.0
      %656 = vmatpush1.msra.mxu0 0.0
      %657 = vmatprep.subr.mxu0 %v615
      %658 = vmatpush1.msra.mxu0 %v613
      %659 = vmatprep.subr.mxu0 %v609
      %660 = vmatpush1.msra.mxu0 %v607
      %661 = vmatprep.subr.mxu0 %v603
      %662 = vmatpush1.msra.mxu0 %v601
      %663 = vmatprep.subr.mxu0 %v597
      %664 = vmatpush1.msra.mxu0 %v595
      %665 = vmatprep.subr.mxu0 0.0
      %666 = vmatpush2.msra.mxu0 0.0
      %667 = vmatprep.subr.mxu0 0.0
      %668 = vmatpush2.msra.mxu0 0.0
      %669 = vmatprep.subr.mxu0 0.0
      %670 = vmatpush2.msra.mxu0 0.0
      %671 = vmatprep.subr.mxu0 0.0
      %672 = vmatpush2.msra.mxu0 0.0
      %673 = vmatprep.subr.mxu0 0.0
      %674 = vmatpush2.msra.mxu0 0.0
      %675 = vmatprep.subr.mxu0 0.0
      %676 = vmatpush2.msra.mxu0 0.0
      %677 = vmatprep.subr.mxu0 0.0
      %678 = vmatpush2.msra.mxu0 0.0
      %679 = vmatprep.subr.mxu0 0.0
      %680 = vmatpush2.msra.mxu0 0.0
      %681 = vmatprep.subr.mxu0 0.0
      %682 = vmatpush2.msra.mxu0 0.0
      %683 = vmatprep.subr.mxu0 0.0
      %684 = vmatpush2.msra.mxu0 0.0
      %685 = vmatprep.subr.mxu0 0.0
      %686 = vmatpush2.msra.mxu0 0.0
      %687 = vmatprep.subr.mxu0 0.0
      %688 = vmatpush2.msra.mxu0 0.0
      %689 = vmatprep.subr.mxu0 0.0
      %690 = vmatpush2.msra.mxu0 0.0
      %691 = vmatprep.subr.mxu0 0.0
      %692 = vmatpush2.msra.mxu0 0.0
      %693 = vmatprep.subr.mxu0 0.0
      %694 = vmatpush2.msra.mxu0 0.0
      %695 = vmatprep.subr.mxu0 0.0
      %696 = vmatpush2.msra.mxu0 0.0
      %697 = vmatprep.mubr.f32.mxu0 0.0
      %698 = vmatmul.mubr.f32.gmra.mxu0 %v622
      %v699 = vpop.f32.mrf.mxu0
      %v700 = vadd.f32 0.0, %v699
      %v701 = vpop.f32.mrf.mxu0
      %v702 = vadd.f32 0.0, %v701
      %703 = vmatprep.mubr.f32.mxu0 0.0
      %704 = vmatmul.mubr.f32.gmra.mxu0 %v625
      %v705 = vpop.f32.mrf.mxu0
      %v706 = vadd.f32 0.0, %v705
      %v707 = vpop.f32.mrf.mxu0
      %v708 = vadd.f32 0.0, %v707
      %709 = vmatprep.mubr.f32.mxu0 0.0
      %710 = vmatmul.mubr.f32.gmra.mxu0 %v628
      %v711 = vpop.f32.mrf.mxu0
      %v712 = vadd.f32 0.0, %v711
      %v713 = vpop.f32.mrf.mxu0
      %v714 = vadd.f32 0.0, %v713
      %715 = vmatprep.mubr.f32.mxu0 0.0
      %716 = vmatmul.mubr.f32.gmra.mxu0 %v631
      %v717 = vpop.f32.mrf.mxu0
      %v718 = vadd.f32 0.0, %v717
      %v719 = vpop.f32.mrf.mxu0
      %v720 = vadd.f32 0.0, %v719
      %721 = vdwg.mxu0
      %722 = vst [vmem:[%s197] sm:$0xff] %v700
      %723 = vst [vmem:[%s197 + $0x8] sm:$0xff] %v702
      %724 = vst [vmem:[%s197 + $0x10] sm:$0xff] %v706
      %725 = vst [vmem:[%s197 + $0x18] sm:$0xff] %v708
      %726 = vst [vmem:[%s197 + $0x20] sm:$0xff] %v712
      %727 = vst [vmem:[%s197 + $0x28] sm:$0xff] %v714
      %728 = vst [vmem:[%s197 + $0x30] sm:$0xff] %v718
      %729 = vst [vmem:[%s197 + $0x38] sm:$0xff] %v720
      %p730 = scmp.lt.s32.totalorder %s15, 1
      %s731 = scalar_select %p730, %s15, 1
      %s732 = smul.addr %s731, 8
      %s733 = smul.addr %s732, 8
      %s734 = scalar_lea.vmem %s4, %s733
      // Predicated region
      $region37: #{ctransformer_block.9} parent=35 // pred_check
        %p735 = pneg %p122
      $region38: #{ctransformer_block.9} parent=35 // pred_check_branch
        %737 = sbr.rel (%p735) target = $region40
      $region39: #{ctransformer_block.9} parent=35 // pred_region
        _
      $region40: #{ctransformer_block.9} parent=35 // pred_fallthru
        _
    $region36: #{ctransformer_block.9} parent=5 // pred_fallthru
      _
    %p738 = scmp.le.s32.totalorder 2, %s10
    // Predicated region
    $region41: #{ctransformer_block.9} parent=5 // pred_check
      %p739 = pneg %p738
    $region42: #{ctransformer_block.9} parent=5 // pred_check_branch
      %741 = sbr.rel (%p739) target = $region44
    $region43: #{ctransformer_block.9} parent=5 // pred_region
      %s742 = ssub.s32 %s10, 2
      // Predicated region
      $region45: #{ctransformer_block.9} parent=43 // pred_check
        %p743 = pneg %p128
      $region46: #{ctransformer_block.9} parent=43 // pred_check_branch
        %745 = sbr.rel (%p743) target = $region48
      $region47: #{ctransformer_block.9} parent=43 // pred_region
        %p746 = scmp.lt.s32.totalorder %s16, 1
        %s747 = scalar_select %p746, %s16, 1
        %s748 = smul.addr %s747, 8
        %s749 = smul.addr %s748, 8
        %s750 = scalar_lea.vmem %s4, %s749
      $region48: #{ctransformer_block.9} parent=43 // pred_fallthru
        _
    $region44: #{ctransformer_block.9} parent=5 // pred_fallthru
      _
  $region6: #{ctransformer_block.9} parent=0 // loop_footer
    %s14 = sadd.s32 1, %s10
  $region7: #{ctransformer_block.9} parent=0 // loop_footer_branch
    %9 = sbr.rel target = $region3
  $region8: #{ctransformer_block.9} parent=0 // loop_exit
    _

// kernel: ctransformer_block.8
$region0: #{ctransformer_block.8}
  #allocation0 [shape = 'u32[]', space=smem, size = 0x4, offset = 0x4, fixed_abs, tag = 'smem constant byte address 0x4 - core index']
  #allocation1 [shape = 'u32[144,128]{1,0:T(1,128)}', space=vmem, size = 0x12000, scoped, tag = 'internal scratch']
  #allocation2 [shape = 'f32[32,512]{1,0:T(8,128)}', space=vmem, size = 0x10000, scoped, tag = 'scratch operand']
  %s0 = inlined_call_operand.vmem [shape: f32[2,96,256], index: 0, kind: input, shape index: {}]
  %s1 = inlined_call_operand.vmem [shape: f32[96,9], index: 1, kind: input, shape index: {}]
  %s2 = inlined_call_operand.vmem [shape: f32[3,256], index: 2, kind: input, shape index: {}]
  %s3 = inlined_call_operand.vmem [shape: f32[2,96,256], index: 3, kind: output, shape index: {}]
  %s4 = sld [smem:[#allocation0]]
  $region45: #{ctransformer_block.8} parent=0
    _
  %s6 = ssub.s32 1, %s4
  %s7 = scalar_select 0, %s6, %s4
  loop: start=0, step=1, limit=8
  $region2: #{ctransformer_block.8} parent=0 // loop_pre_header
    _
  $region3: #{ctransformer_block.8} parent=0 // loop_header
    %s9 = sphi 0, %s13
    %p10 = scmp.ge.s32.totalorder %s9, 8
    %s16 = sphi 0, %s28
    %s17 = sphi 0, %s24
    %s18 = sphi 0, %s16
    %s19 = sphi 0, %s17
    %s20 = sphi 0, %s18
    %s21 = sphi 0, %s19
    %s33 = sphi 0, %s35
    %s36 = sphi 0, %s33
    %s37 = sphi 0, %s36
    %s53 = sphi 0, %s37
    %s59 = sphi 0, %s61
    %s62 = sphi 0, %s59
    %s63 = sphi 0, %s62
    %s79 = sphi 0, %s63
    %s83 = sphi 0, %s83
    %s85 = sphi 0, %s83
    %s86 = sphi 0, %s85
    %s100 = sphi 0, %s86
    %s108 = sphi 0, %s110
    %s111 = sphi 0, %s108
    %s112 = sphi 0, %s111
    %s128 = sphi 0, %s112
  $region4: #{ctransformer_block.8} parent=0 // loop_header_branch
    %12 = sbr.rel (%p10) target = $region8
  $region5: #{ctransformer_block.8} parent=0 // loop_body
    %s14 = ssub.s32 %s9, 1
    %s15 = ssub.s32 %s9, 2
    %s22 = sadd.s32 1, %s17
    %p23 = scmp.ge.s32.totalorder %s22, 3
    %s24 = scalar_select %p23, 0, %s22
    %s25 = sadd.s32 1, %s16
    %s26 = scalar_select %p23, %s25, %s16
    %p27 = scmp.ge.s32.totalorder %s26, 2
    %s28 = scalar_select %p27, 0, %s26
    %s29 = ssub.s32 %s16, %s28
    %s30 = ssub.s32 %s17, %s24
    %s31 = sor.u32 %s29, %s30
    %p32 = scmp.eq.s32.totalorder %s31, 0
    %s34 = sadd.s32 %s33, 1
    %s35 = scalar_select %p32, %s33, %s34
    %p38 = pneg %p32
    %p39 = scmp.eq.s32.totalorder %s9, 5
    %p40 = por %p38, %p39
    %p41 = scmp.ne.s32.totalorder %s33, %s36
    %p42 = scmp.eq.s32.totalorder %s9, 0
    %p43 = por %p41, %p42
    %p44 = scmp.ne.s32.totalorder %s33, %s36
    %p45 = scmp.eq.s32.totalorder %s14, 5
    %p46 = por %p44, %p45
    %p47 = scmp.ne.s32.totalorder %s36, %s37
    %p48 = scmp.eq.s32.totalorder %s14, 0
    %p49 = por %p47, %p48
    %p50 = scmp.ne.s32.totalorder %s36, %s37
    %p51 = scmp.eq.s32.totalorder %s15, 5
    %p52 = por %p50, %p51
    %p54 = scmp.ne.s32.totalorder %s37, %s53
    %p55 = scmp.eq.s32.totalorder %s15, 0
    %p56 = por %p54, %p55
    %s57 = ssub.s32 %s17, %s24
    %p58 = scmp.eq.s32.totalorder %s57, 0
    %s60 = sadd.s32 %s59, 1
    %s61 = scalar_select %p58, %s59, %s60
    %p64 = pneg %p58
    %p65 = scmp.eq.s32.totalorder %s9, 5
    %p66 = por %p64, %p65
    %p67 = scmp.ne.s32.totalorder %s59, %s62
    %p68 = scmp.eq.s32.totalorder %s9, 0
    %p69 = por %p67, %p68
    %p70 = scmp.ne.s32.totalorder %s59, %s62
    %p71 = scmp.eq.s32.totalorder %s14, 5
    %p72 = por %p70, %p71
    %p73 = scmp.ne.s32.totalorder %s62, %s63
    %p74 = scmp.eq.s32.totalorder %s14, 0
    %p75 = por %p73, %p74
    %p76 = scmp.ne.s32.totalorder %s62, %s63
    %p77 = scmp.eq.s32.totalorder %s15, 5
    %p78 = por %p76, %p77
    %p80 = scmp.ne.s32.totalorder %s63, %s79
    %p81 = scmp.eq.s32.totalorder %s15, 0
    %p82 = por %p80, %p81
    %s84 = sadd.s32 %s83, 1
    %p87 = scmp.eq.s32.totalorder %s9, 5
    %p88 = scmp.ne.s32.totalorder %s83, %s85
    %p89 = scmp.eq.s32.totalorder %s9, 0
    %p90 = por %p88, %p89
    %p91 = scmp.ne.s32.totalorder %s83, %s85
    %p92 = scmp.eq.s32.totalorder %s14, 5
    %p93 = por %p91, %p92
    %p94 = scmp.ne.s32.totalorder %s85, %s86
    %p95 = scmp.eq.s32.totalorder %s14, 0
    %p96 = por %p94, %p95
    %p97 = scmp.ne.s32.totalorder %s85, %s86
    %p98 = scmp.eq.s32.totalorder %s15, 5
    %p99 = por %p97, %p98
    %p101 = scmp.ne.s32.totalorder %s86, %s100
    %p102 = scmp.eq.s32.totalorder %s15, 0
    %p103 = por %p101, %p102
    %s104 = ssub.s32 %s16, %s28
    %s105 = ssub.s32 %s17, %s24
    %s106 = sor.u32 %s104, %s105
    %p107 = scmp.eq.s32.totalorder %s106, 0
    %s109 = sadd.s32 %s108, 1
    %s110 = scalar_select %p107, %s108, %s109
    %p113 = pneg %p107
    %p114 = scmp.eq.s32.totalorder %s9, 5
    %p115 = por %p113, %p114
    %p116 = scmp.ne.s32.totalorder %s108, %s111
    %p117 = scmp.eq.s32.totalorder %s9, 0
    %p118 = por %p116, %p117
    %p119 = scmp.ne.s32.totalorder %s108, %s111
    %p120 = scmp.eq.s32.totalorder %s14, 5
    %p121 = por %p119, %p120
    %p122 = scmp.ne.s32.totalorder %s111, %s112
    %p123 = scmp.eq.s32.totalorder %s14, 0
    %p124 = por %p122, %p123
    %p125 = scmp.ne.s32.totalorder %s111, %s112
    %p126 = scmp.eq.s32.totalorder %s15, 5
    %p127 = por %p125, %p126
    %p129 = scmp.ne.s32.totalorder %s112, %s128
    %p130 = scmp.eq.s32.totalorder %s15, 0
    %p131 = por %p129, %p130
    %p132 = scmp.le.s32.totalorder 1, %s9
    %p133 = scmp.lt.s32.totalorder %s9, 7
    %p134 = pnand %p132, %p133
    %p135 = pneg %p134
    // Predicated region
    $region9: #{ctransformer_block.8} parent=5 // pred_check
      _
    $region10: #{ctransformer_block.8} parent=5 // pred_check_branch
      %137 = sbr.rel (%p134) target = $region12
    $region11: #{ctransformer_block.8} parent=5 // pred_region
      %s138 = ssub.s32 %s9, 1
      // Predicated region
      $region13: #{ctransformer_block.8} parent=11 // pred_check
        %p139 = pneg %p96
      $region14: #{ctransformer_block.8} parent=11 // pred_check_branch
        %141 = sbr.rel (%p139) target = $region16
      $region15: #{ctransformer_block.8} parent=11 // pred_region
        _
      $region16: #{ctransformer_block.8} parent=11 // pred_fallthru
        _
    $region12: #{ctransformer_block.8} parent=5 // pred_fallthru
      _
    %p142 = scmp.lt.s32.totalorder %s9, 6
    // Predicated region
    $region17: #{ctransformer_block.8} parent=5 // pred_check
      %p143 = pneg %p142
    $region18: #{ctransformer_block.8} parent=5 // pred_check_branch
      %145 = sbr.rel (%p143) target = $region20
    $region19: #{ctransformer_block.8} parent=5 // pred_region
      // Predicated region
      $region21: #{ctransformer_block.8} parent=19 // pred_check
        %p146 = pneg %p43
      $region22: #{ctransformer_block.8} parent=19 // pred_check_branch
        %148 = sbr.rel (%p146) target = $region24
      $region23: #{ctransformer_block.8} parent=19 // pred_region
        %s149 = smul.u32 4, %s17
        %p150 = scmp.lt.s32.totalorder %s16, 1
        %s151 = scalar_select %p150, %s16, 1
        %p152 = scmp.lt.s32.totalorder %s149, 11
        %s153 = scalar_select %p152, %s149, 11
        %s154 = smul.addr %s153, 2
        %s155 = smul.addr %s151, 24
        %s156 = sadd.s32 %s154, %s155
        %s157 = smul.addr %s156, 8
        %s158 = scalar_lea.vmem %s0, %s157
        %s159 = smul.u32 4, %s17
      $region24: #{ctransformer_block.8} parent=19 // pred_fallthru
        _
      // Predicated region
      $region25: #{ctransformer_block.8} parent=19 // pred_check
        %p160 = pneg %p69
      $region26: #{ctransformer_block.8} parent=19 // pred_check_branch
        %162 = sbr.rel (%p160) target = $region28
      $region27: #{ctransformer_block.8} parent=19 // pred_region
        %s163 = smul.u32 4, %s17
        %p164 = scmp.lt.s32.totalorder %s163, 11
        %s165 = scalar_select %p164, %s163, 11
        %s166 = smul.addr %s165, 8
        %s167 = scalar_lea.vmem %s1, %s166
        %s168 = smul.u32 4, %s17
      $region28: #{ctransformer_block.8} parent=19 // pred_fallthru
        _
    $region20: #{ctransformer_block.8} parent=5 // pred_fallthru
      _
    %p169 = scmp.le.s32.totalorder 1, %s9
    %p170 = scmp.lt.s32.totalorder %s9, 7
    %p171 = pnand %p169, %p170
    %p172 = pneg %p171
    // Predicated region
    $region29: #{ctransformer_block.8} parent=5 // pred_check
      _
    $region30: #{ctransformer_block.8} parent=5 // pred_check_branch
      %174 = sbr.rel (%p171) target = $region32
    $region31: #{ctransformer_block.8} parent=5 // pred_region
      %s175 = ssub.s32 %s9, 1
      %s176 = smul.u32 4, %s19
      %p177 = scmp.lt.s32.totalorder %s18, 1
      %s178 = scalar_select %p177, %s18, 1
      %p179 = scmp.lt.s32.totalorder %s176, 11
      %s180 = scalar_select %p179, %s176, 11
      %s181 = smul.addr %s180, 2
      %s182 = smul.addr %s178, 24
      %s183 = sadd.s32 %s181, %s182
      %s184 = smul.addr %s183, 8
      %s185 = scalar_lea.vmem %s0, %s184
      %p186 = pneg %p49
      %p187 = pneg %p46
      %s188 = smul.u32 4, %s19
      %p189 = scmp.lt.s32.totalorder %s188, 11
      %s190 = scalar_select %p189, %s188, 11
      %s191 = smul.addr %s190, 8
      %s192 = scalar_lea.vmem %s1, %s191
      %p193 = pneg %p75
      %p194 = pneg %p72
      %p195 = pneg %p96
      %p196 = pneg %p93
      %p197 = pneg %p124
      %p198 = pneg %p121
      %s199 = smul.u32 4, %s19
      %p200 = scmp.lt.s32.totalorder %s18, 1
      %s201 = scalar_select %p200, %s18, 1
      %p202 = scmp.lt.s32.totalorder %s199, 11
      %s203 = scalar_select %p202, %s199, 11
      %s204 = smul.addr %s203, 2
      %s205 = smul.addr %s201, 24
      %s206 = sadd.s32 %s204, %s205
      %s207 = smul.addr %s206, 8
      %s208 = scalar_lea.vmem %s3, %s207
      %s209 = smul.u32 4, %s19
      %p210 = scmp.lt.s32.totalorder %s18, 1
      %s211 = scalar_select %p210, %s18, 1
      %p212 = scmp.lt.s32.totalorder %s209, 11
      %s213 = scalar_select %p212, %s209, 11
      %s214 = smul.addr %s213, 2
      %s215 = smul.addr %s211, 24
      %s216 = sadd.s32 %s214, %s215
      %s217 = smul.addr %s216, 8
      %s218 = scalar_lea.vmem %s0, %s217
      %s219 = smul.u32 4, %s19
      %s220 = smul.u32 4, %s19
      %p221 = scmp.lt.s32.totalorder %s220, 11
      %s222 = scalar_select %p221, %s220, 11
      %s223 = smul.addr %s222, 8
      %s224 = scalar_lea.vmem %s1, %s223
      %s225 = smul.u32 4, %s19
      %s226 = smul.u32 4, %s19
      %p227 = scmp.lt.s32.totalorder %s18, 1
      %s228 = scalar_select %p227, %s18, 1
      %p229 = scmp.lt.s32.totalorder %s226, 11
      %s230 = scalar_select %p229, %s226, 11
      %s231 = smul.addr %s230, 2
      %s232 = smul.addr %s228, 24
      %s233 = sadd.s32 %s231, %s232
      %s234 = smul.addr %s233, 8
      %s235 = scalar_lea.vmem %s3, %s234
      %s236 = smul.u32 4, %s19
      %237 = vst [vmem:[#allocation2] sm:$0xff] 0.0
      %238 = vst [vmem:[#allocation2 + $0x8] sm:$0xff] 0.0
      %239 = vst [vmem:[#allocation2 + $0x10] sm:$0xff] 0.0
      %240 = vst [vmem:[#allocation2 + $0x18] sm:$0xff] 0.0
      %241 = vst [vmem:[#allocation2 + $0x20] sm:$0xff] 0.0
      %242 = vst [vmem:[#allocation2 + $0x28] sm:$0xff] 0.0
      %243 = vst [vmem:[#allocation2 + $0x30] sm:$0xff] 0.0
      %244 = vst [vmem:[#allocation2 + $0x38] sm:$0xff] 0.0
      %245 = vst [vmem:[#allocation2 + $0x40] sm:$0xff] 0.0
      %246 = vst [vmem:[#allocation2 + $0x48] sm:$0xff] 0.0
      %247 = vst [vmem:[#allocation2 + $0x50] sm:$0xff] 0.0
      %248 = vst [vmem:[#allocation2 + $0x58] sm:$0xff] 0.0
      %249 = vst [vmem:[#allocation2 + $0x60] sm:$0xff] 0.0
      %250 = vst [vmem:[#allocation2 + $0x68] sm:$0xff] 0.0
      %251 = vst [vmem:[#allocation2 + $0x70] sm:$0xff] 0.0
      %252 = vst [vmem:[#allocation2 + $0x78] sm:$0xff] 0.0
      %v253 = vld [vmem:[%s218] sm:$0xff]
      %v254 = vld [vmem:[%s218 + $0x8] sm:$0xff]
      %v255 = vld [vmem:[%s218 + $0x10] sm:$0xff]
      %v256 = vld [vmem:[%s218 + $0x18] sm:$0xff]
      %v257 = vld [vmem:[%s218 + $0x20] sm:$0xff]
      %v258 = vld [vmem:[%s218 + $0x28] sm:$0xff]
      %v259 = vld [vmem:[%s218 + $0x30] sm:$0xff]
      %v260 = vld [vmem:[%s218 + $0x38] sm:$0xff]
      %261 = vst [vmem:[#allocation2 + $0x8] sm:$0xff] %v253
      %vm262 = vcmask 130048
      %263 = vst.msk [vmem:[#allocation2 + $0x10] sm:$0xff] %vm262, %v254
      %264 = vst [vmem:[#allocation2 + $0x28] sm:$0xff] %v255
      %265 = vst.msk [vmem:[#allocation2 + $0x30] sm:$0xff] %vm262, %v256
      %266 = vst [vmem:[#allocation2 + $0x48] sm:$0xff] %v257
      %267 = vst.msk [vmem:[#allocation2 + $0x50] sm:$0xff] %vm262, %v258
      %268 = vst [vmem:[#allocation2 + $0x68] sm:$0xff] %v259
      %269 = vst.msk [vmem:[#allocation2 + $0x70] sm:$0xff] %vm262, %v260
      %v270 = vld [vmem:[#allocation2] sm:$0xff]
      %v271 = vld [vmem:[#allocation2 + $0x8] sm:$0xff]
      %v272 = vld [vmem:[#allocation2 + $0x10] sm:$0xff]
      %v273 = vld [vmem:[#allocation2 + $0x20] sm:$0xff]
      %v274 = vld [vmem:[#allocation2 + $0x28] sm:$0xff]
      %v275 = vld [vmem:[#allocation2 + $0x30] sm:$0xff]
      %v276 = vld [vmem:[#allocation2 + $0x40] sm:$0xff]
      %v277 = vld [vmem:[#allocation2 + $0x48] sm:$0xff]
      %v278 = vld [vmem:[#allocation2 + $0x50] sm:$0xff]
      %v279 = vld [vmem:[#allocation2 + $0x60] sm:$0xff]
      %v280 = vld [vmem:[#allocation2 + $0x68] sm:$0xff]
      %v281 = vld [vmem:[#allocation2 + $0x70] sm:$0xff]
      %v282 = vld [vmem:[%s224] sm:$0xff]
      %v283 = vld [vmem:[%s224 + $0x8] sm:$0xff]
      %v284 = vld [vmem:[%s224 + $0x10] sm:$0xff]
      %v285 = vld [vmem:[%s224 + $0x18] sm:$0xff]
      %287 = vset.pattern.permute.xlu0 0
      %288 = vperm.xlu0 %287, %v282
      %v289 = vpop.permute.xlu0 %288
      %292 = vset.pattern.permute.xlu0 0
      %293 = vperm.xlu0 %292, %v283
      %v294 = vpop.permute.xlu0 %293
      %297 = vset.pattern.permute.xlu0 0
      %298 = vperm.xlu0 %297, %v284
      %v299 = vpop.permute.xlu0 %298
      %302 = vset.pattern.permute.xlu0 0
      %303 = vperm.xlu0 %302, %v285
      %v304 = vpop.permute.xlu0 %303
      %v306 = vmul.f32 %v270, %v289
      %v307 = vmul.f32 %v271, %v289
      %v308 = vmul.f32 %v272, %v289
      %v309 = vmul.f32 %v273, %v294
      %v310 = vmul.f32 %v274, %v294
      %v311 = vmul.f32 %v275, %v294
      %v312 = vmul.f32 %v276, %v299
      %v313 = vmul.f32 %v277, %v299
      %v314 = vmul.f32 %v278, %v299
      %v315 = vmul.f32 %v279, %v304
      %v316 = vmul.f32 %v280, %v304
      %v317 = vmul.f32 %v281, %v304
      %v318 = vadd.f32 %v306, 0.0
      %v319 = vadd.f32 %v307, 0.0
      %v320 = vadd.f32 %v308, 0.0
      %v321 = vadd.f32 %v309, 0.0
      %v322 = vadd.f32 %v310, 0.0
      %v323 = vadd.f32 %v311, 0.0
      %v324 = vadd.f32 %v312, 0.0
      %v325 = vadd.f32 %v313, 0.0
      %v326 = vadd.f32 %v314, 0.0
      %v327 = vadd.f32 %v315, 0.0
      %v328 = vadd.f32 %v316, 0.0
      %v329 = vadd.f32 %v317, 0.0
      %330 = vset.pattern.permute.xlu0 3
      %331 = vperm.xlu0 %330, %v282
      %v332 = vpop.permute.xlu0 %331
      %334 = vset.pattern.permute.xlu0 3
      %335 = vperm.xlu0 %334, %v283
      %v336 = vpop.permute.xlu0 %335
      %338 = vset.pattern.permute.xlu0 3
      %339 = vperm.xlu0 %338, %v284
      %v340 = vpop.permute.xlu0 %339
      %342 = vset.pattern.permute.xlu0 3
      %343 = vperm.xlu0 %342, %v285
      %v344 = vpop.permute.xlu0 %343
      %v346 = vmul.f32 %v270, %v332
      %v347 = vmul.f32 %v271, %v332
      %v348 = vmul.f32 %v272, %v332
      %v349 = vmul.f32 %v273, %v336
      %v350 = vmul.f32 %v274, %v336
      %v351 = vmul.f32 %v275, %v336
      %v352 = vmul.f32 %v276, %v340
      %v353 = vmul.f32 %v277, %v340
      %v354 = vmul.f32 %v278, %v340
      %v355 = vmul.f32 %v279, %v344
      %v356 = vmul.f32 %v280, %v344
      %v357 = vmul.f32 %v281, %v344
      %370 = vrot.lane.b32.xlu0 %v346, 119
      %v371 = vpop.permute.xlu0 %370
      %372 = vrot.lane.b32.xlu0 %v347, 119
      %v373 = vpop.permute.xlu0 %372
      %374 = vrot.lane.b32.xlu0 %v348, 119
      %v375 = vpop.permute.xlu0 %374
      %376 = vrot.lane.b32.xlu0 %v349, 119
      %v377 = vpop.permute.xlu0 %376
      %378 = vrot.lane.b32.xlu0 %v350, 119
      %v379 = vpop.permute.xlu0 %378
      %380 = vrot.lane.b32.xlu0 %v351, 119
      %v381 = vpop.permute.xlu0 %380
      %382 = vrot.lane.b32.xlu0 %v352, 119
      %v383 = vpop.permute.xlu0 %382
      %384 = vrot.lane.b32.xlu0 %v353, 119
      %v385 = vpop.permute.xlu0 %384
      %386 = vrot.lane.b32.xlu0 %v354, 119
      %v387 = vpop.permute.xlu0 %386
      %388 = vrot.lane.b32.xlu0 %v355, 119
      %v389 = vpop.permute.xlu0 %388
      %390 = vrot.lane.b32.xlu0 %v356, 119
      %v391 = vpop.permute.xlu0 %390
      %392 = vrot.lane.b32.xlu0 %v357, 119
      %v393 = vpop.permute.xlu0 %392
      %vm394 = vcmask 973824
      %v395 = vsel %vm394, %v371, %v373
      %v396 = vsel %vm394, %v373, %v375
      %v397 = vsel %vm394, %v377, %v379
      %v398 = vsel %vm394, %v379, %v381
      %v399 = vsel %vm394, %v383, %v385
      %v400 = vsel %vm394, %v385, %v387
      %v401 = vsel %vm394, %v389, %v391
      %v402 = vsel %vm394, %v391, %v393
      %v415 = vadd.f32 %v318, %v395
      %v416 = vadd.f32 %v319, %v396
      %v417 = vadd.f32 %v320, %v375
      %v418 = vadd.f32 %v321, %v397
      %v419 = vadd.f32 %v322, %v398
      %v420 = vadd.f32 %v323, %v381
      %v421 = vadd.f32 %v324, %v399
      %v422 = vadd.f32 %v325, %v400
      %v423 = vadd.f32 %v326, %v387
      %v424 = vadd.f32 %v327, %v401
      %v425 = vadd.f32 %v328, %v402
      %v426 = vadd.f32 %v329, %v393
      %v427 = vld [vmem:[#allocation2 + $0x8] sm:$0xff]
      %v428 = vld [vmem:[#allocation2 + $0x10] sm:$0xff]
      %v429 = vld [vmem:[#allocation2 + $0x18] sm:$0xff]
      %v430 = vld [vmem:[#allocation2 + $0x28] sm:$0xff]
      %v431 = vld [vmem:[#allocation2 + $0x30] sm:$0xff]
      %v432 = vld [vmem:[#allocation2 + $0x38] sm:$0xff]
      %v433 = vld [vmem:[#allocation2 + $0x48] sm:$0xff]
      %v434 = vld [vmem:[#allocation2 + $0x50] sm:$0xff]
      %v435 = vld [vmem:[#allocation2 + $0x58] sm:$0xff]
      %v436 = vld [vmem:[#allocation2 + $0x68] sm:$0xff]
      %v437 = vld [vmem:[#allocation2 + $0x70] sm:$0xff]
      %v438 = vld [vmem:[#allocation2 + $0x78] sm:$0xff]
      %439 = vset.pattern.permute.xlu0 6
      %440 = vperm.xlu0 %439, %v282
      %v441 = vpop.permute.xlu0 %440
      %443 = vset.pattern.permute.xlu0 6
      %444 = vperm.xlu0 %443, %v283
      %v445 = vpop.permute.xlu0 %444
      %447 = vset.pattern.permute.xlu0 6
      %448 = vperm.xlu0 %447, %v284
      %v449 = vpop.permute.xlu0 %448
      %451 = vset.pattern.permute.xlu0 6
      %452 = vperm.xlu0 %451, %v285
      %v453 = vpop.permute.xlu0 %452
      %v455 = vmul.f32 %v427, %v441
      %v456 = vmul.f32 %v428, %v441
      %v457 = vmul.f32 %v429, %v441
      %v458 = vmul.f32 %v430, %v445
      %v459 = vmul.f32 %v431, %v445
      %v460 = vmul.f32 %v432, %v445
      %v461 = vmul.f32 %v433, %v449
      %v462 = vmul.f32 %v434, %v449
      %v463 = vmul.f32 %v435, %v449
      %v464 = vmul.f32 %v436, %v453
      %v465 = vmul.f32 %v437, %v453
      %v466 = vmul.f32 %v438, %v453
      %479 = vrot.lane.b32.xlu0 %v455, 110
      %v480 = vpop.permute.xlu0 %479
      %481 = vrot.lane.b32.xlu0 %v456, 110
      %v482 = vpop.permute.xlu0 %481
      %483 = vrot.lane.b32.xlu0 %v457, 110
      %v484 = vpop.permute.xlu0 %483
      %485 = vrot.lane.b32.xlu0 %v458, 110
      %v486 = vpop.permute.xlu0 %485
      %487 = vrot.lane.b32.xlu0 %v459, 110
      %v488 = vpop.permute.xlu0 %487
      %489 = vrot.lane.b32.xlu0 %v460, 110
      %v490 = vpop.permute.xlu0 %489
      %491 = vrot.lane.b32.xlu0 %v461, 110
      %v492 = vpop.permute.xlu0 %491
      %493 = vrot.lane.b32.xlu0 %v462, 110
      %v494 = vpop.permute.xlu0 %493
      %495 = vrot.lane.b32.xlu0 %v463, 110
      %v496 = vpop.permute.xlu0 %495
      %497 = vrot.lane.b32.xlu0 %v464, 110
      %v498 = vpop.permute.xlu0 %497
      %499 = vrot.lane.b32.xlu0 %v465, 110
      %v500 = vpop.permute.xlu0 %499
      %501 = vrot.lane.b32.xlu0 %v466, 110
      %v502 = vpop.permute.xlu0 %501
      %vm503 = vcmask 900096
      %v504 = vsel %vm503, %v480, %v482
      %v505 = vsel %vm503, %v482, %v484
      %v506 = vsel %vm503, %v486, %v488
      %v507 = vsel %vm503, %v488, %v490
      %v508 = vsel %vm503, %v492, %v494
      %v509 = vsel %vm503, %v494, %v496
      %v510 = vsel %vm503, %v498, %v500
      %v511 = vsel %vm503, %v500, %v502
      %v524 = vadd.f32 %v415, %v480
      %v525 = vadd.f32 %v416, %v504
      %v526 = vadd.f32 %v417, %v505
      %v527 = vadd.f32 %v418, %v486
      %v528 = vadd.f32 %v419, %v506
      %v529 = vadd.f32 %v420, %v507
      %v530 = vadd.f32 %v421, %v492
      %v531 = vadd.f32 %v422, %v508
      %v532 = vadd.f32 %v423, %v509
      %v533 = vadd.f32 %v424, %v498
      %v534 = vadd.f32 %v425, %v510
      %v535 = vadd.f32 %v426, %v511
      %v536 = vld [vmem:[%s2] ss:$4 sm:$0x3]
      %v538 = vlaneseq
      %v539 = vshrl.u32 %v538, 7
      %v540 = vsub.s32 0, %v539
      %v541 = vrot.slane %v536, %v540
      %v542 = vlaneseq
      %v543 = vshrl.u32 %v542, 7
      %v544 = vsub.s32 1, %v543
      %v545 = vrot.slane %v536, %v544
      %546 = vrot.lane.b32.xlu0 %v541, 118
      %v547 = vpop.permute.xlu0 %546
      %548 = vrot.lane.b32.xlu0 %v545, 118
      %v549 = vpop.permute.xlu0 %548
      %vm550 = vcmask 965632
      %v551 = vsel %vm550, %v547, %v549
      %v555 = vmul.f32 %v524, %v547
      %v556 = vmul.f32 %v525, %v551
      %v557 = vmul.f32 %v526, %v549
      %v558 = vmul.f32 %v527, %v547
      %v559 = vmul.f32 %v528, %v551
      %v560 = vmul.f32 %v529, %v549
      %v561 = vmul.f32 %v530, %v547
      %v562 = vmul.f32 %v531, %v551
      %v563 = vmul.f32 %v532, %v549
      %v564 = vmul.f32 %v533, %v547
      %v565 = vmul.f32 %v534, %v551
      %v566 = vmul.f32 %v535, %v549
      %v567 = vadd.f32 %v555, 0.0
      %v568 = vadd.f32 %v556, 0.0
      %v569 = vadd.f32 %v557, 0.0
      %v570 = vadd.f32 %v558, 0.0
      %v571 = vadd.f32 %v559, 0.0
      %v572 = vadd.f32 %v560, 0.0
      %v573 = vadd.f32 %v561, 0.0
      %v574 = vadd.f32 %v562, 0.0
      %v575 = vadd.f32 %v563, 0.0
      %v576 = vadd.f32 %v564, 0.0
      %v577 = vadd.f32 %v565, 0.0
      %v578 = vadd.f32 %v566, 0.0
      %579 = vset.pattern.permute.xlu0 1
      %580 = vperm.xlu0 %579, %v282
      %v581 = vpop.permute.xlu0 %580
      %583 = vset.pattern.permute.xlu0 1
      %584 = vperm.xlu0 %583, %v283
      %v585 = vpop.permute.xlu0 %584
      %587 = vset.pattern.permute.xlu0 1
      %588 = vperm.xlu0 %587, %v284
      %v589 = vpop.permute.xlu0 %588
      %591 = vset.pattern.permute.xlu0 1
      %592 = vperm.xlu0 %591, %v285
      %v593 = vpop.permute.xlu0 %592
      %v595 = vmul.f32 %v270, %v581
      %v596 = vmul.f32 %v271, %v581
      %v597 = vmul.f32 %v272, %v581
      %v598 = vmul.f32 %v273, %v585
      %v599 = vmul.f32 %v274, %v585
      %v600 = vmul.f32 %v275, %v585
      %v601 = vmul.f32 %v276, %v589
      %v602 = vmul.f32 %v277, %v589
      %v603 = vmul.f32 %v278, %v589
      %v604 = vmul.f32 %v279, %v593
      %v605 = vmul.f32 %v280, %v593
      %v606 = vmul.f32 %v281, %v593
      %v607 = vadd.f32 %v595, 0.0
      %v608 = vadd.f32 %v596, 0.0
      %v609 = vadd.f32 %v597, 0.0
      %v610 = vadd.f32 %v598, 0.0
      %v611 = vadd.f32 %v599, 0.0
      %v612 = vadd.f32 %v600, 0.0
      %v613 = vadd.f32 %v601, 0.0
      %v614 = vadd.f32 %v602, 0.0
      %v615 = vadd.f32 %v603, 0.0
      %v616 = vadd.f32 %v604, 0.0
      %v617 = vadd.f32 %v605, 0.0
      %v618 = vadd.f32 %v606, 0.0
      %619 = vset.pattern.permute.xlu0 4
      %620 = vperm.xlu0 %619, %v282
      %v621 = vpop.permute.xlu0 %620
      %623 = vset.pattern.permute.xlu0 4
      %624 = vperm.xlu0 %623, %v283
      %v625 = vpop.permute.xlu0 %624
      %627 = vset.pattern.permute.xlu0 4
      %628 = vperm.xlu0 %627, %v284
      %v629 = vpop.permute.xlu0 %628
      %631 = vset.pattern.permute.xlu0 4
      %632 = vperm.xlu0 %631, %v285
      %v633 = vpop.permute.xlu0 %632
      %v635 = vmul.f32 %v271, %v621
      %v636 = vmul.f32 %v272, %v621
      %v637 = vmul.f32 %v274, %v625
      %v638 = vmul.f32 %v275, %v625
      %v639 = vmul.f32 %v277, %v629
      %v640 = vmul.f32 %v278, %v629
      %v641 = vmul.f32 %v280, %v633
      %v642 = vmul.f32 %v281, %v633
      %651 = vrot.lane.b32.xlu0 %v635, 119
      %v652 = vpop.permute.xlu0 %651
      %653 = vrot.lane.b32.xlu0 %v636, 119
      %v654 = vpop.permute.xlu0 %653
      %655 = vrot.lane.b32.xlu0 %v637, 119
      %v656 = vpop.permute.xlu0 %655
      %657 = vrot.lane.b32.xlu0 %v638, 119
      %v658 = vpop.permute.xlu0 %657
      %659 = vrot.lane.b32.xlu0 %v639, 119
      %v660 = vpop.permute.xlu0 %659
      %661 = vrot.lane.b32.xlu0 %v640, 119
      %v662 = vpop.permute.xlu0 %661
      %663 = vrot.lane.b32.xlu0 %v641, 119
      %v664 = vpop.permute.xlu0 %663
      %665 = vrot.lane.b32.xlu0 %v642, 119
      %v666 = vpop.permute.xlu0 %665
      %v667 = vsel %vm394, %v652, %v654
      %v668 = vsel %vm394, %v656, %v658
      %v669 = vsel %vm394, %v660, %v662
      %v670 = vsel %vm394, %v664, %v666
      %v683 = vadd.f32 %v607, %v652
      %v684 = vadd.f32 %v608, %v667
      %v685 = vadd.f32 %v609, %v654
      %v686 = vadd.f32 %v610, %v656
      %v687 = vadd.f32 %v611, %v668
      %v688 = vadd.f32 %v612, %v658
      %v689 = vadd.f32 %v613, %v660
      %v690 = vadd.f32 %v614, %v669
      %v691 = vadd.f32 %v615, %v662
      %v692 = vadd.f32 %v616, %v664
      %v693 = vadd.f32 %v617, %v670
      %v694 = vadd.f32 %v618, %v666
      %695 = vset.pattern.permute.xlu0 7
      %696 = vperm.xlu0 %695, %v282
      %v697 = vpop.permute.xlu0 %696
      %699 = vset.pattern.permute.xlu0 7
      %700 = vperm.xlu0 %699, %v283
      %v701 = vpop.permute.xlu0 %700
      %703 = vset.pattern.permute.xlu0 7
      %704 = vperm.xlu0 %703, %v284
      %v705 = vpop.permute.xlu0 %704
      %707 = vset.pattern.permute.xlu0 7
      %708 = vperm.xlu0 %707, %v285
      %v709 = vpop.permute.xlu0 %708
      %v711 = vmul.f32 %v427, %v697
      %v712 = vmul.f32 %v428, %v697
      %v713 = vmul.f32 %v429, %v697
      %v714 = vmul.f32 %v430, %v701
      %v715 = vmul.f32 %v431, %v701
      %v716 = vmul.f32 %v432, %v701
      %v717 = vmul.f32 %v433, %v705
      %v718 = vmul.f32 %v434, %v705
      %v719 = vmul.f32 %v435, %v705
      %v720 = vmul.f32 %v436, %v709
      %v721 = vmul.f32 %v437, %v709
      %v722 = vmul.f32 %v438, %v709
      %735 = vrot.lane.b32.xlu0 %v711, 110
      %v736 = vpop.permute.xlu0 %735
      %737 = vrot.lane.b32.xlu0 %v712, 110
      %v738 = vpop.permute.xlu0 %737
      %739 = vrot.lane.b32.xlu0 %v713, 110
      %v740 = vpop.permute.xlu0 %739
      %741 = vrot.lane.b32.xlu0 %v714, 110
      %v742 = vpop.permute.xlu0 %741
      %743 = vrot.lane.b32.xlu0 %v715, 110
      %v744 = vpop.permute.xlu0 %743
      %745 = vrot.lane.b32.xlu0 %v716, 110
      %v746 = vpop.permute.xlu0 %745
      %747 = vrot.lane.b32.xlu0 %v717, 110
      %v748 = vpop.permute.xlu0 %747
      %749 = vrot.lane.b32.xlu0 %v718, 110
      %v750 = vpop.permute.xlu0 %749
      %751 = vrot.lane.b32.xlu0 %v719, 110
      %v752 = vpop.permute.xlu0 %751
      %753 = vrot.lane.b32.xlu0 %v720, 110
      %v754 = vpop.permute.xlu0 %753
      %755 = vrot.lane.b32.xlu0 %v721, 110
      %v756 = vpop.permute.xlu0 %755
      %757 = vrot.lane.b32.xlu0 %v722, 110
      %v758 = vpop.permute.xlu0 %757
      %v759 = vsel %vm503, %v736, %v738
      %v760 = vsel %vm503, %v738, %v740
      %v761 = vsel %vm503, %v742, %v744
      %v762 = vsel %vm503, %v744, %v746
      %v763 = vsel %vm503, %v748, %v750
      %v764 = vsel %vm503, %v750, %v752
      %v765 = vsel %vm503, %v754, %v756
      %v766 = vsel %vm503, %v756, %v758
      %v779 = vadd.f32 %v683, %v736
      %v780 = vadd.f32 %v684, %v759
      %v781 = vadd.f32 %v685, %v760
      %v782 = vadd.f32 %v686, %v742
      %v783 = vadd.f32 %v687, %v761
      %v784 = vadd.f32 %v688, %v762
      %v785 = vadd.f32 %v689, %v748
      %v786 = vadd.f32 %v690, %v763
      %v787 = vadd.f32 %v691, %v764
      %v788 = vadd.f32 %v692, %v754
      %v789 = vadd.f32 %v693, %v765
      %v790 = vadd.f32 %v694, %v766
      %s791 = scalar_lea.vmem %s2, 1
      %v792 = vld [vmem:[%s791] ss:$4 sm:$0x3]
      %v794 = vlaneseq
      %v795 = vshrl.u32 %v794, 7
      %v796 = vsub.s32 0, %v795
      %v797 = vrot.slane %v792, %v796
      %v798 = vlaneseq
      %v799 = vshrl.u32 %v798, 7
      %v800 = vsub.s32 1, %v799
      %v801 = vrot.slane %v792, %v800
      %802 = vrot.lane.b32.xlu0 %v797, 119
      %v803 = vpop.permute.xlu0 %802
      %804 = vrot.lane.b32.xlu0 %v801, 119
      %v805 = vpop.permute.xlu0 %804
      %v806 = vsel %vm394, %v803, %v805
      %v810 = vmul.f32 %v779, %v803
      %v811 = vmul.f32 %v780, %v806
      %v812 = vmul.f32 %v781, %v805
      %v813 = vmul.f32 %v782, %v803
      %v814 = vmul.f32 %v783, %v806
      %v815 = vmul.f32 %v784, %v805
      %v816 = vmul.f32 %v785, %v803
      %v817 = vmul.f32 %v786, %v806
      %v818 = vmul.f32 %v787, %v805
      %v819 = vmul.f32 %v788, %v803
      %v820 = vmul.f32 %v789, %v806
      %v821 = vmul.f32 %v790, %v805
      %834 = vrot.lane.b32.xlu0 %v810, 127
      %v835 = vpop.permute.xlu0 %834
      %836 = vrot.lane.b32.xlu0 %v811, 127
      %v837 = vpop.permute.xlu0 %836
      %838 = vrot.lane.b32.xlu0 %v812, 127
      %v839 = vpop.permute.xlu0 %838
      %840 = vrot.lane.b32.xlu0 %v813, 127
      %v841 = vpop.permute.xlu0 %840
      %842 = vrot.lane.b32.xlu0 %v814, 127
      %v843 = vpop.permute.xlu0 %842
      %844 = vrot.lane.b32.xlu0 %v815, 127
      %v845 = vpop.permute.xlu0 %844
      %846 = vrot.lane.b32.xlu0 %v816, 127
      %v847 = vpop.permute.xlu0 %846
      %848 = vrot.lane.b32.xlu0 %v817, 127
      %v849 = vpop.permute.xlu0 %848
      %850 = vrot.lane.b32.xlu0 %v818, 127
      %v851 = vpop.permute.xlu0 %850
      %852 = vrot.lane.b32.xlu0 %v819, 127
      %v853 = vpop.permute.xlu0 %852
      %854 = vrot.lane.b32.xlu0 %v820, 127
      %v855 = vpop.permute.xlu0 %854
      %856 = vrot.lane.b32.xlu0 %v821, 127
      %v857 = vpop.permute.xlu0 %856
      %vm858 = vcmask 1039360
      %v859 = vsel %vm858, %v835, %v837
      %v860 = vsel %vm858, %v837, %v839
      %v861 = vsel %vm858, %v841, %v843
      %v862 = vsel %vm858, %v843, %v845
      %v863 = vsel %vm858, %v847, %v849
      %v864 = vsel %vm858, %v849, %v851
      %v865 = vsel %vm858, %v853, %v855
      %v866 = vsel %vm858, %v855, %v857
      %v879 = vadd.f32 %v567, %v859
      %v880 = vadd.f32 %v568, %v860
      %v881 = vadd.f32 %v569, %v839
      %v882 = vadd.f32 %v570, %v861
      %v883 = vadd.f32 %v571, %v862
      %v884 = vadd.f32 %v572, %v845
      %v885 = vadd.f32 %v573, %v863
      %v886 = vadd.f32 %v574, %v864
      %v887 = vadd.f32 %v575, %v851
      %v888 = vadd.f32 %v576, %v865
      %v889 = vadd.f32 %v577, %v866
      %v890 = vadd.f32 %v578, %v857
      %891 = vset.pattern.permute.xlu0 2
      %892 = vperm.xlu0 %891, %v282
      %v893 = vpop.permute.xlu0 %892
      %895 = vset.pattern.permute.xlu0 2
      %896 = vperm.xlu0 %895, %v283
      %v897 = vpop.permute.xlu0 %896
      %899 = vset.pattern.permute.xlu0 2
      %900 = vperm.xlu0 %899, %v284
      %v901 = vpop.permute.xlu0 %900
      %903 = vset.pattern.permute.xlu0 2
      %904 = vperm.xlu0 %903, %v285
      %v905 = vpop.permute.xlu0 %904
      %v907 = vmul.f32 %v270, %v893
      %v908 = vmul.f32 %v271, %v893
      %v909 = vmul.f32 %v272, %v893
      %v910 = vmul.f32 %v273, %v897
      %v911 = vmul.f32 %v274, %v897
      %v912 = vmul.f32 %v275, %v897
      %v913 = vmul.f32 %v276, %v901
      %v914 = vmul.f32 %v277, %v901
      %v915 = vmul.f32 %v278, %v901
      %v916 = vmul.f32 %v279, %v905
      %v917 = vmul.f32 %v280, %v905
      %v918 = vmul.f32 %v281, %v905
      %v919 = vadd.f32 %v907, 0.0
      %v920 = vadd.f32 %v908, 0.0
      %v921 = vadd.f32 %v909, 0.0
      %v922 = vadd.f32 %v910, 0.0
      %v923 = vadd.f32 %v911, 0.0
      %v924 = vadd.f32 %v912, 0.0
      %v925 = vadd.f32 %v913, 0.0
      %v926 = vadd.f32 %v914, 0.0
      %v927 = vadd.f32 %v915, 0.0
      %v928 = vadd.f32 %v916, 0.0
      %v929 = vadd.f32 %v917, 0.0
      %v930 = vadd.f32 %v918, 0.0
      %931 = vset.pattern.permute.xlu0 5
      %932 = vperm.xlu0 %931, %v282
      %v933 = vpop.permute.xlu0 %932
      %935 = vset.pattern.permute.xlu0 5
      %936 = vperm.xlu0 %935, %v283
      %v937 = vpop.permute.xlu0 %936
      %939 = vset.pattern.permute.xlu0 5
      %940 = vperm.xlu0 %939, %v284
      %v941 = vpop.permute.xlu0 %940
      %943 = vset.pattern.permute.xlu0 5
      %944 = vperm.xlu0 %943, %v285
      %v945 = vpop.permute.xlu0 %944
      %v947 = vmul.f32 %v427, %v933
      %v948 = vmul.f32 %v428, %v933
      %v949 = vmul.f32 %v429, %v933
      %v950 = vmul.f32 %v430, %v937
      %v951 = vmul.f32 %v431, %v937
      %v952 = vmul.f32 %v432, %v937
      %v953 = vmul.f32 %v433, %v941
      %v954 = vmul.f32 %v434, %v941
      %v955 = vmul.f32 %v435, %v941
      %v956 = vmul.f32 %v436, %v945
      %v957 = vmul.f32 %v437, %v945
      %v958 = vmul.f32 %v438, %v945
      %971 = vrot.lane.b32.xlu0 %v947, 119
      %v972 = vpop.permute.xlu0 %971
      %973 = vrot.lane.b32.xlu0 %v948, 119
      %v974 = vpop.permute.xlu0 %973
      %975 = vrot.lane.b32.xlu0 %v949, 119
      %v976 = vpop.permute.xlu0 %975
      %977 = vrot.lane.b32.xlu0 %v950, 119
      %v978 = vpop.permute.xlu0 %977
      %979 = vrot.lane.b32.xlu0 %v951, 119
      %v980 = vpop.permute.xlu0 %979
      %981 = vrot.lane.b32.xlu0 %v952, 119
      %v982 = vpop.permute.xlu0 %981
      %983 = vrot.lane.b32.xlu0 %v953, 119
      %v984 = vpop.permute.xlu0 %983
      %985 = vrot.lane.b32.xlu0 %v954, 119
      %v986 = vpop.permute.xlu0 %985
      %987 = vrot.lane.b32.xlu0 %v955, 119
      %v988 = vpop.permute.xlu0 %987
      %989 = vrot.lane.b32.xlu0 %v956, 119
      %v990 = vpop.permute.xlu0 %989
      %991 = vrot.lane.b32.xlu0 %v957, 119
      %v992 = vpop.permute.xlu0 %991
      %993 = vrot.lane.b32.xlu0 %v958, 119
      %v994 = vpop.permute.xlu0 %993
      %v995 = vsel %vm394, %v972, %v974
      %v996 = vsel %vm394, %v974, %v976
      %v997 = vsel %vm394, %v978, %v980
      %v998 = vsel %vm394, %v980, %v982
      %v999 = vsel %vm394, %v984, %v986
      %v1000 = vsel %vm394, %v986, %v988
      %v1001 = vsel %vm394, %v990, %v992
      %v1002 = vsel %vm394, %v992, %v994
      %v1015 = vadd.f32 %v919, %v972
      %v1016 = vadd.f32 %v920, %v995
      %v1017 = vadd.f32 %v921, %v996
      %v1018 = vadd.f32 %v922, %v978
      %v1019 = vadd.f32 %v923, %v997
      %v1020 = vadd.f32 %v924, %v998
      %v1021 = vadd.f32 %v925, %v984
      %v1022 = vadd.f32 %v926, %v999
      %v1023 = vadd.f32 %v927, %v1000
      %v1024 = vadd.f32 %v928, %v990
      %v1025 = vadd.f32 %v929, %v1001
      %v1026 = vadd.f32 %v930, %v1002
      %1027 = vset.pattern.permute.xlu0 8
      %1028 = vperm.xlu0 %1027, %v282
      %v1029 = vpop.permute.xlu0 %1028
      %1031 = vset.pattern.permute.xlu0 8
      %1032 = vperm.xlu0 %1031, %v283
      %v1033 = vpop.permute.xlu0 %1032
      %1035 = vset.pattern.permute.xlu0 8
      %1036 = vperm.xlu0 %1035, %v284
      %v1037 = vpop.permute.xlu0 %1036
      %1039 = vset.pattern.permute.xlu0 8
      %1040 = vperm.xlu0 %1039, %v285
      %v1041 = vpop.permute.xlu0 %1040
      %v1043 = vmul.f32 %v427, %v1029
      %v1044 = vmul.f32 %v428, %v1029
      %v1045 = vmul.f32 %v429, %v1029
      %v1046 = vmul.f32 %v430, %v1033
      %v1047 = vmul.f32 %v431, %v1033
      %v1048 = vmul.f32 %v432, %v1033
      %v1049 = vmul.f32 %v433, %v1037
      %v1050 = vmul.f32 %v434, %v1037
      %v1051 = vmul.f32 %v435, %v1037
      %v1052 = vmul.f32 %v436, %v1041
      %v1053 = vmul.f32 %v437, %v1041
      %v1054 = vmul.f32 %v438, %v1041
      %1067 = vrot.lane.b32.xlu0 %v1043, 110
      %v1068 = vpop.permute.xlu0 %1067
      %1069 = vrot.lane.b32.xlu0 %v1044, 110
      %v1070 = vpop.permute.xlu0 %1069
      %1071 = vrot.lane.b32.xlu0 %v1045, 110
      %v1072 = vpop.permute.xlu0 %1071
      %1073 = vrot.lane.b32.xlu0 %v1046, 110
      %v1074 = vpop.permute.xlu0 %1073
      %1075 = vrot.lane.b32.xlu0 %v1047, 110
      %v1076 = vpop.permute.xlu0 %1075
      %1077 = vrot.lane.b32.xlu0 %v1048, 110
      %v1078 = vpop.permute.xlu0 %1077
      %1079 = vrot.lane.b32.xlu0 %v1049, 110
      %v1080 = vpop.permute.xlu0 %1079
      %1081 = vrot.lane.b32.xlu0 %v1050, 110
      %v1082 = vpop.permute.xlu0 %1081
      %1083 = vrot.lane.b32.xlu0 %v1051, 110
      %v1084 = vpop.permute.xlu0 %1083
      %1085 = vrot.lane.b32.xlu0 %v1052, 110
      %v1086 = vpop.permute.xlu0 %1085
      %1087 = vrot.lane.b32.xlu0 %v1053, 110
      %v1088 = vpop.permute.xlu0 %1087
      %1089 = vrot.lane.b32.xlu0 %v1054, 110
      %v1090 = vpop.permute.xlu0 %1089
      %v1091 = vsel %vm503, %v1068, %v1070
      %v1092 = vsel %vm503, %v1070, %v1072
      %v1093 = vsel %vm503, %v1074, %v1076
      %v1094 = vsel %vm503, %v1076, %v1078
      %v1095 = vsel %vm503, %v1080, %v1082
      %v1096 = vsel %vm503, %v1082, %v1084
      %v1097 = vsel %vm503, %v1086, %v1088
      %v1098 = vsel %vm503, %v1088, %v1090
      %v1111 = vadd.f32 %v1015, %v1068
      %v1112 = vadd.f32 %v1016, %v1091
      %v1113 = vadd.f32 %v1017, %v1092
      %v1114 = vadd.f32 %v1018, %v1074
      %v1115 = vadd.f32 %v1019, %v1093
      %v1116 = vadd.f32 %v1020, %v1094
      %v1117 = vadd.f32 %v1021, %v1080
      %v1118 = vadd.f32 %v1022, %v1095
      %v1119 = vadd.f32 %v1023, %v1096
      %v1120 = vadd.f32 %v1024, %v1086
      %v1121 = vadd.f32 %v1025, %v1097
      %v1122 = vadd.f32 %v1026, %v1098
      %s1123 = scalar_lea.vmem %s2, 2
      %v1124 = vld [vmem:[%s1123] ss:$4 sm:$0x3]
      %v1126 = vlaneseq
      %v1127 = vshrl.u32 %v1126, 7
      %v1128 = vsub.s32 0, %v1127
      %v1129 = vrot.slane %v1124, %v1128
      %v1130 = vlaneseq
      %v1131 = vshrl.u32 %v1130, 7
      %v1132 = vsub.s32 1, %v1131
      %v1133 = vrot.slane %v1124, %v1132
      %1134 = vrot.lane.b32.xlu0 %v1129, 120
      %v1135 = vpop.permute.xlu0 %1134
      %1136 = vrot.lane.b32.xlu0 %v1133, 120
      %v1137 = vpop.permute.xlu0 %1136
      %vm1138 = vcmask 982016
      %v1139 = vsel %vm1138, %v1135, %v1137
      %v1143 = vmul.f32 %v1111, %v1135
      %v1144 = vmul.f32 %v1112, %v1139
      %v1145 = vmul.f32 %v1113, %v1137
      %v1146 = vmul.f32 %v1114, %v1135
      %v1147 = vmul.f32 %v1115, %v1139
      %v1148 = vmul.f32 %v1116, %v1137
      %v1149 = vmul.f32 %v1117, %v1135
      %v1150 = vmul.f32 %v1118, %v1139
      %v1151 = vmul.f32 %v1119, %v1137
      %v1152 = vmul.f32 %v1120, %v1135
      %v1153 = vmul.f32 %v1121, %v1139
      %v1154 = vmul.f32 %v1122, %v1137
      %1167 = vrot.lane.b32.xlu0 %v1143, 126
      %v1168 = vpop.permute.xlu0 %1167
      %1169 = vrot.lane.b32.xlu0 %v1144, 126
      %v1170 = vpop.permute.xlu0 %1169
      %1171 = vrot.lane.b32.xlu0 %v1145, 126
      %v1172 = vpop.permute.xlu0 %1171
      %1173 = vrot.lane.b32.xlu0 %v1146, 126
      %v1174 = vpop.permute.xlu0 %1173
      %1175 = vrot.lane.b32.xlu0 %v1147, 126
      %v1176 = vpop.permute.xlu0 %1175
      %1177 = vrot.lane.b32.xlu0 %v1148, 126
      %v1178 = vpop.permute.xlu0 %1177
      %1179 = vrot.lane.b32.xlu0 %v1149, 126
      %v1180 = vpop.permute.xlu0 %1179
      %1181 = vrot.lane.b32.xlu0 %v1150, 126
      %v1182 = vpop.permute.xlu0 %1181
      %1183 = vrot.lane.b32.xlu0 %v1151, 126
      %v1184 = vpop.permute.xlu0 %1183
      %1185 = vrot.lane.b32.xlu0 %v1152, 126
      %v1186 = vpop.permute.xlu0 %1185
      %1187 = vrot.lane.b32.xlu0 %v1153, 126
      %v1188 = vpop.permute.xlu0 %1187
      %1189 = vrot.lane.b32.xlu0 %v1154, 126
      %v1190 = vpop.permute.xlu0 %1189
      %vm1191 = vcmask 1031168
      %v1192 = vsel %vm1191, %v1168, %v1170
      %v1193 = vsel %vm1191, %v1170, %v1172
      %v1194 = vsel %vm1191, %v1174, %v1176
      %v1195 = vsel %vm1191, %v1176, %v1178
      %v1196 = vsel %vm1191, %v1180, %v1182
      %v1197 = vsel %vm1191, %v1182, %v1184
      %v1198 = vsel %vm1191, %v1186, %v1188
      %v1199 = vsel %vm1191, %v1188, %v1190
      %v1212 = vadd.f32 %v879, %v1192
      %v1213 = vadd.f32 %v880, %v1193
      %v1214 = vadd.f32 %v881, %v1172
      %v1215 = vadd.f32 %v882, %v1194
      %v1216 = vadd.f32 %v883, %v1195
      %v1217 = vadd.f32 %v884, %v1178
      %v1218 = vadd.f32 %v885, %v1196
      %v1219 = vadd.f32 %v886, %v1197
      %v1220 = vadd.f32 %v887, %v1184
      %v1221 = vadd.f32 %v888, %v1198
      %v1222 = vadd.f32 %v889, %v1199
      %v1223 = vadd.f32 %v890, %v1190
      %1236 = vrot.lane.b32.xlu0 %v1212, 10
      %v1237 = vpop.permute.xlu0 %1236
      %1238 = vrot.lane.b32.xlu0 %v1213, 10
      %v1239 = vpop.permute.xlu0 %1238
      %1240 = vrot.lane.b32.xlu0 %v1214, 10
      %v1241 = vpop.permute.xlu0 %1240
      %1242 = vrot.lane.b32.xlu0 %v1215, 10
      %v1243 = vpop.permute.xlu0 %1242
      %1244 = vrot.lane.b32.xlu0 %v1216, 10
      %v1245 = vpop.permute.xlu0 %1244
      %1246 = vrot.lane.b32.xlu0 %v1217, 10
      %v1247 = vpop.permute.xlu0 %1246
      %1248 = vrot.lane.b32.xlu0 %v1218, 10
      %v1249 = vpop.permute.xlu0 %1248
      %1250 = vrot.lane.b32.xlu0 %v1219, 10
      %v1251 = vpop.permute.xlu0 %1250
      %1252 = vrot.lane.b32.xlu0 %v1220, 10
      %v1253 = vpop.permute.xlu0 %1252
      %1254 = vrot.lane.b32.xlu0 %v1221, 10
      %v1255 = vpop.permute.xlu0 %1254
      %1256 = vrot.lane.b32.xlu0 %v1222, 10
      %v1257 = vpop.permute.xlu0 %1256
      %1258 = vrot.lane.b32.xlu0 %v1223, 10
      %v1259 = vpop.permute.xlu0 %1258
      %vm1260 = vcmask 80896
      %v1261 = vsel %vm1260, %v1237, %v1239
      %v1262 = vsel %vm1260, %v1239, %v1241
      %v1263 = vsel %vm1260, %v1243, %v1245
      %v1264 = vsel %vm1260, %v1245, %v1247
      %v1265 = vsel %vm1260, %v1249, %v1251
      %v1266 = vsel %vm1260, %v1251, %v1253
      %v1267 = vsel %vm1260, %v1255, %v1257
      %v1268 = vsel %vm1260, %v1257, %v1259
      %1277 = vst [vmem:[%s235] sm:$0xff] %v1261
      %1278 = vst [vmem:[%s235 + $0x8] sm:$0xff] %v1262
      %1279 = vst [vmem:[%s235 + $0x10] sm:$0xff] %v1263
      %1280 = vst [vmem:[%s235 + $0x18] sm:$0xff] %v1264
      %1281 = vst [vmem:[%s235 + $0x20] sm:$0xff] %v1265
      %1282 = vst [vmem:[%s235 + $0x28] sm:$0xff] %v1266
      %1283 = vst [vmem:[%s235 + $0x30] sm:$0xff] %v1267
      %1284 = vst [vmem:[%s235 + $0x38] sm:$0xff] %v1268
      %s1285 = smul.u32 4, %s19
      %p1286 = scmp.lt.s32.totalorder %s18, 1
      %s1287 = scalar_select %p1286, %s18, 1
      %p1288 = scmp.lt.s32.totalorder %s1285, 11
      %s1289 = scalar_select %p1288, %s1285, 11
      %s1290 = smul.addr %s1289, 2
      %s1291 = smul.addr %s1287, 24
      %s1292 = sadd.s32 %s1290, %s1291
      %s1293 = smul.addr %s1292, 8
      %s1294 = scalar_lea.vmem %s3, %s1293
      // Predicated region
      $region33: #{ctransformer_block.8} parent=31 // pred_check
        %p1295 = pneg %p121
      $region34: #{ctransformer_block.8} parent=31 // pred_check_branch
        %1297 = sbr.rel (%p1295) target = $region36
      $region35: #{ctransformer_block.8} parent=31 // pred_region
        %s1298 = smul.u32 4, %s19
      $region36: #{ctransformer_block.8} parent=31 // pred_fallthru
        _
    $region32: #{ctransformer_block.8} parent=5 // pred_fallthru
      _
    %p1299 = scmp.le.s32.totalorder 2, %s9
    // Predicated region
    $region37: #{ctransformer_block.8} parent=5 // pred_check
      %p1300 = pneg %p1299
    $region38: #{ctransformer_block.8} parent=5 // pred_check_branch
      %1302 = sbr.rel (%p1300) target = $region40
    $region39: #{ctransformer_block.8} parent=5 // pred_region
      %s1303 = ssub.s32 %s9, 2
      // Predicated region
      $region41: #{ctransformer_block.8} parent=39 // pred_check
        %p1304 = pneg %p127
      $region42: #{ctransformer_block.8} parent=39 // pred_check_branch
        %1306 = sbr.rel (%p1304) target = $region44
      $region43: #{ctransformer_block.8} parent=39 // pred_region
        %s1307 = smul.u32 4, %s21
        %p1308 = scmp.lt.s32.totalorder %s20, 1
        %s1309 = scalar_select %p1308, %s20, 1
        %p1310 = scmp.lt.s32.totalorder %s1307, 11
        %s1311 = scalar_select %p1310, %s1307, 11
        %s1312 = smul.addr %s1311, 2
        %s1313 = smul.addr %s1309, 24
        %s1314 = sadd.s32 %s1312, %s1313
        %s1315 = smul.addr %s1314, 8
        %s1316 = scalar_lea.vmem %s3, %s1315
      $region44: #{ctransformer_block.8} parent=39 // pred_fallthru
        _
    $region40: #{ctransformer_block.8} parent=5 // pred_fallthru
      _
  $region6: #{ctransformer_block.8} parent=0 // loop_footer
    %s13 = sadd.s32 1, %s9
  $region7: #{ctransformer_block.8} parent=0 // loop_footer_branch
    %8 = sbr.rel target = $region3
  $region8: #{ctransformer_block.8} parent=0 // loop_exit
    _

// kernel: reverse.4
$region0: #{reverse.4}
  #allocation0 [shape = 's32[1]{0}', space=sflag, size = 0x4, scoped, tag = 'scoped memory for reverse.4']
  %s0 = inlined_call_operand.vmem [shape: f32[2,32,16,7], index: 0, kind: input, shape index: {}]
  %s1 = inlined_call_operand.vmem [shape: f32[2,32,16,7], index: 1, kind: output, shape index: {}]
  %s2 = scalar_lea.vmem %s0, 96
  %v3 = vld [vmem:[%s2] sm:$0xff]
  %4 = vst [vmem:[%s1] sm:$0xff] %v3
  %s5 = scalar_lea.vmem %s0, 208
  %v6 = vld [vmem:[%s5] sm:$0xff]
  %s7 = scalar_lea.vmem %s1, 112
  %8 = vst [vmem:[%s7] sm:$0xff] %v6
  %s9 = scalar_lea.vmem %s0, 80
  %v10 = vld [vmem:[%s9] sm:$0xff]
  %s11 = scalar_lea.vmem %s1, 16
  %12 = vst [vmem:[%s11] sm:$0xff] %v10
  %s13 = scalar_lea.vmem %s0, 192
  %v14 = vld [vmem:[%s13] sm:$0xff]
  %s15 = scalar_lea.vmem %s1, 128
  %16 = vst [vmem:[%s15] sm:$0xff] %v14
  %s17 = scalar_lea.vmem %s0, 64
  %v18 = vld [vmem:[%s17] sm:$0xff]
  %s19 = scalar_lea.vmem %s1, 32
  %20 = vst [vmem:[%s19] sm:$0xff] %v18
  %s21 = scalar_lea.vmem %s0, 176
  %v22 = vld [vmem:[%s21] sm:$0xff]
  %s23 = scalar_lea.vmem %s1, 144
  %24 = vst [vmem:[%s23] sm:$0xff] %v22
  %s25 = scalar_lea.vmem %s0, 48
  %v26 = vld [vmem:[%s25] sm:$0xff]
  %s27 = scalar_lea.vmem %s1, 48
  %28 = vst [vmem:[%s27] sm:$0xff] %v26
  %s29 = scalar_lea.vmem %s0, 160
  %v30 = vld [vmem:[%s29] sm:$0xff]
  %s31 = scalar_lea.vmem %s1, 160
  %32 = vst [vmem:[%s31] sm:$0xff] %v30
  %s33 = scalar_lea.vmem %s0, 32
  %v34 = vld [vmem:[%s33] sm:$0xff]
  %s35 = scalar_lea.vmem %s1, 64
  %36 = vst [vmem:[%s35] sm:$0xff] %v34
  %s37 = scalar_lea.vmem %s0, 144
  %v38 = vld [vmem:[%s37] sm:$0xff]
  %s39 = scalar_lea.vmem %s1, 176
  %40 = vst [vmem:[%s39] sm:$0xff] %v38
  %s41 = scalar_lea.vmem %s0, 16
  %v42 = vld [vmem:[%s41] sm:$0xff]
  %s43 = scalar_lea.vmem %s1, 80
  %44 = vst [vmem:[%s43] sm:$0xff] %v42
  %s45 = scalar_lea.vmem %s0, 128
  %v46 = vld [vmem:[%s45] sm:$0xff]
  %s47 = scalar_lea.vmem %s1, 192
  %48 = vst [vmem:[%s47] sm:$0xff] %v46
  %v49 = vld [vmem:[%s0] sm:$0xff]
  %s50 = scalar_lea.vmem %s1, 96
  %51 = vst [vmem:[%s50] sm:$0xff] %v49
  %s52 = scalar_lea.vmem %s0, 112
  %v53 = vld [vmem:[%s52] sm:$0xff]
  %s54 = scalar_lea.vmem %s1, 208
  %55 = vst [vmem:[%s54] sm:$0xff] %v53
  %s56 = scalar_lea.vmem %s0, 104
  %v57 = vld [vmem:[%s56] sm:$0xff]
  %s58 = scalar_lea.vmem %s1, 8
  %59 = vst [vmem:[%s58] sm:$0xff] %v57
  %s60 = scalar_lea.vmem %s0, 216
  %v61 = vld [vmem:[%s60] sm:$0xff]
  %s62 = scalar_lea.vmem %s1, 120
  %63 = vst [vmem:[%s62] sm:$0xff] %v61
  %s64 = scalar_lea.vmem %s0, 88
  %v65 = vld [vmem:[%s64] sm:$0xff]
  %s66 = scalar_lea.vmem %s1, 24
  %67 = vst [vmem:[%s66] sm:$0xff] %v65
  %s68 = scalar_lea.vmem %s0, 200
  %v69 = vld [vmem:[%s68] sm:$0xff]
  %s70 = scalar_lea.vmem %s1, 136
  %71 = vst [vmem:[%s70] sm:$0xff] %v69
  %s72 = scalar_lea.vmem %s0, 72
  %v73 = vld [vmem:[%s72] sm:$0xff]
  %s74 = scalar_lea.vmem %s1, 40
  %75 = vst [vmem:[%s74] sm:$0xff] %v73
  %s76 = scalar_lea.vmem %s0, 184
  %v77 = vld [vmem:[%s76] sm:$0xff]
  %s78 = scalar_lea.vmem %s1, 152
  %79 = vst [vmem:[%s78] sm:$0xff] %v77
  %s80 = scalar_lea.vmem %s0, 56
  %v81 = vld [vmem:[%s80] sm:$0xff]
  %s82 = scalar_lea.vmem %s1, 56
  %83 = vst [vmem:[%s82] sm:$0xff] %v81
  %s84 = scalar_lea.vmem %s0, 168
  %v85 = vld [vmem:[%s84] sm:$0xff]
  %s86 = scalar_lea.vmem %s1, 168
  %87 = vst [vmem:[%s86] sm:$0xff] %v85
  %s88 = scalar_lea.vmem %s0, 40
  %v89 = vld [vmem:[%s88] sm:$0xff]
  %s90 = scalar_lea.vmem %s1, 72
  %91 = vst [vmem:[%s90] sm:$0xff] %v89
  %s92 = scalar_lea.vmem %s0, 152
  %v93 = vld [vmem:[%s92] sm:$0xff]
  %s94 = scalar_lea.vmem %s1, 184
  %95 = vst [vmem:[%s94] sm:$0xff] %v93
  %s96 = scalar_lea.vmem %s0, 24
  %v97 = vld [vmem:[%s96] sm:$0xff]
  %s98 = scalar_lea.vmem %s1, 88
  %99 = vst [vmem:[%s98] sm:$0xff] %v97
  %s100 = scalar_lea.vmem %s0, 136
  %v101 = vld [vmem:[%s100] sm:$0xff]
  %s102 = scalar_lea.vmem %s1, 200
  %103 = vst [vmem:[%s102] sm:$0xff] %v101
  %s104 = scalar_lea.vmem %s0, 8
  %v105 = vld [vmem:[%s104] sm:$0xff]
  %s106 = scalar_lea.vmem %s1, 104
  %107 = vst [vmem:[%s106] sm:$0xff] %v105
  %s108 = scalar_lea.vmem %s0, 120
  %v109 = vld [vmem:[%s108] sm:$0xff]
  %s110 = scalar_lea.vmem %s1, 216
  %111 = vst [vmem:[%s110] sm:$0xff] %v109

// kernel: ctransformer_block.10
$region0: #{ctransformer_block.10}
  #allocation0 [shape = 'u32[]', space=smem, size = 0x4, offset = 0x4, fixed_abs, tag = 'smem constant byte address 0x4 - core index']
  #allocation1 [shape = 'u32[144,128]{1,0:T(1,128)}', space=vmem, size = 0x12000, scoped, tag = 'internal scratch']
  %s0 = inlined_call_operand.vmem [shape: f32[2,32,256], index: 0, kind: input, shape index: {}]
  %s1 = inlined_call_operand.vmem [shape: f32[64,32], index: 1, kind: input, shape index: {}]
  %s2 = inlined_call_operand.vmem [shape: f32[64,1], index: 2, kind: input, shape index: {}]
  %s3 = inlined_call_operand.vmem [shape: f32[2,64,256], index: 3, kind: output, shape index: {}]
  %s4 = sld [smem:[#allocation0]]
  $region45: #{ctransformer_block.10} parent=0
    _
  %s6 = ssub.s32 1, %s4
  %s7 = scalar_select 0, %s6, %s4
  loop: start=0, step=1, limit=4
  $region2: #{ctransformer_block.10} parent=0 // loop_pre_header
    _
  $region3: #{ctransformer_block.10} parent=0 // loop_header
    %s9 = sphi 0, %s13
    %p10 = scmp.ge.s32.totalorder %s9, 4
    %s16 = sphi 0, %s28
    %s17 = sphi 0, %s24
    %s18 = sphi 0, %s16
    %s19 = sphi 0, %s17
    %s20 = sphi 0, %s18
    %s21 = sphi 0, %s19
    %s33 = sphi 0, %s35
    %s36 = sphi 0, %s33
    %s37 = sphi 0, %s36
    %s53 = sphi 0, %s37
    %s57 = sphi 0, %s57
    %s59 = sphi 0, %s57
    %s60 = sphi 0, %s59
    %s74 = sphi 0, %s60
    %s78 = sphi 0, %s78
    %s80 = sphi 0, %s78
    %s81 = sphi 0, %s80
    %s95 = sphi 0, %s81
    %s103 = sphi 0, %s105
    %s106 = sphi 0, %s103
    %s107 = sphi 0, %s106
    %s123 = sphi 0, %s107
  $region4: #{ctransformer_block.10} parent=0 // loop_header_branch
    %12 = sbr.rel (%p10) target = $region8
  $region5: #{ctransformer_block.10} parent=0 // loop_body
    %s14 = ssub.s32 %s9, 1
    %s15 = ssub.s32 %s9, 2
    %s22 = sadd.s32 1, %s17
    %p23 = scmp.ge.s32.totalorder %s22, 1
    %s24 = scalar_select %p23, 0, %s22
    %s25 = sadd.s32 1, %s16
    %s26 = scalar_select %p23, %s25, %s16
    %p27 = scmp.ge.s32.totalorder %s26, 2
    %s28 = scalar_select %p27, 0, %s26
    %s29 = ssub.s32 %s16, %s28
    %s30 = ssub.s32 %s17, %s24
    %s31 = sor.u32 %s29, %s30
    %p32 = scmp.eq.s32.totalorder %s31, 0
    %s34 = sadd.s32 %s33, 1
    %s35 = scalar_select %p32, %s33, %s34
    %p38 = pneg %p32
    %p39 = scmp.eq.s32.totalorder %s9, 1
    %p40 = por %p38, %p39
    %p41 = scmp.ne.s32.totalorder %s33, %s36
    %p42 = scmp.eq.s32.totalorder %s9, 0
    %p43 = por %p41, %p42
    %p44 = scmp.ne.s32.totalorder %s33, %s36
    %p45 = scmp.eq.s32.totalorder %s14, 1
    %p46 = por %p44, %p45
    %p47 = scmp.ne.s32.totalorder %s36, %s37
    %p48 = scmp.eq.s32.totalorder %s14, 0
    %p49 = por %p47, %p48
    %p50 = scmp.ne.s32.totalorder %s36, %s37
    %p51 = scmp.eq.s32.totalorder %s15, 1
    %p52 = por %p50, %p51
    %p54 = scmp.ne.s32.totalorder %s37, %s53
    %p55 = scmp.eq.s32.totalorder %s15, 0
    %p56 = por %p54, %p55
    %s58 = sadd.s32 %s57, 1
    %p61 = scmp.eq.s32.totalorder %s9, 1
    %p62 = scmp.ne.s32.totalorder %s57, %s59
    %p63 = scmp.eq.s32.totalorder %s9, 0
    %p64 = por %p62, %p63
    %p65 = scmp.ne.s32.totalorder %s57, %s59
    %p66 = scmp.eq.s32.totalorder %s14, 1
    %p67 = por %p65, %p66
    %p68 = scmp.ne.s32.totalorder %s59, %s60
    %p69 = scmp.eq.s32.totalorder %s14, 0
    %p70 = por %p68, %p69
    %p71 = scmp.ne.s32.totalorder %s59, %s60
    %p72 = scmp.eq.s32.totalorder %s15, 1
    %p73 = por %p71, %p72
    %p75 = scmp.ne.s32.totalorder %s60, %s74
    %p76 = scmp.eq.s32.totalorder %s15, 0
    %p77 = por %p75, %p76
    %s79 = sadd.s32 %s78, 1
    %p82 = scmp.eq.s32.totalorder %s9, 1
    %p83 = scmp.ne.s32.totalorder %s78, %s80
    %p84 = scmp.eq.s32.totalorder %s9, 0
    %p85 = por %p83, %p84
    %p86 = scmp.ne.s32.totalorder %s78, %s80
    %p87 = scmp.eq.s32.totalorder %s14, 1
    %p88 = por %p86, %p87
    %p89 = scmp.ne.s32.totalorder %s80, %s81
    %p90 = scmp.eq.s32.totalorder %s14, 0
    %p91 = por %p89, %p90
    %p92 = scmp.ne.s32.totalorder %s80, %s81
    %p93 = scmp.eq.s32.totalorder %s15, 1
    %p94 = por %p92, %p93
    %p96 = scmp.ne.s32.totalorder %s81, %s95
    %p97 = scmp.eq.s32.totalorder %s15, 0
    %p98 = por %p96, %p97
    %s99 = ssub.s32 %s16, %s28
    %s100 = ssub.s32 %s17, %s24
    %s101 = sor.u32 %s99, %s100
    %p102 = scmp.eq.s32.totalorder %s101, 0
    %s104 = sadd.s32 %s103, 1
    %s105 = scalar_select %p102, %s103, %s104
    %p108 = pneg %p102
    %p109 = scmp.eq.s32.totalorder %s9, 1
    %p110 = por %p108, %p109
    %p111 = scmp.ne.s32.totalorder %s103, %s106
    %p112 = scmp.eq.s32.totalorder %s9, 0
    %p113 = por %p111, %p112
    %p114 = scmp.ne.s32.totalorder %s103, %s106
    %p115 = scmp.eq.s32.totalorder %s14, 1
    %p116 = por %p114, %p115
    %p117 = scmp.ne.s32.totalorder %s106, %s107
    %p118 = scmp.eq.s32.totalorder %s14, 0
    %p119 = por %p117, %p118
    %p120 = scmp.ne.s32.totalorder %s106, %s107
    %p121 = scmp.eq.s32.totalorder %s15, 1
    %p122 = por %p120, %p121
    %p124 = scmp.ne.s32.totalorder %s107, %s123
    %p125 = scmp.eq.s32.totalorder %s15, 0
    %p126 = por %p124, %p125
    %p127 = scmp.le.s32.totalorder 1, %s9
    %p128 = scmp.lt.s32.totalorder %s9, 3
    %p129 = pnand %p127, %p128
    %p130 = pneg %p129
    // Predicated region
    $region9: #{ctransformer_block.10} parent=5 // pred_check
      _
    $region10: #{ctransformer_block.10} parent=5 // pred_check_branch
      %132 = sbr.rel (%p129) target = $region12
    $region11: #{ctransformer_block.10} parent=5 // pred_region
      %s133 = ssub.s32 %s9, 1
      // Predicated region
      $region13: #{ctransformer_block.10} parent=11 // pred_check
        %p134 = pneg %p70
      $region14: #{ctransformer_block.10} parent=11 // pred_check_branch
        %136 = sbr.rel (%p134) target = $region16
      $region15: #{ctransformer_block.10} parent=11 // pred_region
        _
      $region16: #{ctransformer_block.10} parent=11 // pred_fallthru
        _
      // Predicated region
      $region17: #{ctransformer_block.10} parent=11 // pred_check
        %p137 = pneg %p91
      $region18: #{ctransformer_block.10} parent=11 // pred_check_branch
        %139 = sbr.rel (%p137) target = $region20
      $region19: #{ctransformer_block.10} parent=11 // pred_region
        _
      $region20: #{ctransformer_block.10} parent=11 // pred_fallthru
        _
    $region12: #{ctransformer_block.10} parent=5 // pred_fallthru
      _
    %p140 = scmp.lt.s32.totalorder %s9, 2
    // Predicated region
    $region21: #{ctransformer_block.10} parent=5 // pred_check
      %p141 = pneg %p140
    $region22: #{ctransformer_block.10} parent=5 // pred_check_branch
      %143 = sbr.rel (%p141) target = $region24
    $region23: #{ctransformer_block.10} parent=5 // pred_region
      // Predicated region
      $region25: #{ctransformer_block.10} parent=23 // pred_check
        %p144 = pneg %p43
      $region26: #{ctransformer_block.10} parent=23 // pred_check_branch
        %146 = sbr.rel (%p144) target = $region28
      $region27: #{ctransformer_block.10} parent=23 // pred_region
        %s147 = smul.u32 2, %s17
        %p148 = scmp.lt.s32.totalorder %s16, 1
        %s149 = scalar_select %p148, %s16, 1
        %p150 = scmp.lt.s32.totalorder %s147, 1
        %s151 = scalar_select %p150, %s147, 1
        %s152 = smul.addr %s149, 8
        %s153 = sadd.s32 %s151, %s152
        %s154 = smul.addr %s153, 8
        %s155 = scalar_lea.vmem %s0, %s154
        %s156 = smul.u32 2, %s17
      $region28: #{ctransformer_block.10} parent=23 // pred_fallthru
        _
    $region24: #{ctransformer_block.10} parent=5 // pred_fallthru
      _
    %p157 = scmp.le.s32.totalorder 1, %s9
    %p158 = scmp.lt.s32.totalorder %s9, 3
    %p159 = pnand %p157, %p158
    %p160 = pneg %p159
    // Predicated region
    $region29: #{ctransformer_block.10} parent=5 // pred_check
      _
    $region30: #{ctransformer_block.10} parent=5 // pred_check_branch
      %162 = sbr.rel (%p159) target = $region32
    $region31: #{ctransformer_block.10} parent=5 // pred_region
      %s163 = ssub.s32 %s9, 1
      %s164 = smul.u32 2, %s19
      %p165 = scmp.lt.s32.totalorder %s18, 1
      %s166 = scalar_select %p165, %s18, 1
      %p167 = scmp.lt.s32.totalorder %s164, 1
      %s168 = scalar_select %p167, %s164, 1
      %s169 = smul.addr %s166, 8
      %s170 = sadd.s32 %s168, %s169
      %s171 = smul.addr %s170, 8
      %s172 = scalar_lea.vmem %s0, %s171
      %p173 = pneg %p49
      %p174 = pneg %p46
      %p175 = pneg %p70
      %p176 = pneg %p67
      %p177 = pneg %p91
      %p178 = pneg %p88
      %p179 = pneg %p119
      %p180 = pneg %p116
      %s181 = smul.u32 2, %s19
      %p182 = scmp.lt.s32.totalorder %s18, 1
      %s183 = scalar_select %p182, %s18, 1
      %p184 = scmp.lt.s32.totalorder %s181, 1
      %s185 = scalar_select %p184, %s181, 1
      %s186 = smul.addr %s183, 16
      %s187 = sadd.s32 %s185, %s186
      %s188 = smul.addr %s187, 8
      %s189 = scalar_lea.vmem %s3, %s188
      %s190 = smul.u32 2, %s19
      %p191 = scmp.lt.s32.totalorder %s18, 1
      %s192 = scalar_select %p191, %s18, 1
      %p193 = scmp.lt.s32.totalorder %s190, 1
      %s194 = scalar_select %p193, %s190, 1
      %s195 = smul.addr %s192, 8
      %s196 = sadd.s32 %s194, %s195
      %s197 = smul.addr %s196, 8
      %s198 = scalar_lea.vmem %s0, %s197
      %s199 = smul.u32 2, %s19
      %s200 = smul.u32 2, %s19
      %p201 = scmp.lt.s32.totalorder %s18, 1
      %s202 = scalar_select %p201, %s18, 1
      %p203 = scmp.lt.s32.totalorder %s200, 1
      %s204 = scalar_select %p203, %s200, 1
      %s205 = smul.addr %s202, 16
      %s206 = sadd.s32 %s204, %s205
      %s207 = smul.addr %s206, 8
      %s208 = scalar_lea.vmem %s3, %s207
      %s209 = smul.u32 2, %s19
      %v210 = vld [vmem:[%s198] sm:$0xff]
      %v211 = vld [vmem:[%s198 + $0x8] sm:$0xff]
      %v212 = vld [vmem:[%s198 + $0x10] sm:$0xff]
      %v213 = vld [vmem:[%s198 + $0x18] sm:$0xff]
      %v214 = vld [vmem:[%s198 + $0x20] sm:$0xff]
      %v215 = vld [vmem:[%s198 + $0x28] sm:$0xff]
      %v216 = vld [vmem:[%s198 + $0x30] sm:$0xff]
      %v217 = vld [vmem:[%s198 + $0x38] sm:$0xff]
      %v218 = vadd.f32 %v210, %v212
      %v219 = vadd.f32 %v218, %v214
      %v220 = vadd.f32 %v219, %v216
      %v221 = vrot.slane %v220, 4
      %v222 = vadd.f32 %v220, %v221
      %v223 = vrot.slane %v222, 2
      %v224 = vadd.f32 %v222, %v223
      %v225 = vrot.slane %v224, 1
      %v226 = vadd.f32 %v224, %v225
      %v227 = vadd.f32 %v211, %v213
      %v228 = vadd.f32 %v227, %v215
      %v229 = vadd.f32 %v228, %v217
      %v230 = vrot.slane %v229, 4
      %v231 = vadd.f32 %v229, %v230
      %v232 = vrot.slane %v231, 2
      %v233 = vadd.f32 %v231, %v232
      %v234 = vrot.slane %v233, 1
      %v235 = vadd.f32 %v233, %v234
      %v236 = vrcp.pop 32.0
      %v237 = vmul.f32 %v226, %v236
      %v238 = vmul.f32 %v235, %v236
      %v239 = vsub.f32 %v210, %v237
      %v240 = vsub.f32 %v211, %v238
      %v241 = vsub.f32 %v212, %v237
      %v242 = vsub.f32 %v213, %v238
      %v243 = vsub.f32 %v214, %v237
      %v244 = vsub.f32 %v215, %v238
      %v245 = vsub.f32 %v216, %v237
      %v246 = vsub.f32 %v217, %v238
      %v247 = vmul.f32 %v239, %v239
      %v248 = vmul.f32 %v240, %v240
      %v249 = vmul.f32 %v241, %v241
      %v250 = vmul.f32 %v242, %v242
      %v251 = vmul.f32 %v243, %v243
      %v252 = vmul.f32 %v244, %v244
      %v253 = vmul.f32 %v245, %v245
      %v254 = vmul.f32 %v246, %v246
      %v255 = vadd.f32 %v247, %v249
      %v256 = vadd.f32 %v255, %v251
      %v257 = vadd.f32 %v256, %v253
      %v258 = vrot.slane %v257, 4
      %v259 = vadd.f32 %v257, %v258
      %v260 = vrot.slane %v259, 2
      %v261 = vadd.f32 %v259, %v260
      %v262 = vrot.slane %v261, 1
      %v263 = vadd.f32 %v261, %v262
      %v264 = vadd.f32 %v248, %v250
      %v265 = vadd.f32 %v264, %v252
      %v266 = vadd.f32 %v265, %v254
      %v267 = vrot.slane %v266, 4
      %v268 = vadd.f32 %v266, %v267
      %v269 = vrot.slane %v268, 2
      %v270 = vadd.f32 %v268, %v269
      %v271 = vrot.slane %v270, 1
      %v272 = vadd.f32 %v270, %v271
      %v273 = vmul.f32 %v263, %v236
      %v274 = vmul.f32 %v272, %v236
      %v275 = vadd.f32 %v273, 1e-05
      %v276 = vadd.f32 %v274, 1e-05
      %v277 = vrsqrt.pop %v275
      %v278 = vrsqrt.pop %v276
      %v279 = vmul.f32 %v239, %v277
      %v280 = vmul.f32 %v240, %v278
      %v281 = vmul.f32 %v241, %v277
      %v282 = vmul.f32 %v242, %v278
      %v283 = vmul.f32 %v243, %v277
      %v284 = vmul.f32 %v244, %v278
      %v285 = vmul.f32 %v245, %v277
      %v286 = vmul.f32 %v246, %v278
      %v287 = vld [vmem:[%s1] sm:$0xff]
      %v288 = vld [vmem:[%s1 + $0x8] sm:$0xff]
      %v289 = vld [vmem:[%s1 + $0x10] sm:$0xff]
      %v290 = vld [vmem:[%s1 + $0x18] sm:$0xff]
      %v291 = vld [vmem:[%s1 + $0x20] sm:$0xff]
      %v292 = vld [vmem:[%s1 + $0x28] sm:$0xff]
      %v293 = vld [vmem:[%s1 + $0x30] sm:$0xff]
      %v294 = vld [vmem:[%s1 + $0x38] sm:$0xff]
      %v295 = vld [vmem:[%s2] sm:$0xff]
      %v296 = vld [vmem:[%s2 + $0x8] sm:$0xff]
      %v297 = vld [vmem:[%s2 + $0x10] sm:$0xff]
      %v298 = vld [vmem:[%s2 + $0x18] sm:$0xff]
      %v299 = vld [vmem:[%s2 + $0x20] sm:$0xff]
      %v300 = vld [vmem:[%s2 + $0x28] sm:$0xff]
      %v301 = vld [vmem:[%s2 + $0x30] sm:$0xff]
      %v302 = vld [vmem:[%s2 + $0x38] sm:$0xff]
      %304 = vset.pattern.permute.xlu0 0
      %305 = vperm.xlu0 %304, %v295
      %v306 = vpop.permute.xlu0 %305
      %309 = vset.pattern.permute.xlu0 0
      %310 = vperm.xlu0 %309, %v296
      %v311 = vpop.permute.xlu0 %310
      %314 = vset.pattern.permute.xlu0 0
      %315 = vperm.xlu0 %314, %v297
      %v316 = vpop.permute.xlu0 %315
      %319 = vset.pattern.permute.xlu0 0
      %320 = vperm.xlu0 %319, %v298
      %v321 = vpop.permute.xlu0 %320
      %324 = vset.pattern.permute.xlu0 0
      %325 = vperm.xlu0 %324, %v299
      %v326 = vpop.permute.xlu0 %325
      %329 = vset.pattern.permute.xlu0 0
      %330 = vperm.xlu0 %329, %v300
      %v331 = vpop.permute.xlu0 %330
      %334 = vset.pattern.permute.xlu0 0
      %335 = vperm.xlu0 %334, %v301
      %v336 = vpop.permute.xlu0 %335
      %339 = vset.pattern.permute.xlu0 0
      %340 = vperm.xlu0 %339, %v302
      %v341 = vpop.permute.xlu0 %340
      %vm343 = vcmask 261120
      %v345 = vsel %vm343, %v287, 0
      %v348 = vsel %vm343, %v288, 0
      %v351 = vsel %vm343, %v289, 0
      %v354 = vsel %vm343, %v290, 0
      %v357 = vsel %vm343, %v291, 0
      %v360 = vsel %vm343, %v292, 0
      %v363 = vsel %vm343, %v293, 0
      %v366 = vsel %vm343, %v294, 0
      %368 = vmatprep.subr.mxu0 0.0
      %369 = vmatpush1.msra.mxu0 0.0
      %370 = vmatprep.subr.mxu0 0.0
      %371 = vmatpush1.msra.mxu0 0.0
      %372 = vmatprep.subr.mxu0 0.0
      %373 = vmatpush1.msra.mxu0 0.0
      %374 = vmatprep.subr.mxu0 0.0
      %375 = vmatpush1.msra.mxu0 0.0
      %376 = vmatprep.subr.mxu0 0.0
      %377 = vmatpush1.msra.mxu0 0.0
      %378 = vmatprep.subr.mxu0 0.0
      %379 = vmatpush1.msra.mxu0 0.0
      %380 = vmatprep.subr.mxu0 0.0
      %381 = vmatpush1.msra.mxu0 0.0
      %382 = vmatprep.subr.mxu0 0.0
      %383 = vmatpush1.msra.mxu0 0.0
      %384 = vmatprep.subr.mxu0 0.0
      %385 = vmatpush1.msra.mxu0 0.0
      %386 = vmatprep.subr.mxu0 0.0
      %387 = vmatpush1.msra.mxu0 0.0
      %388 = vmatprep.subr.mxu0 0.0
      %389 = vmatpush1.msra.mxu0 0.0
      %390 = vmatprep.subr.mxu0 0.0
      %391 = vmatpush1.msra.mxu0 0.0
      %392 = vmatprep.subr.mxu0 %v286
      %393 = vmatpush1.msra.mxu0 %v285
      %394 = vmatprep.subr.mxu0 %v284
      %395 = vmatpush1.msra.mxu0 %v283
      %396 = vmatprep.subr.mxu0 %v282
      %397 = vmatpush1.msra.mxu0 %v281
      %398 = vmatprep.subr.mxu0 %v280
      %399 = vmatpush1.msra.mxu0 %v279
      %400 = vmatprep.subr.mxu0 0.0
      %401 = vmatpush2.msra.mxu0 0.0
      %402 = vmatprep.subr.mxu0 0.0
      %403 = vmatpush2.msra.mxu0 0.0
      %404 = vmatprep.subr.mxu0 0.0
      %405 = vmatpush2.msra.mxu0 0.0
      %406 = vmatprep.subr.mxu0 0.0
      %407 = vmatpush2.msra.mxu0 0.0
      %408 = vmatprep.subr.mxu0 0.0
      %409 = vmatpush2.msra.mxu0 0.0
      %410 = vmatprep.subr.mxu0 0.0
      %411 = vmatpush2.msra.mxu0 0.0
      %412 = vmatprep.subr.mxu0 0.0
      %413 = vmatpush2.msra.mxu0 0.0
      %414 = vmatprep.subr.mxu0 0.0
      %415 = vmatpush2.msra.mxu0 0.0
      %416 = vmatprep.subr.mxu0 0.0
      %417 = vmatpush2.msra.mxu0 0.0
      %418 = vmatprep.subr.mxu0 0.0
      %419 = vmatpush2.msra.mxu0 0.0
      %420 = vmatprep.subr.mxu0 0.0
      %421 = vmatpush2.msra.mxu0 0.0
      %422 = vmatprep.subr.mxu0 0.0
      %423 = vmatpush2.msra.mxu0 0.0
      %424 = vmatprep.subr.mxu0 0.0
      %425 = vmatpush2.msra.mxu0 0.0
      %426 = vmatprep.subr.mxu0 0.0
      %427 = vmatpush2.msra.mxu0 0.0
      %428 = vmatprep.subr.mxu0 0.0
      %429 = vmatpush2.msra.mxu0 0.0
      %430 = vmatprep.subr.mxu0 0.0
      %431 = vmatpush2.msra.mxu0 0.0
      %432 = vmatprep.mubr.f32.mxu0 0.0
      %433 = vmatmul.mubr.f32.gmra.mxu0 %v345
      %v434 = vpop.f32.mrf.mxu0
      %v435 = vadd.f32 %v306, %v434
      %v436 = vpop.f32.mrf.mxu0
      %v437 = vadd.f32 %v306, %v436
      %438 = vmatprep.mubr.f32.mxu0 0.0
      %439 = vmatmul.mubr.f32.gmra.mxu0 %v348
      %v440 = vpop.f32.mrf.mxu0
      %v441 = vadd.f32 %v311, %v440
      %v442 = vpop.f32.mrf.mxu0
      %v443 = vadd.f32 %v311, %v442
      %444 = vmatprep.mubr.f32.mxu0 0.0
      %445 = vmatmul.mubr.f32.gmra.mxu0 %v351
      %v446 = vpop.f32.mrf.mxu0
      %v447 = vadd.f32 %v316, %v446
      %v448 = vpop.f32.mrf.mxu0
      %v449 = vadd.f32 %v316, %v448
      %450 = vmatprep.mubr.f32.mxu0 0.0
      %451 = vmatmul.mubr.f32.gmra.mxu0 %v354
      %v452 = vpop.f32.mrf.mxu0
      %v453 = vadd.f32 %v321, %v452
      %v454 = vpop.f32.mrf.mxu0
      %v455 = vadd.f32 %v321, %v454
      %456 = vmatprep.mubr.f32.mxu0 0.0
      %457 = vmatmul.mubr.f32.gmra.mxu0 %v357
      %v458 = vpop.f32.mrf.mxu0
      %v459 = vadd.f32 %v326, %v458
      %v460 = vpop.f32.mrf.mxu0
      %v461 = vadd.f32 %v326, %v460
      %462 = vmatprep.mubr.f32.mxu0 0.0
      %463 = vmatmul.mubr.f32.gmra.mxu0 %v360
      %v464 = vpop.f32.mrf.mxu0
      %v465 = vadd.f32 %v331, %v464
      %v466 = vpop.f32.mrf.mxu0
      %v467 = vadd.f32 %v331, %v466
      %468 = vmatprep.mubr.f32.mxu0 0.0
      %469 = vmatmul.mubr.f32.gmra.mxu0 %v363
      %v470 = vpop.f32.mrf.mxu0
      %v471 = vadd.f32 %v336, %v470
      %v472 = vpop.f32.mrf.mxu0
      %v473 = vadd.f32 %v336, %v472
      %474 = vmatprep.mubr.f32.mxu0 0.0
      %475 = vmatmul.mubr.f32.gmra.mxu0 %v366
      %v476 = vpop.f32.mrf.mxu0
      %v477 = vadd.f32 %v341, %v476
      %v478 = vpop.f32.mrf.mxu0
      %v479 = vadd.f32 %v341, %v478
      %480 = vdwg.mxu0
      %481 = vst [vmem:[%s208] sm:$0xff] %v435
      %482 = vst [vmem:[%s208 + $0x8] sm:$0xff] %v437
      %483 = vst [vmem:[%s208 + $0x10] sm:$0xff] %v441
      %484 = vst [vmem:[%s208 + $0x18] sm:$0xff] %v443
      %485 = vst [vmem:[%s208 + $0x20] sm:$0xff] %v447
      %486 = vst [vmem:[%s208 + $0x28] sm:$0xff] %v449
      %487 = vst [vmem:[%s208 + $0x30] sm:$0xff] %v453
      %488 = vst [vmem:[%s208 + $0x38] sm:$0xff] %v455
      %489 = vst [vmem:[%s208 + $0x40] sm:$0xff] %v459
      %490 = vst [vmem:[%s208 + $0x48] sm:$0xff] %v461
      %491 = vst [vmem:[%s208 + $0x50] sm:$0xff] %v465
      %492 = vst [vmem:[%s208 + $0x58] sm:$0xff] %v467
      %493 = vst [vmem:[%s208 + $0x60] sm:$0xff] %v471
      %494 = vst [vmem:[%s208 + $0x68] sm:$0xff] %v473
      %495 = vst [vmem:[%s208 + $0x70] sm:$0xff] %v477
      %496 = vst [vmem:[%s208 + $0x78] sm:$0xff] %v479
      %s497 = smul.u32 2, %s19
      %p498 = scmp.lt.s32.totalorder %s18, 1
      %s499 = scalar_select %p498, %s18, 1
      %p500 = scmp.lt.s32.totalorder %s497, 1
      %s501 = scalar_select %p500, %s497, 1
      %s502 = smul.addr %s499, 16
      %s503 = sadd.s32 %s501, %s502
      %s504 = smul.addr %s503, 8
      %s505 = scalar_lea.vmem %s3, %s504
      // Predicated region
      $region33: #{ctransformer_block.10} parent=31 // pred_check
        %p506 = pneg %p116
      $region34: #{ctransformer_block.10} parent=31 // pred_check_branch
        %508 = sbr.rel (%p506) target = $region36
      $region35: #{ctransformer_block.10} parent=31 // pred_region
        %s509 = smul.u32 2, %s19
      $region36: #{ctransformer_block.10} parent=31 // pred_fallthru
        _
    $region32: #{ctransformer_block.10} parent=5 // pred_fallthru
      _
    %p510 = scmp.le.s32.totalorder 2, %s9
    // Predicated region
    $region37: #{ctransformer_block.10} parent=5 // pred_check
      %p511 = pneg %p510
    $region38: #{ctransformer_block.10} parent=5 // pred_check_branch
      %513 = sbr.rel (%p511) target = $region40
    $region39: #{ctransformer_block.10} parent=5 // pred_region
      %s514 = ssub.s32 %s9, 2
      // Predicated region
      $region41: #{ctransformer_block.10} parent=39 // pred_check
        %p515 = pneg %p122
      $region42: #{ctransformer_block.10} parent=39 // pred_check_branch
        %517 = sbr.rel (%p515) target = $region44
      $region43: #{ctransformer_block.10} parent=39 // pred_region
        %s518 = smul.u32 2, %s21
        %p519 = scmp.lt.s32.totalorder %s20, 1
        %s520 = scalar_select %p519, %s20, 1
        %p521 = scmp.lt.s32.totalorder %s518, 1
        %s522 = scalar_select %p521, %s518, 1
        %s523 = smul.addr %s520, 16
        %s524 = sadd.s32 %s522, %s523
        %s525 = smul.addr %s524, 8
        %s526 = scalar_lea.vmem %s3, %s525
      $region44: #{ctransformer_block.10} parent=39 // pred_fallthru
        _
    $region40: #{ctransformer_block.10} parent=5 // pred_fallthru
      _
  $region6: #{ctransformer_block.10} parent=0 // loop_footer
    %s13 = sadd.s32 1, %s9
  $region7: #{ctransformer_block.10} parent=0 // loop_footer_branch
    %8 = sbr.rel target = $region3
  $region8: #{ctransformer_block.10} parent=0 // loop_exit
    _

// kernel: ctransformer_block.11
$region0: #{ctransformer_block.11}
  #allocation0 [shape = 'u32[]', space=smem, size = 0x4, offset = 0x4, fixed_abs, tag = 'smem constant byte address 0x4 - core index']
  #allocation1 [shape = 'u32[144,128]{1,0:T(1,128)}', space=vmem, size = 0x12000, scoped, tag = 'internal scratch']
  #allocation2 [shape = 'f32[64,512]{1,0:T(8,128)}', space=vmem, size = 0x20000, scoped, tag = 'scratch operand']
  %s0 = inlined_call_operand.vmem [shape: f32[2,64,256], index: 0, kind: input, shape index: {}]
  %s1 = inlined_call_operand.vmem [shape: f32[64,9], index: 1, kind: input, shape index: {}]
  %s2 = inlined_call_operand.vmem [shape: f32[3,256], index: 2, kind: input, shape index: {}]
  %s3 = inlined_call_operand.vmem [shape: f32[2,64,256], index: 3, kind: output, shape index: {}]
  %s4 = sld [smem:[#allocation0]]
  $region45: #{ctransformer_block.11} parent=0
    _
  %s6 = ssub.s32 1, %s4
  %s7 = scalar_select 0, %s6, %s4
  loop: start=0, step=1, limit=4
  $region2: #{ctransformer_block.11} parent=0 // loop_pre_header
    _
  $region3: #{ctransformer_block.11} parent=0 // loop_header
    %s9 = sphi 0, %s13
    %p10 = scmp.ge.s32.totalorder %s9, 4
    %s16 = sphi 0, %s28
    %s17 = sphi 0, %s24
    %s18 = sphi 0, %s16
    %s19 = sphi 0, %s17
    %s20 = sphi 0, %s18
    %s21 = sphi 0, %s19
    %s33 = sphi 0, %s35
    %s36 = sphi 0, %s33
    %s37 = sphi 0, %s36
    %s53 = sphi 0, %s37
    %s59 = sphi 0, %s61
    %s62 = sphi 0, %s59
    %s63 = sphi 0, %s62
    %s79 = sphi 0, %s63
    %s83 = sphi 0, %s83
    %s85 = sphi 0, %s83
    %s86 = sphi 0, %s85
    %s100 = sphi 0, %s86
    %s108 = sphi 0, %s110
    %s111 = sphi 0, %s108
    %s112 = sphi 0, %s111
    %s128 = sphi 0, %s112
  $region4: #{ctransformer_block.11} parent=0 // loop_header_branch
    %12 = sbr.rel (%p10) target = $region8
  $region5: #{ctransformer_block.11} parent=0 // loop_body
    %s14 = ssub.s32 %s9, 1
    %s15 = ssub.s32 %s9, 2
    %s22 = sadd.s32 1, %s17
    %p23 = scmp.ge.s32.totalorder %s22, 1
    %s24 = scalar_select %p23, 0, %s22
    %s25 = sadd.s32 1, %s16
    %s26 = scalar_select %p23, %s25, %s16
    %p27 = scmp.ge.s32.totalorder %s26, 2
    %s28 = scalar_select %p27, 0, %s26
    %s29 = ssub.s32 %s16, %s28
    %s30 = ssub.s32 %s17, %s24
    %s31 = sor.u32 %s29, %s30
    %p32 = scmp.eq.s32.totalorder %s31, 0
    %s34 = sadd.s32 %s33, 1
    %s35 = scalar_select %p32, %s33, %s34
    %p38 = pneg %p32
    %p39 = scmp.eq.s32.totalorder %s9, 1
    %p40 = por %p38, %p39
    %p41 = scmp.ne.s32.totalorder %s33, %s36
    %p42 = scmp.eq.s32.totalorder %s9, 0
    %p43 = por %p41, %p42
    %p44 = scmp.ne.s32.totalorder %s33, %s36
    %p45 = scmp.eq.s32.totalorder %s14, 1
    %p46 = por %p44, %p45
    %p47 = scmp.ne.s32.totalorder %s36, %s37
    %p48 = scmp.eq.s32.totalorder %s14, 0
    %p49 = por %p47, %p48
    %p50 = scmp.ne.s32.totalorder %s36, %s37
    %p51 = scmp.eq.s32.totalorder %s15, 1
    %p52 = por %p50, %p51
    %p54 = scmp.ne.s32.totalorder %s37, %s53
    %p55 = scmp.eq.s32.totalorder %s15, 0
    %p56 = por %p54, %p55
    %s57 = ssub.s32 %s17, %s24
    %p58 = scmp.eq.s32.totalorder %s57, 0
    %s60 = sadd.s32 %s59, 1
    %s61 = scalar_select %p58, %s59, %s60
    %p64 = pneg %p58
    %p65 = scmp.eq.s32.totalorder %s9, 1
    %p66 = por %p64, %p65
    %p67 = scmp.ne.s32.totalorder %s59, %s62
    %p68 = scmp.eq.s32.totalorder %s9, 0
    %p69 = por %p67, %p68
    %p70 = scmp.ne.s32.totalorder %s59, %s62
    %p71 = scmp.eq.s32.totalorder %s14, 1
    %p72 = por %p70, %p71
    %p73 = scmp.ne.s32.totalorder %s62, %s63
    %p74 = scmp.eq.s32.totalorder %s14, 0
    %p75 = por %p73, %p74
    %p76 = scmp.ne.s32.totalorder %s62, %s63
    %p77 = scmp.eq.s32.totalorder %s15, 1
    %p78 = por %p76, %p77
    %p80 = scmp.ne.s32.totalorder %s63, %s79
    %p81 = scmp.eq.s32.totalorder %s15, 0
    %p82 = por %p80, %p81
    %s84 = sadd.s32 %s83, 1
    %p87 = scmp.eq.s32.totalorder %s9, 1
    %p88 = scmp.ne.s32.totalorder %s83, %s85
    %p89 = scmp.eq.s32.totalorder %s9, 0
    %p90 = por %p88, %p89
    %p91 = scmp.ne.s32.totalorder %s83, %s85
    %p92 = scmp.eq.s32.totalorder %s14, 1
    %p93 = por %p91, %p92
    %p94 = scmp.ne.s32.totalorder %s85, %s86
    %p95 = scmp.eq.s32.totalorder %s14, 0
    %p96 = por %p94, %p95
    %p97 = scmp.ne.s32.totalorder %s85, %s86
    %p98 = scmp.eq.s32.totalorder %s15, 1
    %p99 = por %p97, %p98
    %p101 = scmp.ne.s32.totalorder %s86, %s100
    %p102 = scmp.eq.s32.totalorder %s15, 0
    %p103 = por %p101, %p102
    %s104 = ssub.s32 %s16, %s28
    %s105 = ssub.s32 %s17, %s24
    %s106 = sor.u32 %s104, %s105
    %p107 = scmp.eq.s32.totalorder %s106, 0
    %s109 = sadd.s32 %s108, 1
    %s110 = scalar_select %p107, %s108, %s109
    %p113 = pneg %p107
    %p114 = scmp.eq.s32.totalorder %s9, 1
    %p115 = por %p113, %p114
    %p116 = scmp.ne.s32.totalorder %s108, %s111
    %p117 = scmp.eq.s32.totalorder %s9, 0
    %p118 = por %p116, %p117
    %p119 = scmp.ne.s32.totalorder %s108, %s111
    %p120 = scmp.eq.s32.totalorder %s14, 1
    %p121 = por %p119, %p120
    %p122 = scmp.ne.s32.totalorder %s111, %s112
    %p123 = scmp.eq.s32.totalorder %s14, 0
    %p124 = por %p122, %p123
    %p125 = scmp.ne.s32.totalorder %s111, %s112
    %p126 = scmp.eq.s32.totalorder %s15, 1
    %p127 = por %p125, %p126
    %p129 = scmp.ne.s32.totalorder %s112, %s128
    %p130 = scmp.eq.s32.totalorder %s15, 0
    %p131 = por %p129, %p130
    %p132 = scmp.le.s32.totalorder 1, %s9
    %p133 = scmp.lt.s32.totalorder %s9, 3
    %p134 = pnand %p132, %p133
    %p135 = pneg %p134
    // Predicated region
    $region9: #{ctransformer_block.11} parent=5 // pred_check
      _
    $region10: #{ctransformer_block.11} parent=5 // pred_check_branch
      %137 = sbr.rel (%p134) target = $region12
    $region11: #{ctransformer_block.11} parent=5 // pred_region
      %s138 = ssub.s32 %s9, 1
      // Predicated region
      $region13: #{ctransformer_block.11} parent=11 // pred_check
        %p139 = pneg %p75
      $region14: #{ctransformer_block.11} parent=11 // pred_check_branch
        %141 = sbr.rel (%p139) target = $region16
      $region15: #{ctransformer_block.11} parent=11 // pred_region
        %s142 = smul.u32 8, %s19
        %p143 = scmp.lt.s32.totalorder %s142, 7
        %s144 = scalar_select %p143, %s142, 7
        %s145 = smul.addr %s144, 8
        %s146 = scalar_lea.vmem %s1, %s145
        %s147 = smul.u32 8, %s19
      $region16: #{ctransformer_block.11} parent=11 // pred_fallthru
        _
      // Predicated region
      $region17: #{ctransformer_block.11} parent=11 // pred_check
        %p148 = pneg %p96
      $region18: #{ctransformer_block.11} parent=11 // pred_check_branch
        %150 = sbr.rel (%p148) target = $region20
      $region19: #{ctransformer_block.11} parent=11 // pred_region
        _
      $region20: #{ctransformer_block.11} parent=11 // pred_fallthru
        _
    $region12: #{ctransformer_block.11} parent=5 // pred_fallthru
      _
    %p151 = scmp.lt.s32.totalorder %s9, 2
    // Predicated region
    $region21: #{ctransformer_block.11} parent=5 // pred_check
      %p152 = pneg %p151
    $region22: #{ctransformer_block.11} parent=5 // pred_check_branch
      %154 = sbr.rel (%p152) target = $region24
    $region23: #{ctransformer_block.11} parent=5 // pred_region
      // Predicated region
      $region25: #{ctransformer_block.11} parent=23 // pred_check
        %p155 = pneg %p43
      $region26: #{ctransformer_block.11} parent=23 // pred_check_branch
        %157 = sbr.rel (%p155) target = $region28
      $region27: #{ctransformer_block.11} parent=23 // pred_region
        %s158 = smul.u32 8, %s17
        %p159 = scmp.lt.s32.totalorder %s16, 1
        %s160 = scalar_select %p159, %s16, 1
        %p161 = scmp.lt.s32.totalorder %s158, 7
        %s162 = scalar_select %p161, %s158, 7
        %s163 = smul.addr %s162, 2
        %s164 = smul.addr %s160, 16
        %s165 = sadd.s32 %s163, %s164
        %s166 = smul.addr %s165, 8
        %s167 = scalar_lea.vmem %s0, %s166
        %s168 = smul.u32 8, %s17
      $region28: #{ctransformer_block.11} parent=23 // pred_fallthru
        _
    $region24: #{ctransformer_block.11} parent=5 // pred_fallthru
      _
    %p169 = scmp.le.s32.totalorder 1, %s9
    %p170 = scmp.lt.s32.totalorder %s9, 3
    %p171 = pnand %p169, %p170
    %p172 = pneg %p171
    // Predicated region
    $region29: #{ctransformer_block.11} parent=5 // pred_check
      _
    $region30: #{ctransformer_block.11} parent=5 // pred_check_branch
      %174 = sbr.rel (%p171) target = $region32
    $region31: #{ctransformer_block.11} parent=5 // pred_region
      %s175 = ssub.s32 %s9, 1
      %s176 = smul.u32 8, %s19
      %p177 = scmp.lt.s32.totalorder %s18, 1
      %s178 = scalar_select %p177, %s18, 1
      %p179 = scmp.lt.s32.totalorder %s176, 7
      %s180 = scalar_select %p179, %s176, 7
      %s181 = smul.addr %s180, 2
      %s182 = smul.addr %s178, 16
      %s183 = sadd.s32 %s181, %s182
      %s184 = smul.addr %s183, 8
      %s185 = scalar_lea.vmem %s0, %s184
      %p186 = pneg %p49
      %p187 = pneg %p46
      %s188 = smul.u32 8, %s19
      %p189 = scmp.lt.s32.totalorder %s188, 7
      %s190 = scalar_select %p189, %s188, 7
      %s191 = smul.addr %s190, 8
      %s192 = scalar_lea.vmem %s1, %s191
      %p193 = pneg %p75
      %p194 = pneg %p72
      %p195 = pneg %p96
      %p196 = pneg %p93
      %p197 = pneg %p124
      %p198 = pneg %p121
      %s199 = smul.u32 8, %s19
      %p200 = scmp.lt.s32.totalorder %s18, 1
      %s201 = scalar_select %p200, %s18, 1
      %p202 = scmp.lt.s32.totalorder %s199, 7
      %s203 = scalar_select %p202, %s199, 7
      %s204 = smul.addr %s203, 2
      %s205 = smul.addr %s201, 16
      %s206 = sadd.s32 %s204, %s205
      %s207 = smul.addr %s206, 8
      %s208 = scalar_lea.vmem %s3, %s207
      %s209 = smul.u32 8, %s19
      %p210 = scmp.lt.s32.totalorder %s18, 1
      %s211 = scalar_select %p210, %s18, 1
      %p212 = scmp.lt.s32.totalorder %s209, 7
      %s213 = scalar_select %p212, %s209, 7
      %s214 = smul.addr %s213, 2
      %s215 = smul.addr %s211, 16
      %s216 = sadd.s32 %s214, %s215
      %s217 = smul.addr %s216, 8
      %s218 = scalar_lea.vmem %s0, %s217
      %s219 = smul.u32 8, %s19
      %s220 = smul.u32 8, %s19
      %p221 = scmp.lt.s32.totalorder %s220, 7
      %s222 = scalar_select %p221, %s220, 7
      %s223 = smul.addr %s222, 8
      %s224 = scalar_lea.vmem %s1, %s223
      %s225 = smul.u32 8, %s19
      %s226 = smul.u32 8, %s19
      %p227 = scmp.lt.s32.totalorder %s18, 1
      %s228 = scalar_select %p227, %s18, 1
      %p229 = scmp.lt.s32.totalorder %s226, 7
      %s230 = scalar_select %p229, %s226, 7
      %s231 = smul.addr %s230, 2
      %s232 = smul.addr %s228, 16
      %s233 = sadd.s32 %s231, %s232
      %s234 = smul.addr %s233, 8
      %s235 = scalar_lea.vmem %s3, %s234
      %s236 = smul.u32 8, %s19
      %237 = vst [vmem:[#allocation2] sm:$0xff] 0.0
      %238 = vst [vmem:[#allocation2 + $0x8] sm:$0xff] 0.0
      %239 = vst [vmem:[#allocation2 + $0x10] sm:$0xff] 0.0
      %240 = vst [vmem:[#allocation2 + $0x18] sm:$0xff] 0.0
      %241 = vst [vmem:[#allocation2 + $0x20] sm:$0xff] 0.0
      %242 = vst [vmem:[#allocation2 + $0x28] sm:$0xff] 0.0
      %243 = vst [vmem:[#allocation2 + $0x30] sm:$0xff] 0.0
      %244 = vst [vmem:[#allocation2 + $0x38] sm:$0xff] 0.0
      %245 = vst [vmem:[#allocation2 + $0x40] sm:$0xff] 0.0
      %246 = vst [vmem:[#allocation2 + $0x48] sm:$0xff] 0.0
      %247 = vst [vmem:[#allocation2 + $0x50] sm:$0xff] 0.0
      %248 = vst [vmem:[#allocation2 + $0x58] sm:$0xff] 0.0
      %249 = vst [vmem:[#allocation2 + $0x60] sm:$0xff] 0.0
      %250 = vst [vmem:[#allocation2 + $0x68] sm:$0xff] 0.0
      %251 = vst [vmem:[#allocation2 + $0x70] sm:$0xff] 0.0
      %252 = vst [vmem:[#allocation2 + $0x78] sm:$0xff] 0.0
      %253 = vst [vmem:[#allocation2 + $0x80] sm:$0xff] 0.0
      %254 = vst [vmem:[#allocation2 + $0x88] sm:$0xff] 0.0
      %255 = vst [vmem:[#allocation2 + $0x90] sm:$0xff] 0.0
      %256 = vst [vmem:[#allocation2 + $0x98] sm:$0xff] 0.0
      %257 = vst [vmem:[#allocation2 + $0xa0] sm:$0xff] 0.0
      %258 = vst [vmem:[#allocation2 + $0xa8] sm:$0xff] 0.0
      %259 = vst [vmem:[#allocation2 + $0xb0] sm:$0xff] 0.0
      %260 = vst [vmem:[#allocation2 + $0xb8] sm:$0xff] 0.0
      %261 = vst [vmem:[#allocation2 + $0xc0] sm:$0xff] 0.0
      %262 = vst [vmem:[#allocation2 + $0xc8] sm:$0xff] 0.0
      %263 = vst [vmem:[#allocation2 + $0xd0] sm:$0xff] 0.0
      %264 = vst [vmem:[#allocation2 + $0xd8] sm:$0xff] 0.0
      %265 = vst [vmem:[#allocation2 + $0xe0] sm:$0xff] 0.0
      %266 = vst [vmem:[#allocation2 + $0xe8] sm:$0xff] 0.0
      %267 = vst [vmem:[#allocation2 + $0xf0] sm:$0xff] 0.0
      %268 = vst [vmem:[#allocation2 + $0xf8] sm:$0xff] 0.0
      %v269 = vld [vmem:[%s218] sm:$0xff]
      %v270 = vld [vmem:[%s218 + $0x8] sm:$0xff]
      %v271 = vld [vmem:[%s218 + $0x10] sm:$0xff]
      %v272 = vld [vmem:[%s218 + $0x18] sm:$0xff]
      %v273 = vld [vmem:[%s218 + $0x20] sm:$0xff]
      %v274 = vld [vmem:[%s218 + $0x28] sm:$0xff]
      %v275 = vld [vmem:[%s218 + $0x30] sm:$0xff]
      %v276 = vld [vmem:[%s218 + $0x38] sm:$0xff]
      %v277 = vld [vmem:[%s218 + $0x40] sm:$0xff]
      %v278 = vld [vmem:[%s218 + $0x48] sm:$0xff]
      %v279 = vld [vmem:[%s218 + $0x50] sm:$0xff]
      %v280 = vld [vmem:[%s218 + $0x58] sm:$0xff]
      %v281 = vld [vmem:[%s218 + $0x60] sm:$0xff]
      %v282 = vld [vmem:[%s218 + $0x68] sm:$0xff]
      %v283 = vld [vmem:[%s218 + $0x70] sm:$0xff]
      %v284 = vld [vmem:[%s218 + $0x78] sm:$0xff]
      %285 = vst [vmem:[#allocation2 + $0x8] sm:$0xff] %v269
      %286 = vst [vmem:[#allocation2 + $0x10] sm:$0xff] %v270
      %287 = vst [vmem:[#allocation2 + $0x28] sm:$0xff] %v271
      %288 = vst [vmem:[#allocation2 + $0x30] sm:$0xff] %v272
      %289 = vst [vmem:[#allocation2 + $0x48] sm:$0xff] %v273
      %290 = vst [vmem:[#allocation2 + $0x50] sm:$0xff] %v274
      %291 = vst [vmem:[#allocation2 + $0x68] sm:$0xff] %v275
      %292 = vst [vmem:[#allocation2 + $0x70] sm:$0xff] %v276
      %293 = vst [vmem:[#allocation2 + $0x88] sm:$0xff] %v277
      %294 = vst [vmem:[#allocation2 + $0x90] sm:$0xff] %v278
      %295 = vst [vmem:[#allocation2 + $0xa8] sm:$0xff] %v279
      %296 = vst [vmem:[#allocation2 + $0xb0] sm:$0xff] %v280
      %297 = vst [vmem:[#allocation2 + $0xc8] sm:$0xff] %v281
      %298 = vst [vmem:[#allocation2 + $0xd0] sm:$0xff] %v282
      %299 = vst [vmem:[#allocation2 + $0xe8] sm:$0xff] %v283
      %300 = vst [vmem:[#allocation2 + $0xf0] sm:$0xff] %v284
      %v301 = vld [vmem:[#allocation2] sm:$0xff]
      %v302 = vld [vmem:[#allocation2 + $0x8] sm:$0xff]
      %v303 = vld [vmem:[#allocation2 + $0x10] sm:$0xff]
      %v304 = vld [vmem:[#allocation2 + $0x20] sm:$0xff]
      %v305 = vld [vmem:[#allocation2 + $0x28] sm:$0xff]
      %v306 = vld [vmem:[#allocation2 + $0x30] sm:$0xff]
      %v307 = vld [vmem:[#allocation2 + $0x40] sm:$0xff]
      %v308 = vld [vmem:[#allocation2 + $0x48] sm:$0xff]
      %v309 = vld [vmem:[#allocation2 + $0x50] sm:$0xff]
      %v310 = vld [vmem:[#allocation2 + $0x60] sm:$0xff]
      %v311 = vld [vmem:[#allocation2 + $0x68] sm:$0xff]
      %v312 = vld [vmem:[#allocation2 + $0x70] sm:$0xff]
      %v313 = vld [vmem:[#allocation2 + $0x80] sm:$0xff]
      %v314 = vld [vmem:[#allocation2 + $0x88] sm:$0xff]
      %v315 = vld [vmem:[#allocation2 + $0x90] sm:$0xff]
      %v316 = vld [vmem:[#allocation2 + $0xa0] sm:$0xff]
      %v317 = vld [vmem:[#allocation2 + $0xa8] sm:$0xff]
      %v318 = vld [vmem:[#allocation2 + $0xb0] sm:$0xff]
      %v319 = vld [vmem:[#allocation2 + $0xc0] sm:$0xff]
      %v320 = vld [vmem:[#allocation2 + $0xc8] sm:$0xff]
      %v321 = vld [vmem:[#allocation2 + $0xd0] sm:$0xff]
      %v322 = vld [vmem:[#allocation2 + $0xe0] sm:$0xff]
      %v323 = vld [vmem:[#allocation2 + $0xe8] sm:$0xff]
      %v324 = vld [vmem:[#allocation2 + $0xf0] sm:$0xff]
      %v325 = vld [vmem:[%s224] sm:$0xff]
      %v326 = vld [vmem:[%s224 + $0x8] sm:$0xff]
      %v327 = vld [vmem:[%s224 + $0x10] sm:$0xff]
      %v328 = vld [vmem:[%s224 + $0x18] sm:$0xff]
      %v329 = vld [vmem:[%s224 + $0x20] sm:$0xff]
      %v330 = vld [vmem:[%s224 + $0x28] sm:$0xff]
      %v331 = vld [vmem:[%s224 + $0x30] sm:$0xff]
      %v332 = vld [vmem:[%s224 + $0x38] sm:$0xff]
      %334 = vset.pattern.permute.xlu0 0
      %335 = vperm.xlu0 %334, %v325
      %v336 = vpop.permute.xlu0 %335
      %339 = vset.pattern.permute.xlu0 0
      %340 = vperm.xlu0 %339, %v326
      %v341 = vpop.permute.xlu0 %340
      %344 = vset.pattern.permute.xlu0 0
      %345 = vperm.xlu0 %344, %v327
      %v346 = vpop.permute.xlu0 %345
      %349 = vset.pattern.permute.xlu0 0
      %350 = vperm.xlu0 %349, %v328
      %v351 = vpop.permute.xlu0 %350
      %354 = vset.pattern.permute.xlu0 0
      %355 = vperm.xlu0 %354, %v329
      %v356 = vpop.permute.xlu0 %355
      %359 = vset.pattern.permute.xlu0 0
      %360 = vperm.xlu0 %359, %v330
      %v361 = vpop.permute.xlu0 %360
      %364 = vset.pattern.permute.xlu0 0
      %365 = vperm.xlu0 %364, %v331
      %v366 = vpop.permute.xlu0 %365
      %369 = vset.pattern.permute.xlu0 0
      %370 = vperm.xlu0 %369, %v332
      %v371 = vpop.permute.xlu0 %370
      %v373 = vmul.f32 %v301, %v336
      %v374 = vmul.f32 %v302, %v336
      %v375 = vmul.f32 %v303, %v336
      %v376 = vmul.f32 %v304, %v341
      %v377 = vmul.f32 %v305, %v341
      %v378 = vmul.f32 %v306, %v341
      %v379 = vmul.f32 %v307, %v346
      %v380 = vmul.f32 %v308, %v346
      %v381 = vmul.f32 %v309, %v346
      %v382 = vmul.f32 %v310, %v351
      %v383 = vmul.f32 %v311, %v351
      %v384 = vmul.f32 %v312, %v351
      %v385 = vmul.f32 %v313, %v356
      %v386 = vmul.f32 %v314, %v356
      %v387 = vmul.f32 %v315, %v356
      %v388 = vmul.f32 %v316, %v361
      %v389 = vmul.f32 %v317, %v361
      %v390 = vmul.f32 %v318, %v361
      %v391 = vmul.f32 %v319, %v366
      %v392 = vmul.f32 %v320, %v366
      %v393 = vmul.f32 %v321, %v366
      %v394 = vmul.f32 %v322, %v371
      %v395 = vmul.f32 %v323, %v371
      %v396 = vmul.f32 %v324, %v371
      %v397 = vadd.f32 %v373, 0.0
      %v398 = vadd.f32 %v374, 0.0
      %v399 = vadd.f32 %v375, 0.0
      %v400 = vadd.f32 %v376, 0.0
      %v401 = vadd.f32 %v377, 0.0
      %v402 = vadd.f32 %v378, 0.0
      %v403 = vadd.f32 %v379, 0.0
      %v404 = vadd.f32 %v380, 0.0
      %v405 = vadd.f32 %v381, 0.0
      %v406 = vadd.f32 %v382, 0.0
      %v407 = vadd.f32 %v383, 0.0
      %v408 = vadd.f32 %v384, 0.0
      %v409 = vadd.f32 %v385, 0.0
      %v410 = vadd.f32 %v386, 0.0
      %v411 = vadd.f32 %v387, 0.0
      %v412 = vadd.f32 %v388, 0.0
      %v413 = vadd.f32 %v389, 0.0
      %v414 = vadd.f32 %v390, 0.0
      %v415 = vadd.f32 %v391, 0.0
      %v416 = vadd.f32 %v392, 0.0
      %v417 = vadd.f32 %v393, 0.0
      %v418 = vadd.f32 %v394, 0.0
      %v419 = vadd.f32 %v395, 0.0
      %v420 = vadd.f32 %v396, 0.0
      %421 = vset.pattern.permute.xlu0 3
      %422 = vperm.xlu0 %421, %v325
      %v423 = vpop.permute.xlu0 %422
      %425 = vset.pattern.permute.xlu0 3
      %426 = vperm.xlu0 %425, %v326
      %v427 = vpop.permute.xlu0 %426
      %429 = vset.pattern.permute.xlu0 3
      %430 = vperm.xlu0 %429, %v327
      %v431 = vpop.permute.xlu0 %430
      %433 = vset.pattern.permute.xlu0 3
      %434 = vperm.xlu0 %433, %v328
      %v435 = vpop.permute.xlu0 %434
      %437 = vset.pattern.permute.xlu0 3
      %438 = vperm.xlu0 %437, %v329
      %v439 = vpop.permute.xlu0 %438
      %441 = vset.pattern.permute.xlu0 3
      %442 = vperm.xlu0 %441, %v330
      %v443 = vpop.permute.xlu0 %442
      %445 = vset.pattern.permute.xlu0 3
      %446 = vperm.xlu0 %445, %v331
      %v447 = vpop.permute.xlu0 %446
      %449 = vset.pattern.permute.xlu0 3
      %450 = vperm.xlu0 %449, %v332
      %v451 = vpop.permute.xlu0 %450
      %v453 = vmul.f32 %v301, %v423
      %v454 = vmul.f32 %v302, %v423
      %v455 = vmul.f32 %v303, %v423
      %v456 = vmul.f32 %v304, %v427
      %v457 = vmul.f32 %v305, %v427
      %v458 = vmul.f32 %v306, %v427
      %v459 = vmul.f32 %v307, %v431
      %v460 = vmul.f32 %v308, %v431
      %v461 = vmul.f32 %v309, %v431
      %v462 = vmul.f32 %v310, %v435
      %v463 = vmul.f32 %v311, %v435
      %v464 = vmul.f32 %v312, %v435
      %v465 = vmul.f32 %v313, %v439
      %v466 = vmul.f32 %v314, %v439
      %v467 = vmul.f32 %v315, %v439
      %v468 = vmul.f32 %v316, %v443
      %v469 = vmul.f32 %v317, %v443
      %v470 = vmul.f32 %v318, %v443
      %v471 = vmul.f32 %v319, %v447
      %v472 = vmul.f32 %v320, %v447
      %v473 = vmul.f32 %v321, %v447
      %v474 = vmul.f32 %v322, %v451
      %v475 = vmul.f32 %v323, %v451
      %v476 = vmul.f32 %v324, %v451
      %501 = vrot.lane.b32.xlu0 %v453, 112
      %v502 = vpop.permute.xlu0 %501
      %503 = vrot.lane.b32.xlu0 %v454, 112
      %v504 = vpop.permute.xlu0 %503
      %505 = vrot.lane.b32.xlu0 %v455, 112
      %v506 = vpop.permute.xlu0 %505
      %507 = vrot.lane.b32.xlu0 %v456, 112
      %v508 = vpop.permute.xlu0 %507
      %509 = vrot.lane.b32.xlu0 %v457, 112
      %v510 = vpop.permute.xlu0 %509
      %511 = vrot.lane.b32.xlu0 %v458, 112
      %v512 = vpop.permute.xlu0 %511
      %513 = vrot.lane.b32.xlu0 %v459, 112
      %v514 = vpop.permute.xlu0 %513
      %515 = vrot.lane.b32.xlu0 %v460, 112
      %v516 = vpop.permute.xlu0 %515
      %517 = vrot.lane.b32.xlu0 %v461, 112
      %v518 = vpop.permute.xlu0 %517
      %519 = vrot.lane.b32.xlu0 %v462, 112
      %v520 = vpop.permute.xlu0 %519
      %521 = vrot.lane.b32.xlu0 %v463, 112
      %v522 = vpop.permute.xlu0 %521
      %523 = vrot.lane.b32.xlu0 %v464, 112
      %v524 = vpop.permute.xlu0 %523
      %525 = vrot.lane.b32.xlu0 %v465, 112
      %v526 = vpop.permute.xlu0 %525
      %527 = vrot.lane.b32.xlu0 %v466, 112
      %v528 = vpop.permute.xlu0 %527
      %529 = vrot.lane.b32.xlu0 %v467, 112
      %v530 = vpop.permute.xlu0 %529
      %531 = vrot.lane.b32.xlu0 %v468, 112
      %v532 = vpop.permute.xlu0 %531
      %533 = vrot.lane.b32.xlu0 %v469, 112
      %v534 = vpop.permute.xlu0 %533
      %535 = vrot.lane.b32.xlu0 %v470, 112
      %v536 = vpop.permute.xlu0 %535
      %537 = vrot.lane.b32.xlu0 %v471, 112
      %v538 = vpop.permute.xlu0 %537
      %539 = vrot.lane.b32.xlu0 %v472, 112
      %v540 = vpop.permute.xlu0 %539
      %541 = vrot.lane.b32.xlu0 %v473, 112
      %v542 = vpop.permute.xlu0 %541
      %543 = vrot.lane.b32.xlu0 %v474, 112
      %v544 = vpop.permute.xlu0 %543
      %545 = vrot.lane.b32.xlu0 %v475, 112
      %v546 = vpop.permute.xlu0 %545
      %547 = vrot.lane.b32.xlu0 %v476, 112
      %v548 = vpop.permute.xlu0 %547
      %vm549 = vcmask 916480
      %v550 = vsel %vm549, %v502, %v504
      %v551 = vsel %vm549, %v504, %v506
      %v552 = vsel %vm549, %v508, %v510
      %v553 = vsel %vm549, %v510, %v512
      %v554 = vsel %vm549, %v514, %v516
      %v555 = vsel %vm549, %v516, %v518
      %v556 = vsel %vm549, %v520, %v522
      %v557 = vsel %vm549, %v522, %v524
      %v558 = vsel %vm549, %v526, %v528
      %v559 = vsel %vm549, %v528, %v530
      %v560 = vsel %vm549, %v532, %v534
      %v561 = vsel %vm549, %v534, %v536
      %v562 = vsel %vm549, %v538, %v540
      %v563 = vsel %vm549, %v540, %v542
      %v564 = vsel %vm549, %v544, %v546
      %v565 = vsel %vm549, %v546, %v548
      %v590 = vadd.f32 %v397, %v550
      %v591 = vadd.f32 %v398, %v551
      %v592 = vadd.f32 %v399, %v506
      %v593 = vadd.f32 %v400, %v552
      %v594 = vadd.f32 %v401, %v553
      %v595 = vadd.f32 %v402, %v512
      %v596 = vadd.f32 %v403, %v554
      %v597 = vadd.f32 %v404, %v555
      %v598 = vadd.f32 %v405, %v518
      %v599 = vadd.f32 %v406, %v556
      %v600 = vadd.f32 %v407, %v557
      %v601 = vadd.f32 %v408, %v524
      %v602 = vadd.f32 %v409, %v558
      %v603 = vadd.f32 %v410, %v559
      %v604 = vadd.f32 %v411, %v530
      %v605 = vadd.f32 %v412, %v560
      %v606 = vadd.f32 %v413, %v561
      %v607 = vadd.f32 %v414, %v536
      %v608 = vadd.f32 %v415, %v562
      %v609 = vadd.f32 %v416, %v563
      %v610 = vadd.f32 %v417, %v542
      %v611 = vadd.f32 %v418, %v564
      %v612 = vadd.f32 %v419, %v565
      %v613 = vadd.f32 %v420, %v548
      %v614 = vld [vmem:[#allocation2 + $0x8] sm:$0xff]
      %v615 = vld [vmem:[#allocation2 + $0x10] sm:$0xff]
      %v616 = vld [vmem:[#allocation2 + $0x18] sm:$0xff]
      %v617 = vld [vmem:[#allocation2 + $0x28] sm:$0xff]
      %v618 = vld [vmem:[#allocation2 + $0x30] sm:$0xff]
      %v619 = vld [vmem:[#allocation2 + $0x38] sm:$0xff]
      %v620 = vld [vmem:[#allocation2 + $0x48] sm:$0xff]
      %v621 = vld [vmem:[#allocation2 + $0x50] sm:$0xff]
      %v622 = vld [vmem:[#allocation2 + $0x58] sm:$0xff]
      %v623 = vld [vmem:[#allocation2 + $0x68] sm:$0xff]
      %v624 = vld [vmem:[#allocation2 + $0x70] sm:$0xff]
      %v625 = vld [vmem:[#allocation2 + $0x78] sm:$0xff]
      %v626 = vld [vmem:[#allocation2 + $0x88] sm:$0xff]
      %v627 = vld [vmem:[#allocation2 + $0x90] sm:$0xff]
      %v628 = vld [vmem:[#allocation2 + $0x98] sm:$0xff]
      %v629 = vld [vmem:[#allocation2 + $0xa8] sm:$0xff]
      %v630 = vld [vmem:[#allocation2 + $0xb0] sm:$0xff]
      %v631 = vld [vmem:[#allocation2 + $0xb8] sm:$0xff]
      %v632 = vld [vmem:[#allocation2 + $0xc8] sm:$0xff]
      %v633 = vld [vmem:[#allocation2 + $0xd0] sm:$0xff]
      %v634 = vld [vmem:[#allocation2 + $0xd8] sm:$0xff]
      %v635 = vld [vmem:[#allocation2 + $0xe8] sm:$0xff]
      %v636 = vld [vmem:[#allocation2 + $0xf0] sm:$0xff]
      %v637 = vld [vmem:[#allocation2 + $0xf8] sm:$0xff]
      %638 = vset.pattern.permute.xlu0 6
      %639 = vperm.xlu0 %638, %v325
      %v640 = vpop.permute.xlu0 %639
      %642 = vset.pattern.permute.xlu0 6
      %643 = vperm.xlu0 %642, %v326
      %v644 = vpop.permute.xlu0 %643
      %646 = vset.pattern.permute.xlu0 6
      %647 = vperm.xlu0 %646, %v327
      %v648 = vpop.permute.xlu0 %647
      %650 = vset.pattern.permute.xlu0 6
      %651 = vperm.xlu0 %650, %v328
      %v652 = vpop.permute.xlu0 %651
      %654 = vset.pattern.permute.xlu0 6
      %655 = vperm.xlu0 %654, %v329
      %v656 = vpop.permute.xlu0 %655
      %658 = vset.pattern.permute.xlu0 6
      %659 = vperm.xlu0 %658, %v330
      %v660 = vpop.permute.xlu0 %659
      %662 = vset.pattern.permute.xlu0 6
      %663 = vperm.xlu0 %662, %v331
      %v664 = vpop.permute.xlu0 %663
      %666 = vset.pattern.permute.xlu0 6
      %667 = vperm.xlu0 %666, %v332
      %v668 = vpop.permute.xlu0 %667
      %v670 = vmul.f32 %v614, %v640
      %v671 = vmul.f32 %v615, %v640
      %v672 = vmul.f32 %v616, %v640
      %v673 = vmul.f32 %v617, %v644
      %v674 = vmul.f32 %v618, %v644
      %v675 = vmul.f32 %v619, %v644
      %v676 = vmul.f32 %v620, %v648
      %v677 = vmul.f32 %v621, %v648
      %v678 = vmul.f32 %v622, %v648
      %v679 = vmul.f32 %v623, %v652
      %v680 = vmul.f32 %v624, %v652
      %v681 = vmul.f32 %v625, %v652
      %v682 = vmul.f32 %v626, %v656
      %v683 = vmul.f32 %v627, %v656
      %v684 = vmul.f32 %v628, %v656
      %v685 = vmul.f32 %v629, %v660
      %v686 = vmul.f32 %v630, %v660
      %v687 = vmul.f32 %v631, %v660
      %v688 = vmul.f32 %v632, %v664
      %v689 = vmul.f32 %v633, %v664
      %v690 = vmul.f32 %v634, %v664
      %v691 = vmul.f32 %v635, %v668
      %v692 = vmul.f32 %v636, %v668
      %v693 = vmul.f32 %v637, %v668
      %718 = vrot.lane.b32.xlu0 %v670, 96
      %v719 = vpop.permute.xlu0 %718
      %720 = vrot.lane.b32.xlu0 %v671, 96
      %v721 = vpop.permute.xlu0 %720
      %722 = vrot.lane.b32.xlu0 %v672, 96
      %v723 = vpop.permute.xlu0 %722
      %724 = vrot.lane.b32.xlu0 %v673, 96
      %v725 = vpop.permute.xlu0 %724
      %726 = vrot.lane.b32.xlu0 %v674, 96
      %v727 = vpop.permute.xlu0 %726
      %728 = vrot.lane.b32.xlu0 %v675, 96
      %v729 = vpop.permute.xlu0 %728
      %730 = vrot.lane.b32.xlu0 %v676, 96
      %v731 = vpop.permute.xlu0 %730
      %732 = vrot.lane.b32.xlu0 %v677, 96
      %v733 = vpop.permute.xlu0 %732
      %734 = vrot.lane.b32.xlu0 %v678, 96
      %v735 = vpop.permute.xlu0 %734
      %736 = vrot.lane.b32.xlu0 %v679, 96
      %v737 = vpop.permute.xlu0 %736
      %738 = vrot.lane.b32.xlu0 %v680, 96
      %v739 = vpop.permute.xlu0 %738
      %740 = vrot.lane.b32.xlu0 %v681, 96
      %v741 = vpop.permute.xlu0 %740
      %742 = vrot.lane.b32.xlu0 %v682, 96
      %v743 = vpop.permute.xlu0 %742
      %744 = vrot.lane.b32.xlu0 %v683, 96
      %v745 = vpop.permute.xlu0 %744
      %746 = vrot.lane.b32.xlu0 %v684, 96
      %v747 = vpop.permute.xlu0 %746
      %748 = vrot.lane.b32.xlu0 %v685, 96
      %v749 = vpop.permute.xlu0 %748
      %750 = vrot.lane.b32.xlu0 %v686, 96
      %v751 = vpop.permute.xlu0 %750
      %752 = vrot.lane.b32.xlu0 %v687, 96
      %v753 = vpop.permute.xlu0 %752
      %754 = vrot.lane.b32.xlu0 %v688, 96
      %v755 = vpop.permute.xlu0 %754
      %756 = vrot.lane.b32.xlu0 %v689, 96
      %v757 = vpop.permute.xlu0 %756
      %758 = vrot.lane.b32.xlu0 %v690, 96
      %v759 = vpop.permute.xlu0 %758
      %760 = vrot.lane.b32.xlu0 %v691, 96
      %v761 = vpop.permute.xlu0 %760
      %762 = vrot.lane.b32.xlu0 %v692, 96
      %v763 = vpop.permute.xlu0 %762
      %764 = vrot.lane.b32.xlu0 %v693, 96
      %v765 = vpop.permute.xlu0 %764
      %vm766 = vcmask 785408
      %v767 = vsel %vm766, %v719, %v721
      %v768 = vsel %vm766, %v721, %v723
      %v769 = vsel %vm766, %v725, %v727
      %v770 = vsel %vm766, %v727, %v729
      %v771 = vsel %vm766, %v731, %v733
      %v772 = vsel %vm766, %v733, %v735
      %v773 = vsel %vm766, %v737, %v739
      %v774 = vsel %vm766, %v739, %v741
      %v775 = vsel %vm766, %v743, %v745
      %v776 = vsel %vm766, %v745, %v747
      %v777 = vsel %vm766, %v749, %v751
      %v778 = vsel %vm766, %v751, %v753
      %v779 = vsel %vm766, %v755, %v757
      %v780 = vsel %vm766, %v757, %v759
      %v781 = vsel %vm766, %v761, %v763
      %v782 = vsel %vm766, %v763, %v765
      %v807 = vadd.f32 %v590, %v719
      %v808 = vadd.f32 %v591, %v767
      %v809 = vadd.f32 %v592, %v768
      %v810 = vadd.f32 %v593, %v725
      %v811 = vadd.f32 %v594, %v769
      %v812 = vadd.f32 %v595, %v770
      %v813 = vadd.f32 %v596, %v731
      %v814 = vadd.f32 %v597, %v771
      %v815 = vadd.f32 %v598, %v772
      %v816 = vadd.f32 %v599, %v737
      %v817 = vadd.f32 %v600, %v773
      %v818 = vadd.f32 %v601, %v774
      %v819 = vadd.f32 %v602, %v743
      %v820 = vadd.f32 %v603, %v775
      %v821 = vadd.f32 %v604, %v776
      %v822 = vadd.f32 %v605, %v749
      %v823 = vadd.f32 %v606, %v777
      %v824 = vadd.f32 %v607, %v778
      %v825 = vadd.f32 %v608, %v755
      %v826 = vadd.f32 %v609, %v779
      %v827 = vadd.f32 %v610, %v780
      %v828 = vadd.f32 %v611, %v761
      %v829 = vadd.f32 %v612, %v781
      %v830 = vadd.f32 %v613, %v782
      %v831 = vld [vmem:[%s2] ss:$4 sm:$0x3]
      %v833 = vlaneseq
      %v834 = vshrl.u32 %v833, 7
      %v835 = vsub.s32 0, %v834
      %v836 = vrot.slane %v831, %v835
      %v837 = vlaneseq
      %v838 = vshrl.u32 %v837, 7
      %v839 = vsub.s32 1, %v838
      %v840 = vrot.slane %v831, %v839
      %841 = vrot.lane.b32.xlu0 %v836, 111
      %v842 = vpop.permute.xlu0 %841
      %843 = vrot.lane.b32.xlu0 %v840, 111
      %v844 = vpop.permute.xlu0 %843
      %vm845 = vcmask 908288
      %v846 = vsel %vm845, %v842, %v844
      %v850 = vmul.f32 %v807, %v842
      %v851 = vmul.f32 %v808, %v846
      %v852 = vmul.f32 %v809, %v844
      %v853 = vmul.f32 %v810, %v842
      %v854 = vmul.f32 %v811, %v846
      %v855 = vmul.f32 %v812, %v844
      %v856 = vmul.f32 %v813, %v842
      %v857 = vmul.f32 %v814, %v846
      %v858 = vmul.f32 %v815, %v844
      %v859 = vmul.f32 %v816, %v842
      %v860 = vmul.f32 %v817, %v846
      %v861 = vmul.f32 %v818, %v844
      %v862 = vmul.f32 %v819, %v842
      %v863 = vmul.f32 %v820, %v846
      %v864 = vmul.f32 %v821, %v844
      %v865 = vmul.f32 %v822, %v842
      %v866 = vmul.f32 %v823, %v846
      %v867 = vmul.f32 %v824, %v844
      %v868 = vmul.f32 %v825, %v842
      %v869 = vmul.f32 %v826, %v846
      %v870 = vmul.f32 %v827, %v844
      %v871 = vmul.f32 %v828, %v842
      %v872 = vmul.f32 %v829, %v846
      %v873 = vmul.f32 %v830, %v844
      %v874 = vadd.f32 %v850, 0.0
      %v875 = vadd.f32 %v851, 0.0
      %v876 = vadd.f32 %v852, 0.0
      %v877 = vadd.f32 %v853, 0.0
      %v878 = vadd.f32 %v854, 0.0
      %v879 = vadd.f32 %v855, 0.0
      %v880 = vadd.f32 %v856, 0.0
      %v881 = vadd.f32 %v857, 0.0
      %v882 = vadd.f32 %v858, 0.0
      %v883 = vadd.f32 %v859, 0.0
      %v884 = vadd.f32 %v860, 0.0
      %v885 = vadd.f32 %v861, 0.0
      %v886 = vadd.f32 %v862, 0.0
      %v887 = vadd.f32 %v863, 0.0
      %v888 = vadd.f32 %v864, 0.0
      %v889 = vadd.f32 %v865, 0.0
      %v890 = vadd.f32 %v866, 0.0
      %v891 = vadd.f32 %v867, 0.0
      %v892 = vadd.f32 %v868, 0.0
      %v893 = vadd.f32 %v869, 0.0
      %v894 = vadd.f32 %v870, 0.0
      %v895 = vadd.f32 %v871, 0.0
      %v896 = vadd.f32 %v872, 0.0
      %v897 = vadd.f32 %v873, 0.0
      %898 = vset.pattern.permute.xlu0 1
      %899 = vperm.xlu0 %898, %v325
      %v900 = vpop.permute.xlu0 %899
      %902 = vset.pattern.permute.xlu0 1
      %903 = vperm.xlu0 %902, %v326
      %v904 = vpop.permute.xlu0 %903
      %906 = vset.pattern.permute.xlu0 1
      %907 = vperm.xlu0 %906, %v327
      %v908 = vpop.permute.xlu0 %907
      %910 = vset.pattern.permute.xlu0 1
      %911 = vperm.xlu0 %910, %v328
      %v912 = vpop.permute.xlu0 %911
      %914 = vset.pattern.permute.xlu0 1
      %915 = vperm.xlu0 %914, %v329
      %v916 = vpop.permute.xlu0 %915
      %918 = vset.pattern.permute.xlu0 1
      %919 = vperm.xlu0 %918, %v330
      %v920 = vpop.permute.xlu0 %919
      %922 = vset.pattern.permute.xlu0 1
      %923 = vperm.xlu0 %922, %v331
      %v924 = vpop.permute.xlu0 %923
      %926 = vset.pattern.permute.xlu0 1
      %927 = vperm.xlu0 %926, %v332
      %v928 = vpop.permute.xlu0 %927
      %v930 = vmul.f32 %v301, %v900
      %v931 = vmul.f32 %v302, %v900
      %v932 = vmul.f32 %v303, %v900
      %v933 = vmul.f32 %v304, %v904
      %v934 = vmul.f32 %v305, %v904
      %v935 = vmul.f32 %v306, %v904
      %v936 = vmul.f32 %v307, %v908
      %v937 = vmul.f32 %v308, %v908
      %v938 = vmul.f32 %v309, %v908
      %v939 = vmul.f32 %v310, %v912
      %v940 = vmul.f32 %v311, %v912
      %v941 = vmul.f32 %v312, %v912
      %v942 = vmul.f32 %v313, %v916
      %v943 = vmul.f32 %v314, %v916
      %v944 = vmul.f32 %v315, %v916
      %v945 = vmul.f32 %v316, %v920
      %v946 = vmul.f32 %v317, %v920
      %v947 = vmul.f32 %v318, %v920
      %v948 = vmul.f32 %v319, %v924
      %v949 = vmul.f32 %v320, %v924
      %v950 = vmul.f32 %v321, %v924
      %v951 = vmul.f32 %v322, %v928
      %v952 = vmul.f32 %v323, %v928
      %v953 = vmul.f32 %v324, %v928
      %v954 = vadd.f32 %v930, 0.0
      %v955 = vadd.f32 %v931, 0.0
      %v956 = vadd.f32 %v932, 0.0
      %v957 = vadd.f32 %v933, 0.0
      %v958 = vadd.f32 %v934, 0.0
      %v959 = vadd.f32 %v935, 0.0
      %v960 = vadd.f32 %v936, 0.0
      %v961 = vadd.f32 %v937, 0.0
      %v962 = vadd.f32 %v938, 0.0
      %v963 = vadd.f32 %v939, 0.0
      %v964 = vadd.f32 %v940, 0.0
      %v965 = vadd.f32 %v941, 0.0
      %v966 = vadd.f32 %v942, 0.0
      %v967 = vadd.f32 %v943, 0.0
      %v968 = vadd.f32 %v944, 0.0
      %v969 = vadd.f32 %v945, 0.0
      %v970 = vadd.f32 %v946, 0.0
      %v971 = vadd.f32 %v947, 0.0
      %v972 = vadd.f32 %v948, 0.0
      %v973 = vadd.f32 %v949, 0.0
      %v974 = vadd.f32 %v950, 0.0
      %v975 = vadd.f32 %v951, 0.0
      %v976 = vadd.f32 %v952, 0.0
      %v977 = vadd.f32 %v953, 0.0
      %978 = vset.pattern.permute.xlu0 4
      %979 = vperm.xlu0 %978, %v325
      %v980 = vpop.permute.xlu0 %979
      %982 = vset.pattern.permute.xlu0 4
      %983 = vperm.xlu0 %982, %v326
      %v984 = vpop.permute.xlu0 %983
      %986 = vset.pattern.permute.xlu0 4
      %987 = vperm.xlu0 %986, %v327
      %v988 = vpop.permute.xlu0 %987
      %990 = vset.pattern.permute.xlu0 4
      %991 = vperm.xlu0 %990, %v328
      %v992 = vpop.permute.xlu0 %991
      %994 = vset.pattern.permute.xlu0 4
      %995 = vperm.xlu0 %994, %v329
      %v996 = vpop.permute.xlu0 %995
      %998 = vset.pattern.permute.xlu0 4
      %999 = vperm.xlu0 %998, %v330
      %v1000 = vpop.permute.xlu0 %999
      %1002 = vset.pattern.permute.xlu0 4
      %1003 = vperm.xlu0 %1002, %v331
      %v1004 = vpop.permute.xlu0 %1003
      %1006 = vset.pattern.permute.xlu0 4
      %1007 = vperm.xlu0 %1006, %v332
      %v1008 = vpop.permute.xlu0 %1007
      %v1010 = vmul.f32 %v302, %v980
      %v1011 = vmul.f32 %v303, %v980
      %v1012 = vmul.f32 %v305, %v984
      %v1013 = vmul.f32 %v306, %v984
      %v1014 = vmul.f32 %v308, %v988
      %v1015 = vmul.f32 %v309, %v988
      %v1016 = vmul.f32 %v311, %v992
      %v1017 = vmul.f32 %v312, %v992
      %v1018 = vmul.f32 %v314, %v996
      %v1019 = vmul.f32 %v315, %v996
      %v1020 = vmul.f32 %v317, %v1000
      %v1021 = vmul.f32 %v318, %v1000
      %v1022 = vmul.f32 %v320, %v1004
      %v1023 = vmul.f32 %v321, %v1004
      %v1024 = vmul.f32 %v323, %v1008
      %v1025 = vmul.f32 %v324, %v1008
      %1042 = vrot.lane.b32.xlu0 %v1010, 112
      %v1043 = vpop.permute.xlu0 %1042
      %1044 = vrot.lane.b32.xlu0 %v1011, 112
      %v1045 = vpop.permute.xlu0 %1044
      %1046 = vrot.lane.b32.xlu0 %v1012, 112
      %v1047 = vpop.permute.xlu0 %1046
      %1048 = vrot.lane.b32.xlu0 %v1013, 112
      %v1049 = vpop.permute.xlu0 %1048
      %1050 = vrot.lane.b32.xlu0 %v1014, 112
      %v1051 = vpop.permute.xlu0 %1050
      %1052 = vrot.lane.b32.xlu0 %v1015, 112
      %v1053 = vpop.permute.xlu0 %1052
      %1054 = vrot.lane.b32.xlu0 %v1016, 112
      %v1055 = vpop.permute.xlu0 %1054
      %1056 = vrot.lane.b32.xlu0 %v1017, 112
      %v1057 = vpop.permute.xlu0 %1056
      %1058 = vrot.lane.b32.xlu0 %v1018, 112
      %v1059 = vpop.permute.xlu0 %1058
      %1060 = vrot.lane.b32.xlu0 %v1019, 112
      %v1061 = vpop.permute.xlu0 %1060
      %1062 = vrot.lane.b32.xlu0 %v1020, 112
      %v1063 = vpop.permute.xlu0 %1062
      %1064 = vrot.lane.b32.xlu0 %v1021, 112
      %v1065 = vpop.permute.xlu0 %1064
      %1066 = vrot.lane.b32.xlu0 %v1022, 112
      %v1067 = vpop.permute.xlu0 %1066
      %1068 = vrot.lane.b32.xlu0 %v1023, 112
      %v1069 = vpop.permute.xlu0 %1068
      %1070 = vrot.lane.b32.xlu0 %v1024, 112
      %v1071 = vpop.permute.xlu0 %1070
      %1072 = vrot.lane.b32.xlu0 %v1025, 112
      %v1073 = vpop.permute.xlu0 %1072
      %v1074 = vsel %vm549, %v1043, %v1045
      %v1075 = vsel %vm549, %v1047, %v1049
      %v1076 = vsel %vm549, %v1051, %v1053
      %v1077 = vsel %vm549, %v1055, %v1057
      %v1078 = vsel %vm549, %v1059, %v1061
      %v1079 = vsel %vm549, %v1063, %v1065
      %v1080 = vsel %vm549, %v1067, %v1069
      %v1081 = vsel %vm549, %v1071, %v1073
      %v1106 = vadd.f32 %v954, %v1043
      %v1107 = vadd.f32 %v955, %v1074
      %v1108 = vadd.f32 %v956, %v1045
      %v1109 = vadd.f32 %v957, %v1047
      %v1110 = vadd.f32 %v958, %v1075
      %v1111 = vadd.f32 %v959, %v1049
      %v1112 = vadd.f32 %v960, %v1051
      %v1113 = vadd.f32 %v961, %v1076
      %v1114 = vadd.f32 %v962, %v1053
      %v1115 = vadd.f32 %v963, %v1055
      %v1116 = vadd.f32 %v964, %v1077
      %v1117 = vadd.f32 %v965, %v1057
      %v1118 = vadd.f32 %v966, %v1059
      %v1119 = vadd.f32 %v967, %v1078
      %v1120 = vadd.f32 %v968, %v1061
      %v1121 = vadd.f32 %v969, %v1063
      %v1122 = vadd.f32 %v970, %v1079
      %v1123 = vadd.f32 %v971, %v1065
      %v1124 = vadd.f32 %v972, %v1067
      %v1125 = vadd.f32 %v973, %v1080
      %v1126 = vadd.f32 %v974, %v1069
      %v1127 = vadd.f32 %v975, %v1071
      %v1128 = vadd.f32 %v976, %v1081
      %v1129 = vadd.f32 %v977, %v1073
      %1130 = vset.pattern.permute.xlu0 7
      %1131 = vperm.xlu0 %1130, %v325
      %v1132 = vpop.permute.xlu0 %1131
      %1134 = vset.pattern.permute.xlu0 7
      %1135 = vperm.xlu0 %1134, %v326
      %v1136 = vpop.permute.xlu0 %1135
      %1138 = vset.pattern.permute.xlu0 7
      %1139 = vperm.xlu0 %1138, %v327
      %v1140 = vpop.permute.xlu0 %1139
      %1142 = vset.pattern.permute.xlu0 7
      %1143 = vperm.xlu0 %1142, %v328
      %v1144 = vpop.permute.xlu0 %1143
      %1146 = vset.pattern.permute.xlu0 7
      %1147 = vperm.xlu0 %1146, %v329
      %v1148 = vpop.permute.xlu0 %1147
      %1150 = vset.pattern.permute.xlu0 7
      %1151 = vperm.xlu0 %1150, %v330
      %v1152 = vpop.permute.xlu0 %1151
      %1154 = vset.pattern.permute.xlu0 7
      %1155 = vperm.xlu0 %1154, %v331
      %v1156 = vpop.permute.xlu0 %1155
      %1158 = vset.pattern.permute.xlu0 7
      %1159 = vperm.xlu0 %1158, %v332
      %v1160 = vpop.permute.xlu0 %1159
      %v1162 = vmul.f32 %v614, %v1132
      %v1163 = vmul.f32 %v615, %v1132
      %v1164 = vmul.f32 %v616, %v1132
      %v1165 = vmul.f32 %v617, %v1136
      %v1166 = vmul.f32 %v618, %v1136
      %v1167 = vmul.f32 %v619, %v1136
      %v1168 = vmul.f32 %v620, %v1140
      %v1169 = vmul.f32 %v621, %v1140
      %v1170 = vmul.f32 %v622, %v1140
      %v1171 = vmul.f32 %v623, %v1144
      %v1172 = vmul.f32 %v624, %v1144
      %v1173 = vmul.f32 %v625, %v1144
      %v1174 = vmul.f32 %v626, %v1148
      %v1175 = vmul.f32 %v627, %v1148
      %v1176 = vmul.f32 %v628, %v1148
      %v1177 = vmul.f32 %v629, %v1152
      %v1178 = vmul.f32 %v630, %v1152
      %v1179 = vmul.f32 %v631, %v1152
      %v1180 = vmul.f32 %v632, %v1156
      %v1181 = vmul.f32 %v633, %v1156
      %v1182 = vmul.f32 %v634, %v1156
      %v1183 = vmul.f32 %v635, %v1160
      %v1184 = vmul.f32 %v636, %v1160
      %v1185 = vmul.f32 %v637, %v1160
      %1210 = vrot.lane.b32.xlu0 %v1162, 96
      %v1211 = vpop.permute.xlu0 %1210
      %1212 = vrot.lane.b32.xlu0 %v1163, 96
      %v1213 = vpop.permute.xlu0 %1212
      %1214 = vrot.lane.b32.xlu0 %v1164, 96
      %v1215 = vpop.permute.xlu0 %1214
      %1216 = vrot.lane.b32.xlu0 %v1165, 96
      %v1217 = vpop.permute.xlu0 %1216
      %1218 = vrot.lane.b32.xlu0 %v1166, 96
      %v1219 = vpop.permute.xlu0 %1218
      %1220 = vrot.lane.b32.xlu0 %v1167, 96
      %v1221 = vpop.permute.xlu0 %1220
      %1222 = vrot.lane.b32.xlu0 %v1168, 96
      %v1223 = vpop.permute.xlu0 %1222
      %1224 = vrot.lane.b32.xlu0 %v1169, 96
      %v1225 = vpop.permute.xlu0 %1224
      %1226 = vrot.lane.b32.xlu0 %v1170, 96
      %v1227 = vpop.permute.xlu0 %1226
      %1228 = vrot.lane.b32.xlu0 %v1171, 96
      %v1229 = vpop.permute.xlu0 %1228
      %1230 = vrot.lane.b32.xlu0 %v1172, 96
      %v1231 = vpop.permute.xlu0 %1230
      %1232 = vrot.lane.b32.xlu0 %v1173, 96
      %v1233 = vpop.permute.xlu0 %1232
      %1234 = vrot.lane.b32.xlu0 %v1174, 96
      %v1235 = vpop.permute.xlu0 %1234
      %1236 = vrot.lane.b32.xlu0 %v1175, 96
      %v1237 = vpop.permute.xlu0 %1236
      %1238 = vrot.lane.b32.xlu0 %v1176, 96
      %v1239 = vpop.permute.xlu0 %1238
      %1240 = vrot.lane.b32.xlu0 %v1177, 96
      %v1241 = vpop.permute.xlu0 %1240
      %1242 = vrot.lane.b32.xlu0 %v1178, 96
      %v1243 = vpop.permute.xlu0 %1242
      %1244 = vrot.lane.b32.xlu0 %v1179, 96
      %v1245 = vpop.permute.xlu0 %1244
      %1246 = vrot.lane.b32.xlu0 %v1180, 96
      %v1247 = vpop.permute.xlu0 %1246
      %1248 = vrot.lane.b32.xlu0 %v1181, 96
      %v1249 = vpop.permute.xlu0 %1248
      %1250 = vrot.lane.b32.xlu0 %v1182, 96
      %v1251 = vpop.permute.xlu0 %1250
      %1252 = vrot.lane.b32.xlu0 %v1183, 96
      %v1253 = vpop.permute.xlu0 %1252
      %1254 = vrot.lane.b32.xlu0 %v1184, 96
      %v1255 = vpop.permute.xlu0 %1254
      %1256 = vrot.lane.b32.xlu0 %v1185, 96
      %v1257 = vpop.permute.xlu0 %1256
      %v1258 = vsel %vm766, %v1211, %v1213
      %v1259 = vsel %vm766, %v1213, %v1215
      %v1260 = vsel %vm766, %v1217, %v1219
      %v1261 = vsel %vm766, %v1219, %v1221
      %v1262 = vsel %vm766, %v1223, %v1225
      %v1263 = vsel %vm766, %v1225, %v1227
      %v1264 = vsel %vm766, %v1229, %v1231
      %v1265 = vsel %vm766, %v1231, %v1233
      %v1266 = vsel %vm766, %v1235, %v1237
      %v1267 = vsel %vm766, %v1237, %v1239
      %v1268 = vsel %vm766, %v1241, %v1243
      %v1269 = vsel %vm766, %v1243, %v1245
      %v1270 = vsel %vm766, %v1247, %v1249
      %v1271 = vsel %vm766, %v1249, %v1251
      %v1272 = vsel %vm766, %v1253, %v1255
      %v1273 = vsel %vm766, %v1255, %v1257
      %v1298 = vadd.f32 %v1106, %v1211
      %v1299 = vadd.f32 %v1107, %v1258
      %v1300 = vadd.f32 %v1108, %v1259
      %v1301 = vadd.f32 %v1109, %v1217
      %v1302 = vadd.f32 %v1110, %v1260
      %v1303 = vadd.f32 %v1111, %v1261
      %v1304 = vadd.f32 %v1112, %v1223
      %v1305 = vadd.f32 %v1113, %v1262
      %v1306 = vadd.f32 %v1114, %v1263
      %v1307 = vadd.f32 %v1115, %v1229
      %v1308 = vadd.f32 %v1116, %v1264
      %v1309 = vadd.f32 %v1117, %v1265
      %v1310 = vadd.f32 %v1118, %v1235
      %v1311 = vadd.f32 %v1119, %v1266
      %v1312 = vadd.f32 %v1120, %v1267
      %v1313 = vadd.f32 %v1121, %v1241
      %v1314 = vadd.f32 %v1122, %v1268
      %v1315 = vadd.f32 %v1123, %v1269
      %v1316 = vadd.f32 %v1124, %v1247
      %v1317 = vadd.f32 %v1125, %v1270
      %v1318 = vadd.f32 %v1126, %v1271
      %v1319 = vadd.f32 %v1127, %v1253
      %v1320 = vadd.f32 %v1128, %v1272
      %v1321 = vadd.f32 %v1129, %v1273
      %s1322 = scalar_lea.vmem %s2, 1
      %v1323 = vld [vmem:[%s1322] ss:$4 sm:$0x3]
      %v1325 = vlaneseq
      %v1326 = vshrl.u32 %v1325, 7
      %v1327 = vsub.s32 0, %v1326
      %v1328 = vrot.slane %v1323, %v1327
      %v1329 = vlaneseq
      %v1330 = vshrl.u32 %v1329, 7
      %v1331 = vsub.s32 1, %v1330
      %v1332 = vrot.slane %v1323, %v1331
      %1333 = vrot.lane.b32.xlu0 %v1328, 112
      %v1334 = vpop.permute.xlu0 %1333
      %1335 = vrot.lane.b32.xlu0 %v1332, 112
      %v1336 = vpop.permute.xlu0 %1335
      %v1337 = vsel %vm549, %v1334, %v1336
      %v1341 = vmul.f32 %v1298, %v1334
      %v1342 = vmul.f32 %v1299, %v1337
      %v1343 = vmul.f32 %v1300, %v1336
      %v1344 = vmul.f32 %v1301, %v1334
      %v1345 = vmul.f32 %v1302, %v1337
      %v1346 = vmul.f32 %v1303, %v1336
      %v1347 = vmul.f32 %v1304, %v1334
      %v1348 = vmul.f32 %v1305, %v1337
      %v1349 = vmul.f32 %v1306, %v1336
      %v1350 = vmul.f32 %v1307, %v1334
      %v1351 = vmul.f32 %v1308, %v1337
      %v1352 = vmul.f32 %v1309, %v1336
      %v1353 = vmul.f32 %v1310, %v1334
      %v1354 = vmul.f32 %v1311, %v1337
      %v1355 = vmul.f32 %v1312, %v1336
      %v1356 = vmul.f32 %v1313, %v1334
      %v1357 = vmul.f32 %v1314, %v1337
      %v1358 = vmul.f32 %v1315, %v1336
      %v1359 = vmul.f32 %v1316, %v1334
      %v1360 = vmul.f32 %v1317, %v1337
      %v1361 = vmul.f32 %v1318, %v1336
      %v1362 = vmul.f32 %v1319, %v1334
      %v1363 = vmul.f32 %v1320, %v1337
      %v1364 = vmul.f32 %v1321, %v1336
      %1389 = vrot.lane.b32.xlu0 %v1341, 127
      %v1390 = vpop.permute.xlu0 %1389
      %1391 = vrot.lane.b32.xlu0 %v1342, 127
      %v1392 = vpop.permute.xlu0 %1391
      %1393 = vrot.lane.b32.xlu0 %v1343, 127
      %v1394 = vpop.permute.xlu0 %1393
      %1395 = vrot.lane.b32.xlu0 %v1344, 127
      %v1396 = vpop.permute.xlu0 %1395
      %1397 = vrot.lane.b32.xlu0 %v1345, 127
      %v1398 = vpop.permute.xlu0 %1397
      %1399 = vrot.lane.b32.xlu0 %v1346, 127
      %v1400 = vpop.permute.xlu0 %1399
      %1401 = vrot.lane.b32.xlu0 %v1347, 127
      %v1402 = vpop.permute.xlu0 %1401
      %1403 = vrot.lane.b32.xlu0 %v1348, 127
      %v1404 = vpop.permute.xlu0 %1403
      %1405 = vrot.lane.b32.xlu0 %v1349, 127
      %v1406 = vpop.permute.xlu0 %1405
      %1407 = vrot.lane.b32.xlu0 %v1350, 127
      %v1408 = vpop.permute.xlu0 %1407
      %1409 = vrot.lane.b32.xlu0 %v1351, 127
      %v1410 = vpop.permute.xlu0 %1409
      %1411 = vrot.lane.b32.xlu0 %v1352, 127
      %v1412 = vpop.permute.xlu0 %1411
      %1413 = vrot.lane.b32.xlu0 %v1353, 127
      %v1414 = vpop.permute.xlu0 %1413
      %1415 = vrot.lane.b32.xlu0 %v1354, 127
      %v1416 = vpop.permute.xlu0 %1415
      %1417 = vrot.lane.b32.xlu0 %v1355, 127
      %v1418 = vpop.permute.xlu0 %1417
      %1419 = vrot.lane.b32.xlu0 %v1356, 127
      %v1420 = vpop.permute.xlu0 %1419
      %1421 = vrot.lane.b32.xlu0 %v1357, 127
      %v1422 = vpop.permute.xlu0 %1421
      %1423 = vrot.lane.b32.xlu0 %v1358, 127
      %v1424 = vpop.permute.xlu0 %1423
      %1425 = vrot.lane.b32.xlu0 %v1359, 127
      %v1426 = vpop.permute.xlu0 %1425
      %1427 = vrot.lane.b32.xlu0 %v1360, 127
      %v1428 = vpop.permute.xlu0 %1427
      %1429 = vrot.lane.b32.xlu0 %v1361, 127
      %v1430 = vpop.permute.xlu0 %1429
      %1431 = vrot.lane.b32.xlu0 %v1362, 127
      %v1432 = vpop.permute.xlu0 %1431
      %1433 = vrot.lane.b32.xlu0 %v1363, 127
      %v1434 = vpop.permute.xlu0 %1433
      %1435 = vrot.lane.b32.xlu0 %v1364, 127
      %v1436 = vpop.permute.xlu0 %1435
      %vm1437 = vcmask 1039360
      %v1438 = vsel %vm1437, %v1390, %v1392
      %v1439 = vsel %vm1437, %v1392, %v1394
      %v1440 = vsel %vm1437, %v1396, %v1398
      %v1441 = vsel %vm1437, %v1398, %v1400
      %v1442 = vsel %vm1437, %v1402, %v1404
      %v1443 = vsel %vm1437, %v1404, %v1406
      %v1444 = vsel %vm1437, %v1408, %v1410
      %v1445 = vsel %vm1437, %v1410, %v1412
      %v1446 = vsel %vm1437, %v1414, %v1416
      %v1447 = vsel %vm1437, %v1416, %v1418
      %v1448 = vsel %vm1437, %v1420, %v1422
      %v1449 = vsel %vm1437, %v1422, %v1424
      %v1450 = vsel %vm1437, %v1426, %v1428
      %v1451 = vsel %vm1437, %v1428, %v1430
      %v1452 = vsel %vm1437, %v1432, %v1434
      %v1453 = vsel %vm1437, %v1434, %v1436
      %v1478 = vadd.f32 %v874, %v1438
      %v1479 = vadd.f32 %v875, %v1439
      %v1480 = vadd.f32 %v876, %v1394
      %v1481 = vadd.f32 %v877, %v1440
      %v1482 = vadd.f32 %v878, %v1441
      %v1483 = vadd.f32 %v879, %v1400
      %v1484 = vadd.f32 %v880, %v1442
      %v1485 = vadd.f32 %v881, %v1443
      %v1486 = vadd.f32 %v882, %v1406
      %v1487 = vadd.f32 %v883, %v1444
      %v1488 = vadd.f32 %v884, %v1445
      %v1489 = vadd.f32 %v885, %v1412
      %v1490 = vadd.f32 %v886, %v1446
      %v1491 = vadd.f32 %v887, %v1447
      %v1492 = vadd.f32 %v888, %v1418
      %v1493 = vadd.f32 %v889, %v1448
      %v1494 = vadd.f32 %v890, %v1449
      %v1495 = vadd.f32 %v891, %v1424
      %v1496 = vadd.f32 %v892, %v1450
      %v1497 = vadd.f32 %v893, %v1451
      %v1498 = vadd.f32 %v894, %v1430
      %v1499 = vadd.f32 %v895, %v1452
      %v1500 = vadd.f32 %v896, %v1453
      %v1501 = vadd.f32 %v897, %v1436
      %1502 = vset.pattern.permute.xlu0 2
      %1503 = vperm.xlu0 %1502, %v325
      %v1504 = vpop.permute.xlu0 %1503
      %1506 = vset.pattern.permute.xlu0 2
      %1507 = vperm.xlu0 %1506, %v326
      %v1508 = vpop.permute.xlu0 %1507
      %1510 = vset.pattern.permute.xlu0 2
      %1511 = vperm.xlu0 %1510, %v327
      %v1512 = vpop.permute.xlu0 %1511
      %1514 = vset.pattern.permute.xlu0 2
      %1515 = vperm.xlu0 %1514, %v328
      %v1516 = vpop.permute.xlu0 %1515
      %1518 = vset.pattern.permute.xlu0 2
      %1519 = vperm.xlu0 %1518, %v329
      %v1520 = vpop.permute.xlu0 %1519
      %1522 = vset.pattern.permute.xlu0 2
      %1523 = vperm.xlu0 %1522, %v330
      %v1524 = vpop.permute.xlu0 %1523
      %1526 = vset.pattern.permute.xlu0 2
      %1527 = vperm.xlu0 %1526, %v331
      %v1528 = vpop.permute.xlu0 %1527
      %1530 = vset.pattern.permute.xlu0 2
      %1531 = vperm.xlu0 %1530, %v332
      %v1532 = vpop.permute.xlu0 %1531
      %v1534 = vmul.f32 %v301, %v1504
      %v1535 = vmul.f32 %v302, %v1504
      %v1536 = vmul.f32 %v303, %v1504
      %v1537 = vmul.f32 %v304, %v1508
      %v1538 = vmul.f32 %v305, %v1508
      %v1539 = vmul.f32 %v306, %v1508
      %v1540 = vmul.f32 %v307, %v1512
      %v1541 = vmul.f32 %v308, %v1512
      %v1542 = vmul.f32 %v309, %v1512
      %v1543 = vmul.f32 %v310, %v1516
      %v1544 = vmul.f32 %v311, %v1516
      %v1545 = vmul.f32 %v312, %v1516
      %v1546 = vmul.f32 %v313, %v1520
      %v1547 = vmul.f32 %v314, %v1520
      %v1548 = vmul.f32 %v315, %v1520
      %v1549 = vmul.f32 %v316, %v1524
      %v1550 = vmul.f32 %v317, %v1524
      %v1551 = vmul.f32 %v318, %v1524
      %v1552 = vmul.f32 %v319, %v1528
      %v1553 = vmul.f32 %v320, %v1528
      %v1554 = vmul.f32 %v321, %v1528
      %v1555 = vmul.f32 %v322, %v1532
      %v1556 = vmul.f32 %v323, %v1532
      %v1557 = vmul.f32 %v324, %v1532
      %v1558 = vadd.f32 %v1534, 0.0
      %v1559 = vadd.f32 %v1535, 0.0
      %v1560 = vadd.f32 %v1536, 0.0
      %v1561 = vadd.f32 %v1537, 0.0
      %v1562 = vadd.f32 %v1538, 0.0
      %v1563 = vadd.f32 %v1539, 0.0
      %v1564 = vadd.f32 %v1540, 0.0
      %v1565 = vadd.f32 %v1541, 0.0
      %v1566 = vadd.f32 %v1542, 0.0
      %v1567 = vadd.f32 %v1543, 0.0
      %v1568 = vadd.f32 %v1544, 0.0
      %v1569 = vadd.f32 %v1545, 0.0
      %v1570 = vadd.f32 %v1546, 0.0
      %v1571 = vadd.f32 %v1547, 0.0
      %v1572 = vadd.f32 %v1548, 0.0
      %v1573 = vadd.f32 %v1549, 0.0
      %v1574 = vadd.f32 %v1550, 0.0
      %v1575 = vadd.f32 %v1551, 0.0
      %v1576 = vadd.f32 %v1552, 0.0
      %v1577 = vadd.f32 %v1553, 0.0
      %v1578 = vadd.f32 %v1554, 0.0
      %v1579 = vadd.f32 %v1555, 0.0
      %v1580 = vadd.f32 %v1556, 0.0
      %v1581 = vadd.f32 %v1557, 0.0
      %1582 = vset.pattern.permute.xlu0 5
      %1583 = vperm.xlu0 %1582, %v325
      %v1584 = vpop.permute.xlu0 %1583
      %1586 = vset.pattern.permute.xlu0 5
      %1587 = vperm.xlu0 %1586, %v326
      %v1588 = vpop.permute.xlu0 %1587
      %1590 = vset.pattern.permute.xlu0 5
      %1591 = vperm.xlu0 %1590, %v327
      %v1592 = vpop.permute.xlu0 %1591
      %1594 = vset.pattern.permute.xlu0 5
      %1595 = vperm.xlu0 %1594, %v328
      %v1596 = vpop.permute.xlu0 %1595
      %1598 = vset.pattern.permute.xlu0 5
      %1599 = vperm.xlu0 %1598, %v329
      %v1600 = vpop.permute.xlu0 %1599
      %1602 = vset.pattern.permute.xlu0 5
      %1603 = vperm.xlu0 %1602, %v330
      %v1604 = vpop.permute.xlu0 %1603
      %1606 = vset.pattern.permute.xlu0 5
      %1607 = vperm.xlu0 %1606, %v331
      %v1608 = vpop.permute.xlu0 %1607
      %1610 = vset.pattern.permute.xlu0 5
      %1611 = vperm.xlu0 %1610, %v332
      %v1612 = vpop.permute.xlu0 %1611
      %v1614 = vmul.f32 %v614, %v1584
      %v1615 = vmul.f32 %v615, %v1584
      %v1616 = vmul.f32 %v616, %v1584
      %v1617 = vmul.f32 %v617, %v1588
      %v1618 = vmul.f32 %v618, %v1588
      %v1619 = vmul.f32 %v619, %v1588
      %v1620 = vmul.f32 %v620, %v1592
      %v1621 = vmul.f32 %v621, %v1592
      %v1622 = vmul.f32 %v622, %v1592
      %v1623 = vmul.f32 %v623, %v1596
      %v1624 = vmul.f32 %v624, %v1596
      %v1625 = vmul.f32 %v625, %v1596
      %v1626 = vmul.f32 %v626, %v1600
      %v1627 = vmul.f32 %v627, %v1600
      %v1628 = vmul.f32 %v628, %v1600
      %v1629 = vmul.f32 %v629, %v1604
      %v1630 = vmul.f32 %v630, %v1604
      %v1631 = vmul.f32 %v631, %v1604
      %v1632 = vmul.f32 %v632, %v1608
      %v1633 = vmul.f32 %v633, %v1608
      %v1634 = vmul.f32 %v634, %v1608
      %v1635 = vmul.f32 %v635, %v1612
      %v1636 = vmul.f32 %v636, %v1612
      %v1637 = vmul.f32 %v637, %v1612
      %1662 = vrot.lane.b32.xlu0 %v1614, 112
      %v1663 = vpop.permute.xlu0 %1662
      %1664 = vrot.lane.b32.xlu0 %v1615, 112
      %v1665 = vpop.permute.xlu0 %1664
      %1666 = vrot.lane.b32.xlu0 %v1616, 112
      %v1667 = vpop.permute.xlu0 %1666
      %1668 = vrot.lane.b32.xlu0 %v1617, 112
      %v1669 = vpop.permute.xlu0 %1668
      %1670 = vrot.lane.b32.xlu0 %v1618, 112
      %v1671 = vpop.permute.xlu0 %1670
      %1672 = vrot.lane.b32.xlu0 %v1619, 112
      %v1673 = vpop.permute.xlu0 %1672
      %1674 = vrot.lane.b32.xlu0 %v1620, 112
      %v1675 = vpop.permute.xlu0 %1674
      %1676 = vrot.lane.b32.xlu0 %v1621, 112
      %v1677 = vpop.permute.xlu0 %1676
      %1678 = vrot.lane.b32.xlu0 %v1622, 112
      %v1679 = vpop.permute.xlu0 %1678
      %1680 = vrot.lane.b32.xlu0 %v1623, 112
      %v1681 = vpop.permute.xlu0 %1680
      %1682 = vrot.lane.b32.xlu0 %v1624, 112
      %v1683 = vpop.permute.xlu0 %1682
      %1684 = vrot.lane.b32.xlu0 %v1625, 112
      %v1685 = vpop.permute.xlu0 %1684
      %1686 = vrot.lane.b32.xlu0 %v1626, 112
      %v1687 = vpop.permute.xlu0 %1686
      %1688 = vrot.lane.b32.xlu0 %v1627, 112
      %v1689 = vpop.permute.xlu0 %1688
      %1690 = vrot.lane.b32.xlu0 %v1628, 112
      %v1691 = vpop.permute.xlu0 %1690
      %1692 = vrot.lane.b32.xlu0 %v1629, 112
      %v1693 = vpop.permute.xlu0 %1692
      %1694 = vrot.lane.b32.xlu0 %v1630, 112
      %v1695 = vpop.permute.xlu0 %1694
      %1696 = vrot.lane.b32.xlu0 %v1631, 112
      %v1697 = vpop.permute.xlu0 %1696
      %1698 = vrot.lane.b32.xlu0 %v1632, 112
      %v1699 = vpop.permute.xlu0 %1698
      %1700 = vrot.lane.b32.xlu0 %v1633, 112
      %v1701 = vpop.permute.xlu0 %1700
      %1702 = vrot.lane.b32.xlu0 %v1634, 112
      %v1703 = vpop.permute.xlu0 %1702
      %1704 = vrot.lane.b32.xlu0 %v1635, 112
      %v1705 = vpop.permute.xlu0 %1704
      %1706 = vrot.lane.b32.xlu0 %v1636, 112
      %v1707 = vpop.permute.xlu0 %1706
      %1708 = vrot.lane.b32.xlu0 %v1637, 112
      %v1709 = vpop.permute.xlu0 %1708
      %v1710 = vsel %vm549, %v1663, %v1665
      %v1711 = vsel %vm549, %v1665, %v1667
      %v1712 = vsel %vm549, %v1669, %v1671
      %v1713 = vsel %vm549, %v1671, %v1673
      %v1714 = vsel %vm549, %v1675, %v1677
      %v1715 = vsel %vm549, %v1677, %v1679
      %v1716 = vsel %vm549, %v1681, %v1683
      %v1717 = vsel %vm549, %v1683, %v1685
      %v1718 = vsel %vm549, %v1687, %v1689
      %v1719 = vsel %vm549, %v1689, %v1691
      %v1720 = vsel %vm549, %v1693, %v1695
      %v1721 = vsel %vm549, %v1695, %v1697
      %v1722 = vsel %vm549, %v1699, %v1701
      %v1723 = vsel %vm549, %v1701, %v1703
      %v1724 = vsel %vm549, %v1705, %v1707
      %v1725 = vsel %vm549, %v1707, %v1709
      %v1750 = vadd.f32 %v1558, %v1663
      %v1751 = vadd.f32 %v1559, %v1710
      %v1752 = vadd.f32 %v1560, %v1711
      %v1753 = vadd.f32 %v1561, %v1669
      %v1754 = vadd.f32 %v1562, %v1712
      %v1755 = vadd.f32 %v1563, %v1713
      %v1756 = vadd.f32 %v1564, %v1675
      %v1757 = vadd.f32 %v1565, %v1714
      %v1758 = vadd.f32 %v1566, %v1715
      %v1759 = vadd.f32 %v1567, %v1681
      %v1760 = vadd.f32 %v1568, %v1716
      %v1761 = vadd.f32 %v1569, %v1717
      %v1762 = vadd.f32 %v1570, %v1687
      %v1763 = vadd.f32 %v1571, %v1718
      %v1764 = vadd.f32 %v1572, %v1719
      %v1765 = vadd.f32 %v1573, %v1693
      %v1766 = vadd.f32 %v1574, %v1720
      %v1767 = vadd.f32 %v1575, %v1721
      %v1768 = vadd.f32 %v1576, %v1699
      %v1769 = vadd.f32 %v1577, %v1722
      %v1770 = vadd.f32 %v1578, %v1723
      %v1771 = vadd.f32 %v1579, %v1705
      %v1772 = vadd.f32 %v1580, %v1724
      %v1773 = vadd.f32 %v1581, %v1725
      %1774 = vset.pattern.permute.xlu0 8
      %1775 = vperm.xlu0 %1774, %v325
      %v1776 = vpop.permute.xlu0 %1775
      %1778 = vset.pattern.permute.xlu0 8
      %1779 = vperm.xlu0 %1778, %v326
      %v1780 = vpop.permute.xlu0 %1779
      %1782 = vset.pattern.permute.xlu0 8
      %1783 = vperm.xlu0 %1782, %v327
      %v1784 = vpop.permute.xlu0 %1783
      %1786 = vset.pattern.permute.xlu0 8
      %1787 = vperm.xlu0 %1786, %v328
      %v1788 = vpop.permute.xlu0 %1787
      %1790 = vset.pattern.permute.xlu0 8
      %1791 = vperm.xlu0 %1790, %v329
      %v1792 = vpop.permute.xlu0 %1791
      %1794 = vset.pattern.permute.xlu0 8
      %1795 = vperm.xlu0 %1794, %v330
      %v1796 = vpop.permute.xlu0 %1795
      %1798 = vset.pattern.permute.xlu0 8
      %1799 = vperm.xlu0 %1798, %v331
      %v1800 = vpop.permute.xlu0 %1799
      %1802 = vset.pattern.permute.xlu0 8
      %1803 = vperm.xlu0 %1802, %v332
      %v1804 = vpop.permute.xlu0 %1803
      %v1806 = vmul.f32 %v614, %v1776
      %v1807 = vmul.f32 %v615, %v1776
      %v1808 = vmul.f32 %v616, %v1776
      %v1809 = vmul.f32 %v617, %v1780
      %v1810 = vmul.f32 %v618, %v1780
      %v1811 = vmul.f32 %v619, %v1780
      %v1812 = vmul.f32 %v620, %v1784
      %v1813 = vmul.f32 %v621, %v1784
      %v1814 = vmul.f32 %v622, %v1784
      %v1815 = vmul.f32 %v623, %v1788
      %v1816 = vmul.f32 %v624, %v1788
      %v1817 = vmul.f32 %v625, %v1788
      %v1818 = vmul.f32 %v626, %v1792
      %v1819 = vmul.f32 %v627, %v1792
      %v1820 = vmul.f32 %v628, %v1792
      %v1821 = vmul.f32 %v629, %v1796
      %v1822 = vmul.f32 %v630, %v1796
      %v1823 = vmul.f32 %v631, %v1796
      %v1824 = vmul.f32 %v632, %v1800
      %v1825 = vmul.f32 %v633, %v1800
      %v1826 = vmul.f32 %v634, %v1800
      %v1827 = vmul.f32 %v635, %v1804
      %v1828 = vmul.f32 %v636, %v1804
      %v1829 = vmul.f32 %v637, %v1804
      %1854 = vrot.lane.b32.xlu0 %v1806, 96
      %v1855 = vpop.permute.xlu0 %1854
      %1856 = vrot.lane.b32.xlu0 %v1807, 96
      %v1857 = vpop.permute.xlu0 %1856
      %1858 = vrot.lane.b32.xlu0 %v1808, 96
      %v1859 = vpop.permute.xlu0 %1858
      %1860 = vrot.lane.b32.xlu0 %v1809, 96
      %v1861 = vpop.permute.xlu0 %1860
      %1862 = vrot.lane.b32.xlu0 %v1810, 96
      %v1863 = vpop.permute.xlu0 %1862
      %1864 = vrot.lane.b32.xlu0 %v1811, 96
      %v1865 = vpop.permute.xlu0 %1864
      %1866 = vrot.lane.b32.xlu0 %v1812, 96
      %v1867 = vpop.permute.xlu0 %1866
      %1868 = vrot.lane.b32.xlu0 %v1813, 96
      %v1869 = vpop.permute.xlu0 %1868
      %1870 = vrot.lane.b32.xlu0 %v1814, 96
      %v1871 = vpop.permute.xlu0 %1870
      %1872 = vrot.lane.b32.xlu0 %v1815, 96
      %v1873 = vpop.permute.xlu0 %1872
      %1874 = vrot.lane.b32.xlu0 %v1816, 96
      %v1875 = vpop.permute.xlu0 %1874
      %1876 = vrot.lane.b32.xlu0 %v1817, 96
      %v1877 = vpop.permute.xlu0 %1876
      %1878 = vrot.lane.b32.xlu0 %v1818, 96
      %v1879 = vpop.permute.xlu0 %1878
      %1880 = vrot.lane.b32.xlu0 %v1819, 96
      %v1881 = vpop.permute.xlu0 %1880
      %1882 = vrot.lane.b32.xlu0 %v1820, 96
      %v1883 = vpop.permute.xlu0 %1882
      %1884 = vrot.lane.b32.xlu0 %v1821, 96
      %v1885 = vpop.permute.xlu0 %1884
      %1886 = vrot.lane.b32.xlu0 %v1822, 96
      %v1887 = vpop.permute.xlu0 %1886
      %1888 = vrot.lane.b32.xlu0 %v1823, 96
      %v1889 = vpop.permute.xlu0 %1888
      %1890 = vrot.lane.b32.xlu0 %v1824, 96
      %v1891 = vpop.permute.xlu0 %1890
      %1892 = vrot.lane.b32.xlu0 %v1825, 96
      %v1893 = vpop.permute.xlu0 %1892
      %1894 = vrot.lane.b32.xlu0 %v1826, 96
      %v1895 = vpop.permute.xlu0 %1894
      %1896 = vrot.lane.b32.xlu0 %v1827, 96
      %v1897 = vpop.permute.xlu0 %1896
      %1898 = vrot.lane.b32.xlu0 %v1828, 96
      %v1899 = vpop.permute.xlu0 %1898
      %1900 = vrot.lane.b32.xlu0 %v1829, 96
      %v1901 = vpop.permute.xlu0 %1900
      %v1902 = vsel %vm766, %v1855, %v1857
      %v1903 = vsel %vm766, %v1857, %v1859
      %v1904 = vsel %vm766, %v1861, %v1863
      %v1905 = vsel %vm766, %v1863, %v1865
      %v1906 = vsel %vm766, %v1867, %v1869
      %v1907 = vsel %vm766, %v1869, %v1871
      %v1908 = vsel %vm766, %v1873, %v1875
      %v1909 = vsel %vm766, %v1875, %v1877
      %v1910 = vsel %vm766, %v1879, %v1881
      %v1911 = vsel %vm766, %v1881, %v1883
      %v1912 = vsel %vm766, %v1885, %v1887
      %v1913 = vsel %vm766, %v1887, %v1889
      %v1914 = vsel %vm766, %v1891, %v1893
      %v1915 = vsel %vm766, %v1893, %v1895
      %v1916 = vsel %vm766, %v1897, %v1899
      %v1917 = vsel %vm766, %v1899, %v1901
      %v1942 = vadd.f32 %v1750, %v1855
      %v1943 = vadd.f32 %v1751, %v1902
      %v1944 = vadd.f32 %v1752, %v1903
      %v1945 = vadd.f32 %v1753, %v1861
      %v1946 = vadd.f32 %v1754, %v1904
      %v1947 = vadd.f32 %v1755, %v1905
      %v1948 = vadd.f32 %v1756, %v1867
      %v1949 = vadd.f32 %v1757, %v1906
      %v1950 = vadd.f32 %v1758, %v1907
      %v1951 = vadd.f32 %v1759, %v1873
      %v1952 = vadd.f32 %v1760, %v1908
      %v1953 = vadd.f32 %v1761, %v1909
      %v1954 = vadd.f32 %v1762, %v1879
      %v1955 = vadd.f32 %v1763, %v1910
      %v1956 = vadd.f32 %v1764, %v1911
      %v1957 = vadd.f32 %v1765, %v1885
      %v1958 = vadd.f32 %v1766, %v1912
      %v1959 = vadd.f32 %v1767, %v1913
      %v1960 = vadd.f32 %v1768, %v1891
      %v1961 = vadd.f32 %v1769, %v1914
      %v1962 = vadd.f32 %v1770, %v1915
      %v1963 = vadd.f32 %v1771, %v1897
      %v1964 = vadd.f32 %v1772, %v1916
      %v1965 = vadd.f32 %v1773, %v1917
      %s1966 = scalar_lea.vmem %s2, 2
      %v1967 = vld [vmem:[%s1966] ss:$4 sm:$0x3]
      %v1969 = vlaneseq
      %v1970 = vshrl.u32 %v1969, 7
      %v1971 = vsub.s32 0, %v1970
      %v1972 = vrot.slane %v1967, %v1971
      %v1973 = vlaneseq
      %v1974 = vshrl.u32 %v1973, 7
      %v1975 = vsub.s32 1, %v1974
      %v1976 = vrot.slane %v1967, %v1975
      %1977 = vrot.lane.b32.xlu0 %v1972, 113
      %v1978 = vpop.permute.xlu0 %1977
      %1979 = vrot.lane.b32.xlu0 %v1976, 113
      %v1980 = vpop.permute.xlu0 %1979
      %vm1981 = vcmask 924672
      %v1982 = vsel %vm1981, %v1978, %v1980
      %v1986 = vmul.f32 %v1942, %v1978
      %v1987 = vmul.f32 %v1943, %v1982
      %v1988 = vmul.f32 %v1944, %v1980
      %v1989 = vmul.f32 %v1945, %v1978
      %v1990 = vmul.f32 %v1946, %v1982
      %v1991 = vmul.f32 %v1947, %v1980
      %v1992 = vmul.f32 %v1948, %v1978
      %v1993 = vmul.f32 %v1949, %v1982
      %v1994 = vmul.f32 %v1950, %v1980
      %v1995 = vmul.f32 %v1951, %v1978
      %v1996 = vmul.f32 %v1952, %v1982
      %v1997 = vmul.f32 %v1953, %v1980
      %v1998 = vmul.f32 %v1954, %v1978
      %v1999 = vmul.f32 %v1955, %v1982
      %v2000 = vmul.f32 %v1956, %v1980
      %v2001 = vmul.f32 %v1957, %v1978
      %v2002 = vmul.f32 %v1958, %v1982
      %v2003 = vmul.f32 %v1959, %v1980
      %v2004 = vmul.f32 %v1960, %v1978
      %v2005 = vmul.f32 %v1961, %v1982
      %v2006 = vmul.f32 %v1962, %v1980
      %v2007 = vmul.f32 %v1963, %v1978
      %v2008 = vmul.f32 %v1964, %v1982
      %v2009 = vmul.f32 %v1965, %v1980
      %2034 = vrot.lane.b32.xlu0 %v1986, 126
      %v2035 = vpop.permute.xlu0 %2034
      %2036 = vrot.lane.b32.xlu0 %v1987, 126
      %v2037 = vpop.permute.xlu0 %2036
      %2038 = vrot.lane.b32.xlu0 %v1988, 126
      %v2039 = vpop.permute.xlu0 %2038
      %2040 = vrot.lane.b32.xlu0 %v1989, 126
      %v2041 = vpop.permute.xlu0 %2040
      %2042 = vrot.lane.b32.xlu0 %v1990, 126
      %v2043 = vpop.permute.xlu0 %2042
      %2044 = vrot.lane.b32.xlu0 %v1991, 126
      %v2045 = vpop.permute.xlu0 %2044
      %2046 = vrot.lane.b32.xlu0 %v1992, 126
      %v2047 = vpop.permute.xlu0 %2046
      %2048 = vrot.lane.b32.xlu0 %v1993, 126
      %v2049 = vpop.permute.xlu0 %2048
      %2050 = vrot.lane.b32.xlu0 %v1994, 126
      %v2051 = vpop.permute.xlu0 %2050
      %2052 = vrot.lane.b32.xlu0 %v1995, 126
      %v2053 = vpop.permute.xlu0 %2052
      %2054 = vrot.lane.b32.xlu0 %v1996, 126
      %v2055 = vpop.permute.xlu0 %2054
      %2056 = vrot.lane.b32.xlu0 %v1997, 126
      %v2057 = vpop.permute.xlu0 %2056
      %2058 = vrot.lane.b32.xlu0 %v1998, 126
      %v2059 = vpop.permute.xlu0 %2058
      %2060 = vrot.lane.b32.xlu0 %v1999, 126
      %v2061 = vpop.permute.xlu0 %2060
      %2062 = vrot.lane.b32.xlu0 %v2000, 126
      %v2063 = vpop.permute.xlu0 %2062
      %2064 = vrot.lane.b32.xlu0 %v2001, 126
      %v2065 = vpop.permute.xlu0 %2064
      %2066 = vrot.lane.b32.xlu0 %v2002, 126
      %v2067 = vpop.permute.xlu0 %2066
      %2068 = vrot.lane.b32.xlu0 %v2003, 126
      %v2069 = vpop.permute.xlu0 %2068
      %2070 = vrot.lane.b32.xlu0 %v2004, 126
      %v2071 = vpop.permute.xlu0 %2070
      %2072 = vrot.lane.b32.xlu0 %v2005, 126
      %v2073 = vpop.permute.xlu0 %2072
      %2074 = vrot.lane.b32.xlu0 %v2006, 126
      %v2075 = vpop.permute.xlu0 %2074
      %2076 = vrot.lane.b32.xlu0 %v2007, 126
      %v2077 = vpop.permute.xlu0 %2076
      %2078 = vrot.lane.b32.xlu0 %v2008, 126
      %v2079 = vpop.permute.xlu0 %2078
      %2080 = vrot.lane.b32.xlu0 %v2009, 126
      %v2081 = vpop.permute.xlu0 %2080
      %vm2082 = vcmask 1031168
      %v2083 = vsel %vm2082, %v2035, %v2037
      %v2084 = vsel %vm2082, %v2037, %v2039
      %v2085 = vsel %vm2082, %v2041, %v2043
      %v2086 = vsel %vm2082, %v2043, %v2045
      %v2087 = vsel %vm2082, %v2047, %v2049
      %v2088 = vsel %vm2082, %v2049, %v2051
      %v2089 = vsel %vm2082, %v2053, %v2055
      %v2090 = vsel %vm2082, %v2055, %v2057
      %v2091 = vsel %vm2082, %v2059, %v2061
      %v2092 = vsel %vm2082, %v2061, %v2063
      %v2093 = vsel %vm2082, %v2065, %v2067
      %v2094 = vsel %vm2082, %v2067, %v2069
      %v2095 = vsel %vm2082, %v2071, %v2073
      %v2096 = vsel %vm2082, %v2073, %v2075
      %v2097 = vsel %vm2082, %v2077, %v2079
      %v2098 = vsel %vm2082, %v2079, %v2081
      %v2123 = vadd.f32 %v1478, %v2083
      %v2124 = vadd.f32 %v1479, %v2084
      %v2125 = vadd.f32 %v1480, %v2039
      %v2126 = vadd.f32 %v1481, %v2085
      %v2127 = vadd.f32 %v1482, %v2086
      %v2128 = vadd.f32 %v1483, %v2045
      %v2129 = vadd.f32 %v1484, %v2087
      %v2130 = vadd.f32 %v1485, %v2088
      %v2131 = vadd.f32 %v1486, %v2051
      %v2132 = vadd.f32 %v1487, %v2089
      %v2133 = vadd.f32 %v1488, %v2090
      %v2134 = vadd.f32 %v1489, %v2057
      %v2135 = vadd.f32 %v1490, %v2091
      %v2136 = vadd.f32 %v1491, %v2092
      %v2137 = vadd.f32 %v1492, %v2063
      %v2138 = vadd.f32 %v1493, %v2093
      %v2139 = vadd.f32 %v1494, %v2094
      %v2140 = vadd.f32 %v1495, %v2069
      %v2141 = vadd.f32 %v1496, %v2095
      %v2142 = vadd.f32 %v1497, %v2096
      %v2143 = vadd.f32 %v1498, %v2075
      %v2144 = vadd.f32 %v1499, %v2097
      %v2145 = vadd.f32 %v1500, %v2098
      %v2146 = vadd.f32 %v1501, %v2081
      %2171 = vrot.lane.b32.xlu0 %v2123, 17
      %v2172 = vpop.permute.xlu0 %2171
      %2173 = vrot.lane.b32.xlu0 %v2124, 17
      %v2174 = vpop.permute.xlu0 %2173
      %2175 = vrot.lane.b32.xlu0 %v2125, 17
      %v2176 = vpop.permute.xlu0 %2175
      %2177 = vrot.lane.b32.xlu0 %v2126, 17
      %v2178 = vpop.permute.xlu0 %2177
      %2179 = vrot.lane.b32.xlu0 %v2127, 17
      %v2180 = vpop.permute.xlu0 %2179
      %2181 = vrot.lane.b32.xlu0 %v2128, 17
      %v2182 = vpop.permute.xlu0 %2181
      %2183 = vrot.lane.b32.xlu0 %v2129, 17
      %v2184 = vpop.permute.xlu0 %2183
      %2185 = vrot.lane.b32.xlu0 %v2130, 17
      %v2186 = vpop.permute.xlu0 %2185
      %2187 = vrot.lane.b32.xlu0 %v2131, 17
      %v2188 = vpop.permute.xlu0 %2187
      %2189 = vrot.lane.b32.xlu0 %v2132, 17
      %v2190 = vpop.permute.xlu0 %2189
      %2191 = vrot.lane.b32.xlu0 %v2133, 17
      %v2192 = vpop.permute.xlu0 %2191
      %2193 = vrot.lane.b32.xlu0 %v2134, 17
      %v2194 = vpop.permute.xlu0 %2193
      %2195 = vrot.lane.b32.xlu0 %v2135, 17
      %v2196 = vpop.permute.xlu0 %2195
      %2197 = vrot.lane.b32.xlu0 %v2136, 17
      %v2198 = vpop.permute.xlu0 %2197
      %2199 = vrot.lane.b32.xlu0 %v2137, 17
      %v2200 = vpop.permute.xlu0 %2199
      %2201 = vrot.lane.b32.xlu0 %v2138, 17
      %v2202 = vpop.permute.xlu0 %2201
      %2203 = vrot.lane.b32.xlu0 %v2139, 17
      %v2204 = vpop.permute.xlu0 %2203
      %2205 = vrot.lane.b32.xlu0 %v2140, 17
      %v2206 = vpop.permute.xlu0 %2205
      %2207 = vrot.lane.b32.xlu0 %v2141, 17
      %v2208 = vpop.permute.xlu0 %2207
      %2209 = vrot.lane.b32.xlu0 %v2142, 17
      %v2210 = vpop.permute.xlu0 %2209
      %2211 = vrot.lane.b32.xlu0 %v2143, 17
      %v2212 = vpop.permute.xlu0 %2211
      %2213 = vrot.lane.b32.xlu0 %v2144, 17
      %v2214 = vpop.permute.xlu0 %2213
      %2215 = vrot.lane.b32.xlu0 %v2145, 17
      %v2216 = vpop.permute.xlu0 %2215
      %2217 = vrot.lane.b32.xlu0 %v2146, 17
      %v2218 = vpop.permute.xlu0 %2217
      %vm2219 = vcmask 138240
      %v2220 = vsel %vm2219, %v2172, %v2174
      %v2221 = vsel %vm2219, %v2174, %v2176
      %v2222 = vsel %vm2219, %v2178, %v2180
      %v2223 = vsel %vm2219, %v2180, %v2182
      %v2224 = vsel %vm2219, %v2184, %v2186
      %v2225 = vsel %vm2219, %v2186, %v2188
      %v2226 = vsel %vm2219, %v2190, %v2192
      %v2227 = vsel %vm2219, %v2192, %v2194
      %v2228 = vsel %vm2219, %v2196, %v2198
      %v2229 = vsel %vm2219, %v2198, %v2200
      %v2230 = vsel %vm2219, %v2202, %v2204
      %v2231 = vsel %vm2219, %v2204, %v2206
      %v2232 = vsel %vm2219, %v2208, %v2210
      %v2233 = vsel %vm2219, %v2210, %v2212
      %v2234 = vsel %vm2219, %v2214, %v2216
      %v2235 = vsel %vm2219, %v2216, %v2218
      %2252 = vst [vmem:[%s235] sm:$0xff] %v2220
      %2253 = vst [vmem:[%s235 + $0x8] sm:$0xff] %v2221
      %2254 = vst [vmem:[%s235 + $0x10] sm:$0xff] %v2222
      %2255 = vst [vmem:[%s235 + $0x18] sm:$0xff] %v2223
      %2256 = vst [vmem:[%s235 + $0x20] sm:$0xff] %v2224
      %2257 = vst [vmem:[%s235 + $0x28] sm:$0xff] %v2225
      %2258 = vst [vmem:[%s235 + $0x30] sm:$0xff] %v2226
      %2259 = vst [vmem:[%s235 + $0x38] sm:$0xff] %v2227
      %2260 = vst [vmem:[%s235 + $0x40] sm:$0xff] %v2228
      %2261 = vst [vmem:[%s235 + $0x48] sm:$0xff] %v2229
      %2262 = vst [vmem:[%s235 + $0x50] sm:$0xff] %v2230
      %2263 = vst [vmem:[%s235 + $0x58] sm:$0xff] %v2231
      %2264 = vst [vmem:[%s235 + $0x60] sm:$0xff] %v2232
      %2265 = vst [vmem:[%s235 + $0x68] sm:$0xff] %v2233
      %2266 = vst [vmem:[%s235 + $0x70] sm:$0xff] %v2234
      %2267 = vst [vmem:[%s235 + $0x78] sm:$0xff] %v2235
      %s2268 = smul.u32 8, %s19
      %p2269 = scmp.lt.s32.totalorder %s18, 1
      %s2270 = scalar_select %p2269, %s18, 1
      %p2271 = scmp.lt.s32.totalorder %s2268, 7
      %s2272 = scalar_select %p2271, %s2268, 7
      %s2273 = smul.addr %s2272, 2
      %s2274 = smul.addr %s2270, 16
      %s2275 = sadd.s32 %s2273, %s2274
      %s2276 = smul.addr %s2275, 8
      %s2277 = scalar_lea.vmem %s3, %s2276
      // Predicated region
      $region33: #{ctransformer_block.11} parent=31 // pred_check
        %p2278 = pneg %p121
      $region34: #{ctransformer_block.11} parent=31 // pred_check_branch
        %2280 = sbr.rel (%p2278) target = $region36
      $region35: #{ctransformer_block.11} parent=31 // pred_region
        %s2281 = smul.u32 8, %s19
      $region36: #{ctransformer_block.11} parent=31 // pred_fallthru
        _
    $region32: #{ctransformer_block.11} parent=5 // pred_fallthru
      _
    %p2282 = scmp.le.s32.totalorder 2, %s9
    // Predicated region
    $region37: #{ctransformer_block.11} parent=5 // pred_check
      %p2283 = pneg %p2282
    $region38: #{ctransformer_block.11} parent=5 // pred_check_branch
      %2285 = sbr.rel (%p2283) target = $region40
    $region39: #{ctransformer_block.11} parent=5 // pred_region
      %s2286 = ssub.s32 %s9, 2
      // Predicated region
      $region41: #{ctransformer_block.11} parent=39 // pred_check
        %p2287 = pneg %p127
      $region42: #{ctransformer_block.11} parent=39 // pred_check_branch
        %2289 = sbr.rel (%p2287) target = $region44
      $region43: #{ctransformer_block.11} parent=39 // pred_region
        %s2290 = smul.u32 8, %s21
        %p2291 = scmp.lt.s32.totalorder %s20, 1
        %s2292 = scalar_select %p2291, %s20, 1
        %p2293 = scmp.lt.s32.totalorder %s2290, 7
        %s2294 = scalar_select %p2293, %s2290, 7
        %s2295 = smul.addr %s2294, 2
        %s2296 = smul.addr %s2292, 16
        %s2297 = sadd.s32 %s2295, %s2296
        %s2298 = smul.addr %s2297, 8
        %s2299 = scalar_lea.vmem %s3, %s2298
      $region44: #{ctransformer_block.11} parent=39 // pred_fallthru
        _
    $region40: #{ctransformer_block.11} parent=5 // pred_fallthru
      _
  $region6: #{ctransformer_block.11} parent=0 // loop_footer
    %s13 = sadd.s32 1, %s9
  $region7: #{ctransformer_block.11} parent=0 // loop_footer_branch
    %8 = sbr.rel target = $region3
  $region8: #{ctransformer_block.11} parent=0 // loop_exit
    _

// kernel: ctransformer_block.12
$region0: #{ctransformer_block.12}
  #allocation0 [shape = 'u32[]', space=smem, size = 0x4, offset = 0x4, fixed_abs, tag = 'smem constant byte address 0x4 - core index']
  #allocation1 [shape = 'u32[144,128]{1,0:T(1,128)}', space=vmem, size = 0x12000, scoped, tag = 'internal scratch']
  %s0 = inlined_call_operand.vmem [shape: f32[2,32,256], index: 0, kind: input, shape index: {}]
  %s1 = inlined_call_operand.vmem [shape: f32[2,32], index: 1, kind: input, shape index: {}]
  %s2 = inlined_call_operand.vmem [shape: f32[2,32], index: 2, kind: input, shape index: {}]
  %s3 = inlined_call_operand.vmem [shape: f32[2,32,256], index: 3, kind: output, shape index: {}]
  %s4 = sld [smem:[#allocation0]]
  $region22: #{ctransformer_block.12} parent=0
    _
  %s6 = ssub.s32 1, %s4
  %s7 = scalar_select 0, %s6, %s4
  // Predicated region
  $region2: #{ctransformer_block.12} parent=0 // pred_check
    _
  $region3: #{ctransformer_block.12} parent=0 // pred_check_branch
    %9 = sbr.rel (0) target = $region5
  $region4: #{ctransformer_block.12} parent=0 // pred_region
    _
  $region5: #{ctransformer_block.12} parent=0 // pred_fallthru
    _
  // Predicated region
  $region6: #{ctransformer_block.12} parent=0 // pred_check
    _
  $region7: #{ctransformer_block.12} parent=0 // pred_check_branch
    %11 = sbr.rel (0) target = $region9
  $region8: #{ctransformer_block.12} parent=0 // pred_region
    _
  $region9: #{ctransformer_block.12} parent=0 // pred_fallthru
    _
  // Predicated region
  $region10: #{ctransformer_block.12} parent=0 // pred_check
    _
  $region11: #{ctransformer_block.12} parent=0 // pred_check_branch
    %13 = sbr.rel (0) target = $region13
  $region12: #{ctransformer_block.12} parent=0 // pred_region
    _
  $region13: #{ctransformer_block.12} parent=0 // pred_fallthru
    _
  %v14 = vld [vmem:[%s0] sm:$0xff]
  %v15 = vld [vmem:[%s0 + $0x8] sm:$0xff]
  %v16 = vld [vmem:[%s0 + $0x10] sm:$0xff]
  %v17 = vld [vmem:[%s0 + $0x18] sm:$0xff]
  %v18 = vld [vmem:[%s0 + $0x20] sm:$0xff]
  %v19 = vld [vmem:[%s0 + $0x28] sm:$0xff]
  %v20 = vld [vmem:[%s0 + $0x30] sm:$0xff]
  %v21 = vld [vmem:[%s0 + $0x38] sm:$0xff]
  %v22 = vld [vmem:[%s0 + $0x40] sm:$0xff]
  %v23 = vld [vmem:[%s0 + $0x48] sm:$0xff]
  %v24 = vld [vmem:[%s0 + $0x50] sm:$0xff]
  %v25 = vld [vmem:[%s0 + $0x58] sm:$0xff]
  %v26 = vld [vmem:[%s0 + $0x60] sm:$0xff]
  %v27 = vld [vmem:[%s0 + $0x68] sm:$0xff]
  %v28 = vld [vmem:[%s0 + $0x70] sm:$0xff]
  %v29 = vld [vmem:[%s0 + $0x78] sm:$0xff]
  %v30 = vadd.f32 %v14, %v15
  %31 = vadd.xlane.f32.xlu0 %v30
  %v32 = vpop.xlane.xlu0 %31
  %v33 = vadd.f32 %v16, %v17
  %34 = vadd.xlane.f32.xlu0 %v33
  %v35 = vpop.xlane.xlu0 %34
  %v36 = vadd.f32 %v18, %v19
  %37 = vadd.xlane.f32.xlu0 %v36
  %v38 = vpop.xlane.xlu0 %37
  %v39 = vadd.f32 %v20, %v21
  %40 = vadd.xlane.f32.xlu0 %v39
  %v41 = vpop.xlane.xlu0 %40
  %v42 = vadd.f32 %v22, %v23
  %43 = vadd.xlane.f32.xlu0 %v42
  %v44 = vpop.xlane.xlu0 %43
  %v45 = vadd.f32 %v24, %v25
  %46 = vadd.xlane.f32.xlu0 %v45
  %v47 = vpop.xlane.xlu0 %46
  %v48 = vadd.f32 %v26, %v27
  %49 = vadd.xlane.f32.xlu0 %v48
  %v50 = vpop.xlane.xlu0 %49
  %v51 = vadd.f32 %v28, %v29
  %52 = vadd.xlane.f32.xlu0 %v51
  %v53 = vpop.xlane.xlu0 %52
  %v54 = vmul.f32 %v32, 0.0069444445
  %v55 = vmul.f32 %v35, 0.0069444445
  %v56 = vmul.f32 %v38, 0.0069444445
  %v57 = vmul.f32 %v41, 0.0069444445
  %v58 = vmul.f32 %v44, 0.0069444445
  %v59 = vmul.f32 %v47, 0.0069444445
  %v60 = vmul.f32 %v50, 0.0069444445
  %v61 = vmul.f32 %v53, 0.0069444445
  %v62 = vld [vmem:[%s1] sm:$0x1]
  %v63 = vlaneseq
  %v64 = vshrl.u32 %v63, 7
  %v65 = vsub.s32 0, %v64
  %v66 = vrot.slane %v62, %v65
  %69 = vbcast.lane.b32.xlu0 %v66, 256
  %v70 = vpop.permute.xlu0 %69
  %s72 = sor.u32 256, 8
  %73 = vbcast.lane.b32.xlu0 %v66, %s72
  %v74 = vpop.permute.xlu0 %73
  %s76 = sor.u32 256, 16
  %77 = vbcast.lane.b32.xlu0 %v66, %s76
  %v78 = vpop.permute.xlu0 %77
  %s80 = sor.u32 256, 24
  %81 = vbcast.lane.b32.xlu0 %v66, %s80
  %v82 = vpop.permute.xlu0 %81
  %v87 = vmul.f32 %v54, %v70
  %v88 = vmul.f32 %v55, %v74
  %v89 = vmul.f32 %v56, %v78
  %v90 = vmul.f32 %v57, %v82
  %v91 = vmul.f32 %v58, %v70
  %v92 = vmul.f32 %v59, %v74
  %v93 = vmul.f32 %v60, %v78
  %v94 = vmul.f32 %v61, %v82
  %103 = vset.pattern.permute.xlu0 0
  %104 = vperm.xlu0 %103, %v87
  %v105 = vpop.permute.xlu0 %104
  %106 = vset.pattern.permute.xlu0 0
  %107 = vperm.xlu0 %106, %v88
  %v108 = vpop.permute.xlu0 %107
  %109 = vset.pattern.permute.xlu0 0
  %110 = vperm.xlu0 %109, %v89
  %v111 = vpop.permute.xlu0 %110
  %112 = vset.pattern.permute.xlu0 0
  %113 = vperm.xlu0 %112, %v90
  %v114 = vpop.permute.xlu0 %113
  %115 = vset.pattern.permute.xlu0 0
  %116 = vperm.xlu0 %115, %v91
  %v117 = vpop.permute.xlu0 %116
  %118 = vset.pattern.permute.xlu0 0
  %119 = vperm.xlu0 %118, %v92
  %v120 = vpop.permute.xlu0 %119
  %121 = vset.pattern.permute.xlu0 0
  %122 = vperm.xlu0 %121, %v93
  %v123 = vpop.permute.xlu0 %122
  %124 = vset.pattern.permute.xlu0 0
  %125 = vperm.xlu0 %124, %v94
  %v126 = vpop.permute.xlu0 %125
  %v127 = vlaneseq
  %v128 = vand.u32 %v127, 127
  %v129 = vlaneseq
  %v130 = vshrl.u32 %v129, 7
  %v131 = vsub.s32 %v128, %v130
  %v132 = vrot.slane %v105, %v131
  %v133 = vadd.s32 %v128, 4294967288
  %v134 = vlaneseq
  %v135 = vshrl.u32 %v134, 7
  %v136 = vsub.s32 %v133, %v135
  %v137 = vrot.slane %v108, %v136
  %vm138 = vcmask 130112
  %v139 = vsel %vm138, %v137, %v132
  %v140 = vadd.s32 %v128, 4294967280
  %v141 = vlaneseq
  %v142 = vshrl.u32 %v141, 7
  %v143 = vsub.s32 %v140, %v142
  %v144 = vrot.slane %v111, %v143
  %vm145 = vcmask 195712
  %v146 = vsel %vm145, %v144, %v139
  %v147 = vadd.s32 %v128, 4294967272
  %v148 = vlaneseq
  %v149 = vshrl.u32 %v148, 7
  %v150 = vsub.s32 %v147, %v149
  %v151 = vrot.slane %v114, %v150
  %vm152 = vcmask 261312
  %v153 = vsel %vm152, %v151, %v146
  %v154 = vlaneseq
  %v155 = vshrl.u32 %v154, 7
  %v156 = vsub.s32 %v128, %v155
  %v157 = vrot.slane %v117, %v156
  %v158 = vlaneseq
  %v159 = vshrl.u32 %v158, 7
  %v160 = vsub.s32 %v133, %v159
  %v161 = vrot.slane %v120, %v160
  %v162 = vsel %vm138, %v161, %v157
  %v163 = vlaneseq
  %v164 = vshrl.u32 %v163, 7
  %v165 = vsub.s32 %v140, %v164
  %v166 = vrot.slane %v123, %v165
  %v167 = vsel %vm145, %v166, %v162
  %v168 = vlaneseq
  %v169 = vshrl.u32 %v168, 7
  %v170 = vsub.s32 %v147, %v169
  %v171 = vrot.slane %v126, %v170
  %v172 = vsel %vm152, %v171, %v167
  %vm173 = vcmask 1041409
  %v174 = vsel %vm173, %v172, %v153
  %vm176 = vcmask 254976
  %v177 = vsel %vm176, %v174, 0.0
  %178 = vadd.xlane.f32.xlu0 %v177
  %v179 = vpop.xlane.xlu0 %178
  %v180 = vmax.f32 %v179, 0.0
  %v181 = vld [vmem:[%s2] sm:$0x1]
  %v182 = vlaneseq
  %v183 = vshrl.u32 %v182, 7
  %v184 = vsub.s32 0, %v183
  %v185 = vrot.slane %v181, %v184
  %v186 = vmul.f32 %v180, %v185
  %v187 = vadd.f32 %v186, 0.0
  %v188 = vld [vmem:[%s1 + $0x1] sm:$0x1]
  %v189 = vlaneseq
  %v190 = vshrl.u32 %v189, 7
  %v191 = vsub.s32 0, %v190
  %v192 = vrot.slane %v188, %v191
  %195 = vbcast.lane.b32.xlu0 %v192, 256
  %v196 = vpop.permute.xlu0 %195
  %s198 = sor.u32 256, 8
  %199 = vbcast.lane.b32.xlu0 %v192, %s198
  %v200 = vpop.permute.xlu0 %199
  %s202 = sor.u32 256, 16
  %203 = vbcast.lane.b32.xlu0 %v192, %s202
  %v204 = vpop.permute.xlu0 %203
  %s206 = sor.u32 256, 24
  %207 = vbcast.lane.b32.xlu0 %v192, %s206
  %v208 = vpop.permute.xlu0 %207
  %v213 = vmul.f32 %v54, %v196
  %v214 = vmul.f32 %v55, %v200
  %v215 = vmul.f32 %v56, %v204
  %v216 = vmul.f32 %v57, %v208
  %v217 = vmul.f32 %v58, %v196
  %v218 = vmul.f32 %v59, %v200
  %v219 = vmul.f32 %v60, %v204
  %v220 = vmul.f32 %v61, %v208
  %229 = vset.pattern.permute.xlu0 0
  %230 = vperm.xlu0 %229, %v213
  %v231 = vpop.permute.xlu0 %230
  %232 = vset.pattern.permute.xlu0 0
  %233 = vperm.xlu0 %232, %v214
  %v234 = vpop.permute.xlu0 %233
  %235 = vset.pattern.permute.xlu0 0
  %236 = vperm.xlu0 %235, %v215
  %v237 = vpop.permute.xlu0 %236
  %238 = vset.pattern.permute.xlu0 0
  %239 = vperm.xlu0 %238, %v216
  %v240 = vpop.permute.xlu0 %239
  %241 = vset.pattern.permute.xlu0 0
  %242 = vperm.xlu0 %241, %v217
  %v243 = vpop.permute.xlu0 %242
  %244 = vset.pattern.permute.xlu0 0
  %245 = vperm.xlu0 %244, %v218
  %v246 = vpop.permute.xlu0 %245
  %247 = vset.pattern.permute.xlu0 0
  %248 = vperm.xlu0 %247, %v219
  %v249 = vpop.permute.xlu0 %248
  %250 = vset.pattern.permute.xlu0 0
  %251 = vperm.xlu0 %250, %v220
  %v252 = vpop.permute.xlu0 %251
  %v253 = vlaneseq
  %v254 = vshrl.u32 %v253, 7
  %v255 = vsub.s32 %v128, %v254
  %v256 = vrot.slane %v231, %v255
  %v257 = vlaneseq
  %v258 = vshrl.u32 %v257, 7
  %v259 = vsub.s32 %v133, %v258
  %v260 = vrot.slane %v234, %v259
  %v261 = vsel %vm138, %v260, %v256
  %v262 = vlaneseq
  %v263 = vshrl.u32 %v262, 7
  %v264 = vsub.s32 %v140, %v263
  %v265 = vrot.slane %v237, %v264
  %v266 = vsel %vm145, %v265, %v261
  %v267 = vlaneseq
  %v268 = vshrl.u32 %v267, 7
  %v269 = vsub.s32 %v147, %v268
  %v270 = vrot.slane %v240, %v269
  %v271 = vsel %vm152, %v270, %v266
  %v272 = vlaneseq
  %v273 = vshrl.u32 %v272, 7
  %v274 = vsub.s32 %v128, %v273
  %v275 = vrot.slane %v243, %v274
  %v276 = vlaneseq
  %v277 = vshrl.u32 %v276, 7
  %v278 = vsub.s32 %v133, %v277
  %v279 = vrot.slane %v246, %v278
  %v280 = vsel %vm138, %v279, %v275
  %v281 = vlaneseq
  %v282 = vshrl.u32 %v281, 7
  %v283 = vsub.s32 %v140, %v282
  %v284 = vrot.slane %v249, %v283
  %v285 = vsel %vm145, %v284, %v280
  %v286 = vlaneseq
  %v287 = vshrl.u32 %v286, 7
  %v288 = vsub.s32 %v147, %v287
  %v289 = vrot.slane %v252, %v288
  %v290 = vsel %vm152, %v289, %v285
  %v291 = vsel %vm173, %v290, %v271
  %v293 = vsel %vm176, %v291, 0.0
  %294 = vadd.xlane.f32.xlu0 %v293
  %v295 = vpop.xlane.xlu0 %294
  %v296 = vmax.f32 %v295, 0.0
  %v297 = vld [vmem:[%s2 + $0x1] sm:$0x1]
  %v298 = vlaneseq
  %v299 = vshrl.u32 %v298, 7
  %v300 = vsub.s32 0, %v299
  %v301 = vrot.slane %v297, %v300
  %v302 = vmul.f32 %v296, %v301
  %v303 = vadd.f32 %v187, %v302
  %v304 = vsub.f32 0.0, %v303
  %v305 = vmul.f32 %v304, 1.442695
  %v306 = vpow.pop %v305
  %v307 = vadd.f32 %v306, 1.0
  %v308 = vrcp.pop %v307
  %v309 = vmul.f32 1.0, %v308
  %v310 = vlaneseq
  %v311 = vshrl.u32 %v310, 7
  %v312 = vsub.s32 0, %v311
  %v313 = vrot.slane %v309, %v312
  %315 = vbcast.lane.b32.xlu0 %v313, 256
  %v316 = vpop.permute.xlu0 %315
  %s318 = sor.u32 256, 8
  %319 = vbcast.lane.b32.xlu0 %v313, %s318
  %v320 = vpop.permute.xlu0 %319
  %s322 = sor.u32 256, 16
  %323 = vbcast.lane.b32.xlu0 %v313, %s322
  %v324 = vpop.permute.xlu0 %323
  %s326 = sor.u32 256, 24
  %327 = vbcast.lane.b32.xlu0 %v313, %s326
  %v328 = vpop.permute.xlu0 %327
  %v329 = vlaneseq
  %v330 = vshrl.u32 %v329, 7
  %v331 = vsub.s32 1, %v330
  %v332 = vrot.slane %v309, %v331
  %334 = vbcast.lane.b32.xlu0 %v332, 256
  %v335 = vpop.permute.xlu0 %334
  %s337 = sor.u32 256, 8
  %338 = vbcast.lane.b32.xlu0 %v332, %s337
  %v339 = vpop.permute.xlu0 %338
  %s341 = sor.u32 256, 16
  %342 = vbcast.lane.b32.xlu0 %v332, %s341
  %v343 = vpop.permute.xlu0 %342
  %s345 = sor.u32 256, 24
  %346 = vbcast.lane.b32.xlu0 %v332, %s345
  %v347 = vpop.permute.xlu0 %346
  %v348 = vmul.f32 %v14, %v316
  %v349 = vmul.f32 %v15, %v316
  %v350 = vmul.f32 %v16, %v320
  %v351 = vmul.f32 %v17, %v320
  %v352 = vmul.f32 %v18, %v324
  %v353 = vmul.f32 %v19, %v324
  %v354 = vmul.f32 %v20, %v328
  %v355 = vmul.f32 %v21, %v328
  %v356 = vmul.f32 %v22, %v335
  %v357 = vmul.f32 %v23, %v335
  %v358 = vmul.f32 %v24, %v339
  %v359 = vmul.f32 %v25, %v339
  %v360 = vmul.f32 %v26, %v343
  %v361 = vmul.f32 %v27, %v343
  %v362 = vmul.f32 %v28, %v347
  %v363 = vmul.f32 %v29, %v347
  %364 = vst [vmem:[%s3] sm:$0xff] %v348
  %365 = vst [vmem:[%s3 + $0x8] sm:$0xff] %v349
  %366 = vst [vmem:[%s3 + $0x10] sm:$0xff] %v350
  %367 = vst [vmem:[%s3 + $0x18] sm:$0xff] %v351
  %368 = vst [vmem:[%s3 + $0x20] sm:$0xff] %v352
  %369 = vst [vmem:[%s3 + $0x28] sm:$0xff] %v353
  %370 = vst [vmem:[%s3 + $0x30] sm:$0xff] %v354
  %371 = vst [vmem:[%s3 + $0x38] sm:$0xff] %v355
  %372 = vst [vmem:[%s3 + $0x40] sm:$0xff] %v356
  %373 = vst [vmem:[%s3 + $0x48] sm:$0xff] %v357
  %374 = vst [vmem:[%s3 + $0x50] sm:$0xff] %v358
  %375 = vst [vmem:[%s3 + $0x58] sm:$0xff] %v359
  %376 = vst [vmem:[%s3 + $0x60] sm:$0xff] %v360
  %377 = vst [vmem:[%s3 + $0x68] sm:$0xff] %v361
  %378 = vst [vmem:[%s3 + $0x70] sm:$0xff] %v362
  %379 = vst [vmem:[%s3 + $0x78] sm:$0xff] %v363
  // Predicated region
  $region14: #{ctransformer_block.12} parent=0 // pred_check
    _
  $region15: #{ctransformer_block.12} parent=0 // pred_check_branch
    %381 = sbr.rel (0) target = $region17
  $region16: #{ctransformer_block.12} parent=0 // pred_region
    _
  $region17: #{ctransformer_block.12} parent=0 // pred_fallthru
    _
  // Predicated region
  $region18: #{ctransformer_block.12} parent=0 // pred_check
    _
  $region19: #{ctransformer_block.12} parent=0 // pred_check_branch
    %383 = sbr.rel (0) target = $region21
  $region20: #{ctransformer_block.12} parent=0 // pred_region
    _
  $region21: #{ctransformer_block.12} parent=0 // pred_fallthru
    _

// kernel: ctransformer_block.13
$region0: #{ctransformer_block.13}
  #allocation0 [shape = 'u32[]', space=smem, size = 0x4, offset = 0x4, fixed_abs, tag = 'smem constant byte address 0x4 - core index']
  #allocation1 [shape = 'u32[144,128]{1,0:T(1,128)}', space=vmem, size = 0x12000, scoped, tag = 'internal scratch']
  %s0 = inlined_call_operand.vmem [shape: f32[2,64,256], index: 0, kind: input, shape index: {}]
  %s1 = inlined_call_operand.vmem [shape: f32[2,32,256], index: 1, kind: input, shape index: {}]
  %s2 = inlined_call_operand.vmem [shape: f32[32,32], index: 2, kind: input, shape index: {}]
  %s3 = inlined_call_operand.vmem [shape: f32[2,32,256], index: 3, kind: output, shape index: {}]
  %s4 = sld [smem:[#allocation0]]
  $region45: #{ctransformer_block.13} parent=0
    _
  %s6 = ssub.s32 1, %s4
  %s7 = scalar_select 0, %s6, %s4
  loop: start=0, step=1, limit=4
  $region2: #{ctransformer_block.13} parent=0 // loop_pre_header
    _
  $region3: #{ctransformer_block.13} parent=0 // loop_header
    %s9 = sphi 0, %s13
    %p10 = scmp.ge.s32.totalorder %s9, 4
    %s16 = sphi 0, %s28
    %s17 = sphi 0, %s24
    %s18 = sphi 0, %s16
    %s19 = sphi 0, %s17
    %s20 = sphi 0, %s18
    %s21 = sphi 0, %s19
    %s33 = sphi 0, %s35
    %s36 = sphi 0, %s33
    %s37 = sphi 0, %s36
    %s53 = sphi 0, %s37
    %s61 = sphi 0, %s63
    %s64 = sphi 0, %s61
    %s65 = sphi 0, %s64
    %s81 = sphi 0, %s65
    %s85 = sphi 0, %s85
    %s87 = sphi 0, %s85
    %s88 = sphi 0, %s87
    %s102 = sphi 0, %s88
    %s110 = sphi 0, %s112
    %s113 = sphi 0, %s110
    %s114 = sphi 0, %s113
    %s130 = sphi 0, %s114
  $region4: #{ctransformer_block.13} parent=0 // loop_header_branch
    %12 = sbr.rel (%p10) target = $region8
  $region5: #{ctransformer_block.13} parent=0 // loop_body
    %s14 = ssub.s32 %s9, 1
    %s15 = ssub.s32 %s9, 2
    %s22 = sadd.s32 1, %s17
    %p23 = scmp.ge.s32.totalorder %s22, 1
    %s24 = scalar_select %p23, 0, %s22
    %s25 = sadd.s32 1, %s16
    %s26 = scalar_select %p23, %s25, %s16
    %p27 = scmp.ge.s32.totalorder %s26, 2
    %s28 = scalar_select %p27, 0, %s26
    %s29 = ssub.s32 %s16, %s28
    %s30 = ssub.s32 %s17, %s24
    %s31 = sor.u32 %s29, %s30
    %p32 = scmp.eq.s32.totalorder %s31, 0
    %s34 = sadd.s32 %s33, 1
    %s35 = scalar_select %p32, %s33, %s34
    %p38 = pneg %p32
    %p39 = scmp.eq.s32.totalorder %s9, 1
    %p40 = por %p38, %p39
    %p41 = scmp.ne.s32.totalorder %s33, %s36
    %p42 = scmp.eq.s32.totalorder %s9, 0
    %p43 = por %p41, %p42
    %p44 = scmp.ne.s32.totalorder %s33, %s36
    %p45 = scmp.eq.s32.totalorder %s14, 1
    %p46 = por %p44, %p45
    %p47 = scmp.ne.s32.totalorder %s36, %s37
    %p48 = scmp.eq.s32.totalorder %s14, 0
    %p49 = por %p47, %p48
    %p50 = scmp.ne.s32.totalorder %s36, %s37
    %p51 = scmp.eq.s32.totalorder %s15, 1
    %p52 = por %p50, %p51
    %p54 = scmp.ne.s32.totalorder %s37, %s53
    %p55 = scmp.eq.s32.totalorder %s15, 0
    %p56 = por %p54, %p55
    %s57 = ssub.s32 %s16, %s28
    %s58 = ssub.s32 %s17, %s24
    %s59 = sor.u32 %s57, %s58
    %p60 = scmp.eq.s32.totalorder %s59, 0
    %s62 = sadd.s32 %s61, 1
    %s63 = scalar_select %p60, %s61, %s62
    %p66 = pneg %p60
    %p67 = scmp.eq.s32.totalorder %s9, 1
    %p68 = por %p66, %p67
    %p69 = scmp.ne.s32.totalorder %s61, %s64
    %p70 = scmp.eq.s32.totalorder %s9, 0
    %p71 = por %p69, %p70
    %p72 = scmp.ne.s32.totalorder %s61, %s64
    %p73 = scmp.eq.s32.totalorder %s14, 1
    %p74 = por %p72, %p73
    %p75 = scmp.ne.s32.totalorder %s64, %s65
    %p76 = scmp.eq.s32.totalorder %s14, 0
    %p77 = por %p75, %p76
    %p78 = scmp.ne.s32.totalorder %s64, %s65
    %p79 = scmp.eq.s32.totalorder %s15, 1
    %p80 = por %p78, %p79
    %p82 = scmp.ne.s32.totalorder %s65, %s81
    %p83 = scmp.eq.s32.totalorder %s15, 0
    %p84 = por %p82, %p83
    %s86 = sadd.s32 %s85, 1
    %p89 = scmp.eq.s32.totalorder %s9, 1
    %p90 = scmp.ne.s32.totalorder %s85, %s87
    %p91 = scmp.eq.s32.totalorder %s9, 0
    %p92 = por %p90, %p91
    %p93 = scmp.ne.s32.totalorder %s85, %s87
    %p94 = scmp.eq.s32.totalorder %s14, 1
    %p95 = por %p93, %p94
    %p96 = scmp.ne.s32.totalorder %s87, %s88
    %p97 = scmp.eq.s32.totalorder %s14, 0
    %p98 = por %p96, %p97
    %p99 = scmp.ne.s32.totalorder %s87, %s88
    %p100 = scmp.eq.s32.totalorder %s15, 1
    %p101 = por %p99, %p100
    %p103 = scmp.ne.s32.totalorder %s88, %s102
    %p104 = scmp.eq.s32.totalorder %s15, 0
    %p105 = por %p103, %p104
    %s106 = ssub.s32 %s16, %s28
    %s107 = ssub.s32 %s17, %s24
    %s108 = sor.u32 %s106, %s107
    %p109 = scmp.eq.s32.totalorder %s108, 0
    %s111 = sadd.s32 %s110, 1
    %s112 = scalar_select %p109, %s110, %s111
    %p115 = pneg %p109
    %p116 = scmp.eq.s32.totalorder %s9, 1
    %p117 = por %p115, %p116
    %p118 = scmp.ne.s32.totalorder %s110, %s113
    %p119 = scmp.eq.s32.totalorder %s9, 0
    %p120 = por %p118, %p119
    %p121 = scmp.ne.s32.totalorder %s110, %s113
    %p122 = scmp.eq.s32.totalorder %s14, 1
    %p123 = por %p121, %p122
    %p124 = scmp.ne.s32.totalorder %s113, %s114
    %p125 = scmp.eq.s32.totalorder %s14, 0
    %p126 = por %p124, %p125
    %p127 = scmp.ne.s32.totalorder %s113, %s114
    %p128 = scmp.eq.s32.totalorder %s15, 1
    %p129 = por %p127, %p128
    %p131 = scmp.ne.s32.totalorder %s114, %s130
    %p132 = scmp.eq.s32.totalorder %s15, 0
    %p133 = por %p131, %p132
    %p134 = scmp.le.s32.totalorder 1, %s9
    %p135 = scmp.lt.s32.totalorder %s9, 3
    %p136 = pnand %p134, %p135
    %p137 = pneg %p136
    // Predicated region
    $region9: #{ctransformer_block.13} parent=5 // pred_check
      _
    $region10: #{ctransformer_block.13} parent=5 // pred_check_branch
      %139 = sbr.rel (%p136) target = $region12
    $region11: #{ctransformer_block.13} parent=5 // pred_region
      %s140 = ssub.s32 %s9, 1
      // Predicated region
      $region13: #{ctransformer_block.13} parent=11 // pred_check
        %p141 = pneg %p98
      $region14: #{ctransformer_block.13} parent=11 // pred_check_branch
        %143 = sbr.rel (%p141) target = $region16
      $region15: #{ctransformer_block.13} parent=11 // pred_region
        _
      $region16: #{ctransformer_block.13} parent=11 // pred_fallthru
        _
    $region12: #{ctransformer_block.13} parent=5 // pred_fallthru
      _
    %p144 = scmp.lt.s32.totalorder %s9, 2
    // Predicated region
    $region17: #{ctransformer_block.13} parent=5 // pred_check
      %p145 = pneg %p144
    $region18: #{ctransformer_block.13} parent=5 // pred_check_branch
      %147 = sbr.rel (%p145) target = $region20
    $region19: #{ctransformer_block.13} parent=5 // pred_region
      // Predicated region
      $region21: #{ctransformer_block.13} parent=19 // pred_check
        %p148 = pneg %p43
      $region22: #{ctransformer_block.13} parent=19 // pred_check_branch
        %150 = sbr.rel (%p148) target = $region24
      $region23: #{ctransformer_block.13} parent=19 // pred_region
        %s151 = smul.u32 2, %s17
        %p152 = scmp.lt.s32.totalorder %s16, 1
        %s153 = scalar_select %p152, %s16, 1
        %p154 = scmp.lt.s32.totalorder %s151, 1
        %s155 = scalar_select %p154, %s151, 1
        %s156 = smul.addr %s153, 16
        %s157 = sadd.s32 %s155, %s156
        %s158 = smul.addr %s157, 8
        %s159 = scalar_lea.vmem %s0, %s158
        %s160 = smul.u32 2, %s17
      $region24: #{ctransformer_block.13} parent=19 // pred_fallthru
        _
      // Predicated region
      $region25: #{ctransformer_block.13} parent=19 // pred_check
        %p161 = pneg %p71
      $region26: #{ctransformer_block.13} parent=19 // pred_check_branch
        %163 = sbr.rel (%p161) target = $region28
      $region27: #{ctransformer_block.13} parent=19 // pred_region
        %s164 = smul.u32 2, %s17
        %p165 = scmp.lt.s32.totalorder %s16, 1
        %s166 = scalar_select %p165, %s16, 1
        %p167 = scmp.lt.s32.totalorder %s164, 1
        %s168 = scalar_select %p167, %s164, 1
        %s169 = smul.addr %s166, 8
        %s170 = sadd.s32 %s168, %s169
        %s171 = smul.addr %s170, 8
        %s172 = scalar_lea.vmem %s1, %s171
        %s173 = smul.u32 2, %s17
      $region28: #{ctransformer_block.13} parent=19 // pred_fallthru
        _
    $region20: #{ctransformer_block.13} parent=5 // pred_fallthru
      _
    %p174 = scmp.le.s32.totalorder 1, %s9
    %p175 = scmp.lt.s32.totalorder %s9, 3
    %p176 = pnand %p174, %p175
    %p177 = pneg %p176
    // Predicated region
    $region29: #{ctransformer_block.13} parent=5 // pred_check
      _
    $region30: #{ctransformer_block.13} parent=5 // pred_check_branch
      %179 = sbr.rel (%p176) target = $region32
    $region31: #{ctransformer_block.13} parent=5 // pred_region
      %s180 = ssub.s32 %s9, 1
      %s181 = smul.u32 2, %s19
      %p182 = scmp.lt.s32.totalorder %s18, 1
      %s183 = scalar_select %p182, %s18, 1
      %p184 = scmp.lt.s32.totalorder %s181, 1
      %s185 = scalar_select %p184, %s181, 1
      %s186 = smul.addr %s183, 16
      %s187 = sadd.s32 %s185, %s186
      %s188 = smul.addr %s187, 8
      %s189 = scalar_lea.vmem %s0, %s188
      %p190 = pneg %p49
      %p191 = pneg %p46
      %s192 = smul.u32 2, %s19
      %p193 = scmp.lt.s32.totalorder %s18, 1
      %s194 = scalar_select %p193, %s18, 1
      %p195 = scmp.lt.s32.totalorder %s192, 1
      %s196 = scalar_select %p195, %s192, 1
      %s197 = smul.addr %s194, 8
      %s198 = sadd.s32 %s196, %s197
      %s199 = smul.addr %s198, 8
      %s200 = scalar_lea.vmem %s1, %s199
      %p201 = pneg %p77
      %p202 = pneg %p74
      %p203 = pneg %p98
      %p204 = pneg %p95
      %p205 = pneg %p126
      %p206 = pneg %p123
      %s207 = smul.u32 2, %s19
      %p208 = scmp.lt.s32.totalorder %s18, 1
      %s209 = scalar_select %p208, %s18, 1
      %p210 = scmp.lt.s32.totalorder %s207, 1
      %s211 = scalar_select %p210, %s207, 1
      %s212 = smul.addr %s209, 8
      %s213 = sadd.s32 %s211, %s212
      %s214 = smul.addr %s213, 8
      %s215 = scalar_lea.vmem %s3, %s214
      %s216 = smul.u32 2, %s19
      %p217 = scmp.lt.s32.totalorder %s18, 1
      %s218 = scalar_select %p217, %s18, 1
      %p219 = scmp.lt.s32.totalorder %s216, 1
      %s220 = scalar_select %p219, %s216, 1
      %s221 = smul.addr %s218, 16
      %s222 = sadd.s32 %s220, %s221
      %s223 = smul.addr %s222, 8
      %s224 = scalar_lea.vmem %s0, %s223
      %s225 = smul.u32 2, %s19
      %s226 = smul.u32 2, %s19
      %p227 = scmp.lt.s32.totalorder %s18, 1
      %s228 = scalar_select %p227, %s18, 1
      %p229 = scmp.lt.s32.totalorder %s226, 1
      %s230 = scalar_select %p229, %s226, 1
      %s231 = smul.addr %s228, 8
      %s232 = sadd.s32 %s230, %s231
      %s233 = smul.addr %s232, 8
      %s234 = scalar_lea.vmem %s1, %s233
      %s235 = smul.u32 2, %s19
      %s236 = smul.u32 2, %s19
      %p237 = scmp.lt.s32.totalorder %s18, 1
      %s238 = scalar_select %p237, %s18, 1
      %p239 = scmp.lt.s32.totalorder %s236, 1
      %s240 = scalar_select %p239, %s236, 1
      %s241 = smul.addr %s238, 8
      %s242 = sadd.s32 %s240, %s241
      %s243 = smul.addr %s242, 8
      %s244 = scalar_lea.vmem %s3, %s243
      %s245 = smul.u32 2, %s19
      %v246 = vld [vmem:[%s224] sm:$0xff]
      %v247 = vld [vmem:[%s224 + $0x8] sm:$0xff]
      %v248 = vld [vmem:[%s224 + $0x10] sm:$0xff]
      %v249 = vld [vmem:[%s224 + $0x18] sm:$0xff]
      %v250 = vld [vmem:[%s224 + $0x20] sm:$0xff]
      %v251 = vld [vmem:[%s224 + $0x28] sm:$0xff]
      %v252 = vld [vmem:[%s224 + $0x30] sm:$0xff]
      %v253 = vld [vmem:[%s224 + $0x38] sm:$0xff]
      %v254 = vmul.f32 %v246, 0.5
      %v255 = vmul.f32 %v247, 0.5
      %v256 = vmul.f32 %v248, 0.5
      %v257 = vmul.f32 %v249, 0.5
      %v258 = vmul.f32 %v250, 0.5
      %v259 = vmul.f32 %v251, 0.5
      %v260 = vmul.f32 %v252, 0.5
      %v261 = vmul.f32 %v253, 0.5
      %v262 = vmul.f32 %v246, 0.044715
      %v263 = vmul.f32 %v247, 0.044715
      %v264 = vmul.f32 %v248, 0.044715
      %v265 = vmul.f32 %v249, 0.044715
      %v266 = vmul.f32 %v250, 0.044715
      %v267 = vmul.f32 %v251, 0.044715
      %v268 = vmul.f32 %v252, 0.044715
      %v269 = vmul.f32 %v253, 0.044715
      %v270 = vmul.f32 %v262, %v246
      %v271 = vmul.f32 %v263, %v247
      %v272 = vmul.f32 %v264, %v248
      %v273 = vmul.f32 %v265, %v249
      %v274 = vmul.f32 %v266, %v250
      %v275 = vmul.f32 %v267, %v251
      %v276 = vmul.f32 %v268, %v252
      %v277 = vmul.f32 %v269, %v253
      %v278 = vmul.f32 %v270, %v246
      %v279 = vmul.f32 %v271, %v247
      %v280 = vmul.f32 %v272, %v248
      %v281 = vmul.f32 %v273, %v249
      %v282 = vmul.f32 %v274, %v250
      %v283 = vmul.f32 %v275, %v251
      %v284 = vmul.f32 %v276, %v252
      %v285 = vmul.f32 %v277, %v253
      %v286 = vadd.f32 %v246, %v278
      %v287 = vadd.f32 %v247, %v279
      %v288 = vadd.f32 %v248, %v280
      %v289 = vadd.f32 %v249, %v281
      %v290 = vadd.f32 %v250, %v282
      %v291 = vadd.f32 %v251, %v283
      %v292 = vadd.f32 %v252, %v284
      %v293 = vadd.f32 %v253, %v285
      %v294 = vmul.f32 %v286, 0.7978846
      %v295 = vmul.f32 %v287, 0.7978846
      %v296 = vmul.f32 %v288, 0.7978846
      %v297 = vmul.f32 %v289, 0.7978846
      %v298 = vmul.f32 %v290, 0.7978846
      %v299 = vmul.f32 %v291, 0.7978846
      %v300 = vmul.f32 %v292, 0.7978846
      %v301 = vmul.f32 %v293, 0.7978846
      %v302 = vtanh.pop %v294
      %v303 = vtanh.pop %v295
      %v304 = vtanh.pop %v296
      %v305 = vtanh.pop %v297
      %v306 = vtanh.pop %v298
      %v307 = vtanh.pop %v299
      %v308 = vtanh.pop %v300
      %v309 = vtanh.pop %v301
      %v310 = vadd.f32 %v302, 1.0
      %v311 = vadd.f32 %v303, 1.0
      %v312 = vadd.f32 %v304, 1.0
      %v313 = vadd.f32 %v305, 1.0
      %v314 = vadd.f32 %v306, 1.0
      %v315 = vadd.f32 %v307, 1.0
      %v316 = vadd.f32 %v308, 1.0
      %v317 = vadd.f32 %v309, 1.0
      %v318 = vmul.f32 %v254, %v310
      %v319 = vmul.f32 %v255, %v311
      %v320 = vmul.f32 %v256, %v312
      %v321 = vmul.f32 %v257, %v313
      %v322 = vmul.f32 %v258, %v314
      %v323 = vmul.f32 %v259, %v315
      %v324 = vmul.f32 %v260, %v316
      %v325 = vmul.f32 %v261, %v317
      %v326 = vld [vmem:[%s234] sm:$0xff]
      %v327 = vld [vmem:[%s234 + $0x8] sm:$0xff]
      %v328 = vld [vmem:[%s234 + $0x10] sm:$0xff]
      %v329 = vld [vmem:[%s234 + $0x18] sm:$0xff]
      %v330 = vld [vmem:[%s234 + $0x20] sm:$0xff]
      %v331 = vld [vmem:[%s234 + $0x28] sm:$0xff]
      %v332 = vld [vmem:[%s234 + $0x30] sm:$0xff]
      %v333 = vld [vmem:[%s234 + $0x38] sm:$0xff]
      %v334 = vmul.f32 %v318, %v326
      %v335 = vmul.f32 %v319, %v327
      %v336 = vmul.f32 %v320, %v328
      %v337 = vmul.f32 %v321, %v329
      %v338 = vmul.f32 %v322, %v330
      %v339 = vmul.f32 %v323, %v331
      %v340 = vmul.f32 %v324, %v332
      %v341 = vmul.f32 %v325, %v333
      %v342 = vld [vmem:[%s2] sm:$0xff]
      %v343 = vld [vmem:[%s2 + $0x8] sm:$0xff]
      %v344 = vld [vmem:[%s2 + $0x10] sm:$0xff]
      %v345 = vld [vmem:[%s2 + $0x18] sm:$0xff]
      %vm346 = vcmask 261120
      %v348 = vsel %vm346, %v342, 0
      %v351 = vsel %vm346, %v343, 0
      %v354 = vsel %vm346, %v344, 0
      %v357 = vsel %vm346, %v345, 0
      %359 = vmatprep.subr.mxu0 0.0
      %360 = vmatpush1.msra.mxu0 0.0
      %361 = vmatprep.subr.mxu0 0.0
      %362 = vmatpush1.msra.mxu0 0.0
      %363 = vmatprep.subr.mxu0 0.0
      %364 = vmatpush1.msra.mxu0 0.0
      %365 = vmatprep.subr.mxu0 0.0
      %366 = vmatpush1.msra.mxu0 0.0
      %367 = vmatprep.subr.mxu0 0.0
      %368 = vmatpush1.msra.mxu0 0.0
      %369 = vmatprep.subr.mxu0 0.0
      %370 = vmatpush1.msra.mxu0 0.0
      %371 = vmatprep.subr.mxu0 0.0
      %372 = vmatpush1.msra.mxu0 0.0
      %373 = vmatprep.subr.mxu0 0.0
      %374 = vmatpush1.msra.mxu0 0.0
      %375 = vmatprep.subr.mxu0 0.0
      %376 = vmatpush1.msra.mxu0 0.0
      %377 = vmatprep.subr.mxu0 0.0
      %378 = vmatpush1.msra.mxu0 0.0
      %379 = vmatprep.subr.mxu0 0.0
      %380 = vmatpush1.msra.mxu0 0.0
      %381 = vmatprep.subr.mxu0 0.0
      %382 = vmatpush1.msra.mxu0 0.0
      %383 = vmatprep.subr.mxu0 %v341
      %384 = vmatpush1.msra.mxu0 %v340
      %385 = vmatprep.subr.mxu0 %v339
      %386 = vmatpush1.msra.mxu0 %v338
      %387 = vmatprep.subr.mxu0 %v337
      %388 = vmatpush1.msra.mxu0 %v336
      %389 = vmatprep.subr.mxu0 %v335
      %390 = vmatpush1.msra.mxu0 %v334
      %391 = vmatprep.subr.mxu0 0.0
      %392 = vmatpush2.msra.mxu0 0.0
      %393 = vmatprep.subr.mxu0 0.0
      %394 = vmatpush2.msra.mxu0 0.0
      %395 = vmatprep.subr.mxu0 0.0
      %396 = vmatpush2.msra.mxu0 0.0
      %397 = vmatprep.subr.mxu0 0.0
      %398 = vmatpush2.msra.mxu0 0.0
      %399 = vmatprep.subr.mxu0 0.0
      %400 = vmatpush2.msra.mxu0 0.0
      %401 = vmatprep.subr.mxu0 0.0
      %402 = vmatpush2.msra.mxu0 0.0
      %403 = vmatprep.subr.mxu0 0.0
      %404 = vmatpush2.msra.mxu0 0.0
      %405 = vmatprep.subr.mxu0 0.0
      %406 = vmatpush2.msra.mxu0 0.0
      %407 = vmatprep.subr.mxu0 0.0
      %408 = vmatpush2.msra.mxu0 0.0
      %409 = vmatprep.subr.mxu0 0.0
      %410 = vmatpush2.msra.mxu0 0.0
      %411 = vmatprep.subr.mxu0 0.0
      %412 = vmatpush2.msra.mxu0 0.0
      %413 = vmatprep.subr.mxu0 0.0
      %414 = vmatpush2.msra.mxu0 0.0
      %415 = vmatprep.subr.mxu0 0.0
      %416 = vmatpush2.msra.mxu0 0.0
      %417 = vmatprep.subr.mxu0 0.0
      %418 = vmatpush2.msra.mxu0 0.0
      %419 = vmatprep.subr.mxu0 0.0
      %420 = vmatpush2.msra.mxu0 0.0
      %421 = vmatprep.subr.mxu0 0.0
      %422 = vmatpush2.msra.mxu0 0.0
      %423 = vmatprep.mubr.f32.mxu0 0.0
      %424 = vmatmul.mubr.f32.gmra.mxu0 %v348
      %v425 = vpop.f32.mrf.mxu0
      %v426 = vadd.f32 0.0, %v425
      %v427 = vpop.f32.mrf.mxu0
      %v428 = vadd.f32 0.0, %v427
      %429 = vmatprep.mubr.f32.mxu0 0.0
      %430 = vmatmul.mubr.f32.gmra.mxu0 %v351
      %v431 = vpop.f32.mrf.mxu0
      %v432 = vadd.f32 0.0, %v431
      %v433 = vpop.f32.mrf.mxu0
      %v434 = vadd.f32 0.0, %v433
      %435 = vmatprep.mubr.f32.mxu0 0.0
      %436 = vmatmul.mubr.f32.gmra.mxu0 %v354
      %v437 = vpop.f32.mrf.mxu0
      %v438 = vadd.f32 0.0, %v437
      %v439 = vpop.f32.mrf.mxu0
      %v440 = vadd.f32 0.0, %v439
      %441 = vmatprep.mubr.f32.mxu0 0.0
      %442 = vmatmul.mubr.f32.gmra.mxu0 %v357
      %v443 = vpop.f32.mrf.mxu0
      %v444 = vadd.f32 0.0, %v443
      %v445 = vpop.f32.mrf.mxu0
      %v446 = vadd.f32 0.0, %v445
      %447 = vdwg.mxu0
      %448 = vst [vmem:[%s244] sm:$0xff] %v426
      %449 = vst [vmem:[%s244 + $0x8] sm:$0xff] %v428
      %450 = vst [vmem:[%s244 + $0x10] sm:$0xff] %v432
      %451 = vst [vmem:[%s244 + $0x18] sm:$0xff] %v434
      %452 = vst [vmem:[%s244 + $0x20] sm:$0xff] %v438
      %453 = vst [vmem:[%s244 + $0x28] sm:$0xff] %v440
      %454 = vst [vmem:[%s244 + $0x30] sm:$0xff] %v444
      %455 = vst [vmem:[%s244 + $0x38] sm:$0xff] %v446
      %s456 = smul.u32 2, %s19
      %p457 = scmp.lt.s32.totalorder %s18, 1
      %s458 = scalar_select %p457, %s18, 1
      %p459 = scmp.lt.s32.totalorder %s456, 1
      %s460 = scalar_select %p459, %s456, 1
      %s461 = smul.addr %s458, 8
      %s462 = sadd.s32 %s460, %s461
      %s463 = smul.addr %s462, 8
      %s464 = scalar_lea.vmem %s3, %s463
      // Predicated region
      $region33: #{ctransformer_block.13} parent=31 // pred_check
        %p465 = pneg %p123
      $region34: #{ctransformer_block.13} parent=31 // pred_check_branch
        %467 = sbr.rel (%p465) target = $region36
      $region35: #{ctransformer_block.13} parent=31 // pred_region
        %s468 = smul.u32 2, %s19
      $region36: #{ctransformer_block.13} parent=31 // pred_fallthru
        _
    $region32: #{ctransformer_block.13} parent=5 // pred_fallthru
      _
    %p469 = scmp.le.s32.totalorder 2, %s9
    // Predicated region
    $region37: #{ctransformer_block.13} parent=5 // pred_check
      %p470 = pneg %p469
    $region38: #{ctransformer_block.13} parent=5 // pred_check_branch
      %472 = sbr.rel (%p470) target = $region40
    $region39: #{ctransformer_block.13} parent=5 // pred_region
      %s473 = ssub.s32 %s9, 2
      // Predicated region
      $region41: #{ctransformer_block.13} parent=39 // pred_check
        %p474 = pneg %p129
      $region42: #{ctransformer_block.13} parent=39 // pred_check_branch
        %476 = sbr.rel (%p474) target = $region44
      $region43: #{ctransformer_block.13} parent=39 // pred_region
        %s477 = smul.u32 2, %s21
        %p478 = scmp.lt.s32.totalorder %s20, 1
        %s479 = scalar_select %p478, %s20, 1
        %p480 = scmp.lt.s32.totalorder %s477, 1
        %s481 = scalar_select %p480, %s477, 1
        %s482 = smul.addr %s479, 8
        %s483 = sadd.s32 %s481, %s482
        %s484 = smul.addr %s483, 8
        %s485 = scalar_lea.vmem %s3, %s484
      $region44: #{ctransformer_block.13} parent=39 // pred_fallthru
        _
    $region40: #{ctransformer_block.13} parent=5 // pred_fallthru
      _
  $region6: #{ctransformer_block.13} parent=0 // loop_footer
    %s13 = sadd.s32 1, %s9
  $region7: #{ctransformer_block.13} parent=0 // loop_footer_branch
    %8 = sbr.rel target = $region3
  $region8: #{ctransformer_block.13} parent=0 // loop_exit
    _

</llo_original>
